<compile_context>
chip_gen: v7x
topology: tpu7x:2x2x1
jax: 0.10.0
libtpu: 0.0.40
codegen_flags: <defaults>
</compile_context>

<pallas_src>
import functools

import jax
import jax.numpy as jnp
from jax.experimental import pallas as pl
from jax.experimental.pallas import tpu as pltpu

EPS = 1e-5


# ----------------------------- Pallas kernels -----------------------------

def _stage1_kernel(x_ref, s1_ref, t1_ref, w1_ref, b1_ref, o_ref):
    """z = relu(bn2(conv1x1(relu(bn1(x)))))   with bn2 folded into (w1, b1)."""
    x = x_ref[...].astype(jnp.float32)
    a = jnp.maximum(x * s1_ref[...] + t1_ref[...], 0.0)       # bn1 + relu (f32)
    y = jnp.dot(a.astype(w1_ref.dtype), w1_ref[...],
                preferred_element_type=jnp.float32)
    o_ref[...] = jnp.maximum(y + b1_ref[...], 0.0).astype(o_ref.dtype)


def _stage23_kernel(zm_ref, z0_ref, zp_ref, x_ref, w2_ref, b2_ref, w3_ref,
                    ws_ref, bo_ref, o_ref, *, w_ext, n_rows):
    """m = relu(bn3(conv3x3x3(z)));  out = conv3(m) + skip(x)   (bn3 folded).

    zm/z0/zp are the padded z depth planes (d-1, d, d+1), each flattened to
    ((H+3)*(W+2), Cm).  Tap (kd, kh, kw) of the 3x3x3 conv is the contiguous
    row-slice of plane kd starting at kh*(W+2)+kw, so each tap is a plain 2-D
    matmul on VMEM data — no im2col tensor ever touches HBM.  The 2 extra
    (garbage) columns per row are discarded by the wrapper.
    """
    cm = w2_ref.shape[2]
    acc = jnp.zeros((n_rows, cm), jnp.float32)
    planes = (zm_ref[...], z0_ref[...], zp_ref[...])
    for kd in range(3):
        plane = planes[kd]
        for kh in range(3):
            for kw in range(3):
                s = kh * w_ext + kw
                tap = kd * 9 + kh * 3 + kw
                acc += jnp.dot(plane[s:s + n_rows, :], w2_ref[tap],
                               preferred_element_type=jnp.float32)
    m = jnp.maximum(acc + b2_ref[...], 0.0)                    # bn3 folded + relu
    out = jnp.dot(m.astype(w3_ref.dtype), w3_ref[...],
                  preferred_element_type=jnp.float32)
    out = out + jnp.dot(x_ref[...].astype(ws_ref.dtype), ws_ref[...],
                        preferred_element_type=jnp.float32)
    o_ref[...] = (out + bo_ref[...]).astype(o_ref.dtype)


# ----------------------------- wrapper -----------------------------

def _vmem_limit_bytes(*byte_counts):
    need = sum(byte_counts)
    return int(min(max(int(1.5 * need) + (4 << 20), 32 << 20), 64 << 20))


@functools.partial(jax.jit, static_argnames=("use_bf16",))
def residual_forward(x_ncdhw, p, *, use_bf16=True):
    N, Cin, D, H, W = x_ncdhw.shape
    Cm = p["w1"].shape[1]
    Cout = p["w3"].shape[1]
    S = N * D * H * W
    f32 = jnp.float32
    cdt = jnp.bfloat16 if use_bf16 else f32
    isz = jnp.dtype(cdt).itemsize

    # ---- fold post-conv BatchNorms into conv weights / biases (free algebra) ----
    w1f = (p["w1"] * p["s2"]).astype(cdt)                    # (Cin, Cm)
    b1f = (p["b1"] * p["s2"] + p["t2"]).astype(f32)          # (1, Cm)
    w2f = (p["w2col"] * p["s3"][None]).astype(cdt)           # (27, Cm, Cm)
    b2f = (p["b2"] * p["s3"] + p["t3"]).astype(f32)          # (1, Cm)
    w3f = p["w3"].astype(cdt)                                # (Cm, Cout)
    wsf = p["wskip"].astype(cdt)                             # (Cin, Cout)
    bof = (p["b3"] + p["bskip"]).astype(f32)                 # (1, Cout)

    # NCDHW -> NDHWC.  TODO(synk): these two transposes vanish if the surrounding
    # model carries NDHWC activations.
    x_cl = jnp.transpose(x_ncdhw, (0, 2, 3, 4, 1))
    x_flat = x_cl.reshape(S, Cin)

    # ---------------- stage 1: bn1 -> relu -> conv1x1 (+bn2 folded) -> relu ----------
    tm = S if S <= 2048 else 2048
    vlim1 = _vmem_limit_bytes(2 * tm * Cin * 4, 2 * tm * Cm * isz, Cin * Cm * isz)
    vec = lambda c: pl.BlockSpec((1, c), lambda i: (0, 0))
    z_flat = pl.pallas_call(
        _stage1_kernel,
        out_shape=jax.ShapeDtypeStruct((S, Cm), cdt),
        grid=(pl.cdiv(S, tm),),
        in_specs=[
            pl.BlockSpec((tm, Cin), lambda i: (i, 0)),
            vec(Cin), vec(Cin),
            pl.BlockSpec((Cin, Cm), lambda i: (0, 0)),
            vec(Cm),
        ],
        out_specs=pl.BlockSpec((tm, Cm), lambda i: (i, 0)),
        compiler_params=pltpu.CompilerParams(
            dimension_semantics=("parallel",), vmem_limit_bytes=vlim1),
    )(x_flat, p["s1"], p["t1"], w1f, b1f)

    # ------------- glue: single zero-pad of z (no 27x im2col materialization) --------
    z = z_flat.reshape(N, D, H, W, Cm)
    # depth pad (1,1); height pad (1,2) -> one extra zero row so every in-kernel tap
    # slice stays in-bounds; width pad (1,1).
    zpad = jnp.pad(z, ((0, 0), (1, 1), (1, 2), (1, 1), (0, 0)))
    Rp = (H + 3) * (W + 2)           # rows of one flattened padded plane
    RE = H * (W + 2)                 # extended output rows (2 garbage cols per row)
    zpad = zpad.reshape(N, D + 2, Rp, Cm)

    # skip-path input aligned to the extended (W+2)-column row layout
    x_ext = jnp.pad(x_cl, ((0, 0), (0, 0), (0, 0), (0, 2), (0, 0)))
    x_ext = x_ext.reshape(N, D, RE, Cin)

    # --------- stage 2+3: conv3x3x3 (+bn3 folded) -> relu -> conv1x1 + skip ----------
    vlim2 = _vmem_limit_bytes(2 * 3 * Rp * Cm * isz, 2 * RE * Cin * 4,
                              2 * RE * Cout * 4, 27 * Cm * Cm * isz)
    kern = functools.partial(_stage23_kernel, w_ext=W + 2, n_rows=RE)

    def plane_spec(kd):
        return pl.BlockSpec((None, None, Rp, Cm),
                            lambda n, d, _kd=kd: (n, d + _kd, 0, 0))

    out_ext = pl.pallas_call(
        kern,
        out_shape=jax.ShapeDtypeStruct((N, D, RE, Cout), jnp.float32),
        grid=(N, D),
        in_specs=[
            plane_spec(0), plane_spec(1), plane_spec(2),
            pl.BlockSpec((None, None, RE, Cin), lambda n, d: (n, d, 0, 0)),
            pl.BlockSpec((27, Cm, Cm), lambda n, d: (0, 0, 0)),
            pl.BlockSpec((1, Cm), lambda n, d: (0, 0)),
            pl.BlockSpec((Cm, Cout), lambda n, d: (0, 0)),
            pl.BlockSpec((Cin, Cout), lambda n, d: (0, 0)),
            pl.BlockSpec((1, Cout), lambda n, d: (0, 0)),
        ],
        out_specs=pl.BlockSpec((None, None, RE, Cout), lambda n, d: (n, d, 0, 0)),
        compiler_params=pltpu.CompilerParams(
            dimension_semantics=("parallel", "parallel"), vmem_limit_bytes=vlim2),
    )(zpad, zpad, zpad, x_ext, w2f, b2f, w3f, wsf, bof)

    out = out_ext.reshape(N, D, H, W + 2, Cout)[:, :, :, :W, :]
    return jnp.transpose(out, (0, 4, 1, 2, 3))    # back to NCDHW


# ----------------------------- parameters -----------------------------

def init_params(key, Cin, Cout):
    Cm = Cout // 2
    ks = jax.random.split(key, 24)

    def nrm(k, shape, s=0.1):
        return s * jax.random.normal(k, shape, jnp.float32)

    # PyTorch nn.Conv3d weight shapes: (out_ch, in_ch, kD, kH, kW)
    w1_pt = nrm(ks[0], (Cm, Cin, 1, 1, 1)); b1 = nrm(ks[1], (Cm,))
    w2_pt = nrm(ks[2], (Cm, Cm, 3, 3, 3));  b2 = nrm(ks[3], (Cm,))
    w3_pt = nrm(ks[4], (Cout, Cm, 1, 1, 1)); b3 = nrm(ks[5], (Cout,))
    ws_pt = nrm(ks[6], (Cout, Cin, 1, 1, 1)); bs = nrm(ks[7], (Cout,))

    def bn(kg, kb, km, kv, C):
        gamma = 1.0 + 0.1 * jax.random.normal(kg, (C,), jnp.float32)
        beta = 0.1 * jax.random.normal(kb, (C,), jnp.float32)
        mean = 0.1 * jax.random.normal(km, (C,), jnp.float32)
        var = jax.random.uniform(kv, (C,), jnp.float32, minval=0.5, maxval=1.5)
        scale = gamma / jnp.sqrt(var + EPS)
        shift = beta - mean * scale
        return scale.reshape(1, C), shift.reshape(1, C)

    s1, t1 = bn(ks[8], ks[9], ks[10], ks[11], Cin)
    s2, t2 = bn(ks[12], ks[13], ks[14], ks[15], Cm)
    s3, t3 = bn(ks[16], ks[17], ks[18], ks[19], Cm)

    w2_dhwio = jnp.transpose(w2_pt, (2, 3, 4, 1, 0))  # (3,3,3,Cin_m,Cout_m)
    return {
        "s1": s1, "t1": t1,
        "w1": w1_pt[:, :, 0, 0, 0].T, "b1": b1.reshape(1, Cm),
        "s2": s2, "t2": t2,
        "w2_dhwio": w2_dhwio, "w2col": w2_dhwio.reshape(27, Cm, Cm),
        "b2": b2.reshape(1, Cm),
        "s3": s3, "t3": t3,
        "w3": w3_pt[:, :, 0, 0, 0].T, "b3": b3.reshape(1, Cout),
        "wskip": ws_pt[:, :, 0, 0, 0].T, "bskip": bs.reshape(1, Cout),
    }


# ----------------------------- pure-JAX reference -----------------------------

def reference_forward(x_ncdhw, p):
    x = jnp.transpose(x_ncdhw, (0, 2, 3, 4, 1))  # NDHWC
    cvec = lambda v: v.reshape(1, 1, 1, 1, -1)

    def conv1x1(v, w, b):
        return jnp.einsum("ndhwc,co->ndhwo", v, w) + cvec(b)

    res = conv1x1(x, p["wskip"], p["bskip"])
    o = jax.nn.relu(x * cvec(p["s1"]) + cvec(p["t1"]))
    o = conv1x1(o, p["w1"], p["b1"])
    o = jax.nn.relu(o * cvec(p["s2"]) + cvec(p["t2"]))
    o = jax.lax.conv_general_dilated(
        o, p["w2_dhwio"], (1, 1, 1), [(1, 1)] * 3,
        dimension_numbers=("NDHWC", "DHWIO", "NDHWC")) + cvec(p["b2"])
    o = jax.nn.relu(o * cvec(p["s3"]) + cvec(p["t3"]))
    o = conv1x1(o, p["w3"], p["b3"])
    o = o + res
    return jnp.transpose(o, (0, 4, 1, 2, 3))


# ----------------------------- main -----------------------------

if __name__ == "__main__":
    N, Cin, Cout, D, H, W = 2, 4, 8, 4, 8, 8  # inp_dim=4, out_dim=8 -> need_skip=True
    key = jax.random.PRNGKey(0)
    kx, kp = jax.random.split(key)
    x = jax.random.normal(kx, (N, Cin, D, H, W), jnp.float32)
    params = init_params(kp, Cin, Cout)

    ref = reference_forward(x, params)
    ref_scale = float(jnp.maximum(1.0, jnp.max(jnp.abs(ref))))

    # exact-math path (f32 matmuls): tight correctness check of the fused structure
    out_f32 = jax.block_until_ready(residual_forward(x, params, use_bf16=False))
    assert out_f32.shape == (N, Cout, D, H, W), out_f32.shape
    err_f32 = float(jnp.max(jnp.abs(out_f32 - ref)))
    assert err_f32 < 1e-3, f"f32 mismatch vs reference: {err_f32}"

    # bf16-operand path (halves HBM traffic / doubles MXU rate on v6e/v7x)
    out_bf16 = jax.block_until_ready(residual_forward(x, params, use_bf16=True))
    assert out_bf16.shape == (N, Cout, D, H, W), out_bf16.shape
    err_bf16 = float(jnp.max(jnp.abs(out_bf16 - ref)))
    assert err_bf16 < 5e-2 * ref_scale, f"bf16 mismatch vs reference: {err_bf16}"

    print("KERNEL_OK")
</pallas_src>

<mosaic_0001>
module attributes {stable_mosaic.version = 11 : i64} {
  func.func @_stage1_kernel(%arg0: i32, %arg1: memref<512x4xf32, #tpu.memory_space<vmem>>, %arg2: memref<1x4xf32, #tpu.memory_space<vmem>>, %arg3: memref<1x4xf32, #tpu.memory_space<vmem>>, %arg4: memref<4x4xf32, #tpu.memory_space<vmem>>, %arg5: memref<1x4xf32, #tpu.memory_space<vmem>>, %arg6: memref<512x4xf32, #tpu.memory_space<vmem>>) attributes {dimension_semantics = [#tpu.dimension_semantics<parallel>], iteration_bounds = array<i64: 1>, scalar_prefetch = 0 : i64, scratch_operands = 0 : i64, tpu.core_type = #tpu.core_type<tc>, window_params = [{transform_indices = @transform_0, window_bounds = array<i64: 512, 4>}, {pipeline_mode = #tpu.pipeline_mode<synchronous>, transform_indices = @transform_1, window_bounds = array<i64: 1, 4>}, {pipeline_mode = #tpu.pipeline_mode<synchronous>, transform_indices = @transform_2, window_bounds = array<i64: 1, 4>}, {pipeline_mode = #tpu.pipeline_mode<synchronous>, transform_indices = @transform_3, window_bounds = array<i64: 4, 4>}, {pipeline_mode = #tpu.pipeline_mode<synchronous>, transform_indices = @transform_4, window_bounds = array<i64: 1, 4>}, {transform_indices = @transform_5, window_bounds = array<i64: 512, 4>}]} {
    %c0 = arith.constant 0 : index
    %c0_0 = arith.constant 0 : index
    %0 = vector.load %arg1[%c0, %c0_0] : memref<512x4xf32, #tpu.memory_space<vmem>>, vector<512x4xf32>
    %c0_1 = arith.constant 0 : index
    %c0_2 = arith.constant 0 : index
    %1 = vector.load %arg2[%c0_1, %c0_2] : memref<1x4xf32, #tpu.memory_space<vmem>>, vector<1x4xf32>
    %2 = vector.broadcast %1 : vector<1x4xf32> to vector<512x4xf32>
    %3 = arith.mulf %0, %2 : vector<512x4xf32>
    %c0_3 = arith.constant 0 : index
    %c0_4 = arith.constant 0 : index
    %4 = vector.load %arg3[%c0_3, %c0_4] : memref<1x4xf32, #tpu.memory_space<vmem>>, vector<1x4xf32>
    %5 = vector.broadcast %4 : vector<1x4xf32> to vector<512x4xf32>
    %6 = arith.addf %3, %5 : vector<512x4xf32>
    %cst = arith.constant 0.000000e+00 : f32
    %7 = vector.broadcast %cst : f32 to vector<512x4xf32>
    %8 = arith.maximumf %6, %7 : vector<512x4xf32>
    %c0_5 = arith.constant 0 : index
    %c0_6 = arith.constant 0 : index
    %9 = vector.load %arg4[%c0_5, %c0_6] : memref<4x4xf32, #tpu.memory_space<vmem>>, vector<4x4xf32>
    %cst_7 = arith.constant dense<0.000000e+00> : vector<512x4xf32>
    %10 = tpu.matmul %8, %9, %cst_7 {dimension_numbers = #tpu.dot_dimension_numbers<[1], [0], [0], [1], [0, 0, 1, 1], [], []>} : vector<512x4xf32>, vector<4x4xf32>, vector<512x4xf32> -> vector<512x4xf32>
    %c0_8 = arith.constant 0 : index
    %c0_9 = arith.constant 0 : index
    %11 = vector.load %arg5[%c0_8, %c0_9] : memref<1x4xf32, #tpu.memory_space<vmem>>, vector<1x4xf32>
    %12 = vector.broadcast %11 : vector<1x4xf32> to vector<512x4xf32>
    %13 = arith.addf %10, %12 : vector<512x4xf32>
    %cst_10 = arith.constant 0.000000e+00 : f32
    %14 = vector.broadcast %cst_10 : f32 to vector<512x4xf32>
    %15 = arith.maximumf %13, %14 : vector<512x4xf32>
    %c0_11 = arith.constant 0 : index
    %c0_12 = arith.constant 0 : index
    %16 = vector.load %arg6[%c0_11, %c0_12] : memref<512x4xf32, #tpu.memory_space<vmem>>, vector<512x4xf32>
    tpu.vector_store %arg6[%c0_11, %c0_12], %15 {strides = array<i32>} : memref<512x4xf32, #tpu.memory_space<vmem>>, vector<512x4xf32>,
    return
  }
  func.func @transform_0(%arg0: i32) -> (i32, i32) {
    %c0_i32 = arith.constant 0 : i32
    %c0_i32_0 = arith.constant 0 : i32
    return %arg0, %c0_i32 : i32, i32
  }
  func.func @transform_1(%arg0: i32) -> (i32, i32) {
    %c0_i32 = arith.constant 0 : i32
    %c0_i32_0 = arith.constant 0 : i32
    %c0_i32_1 = arith.constant 0 : i32
    return %c0_i32, %c0_i32_0 : i32, i32
  }
  func.func @transform_2(%arg0: i32) -> (i32, i32) {
    %c0_i32 = arith.constant 0 : i32
    %c0_i32_0 = arith.constant 0 : i32
    %c0_i32_1 = arith.constant 0 : i32
    return %c0_i32, %c0_i32_0 : i32, i32
  }
  func.func @transform_3(%arg0: i32) -> (i32, i32) {
    %c0_i32 = arith.constant 0 : i32
    %c0_i32_0 = arith.constant 0 : i32
    %c0_i32_1 = arith.constant 0 : i32
    return %c0_i32, %c0_i32_0 : i32, i32
  }
  func.func @transform_4(%arg0: i32) -> (i32, i32) {
    %c0_i32 = arith.constant 0 : i32
    %c0_i32_0 = arith.constant 0 : i32
    %c0_i32_1 = arith.constant 0 : i32
    return %c0_i32, %c0_i32_0 : i32, i32
  }
  func.func @transform_5(%arg0: i32) -> (i32, i32) {
    %c0_i32 = arith.constant 0 : i32
    %c0_i32_0 = arith.constant 0 : i32
    return %arg0, %c0_i32 : i32, i32
  }
}

module attributes {stable_mosaic.version = 11 : i64} {
  func.func @_stage23_kernel(%arg0: i32, %arg1: i32, %arg2: memref<1x1x110x4xf32, #tpu.memory_space<vmem>>, %arg3: memref<1x1x110x4xf32, #tpu.memory_space<vmem>>, %arg4: memref<1x1x110x4xf32, #tpu.memory_space<vmem>>, %arg5: memref<1x1x80x4xf32, #tpu.memory_space<vmem>>, %arg6: memref<27x4x4xf32, #tpu.memory_space<vmem>>, %arg7: memref<1x4xf32, #tpu.memory_space<vmem>>, %arg8: memref<4x8xf32, #tpu.memory_space<vmem>>, %arg9: memref<4x8xf32, #tpu.memory_space<vmem>>, %arg10: memref<1x8xf32, #tpu.memory_space<vmem>>, %arg11: memref<1x1x80x8xf32, #tpu.memory_space<vmem>>) attributes {dimension_semantics = [#tpu.dimension_semantics<parallel>, #tpu.dimension_semantics<parallel>], iteration_bounds = array<i64: 2, 4>, scalar_prefetch = 0 : i64, scratch_operands = 0 : i64, tpu.core_type = #tpu.core_type<tc>, window_params = [{transform_indices = @transform_0, window_bounds = array<i64: 1, 1, 110, 4>}, {transform_indices = @transform_1, window_bounds = array<i64: 1, 1, 110, 4>}, {transform_indices = @transform_2, window_bounds = array<i64: 1, 1, 110, 4>}, {transform_indices = @transform_3, window_bounds = array<i64: 1, 1, 80, 4>}, {pipeline_mode = #tpu.pipeline_mode<synchronous>, transform_indices = @transform_4, window_bounds = array<i64: 27, 4, 4>}, {pipeline_mode = #tpu.pipeline_mode<synchronous>, transform_indices = @transform_5, window_bounds = array<i64: 1, 4>}, {pipeline_mode = #tpu.pipeline_mode<synchronous>, transform_indices = @transform_6, window_bounds = array<i64: 4, 8>}, {pipeline_mode = #tpu.pipeline_mode<synchronous>, transform_indices = @transform_7, window_bounds = array<i64: 4, 8>}, {pipeline_mode = #tpu.pipeline_mode<synchronous>, transform_indices = @transform_8, window_bounds = array<i64: 1, 8>}, {transform_indices = @transform_9, window_bounds = array<i64: 1, 1, 80, 8>}]} {
    %cst = arith.constant 0.000000e+00 : f32
    %0 = vector.broadcast %cst : f32 to vector<80x4xf32>
    %c0 = arith.constant 0 : index
    %c0_0 = arith.constant 0 : index
    %c0_1 = arith.constant 0 : index
    %c0_2 = arith.constant 0 : index
    %1 = vector.load %arg2[%c0, %c0_0, %c0_1, %c0_2] : memref<1x1x110x4xf32, #tpu.memory_space<vmem>>, vector<1x1x110x4xf32>
    %2 = vector.shape_cast %1 : vector<1x1x110x4xf32> to vector<110x4xf32>
    %c0_3 = arith.constant 0 : index
    %c0_4 = arith.constant 0 : index
    %c0_5 = arith.constant 0 : index
    %c0_6 = arith.constant 0 : index
    %3 = vector.load %arg3[%c0_3, %c0_4, %c0_5, %c0_6] : memref<1x1x110x4xf32, #tpu.memory_space<vmem>>, vector<1x1x110x4xf32>
    %4 = vector.shape_cast %3 : vector<1x1x110x4xf32> to vector<110x4xf32>
    %c0_7 = arith.constant 0 : index
    %c0_8 = arith.constant 0 : index
    %c0_9 = arith.constant 0 : index
    %c0_10 = arith.constant 0 : index
    %5 = vector.load %arg4[%c0_7, %c0_8, %c0_9, %c0_10] : memref<1x1x110x4xf32, #tpu.memory_space<vmem>>, vector<1x1x110x4xf32>
    %6 = vector.shape_cast %5 : vector<1x1x110x4xf32> to vector<110x4xf32>
    %7 = vector.extract_strided_slice %2 {offsets = [0, 0], sizes = [80, 4], strides = [1, 1]} : vector<110x4xf32> to vector<80x4xf32>
    %c0_11 = arith.constant 0 : index
    %c0_12 = arith.constant 0 : index
    %c0_13 = arith.constant 0 : index
    %8 = vector.load %arg6[%c0_11, %c0_12, %c0_13] : memref<27x4x4xf32, #tpu.memory_space<vmem>>, vector<1x4x4xf32>
    %9 = vector.shape_cast %8 : vector<1x4x4xf32> to vector<4x4xf32>
    %cst_14 = arith.constant dense<0.000000e+00> : vector<80x4xf32>
    %10 = tpu.matmul %7, %9, %cst_14 {dimension_numbers = #tpu.dot_dimension_numbers<[1], [0], [0], [1], [0, 0, 1, 1], [], []>} : vector<80x4xf32>, vector<4x4xf32>, vector<80x4xf32> -> vector<80x4xf32>
    %11 = arith.addf %0, %10 : vector<80x4xf32>
    %12 = vector.extract_strided_slice %2 {offsets = [1, 0], sizes = [80, 4], strides = [1, 1]} : vector<110x4xf32> to vector<80x4xf32>
    %c1 = arith.constant 1 : index
    %c0_15 = arith.constant 0 : index
    %c0_16 = arith.constant 0 : index
    %13 = vector.load %arg6[%c1, %c0_15, %c0_16] : memref<27x4x4xf32, #tpu.memory_space<vmem>>, vector<1x4x4xf32>
    %14 = vector.shape_cast %13 : vector<1x4x4xf32> to vector<4x4xf32>
    %cst_17 = arith.constant dense<0.000000e+00> : vector<80x4xf32>
    %15 = tpu.matmul %12, %14, %cst_17 {dimension_numbers = #tpu.dot_dimension_numbers<[1], [0], [0], [1], [0, 0, 1, 1], [], []>} : vector<80x4xf32>, vector<4x4xf32>, vector<80x4xf32> -> vector<80x4xf32>
    %16 = arith.addf %11, %15 : vector<80x4xf32>
    %17 = vector.extract_strided_slice %2 {offsets = [2, 0], sizes = [80, 4], strides = [1, 1]} : vector<110x4xf32> to vector<80x4xf32>
    %c2 = arith.constant 2 : index
    %c0_18 = arith.constant 0 : index
    %c0_19 = arith.constant 0 : index
    %18 = vector.load %arg6[%c2, %c0_18, %c0_19] : memref<27x4x4xf32, #tpu.memory_space<vmem>>, vector<1x4x4xf32>
    %19 = vector.shape_cast %18 : vector<1x4x4xf32> to vector<4x4xf32>
    %cst_20 = arith.constant dense<0.000000e+00> : vector<80x4xf32>
    %20 = tpu.matmul %17, %19, %cst_20 {dimension_numbers = #tpu.dot_dimension_numbers<[1], [0], [0], [1], [0, 0, 1, 1], [], []>} : vector<80x4xf32>, vector<4x4xf32>, vector<80x4xf32> -> vector<80x4xf32>
    %21 = arith.addf %16, %20 : vector<80x4xf32>
    %22 = vector.extract_strided_slice %2 {offsets = [10, 0], sizes = [80, 4], strides = [1, 1]} : vector<110x4xf32> to vector<80x4xf32>
    %c3 = arith.constant 3 : index
    %c0_21 = arith.constant 0 : index
    %c0_22 = arith.constant 0 : index
    %23 = vector.load %arg6[%c3, %c0_21, %c0_22] : memref<27x4x4xf32, #tpu.memory_space<vmem>>, vector<1x4x4xf32>
    %24 = vector.shape_cast %23 : vector<1x4x4xf32> to vector<4x4xf32>
    %cst_23 = arith.constant dense<0.000000e+00> : vector<80x4xf32>
    %25 = tpu.matmul %22, %24, %cst_23 {dimension_numbers = #tpu.dot_dimension_numbers<[1], [0], [0], [1], [0, 0, 1, 1], [], []>} : vector<80x4xf32>, vector<4x4xf32>, vector<80x4xf32> -> vector<80x4xf32>
    %26 = arith.addf %21, %25 : vector<80x4xf32>
    %27 = vector.extract_strided_slice %2 {offsets = [11, 0], sizes = [80, 4], strides = [1, 1]} : vector<110x4xf32> to vector<80x4xf32>
    %c4 = arith.constant 4 : index
    %c0_24 = arith.constant 0 : index
    %c0_25 = arith.constant 0 : index
    %28 = vector.load %arg6[%c4, %c0_24, %c0_25] : memref<27x4x4xf32, #tpu.memory_space<vmem>>, vector<1x4x4xf32>
    %29 = vector.shape_cast %28 : vector<1x4x4xf32> to vector<4x4xf32>
    %cst_26 = arith.constant dense<0.000000e+00> : vector<80x4xf32>
    %30 = tpu.matmul %27, %29, %cst_26 {dimension_numbers = #tpu.dot_dimension_numbers<[1], [0], [0], [1], [0, 0, 1, 1], [], []>} : vector<80x4xf32>, vector<4x4xf32>, vector<80x4xf32> -> vector<80x4xf32>
    %31 = arith.addf %26, %30 : vector<80x4xf32>
    %32 = vector.extract_strided_slice %2 {offsets = [12, 0], sizes = [80, 4], strides = [1, 1]} : vector<110x4xf32> to vector<80x4xf32>
    %c5 = arith.constant 5 : index
    %c0_27 = arith.constant 0 : index
    %c0_28 = arith.constant 0 : index
    %33 = vector.load %arg6[%c5, %c0_27, %c0_28] : memref<27x4x4xf32, #tpu.memory_space<vmem>>, vector<1x4x4xf32>
    %34 = vector.shape_cast %33 : vector<1x4x4xf32> to vector<4x4xf32>
    %cst_29 = arith.constant dense<0.000000e+00> : vector<80x4xf32>
    %35 = tpu.matmul %32, %34, %cst_29 {dimension_numbers = #tpu.dot_dimension_numbers<[1], [0], [0], [1], [0, 0, 1, 1], [], []>} : vector<80x4xf32>, vector<4x4xf32>, vector<80x4xf32> -> vector<80x4xf32>
    %36 = arith.addf %31, %35 : vector<80x4xf32>
    %37 = vector.extract_strided_slice %2 {offsets = [20, 0], sizes = [80, 4], strides = [1, 1]} : vector<110x4xf32> to vector<80x4xf32>
    %c6 = arith.constant 6 : index
    %c0_30 = arith.constant 0 : index
    %c0_31 = arith.constant 0 : index
    %38 = vector.load %arg6[%c6, %c0_30, %c0_31] : memref<27x4x4xf32, #tpu.memory_space<vmem>>, vector<1x4x4xf32>
    %39 = vector.shape_cast %38 : vector<1x4x4xf32> to vector<4x4xf32>
    %cst_32 = arith.constant dense<0.000000e+00> : vector<80x4xf32>
    %40 = tpu.matmul %37, %39, %cst_32 {dimension_numbers = #tpu.dot_dimension_numbers<[1], [0], [0], [1], [0, 0, 1, 1], [], []>} : vector<80x4xf32>, vector<4x4xf32>, vector<80x4xf32> -> vector<80x4xf32>
    %41 = arith.addf %36, %40 : vector<80x4xf32>
    %42 = vector.extract_strided_slice %2 {offsets = [21, 0], sizes = [80, 4], strides = [1, 1]} : vector<110x4xf32> to vector<80x4xf32>
    %c7 = arith.constant 7 : index
    %c0_33 = arith.constant 0 : index
    %c0_34 = arith.constant 0 : index
    %43 = vector.load %arg6[%c7, %c0_33, %c0_34] : memref<27x4x4xf32, #tpu.memory_space<vmem>>, vector<1x4x4xf32>
    %44 = vector.shape_cast %43 : vector<1x4x4xf32> to vector<4x4xf32>
    %cst_35 = arith.constant dense<0.000000e+00> : vector<80x4xf32>
    %45 = tpu.matmul %42, %44, %cst_35 {dimension_numbers = #tpu.dot_dimension_numbers<[1], [0], [0], [1], [0, 0, 1, 1], [], []>} : vector<80x4xf32>, vector<4x4xf32>, vector<80x4xf32> -> vector<80x4xf32>
    %46 = arith.addf %41, %45 : vector<80x4xf32>
    %47 = vector.extract_strided_slice %2 {offsets = [22, 0], sizes = [80, 4], strides = [1, 1]} : vector<110x4xf32> to vector<80x4xf32>
    %c8 = arith.constant 8 : index
    %c0_36 = arith.constant 0 : index
    %c0_37 = arith.constant 0 : index
    %48 = vector.load %arg6[%c8, %c0_36, %c0_37] : memref<27x4x4xf32, #tpu.memory_space<vmem>>, vector<1x4x4xf32>
    %49 = vector.shape_cast %48 : vector<1x4x4xf32> to vector<4x4xf32>
    %cst_38 = arith.constant dense<0.000000e+00> : vector<80x4xf32>
    %50 = tpu.matmul %47, %49, %cst_38 {dimension_numbers = #tpu.dot_dimension_numbers<[1], [0], [0], [1], [0, 0, 1, 1], [], []>} : vector<80x4xf32>, vector<4x4xf32>, vector<80x4xf32> -> vector<80x4xf32>
    %51 = arith.addf %46, %50 : vector<80x4xf32>
    %52 = vector.extract_strided_slice %4 {offsets = [0, 0], sizes = [80, 4], strides = [1, 1]} : vector<110x4xf32> to vector<80x4xf32>
    %c9 = arith.constant 9 : index
    %c0_39 = arith.constant 0 : index
    %c0_40 = arith.constant 0 : index
    %53 = vector.load %arg6[%c9, %c0_39, %c0_40] : memref<27x4x4xf32, #tpu.memory_space<vmem>>, vector<1x4x4xf32>
    %54 = vector.shape_cast %53 : vector<1x4x4xf32> to vector<4x4xf32>
    %cst_41 = arith.constant dense<0.000000e+00> : vector<80x4xf32>
    %55 = tpu.matmul %52, %54, %cst_41 {dimension_numbers = #tpu.dot_dimension_numbers<[1], [0], [0], [1], [0, 0, 1, 1], [], []>} : vector<80x4xf32>, vector<4x4xf32>, vector<80x4xf32> -> vector<80x4xf32>
    %56 = arith.addf %51, %55 : vector<80x4xf32>
    %57 = vector.extract_strided_slice %4 {offsets = [1, 0], sizes = [80, 4], strides = [1, 1]} : vector<110x4xf32> to vector<80x4xf32>
    %c10 = arith.constant 10 : index
    %c0_42 = arith.constant 0 : index
    %c0_43 = arith.constant 0 : index
    %58 = vector.load %arg6[%c10, %c0_42, %c0_43] : memref<27x4x4xf32, #tpu.memory_space<vmem>>, vector<1x4x4xf32>
    %59 = vector.shape_cast %58 : vector<1x4x4xf32> to vector<4x4xf32>
    %cst_44 = arith.constant dense<0.000000e+00> : vector<80x4xf32>
    %60 = tpu.matmul %57, %59, %cst_44 {dimension_numbers = #tpu.dot_dimension_numbers<[1], [0], [0], [1], [0, 0, 1, 1], [], []>} : vector<80x4xf32>, vector<4x4xf32>, vector<80x4xf32> -> vector<80x4xf32>
    %61 = arith.addf %56, %60 : vector<80x4xf32>
    %62 = vector.extract_strided_slice %4 {offsets = [2, 0], sizes = [80, 4], strides = [1, 1]} : vector<110x4xf32> to vector<80x4xf32>
    %c11 = arith.constant 11 : index
    %c0_45 = arith.constant 0 : index
    %c0_46 = arith.constant 0 : index
    %63 = vector.load %arg6[%c11, %c0_45, %c0_46] : memref<27x4x4xf32, #tpu.memory_space<vmem>>, vector<1x4x4xf32>
    %64 = vector.shape_cast %63 : vector<1x4x4xf32> to vector<4x4xf32>
    %cst_47 = arith.constant dense<0.000000e+00> : vector<80x4xf32>
    %65 = tpu.matmul %62, %64, %cst_47 {dimension_numbers = #tpu.dot_dimension_numbers<[1], [0], [0], [1], [0, 0, 1, 1], [], []>} : vector<80x4xf32>, vector<4x4xf32>, vector<80x4xf32> -> vector<80x4xf32>
    %66 = arith.addf %61, %65 : vector<80x4xf32>
    %67 = vector.extract_strided_slice %4 {offsets = [10, 0], sizes = [80, 4], strides = [1, 1]} : vector<110x4xf32> to vector<80x4xf32>
    %c12 = arith.constant 12 : index
    %c0_48 = arith.constant 0 : index
    %c0_49 = arith.constant 0 : index
    %68 = vector.load %arg6[%c12, %c0_48, %c0_49] : memref<27x4x4xf32, #tpu.memory_space<vmem>>, vector<1x4x4xf32>
    %69 = vector.shape_cast %68 : vector<1x4x4xf32> to vector<4x4xf32>
    %cst_50 = arith.constant dense<0.000000e+00> : vector<80x4xf32>
    %70 = tpu.matmul %67, %69, %cst_50 {dimension_numbers = #tpu.dot_dimension_numbers<[1], [0], [0], [1], [0, 0, 1, 1], [], []>} : vector<80x4xf32>, vector<4x4xf32>, vector<80x4xf32> -> vector<80x4xf32>
    %71 = arith.addf %66, %70 : vector<80x4xf32>
    %72 = vector.extract_strided_slice %4 {offsets = [11, 0], sizes = [80, 4], strides = [1, 1]} : vector<110x4xf32> to vector<80x4xf32>
    %c13 = arith.constant 13 : index
    %c0_51 = arith.constant 0 : index
    %c0_52 = arith.constant 0 : index
    %73 = vector.load %arg6[%c13, %c0_51, %c0_52] : memref<27x4x4xf32, #tpu.memory_space<vmem>>, vector<1x4x4xf32>
    %74 = vector.shape_cast %73 : vector<1x4x4xf32> to vector<4x4xf32>
    %cst_53 = arith.constant dense<0.000000e+00> : vector<80x4xf32>
    %75 = tpu.matmul %72, %74, %cst_53 {dimension_numbers = #tpu.dot_dimension_numbers<[1], [0], [0], [1], [0, 0, 1, 1], [], []>} : vector<80x4xf32>, vector<4x4xf32>, vector<80x4xf32> -> vector<80x4xf32>
    %76 = arith.addf %71, %75 : vector<80x4xf32>
    %77 = vector.extract_strided_slice %4 {offsets = [12, 0], sizes = [80, 4], strides = [1, 1]} : vector<110x4xf32> to vector<80x4xf32>
    %c14 = arith.constant 14 : index
    %c0_54 = arith.constant 0 : index
    %c0_55 = arith.constant 0 : index
    %78 = vector.load %arg6[%c14, %c0_54, %c0_55] : memref<27x4x4xf32, #tpu.memory_space<vmem>>, vector<1x4x4xf32>
    %79 = vector.shape_cast %78 : vector<1x4x4xf32> to vector<4x4xf32>
    %cst_56 = arith.constant dense<0.000000e+00> : vector<80x4xf32>
    %80 = tpu.matmul %77, %79, %cst_56 {dimension_numbers = #tpu.dot_dimension_numbers<[1], [0], [0], [1], [0, 0, 1, 1], [], []>} : vector<80x4xf32>, vector<4x4xf32>, vector<80x4xf32> -> vector<80x4xf32>
    %81 = arith.addf %76, %80 : vector<80x4xf32>
    %82 = vector.extract_strided_slice %4 {offsets = [20, 0], sizes = [80, 4], strides = [1, 1]} : vector<110x4xf32> to vector<80x4xf32>
    %c15 = arith.constant 15 : index
    %c0_57 = arith.constant 0 : index
    %c0_58 = arith.constant 0 : index
    %83 = vector.load %arg6[%c15, %c0_57, %c0_58] : memref<27x4x4xf32, #tpu.memory_space<vmem>>, vector<1x4x4xf32>
    %84 = vector.shape_cast %83 : vector<1x4x4xf32> to vector<4x4xf32>
    %cst_59 = arith.constant dense<0.000000e+00> : vector<80x4xf32>
    %85 = tpu.matmul %82, %84, %cst_59 {dimension_numbers = #tpu.dot_dimension_numbers<[1], [0], [0], [1], [0, 0, 1, 1], [], []>} : vector<80x4xf32>, vector<4x4xf32>, vector<80x4xf32> -> vector<80x4xf32>
    %86 = arith.addf %81, %85 : vector<80x4xf32>
    %87 = vector.extract_strided_slice %4 {offsets = [21, 0], sizes = [80, 4], strides = [1, 1]} : vector<110x4xf32> to vector<80x4xf32>
    %c16 = arith.constant 16 : index
    %c0_60 = arith.constant 0 : index
    %c0_61 = arith.constant 0 : index
    %88 = vector.load %arg6[%c16, %c0_60, %c0_61] : memref<27x4x4xf32, #tpu.memory_space<vmem>>, vector<1x4x4xf32>
    %89 = vector.shape_cast %88 : vector<1x4x4xf32> to vector<4x4xf32>
    %cst_62 = arith.constant dense<0.000000e+00> : vector<80x4xf32>
    %90 = tpu.matmul %87, %89, %cst_62 {dimension_numbers = #tpu.dot_dimension_numbers<[1], [0], [0], [1], [0, 0, 1, 1], [], []>} : vector<80x4xf32>, vector<4x4xf32>, vector<80x4xf32> -> vector<80x4xf32>
    %91 = arith.addf %86, %90 : vector<80x4xf32>
    %92 = vector.extract_strided_slice %4 {offsets = [22, 0], sizes = [80, 4], strides = [1, 1]} : vector<110x4xf32> to vector<80x4xf32>
    %c17 = arith.constant 17 : index
    %c0_63 = arith.constant 0 : index
    %c0_64 = arith.constant 0 : index
    %93 = vector.load %arg6[%c17, %c0_63, %c0_64] : memref<27x4x4xf32, #tpu.memory_space<vmem>>, vector<1x4x4xf32>
    %94 = vector.shape_cast %93 : vector<1x4x4xf32> to vector<4x4xf32>
    %cst_65 = arith.constant dense<0.000000e+00> : vector<80x4xf32>
    %95 = tpu.matmul %92, %94, %cst_65 {dimension_numbers = #tpu.dot_dimension_numbers<[1], [0], [0], [1], [0, 0, 1, 1], [], []>} : vector<80x4xf32>, vector<4x4xf32>, vector<80x4xf32> -> vector<80x4xf32>
    %96 = arith.addf %91, %95 : vector<80x4xf32>
    %97 = vector.extract_strided_slice %6 {offsets = [0, 0], sizes = [80, 4], strides = [1, 1]} : vector<110x4xf32> to vector<80x4xf32>
    %c18 = arith.constant 18 : index
    %c0_66 = arith.constant 0 : index
    %c0_67 = arith.constant 0 : index
    %98 = vector.load %arg6[%c18, %c0_66, %c0_67] : memref<27x4x4xf32, #tpu.memory_space<vmem>>, vector<1x4x4xf32>
    %99 = vector.shape_cast %98 : vector<1x4x4xf32> to vector<4x4xf32>
    %cst_68 = arith.constant dense<0.000000e+00> : vector<80x4xf32>
    %100 = tpu.matmul %97, %99, %cst_68 {dimension_numbers = #tpu.dot_dimension_numbers<[1], [0], [0], [1], [0, 0, 1, 1], [], []>} : vector<80x4xf32>, vector<4x4xf32>, vector<80x4xf32> -> vector<80x4xf32>
    %101 = arith.addf %96, %100 : vector<80x4xf32>
    %102 = vector.extract_strided_slice %6 {offsets = [1, 0], sizes = [80, 4], strides = [1, 1]} : vector<110x4xf32> to vector<80x4xf32>
    %c19 = arith.constant 19 : index
    %c0_69 = arith.constant 0 : index
    %c0_70 = arith.constant 0 : index
    %103 = vector.load %arg6[%c19, %c0_69, %c0_70] : memref<27x4x4xf32, #tpu.memory_space<vmem>>, vector<1x4x4xf32>
    %104 = vector.shape_cast %103 : vector<1x4x4xf32> to vector<4x4xf32>
    %cst_71 = arith.constant dense<0.000000e+00> : vector<80x4xf32>
    %105 = tpu.matmul %102, %104, %cst_71 {dimension_numbers = #tpu.dot_dimension_numbers<[1], [0], [0], [1], [0, 0, 1, 1], [], []>} : vector<80x4xf32>, vector<4x4xf32>, vector<80x4xf32> -> vector<80x4xf32>
    %106 = arith.addf %101, %105 : vector<80x4xf32>
    %107 = vector.extract_strided_slice %6 {offsets = [2, 0], sizes = [80, 4], strides = [1, 1]} : vector<110x4xf32> to vector<80x4xf32>
    %c20 = arith.constant 20 : index
    %c0_72 = arith.constant 0 : index
    %c0_73 = arith.constant 0 : index
    %108 = vector.load %arg6[%c20, %c0_72, %c0_73] : memref<27x4x4xf32, #tpu.memory_space<vmem>>, vector<1x4x4xf32>
    %109 = vector.shape_cast %108 : vector<1x4x4xf32> to vector<4x4xf32>
    %cst_74 = arith.constant dense<0.000000e+00> : vector<80x4xf32>
    %110 = tpu.matmul %107, %109, %cst_74 {dimension_numbers = #tpu.dot_dimension_numbers<[1], [0], [0], [1], [0, 0, 1, 1], [], []>} : vector<80x4xf32>, vector<4x4xf32>, vector<80x4xf32> -> vector<80x4xf32>
    %111 = arith.addf %106, %110 : vector<80x4xf32>
    %112 = vector.extract_strided_slice %6 {offsets = [10, 0], sizes = [80, 4], strides = [1, 1]} : vector<110x4xf32> to vector<80x4xf32>
    %c21 = arith.constant 21 : index
    %c0_75 = arith.constant 0 : index
    %c0_76 = arith.constant 0 : index
    %113 = vector.load %arg6[%c21, %c0_75, %c0_76] : memref<27x4x4xf32, #tpu.memory_space<vmem>>, vector<1x4x4xf32>
    %114 = vector.shape_cast %113 : vector<1x4x4xf32> to vector<4x4xf32>
    %cst_77 = arith.constant dense<0.000000e+00> : vector<80x4xf32>
    %115 = tpu.matmul %112, %114, %cst_77 {dimension_numbers = #tpu.dot_dimension_numbers<[1], [0], [0], [1], [0, 0, 1, 1], [], []>} : vector<80x4xf32>, vector<4x4xf32>, vector<80x4xf32> -> vector<80x4xf32>
    %116 = arith.addf %111, %115 : vector<80x4xf32>
    %117 = vector.extract_strided_slice %6 {offsets = [11, 0], sizes = [80, 4], strides = [1, 1]} : vector<110x4xf32> to vector<80x4xf32>
    %c22 = arith.constant 22 : index
    %c0_78 = arith.constant 0 : index
    %c0_79 = arith.constant 0 : index
    %118 = vector.load %arg6[%c22, %c0_78, %c0_79] : memref<27x4x4xf32, #tpu.memory_space<vmem>>, vector<1x4x4xf32>
    %119 = vector.shape_cast %118 : vector<1x4x4xf32> to vector<4x4xf32>
    %cst_80 = arith.constant dense<0.000000e+00> : vector<80x4xf32>
    %120 = tpu.matmul %117, %119, %cst_80 {dimension_numbers = #tpu.dot_dimension_numbers<[1], [0], [0], [1], [0, 0, 1, 1], [], []>} : vector<80x4xf32>, vector<4x4xf32>, vector<80x4xf32> -> vector<80x4xf32>
    %121 = arith.addf %116, %120 : vector<80x4xf32>
    %122 = vector.extract_strided_slice %6 {offsets = [12, 0], sizes = [80, 4], strides = [1, 1]} : vector<110x4xf32> to vector<80x4xf32>
    %c23 = arith.constant 23 : index
    %c0_81 = arith.constant 0 : index
    %c0_82 = arith.constant 0 : index
    %123 = vector.load %arg6[%c23, %c0_81, %c0_82] : memref<27x4x4xf32, #tpu.memory_space<vmem>>, vector<1x4x4xf32>
    %124 = vector.shape_cast %123 : vector<1x4x4xf32> to vector<4x4xf32>
    %cst_83 = arith.constant dense<0.000000e+00> : vector<80x4xf32>
    %125 = tpu.matmul %122, %124, %cst_83 {dimension_numbers = #tpu.dot_dimension_numbers<[1], [0], [0], [1], [0, 0, 1, 1], [], []>} : vector<80x4xf32>, vector<4x4xf32>, vector<80x4xf32> -> vector<80x4xf32>
    %126 = arith.addf %121, %125 : vector<80x4xf32>
    %127 = vector.extract_strided_slice %6 {offsets = [20, 0], sizes = [80, 4], strides = [1, 1]} : vector<110x4xf32> to vector<80x4xf32>
    %c24 = arith.constant 24 : index
    %c0_84 = arith.constant 0 : index
    %c0_85 = arith.constant 0 : index
    %128 = vector.load %arg6[%c24, %c0_84, %c0_85] : memref<27x4x4xf32, #tpu.memory_space<vmem>>, vector<1x4x4xf32>
    %129 = vector.shape_cast %128 : vector<1x4x4xf32> to vector<4x4xf32>
    %cst_86 = arith.constant dense<0.000000e+00> : vector<80x4xf32>
    %130 = tpu.matmul %127, %129, %cst_86 {dimension_numbers = #tpu.dot_dimension_numbers<[1], [0], [0], [1], [0, 0, 1, 1], [], []>} : vector<80x4xf32>, vector<4x4xf32>, vector<80x4xf32> -> vector<80x4xf32>
    %131 = arith.addf %126, %130 : vector<80x4xf32>
    %132 = vector.extract_strided_slice %6 {offsets = [21, 0], sizes = [80, 4], strides = [1, 1]} : vector<110x4xf32> to vector<80x4xf32>
    %c25 = arith.constant 25 : index
    %c0_87 = arith.constant 0 : index
    %c0_88 = arith.constant 0 : index
    %133 = vector.load %arg6[%c25, %c0_87, %c0_88] : memref<27x4x4xf32, #tpu.memory_space<vmem>>, vector<1x4x4xf32>
    %134 = vector.shape_cast %133 : vector<1x4x4xf32> to vector<4x4xf32>
    %cst_89 = arith.constant dense<0.000000e+00> : vector<80x4xf32>
    %135 = tpu.matmul %132, %134, %cst_89 {dimension_numbers = #tpu.dot_dimension_numbers<[1], [0], [0], [1], [0, 0, 1, 1], [], []>} : vector<80x4xf32>, vector<4x4xf32>, vector<80x4xf32> -> vector<80x4xf32>
    %136 = arith.addf %131, %135 : vector<80x4xf32>
    %137 = vector.extract_strided_slice %6 {offsets = [22, 0], sizes = [80, 4], strides = [1, 1]} : vector<110x4xf32> to vector<80x4xf32>
    %c26 = arith.constant 26 : index
    %c0_90 = arith.constant 0 : index
    %c0_91 = arith.constant 0 : index
    %138 = vector.load %arg6[%c26, %c0_90, %c0_91] : memref<27x4x4xf32, #tpu.memory_space<vmem>>, vector<1x4x4xf32>
    %139 = vector.shape_cast %138 : vector<1x4x4xf32> to vector<4x4xf32>
    %cst_92 = arith.constant dense<0.000000e+00> : vector<80x4xf32>
    %140 = tpu.matmul %137, %139, %cst_92 {dimension_numbers = #tpu.dot_dimension_numbers<[1], [0], [0], [1], [0, 0, 1, 1], [], []>} : vector<80x4xf32>, vector<4x4xf32>, vector<80x4xf32> -> vector<80x4xf32>
    %141 = arith.addf %136, %140 : vector<80x4xf32>
    %c0_93 = arith.constant 0 : index
    %c0_94 = arith.constant 0 : index
    %142 = vector.load %arg7[%c0_93, %c0_94] : memref<1x4xf32, #tpu.memory_space<vmem>>, vector<1x4xf32>
    %143 = vector.broadcast %142 : vector<1x4xf32> to vector<80x4xf32>
    %144 = arith.addf %141, %143 : vector<80x4xf32>
    %cst_95 = arith.constant 0.000000e+00 : f32
    %145 = vector.broadcast %cst_95 : f32 to vector<80x4xf32>
    %146 = arith.maximumf %144, %145 : vector<80x4xf32>
    %c0_96 = arith.constant 0 : index
    %c0_97 = arith.constant 0 : index
    %147 = vector.load %arg8[%c0_96, %c0_97] : memref<4x8xf32, #tpu.memory_space<vmem>>, vector<4x8xf32>
    %cst_98 = arith.constant dense<0.000000e+00> : vector<80x8xf32>
    %148 = tpu.matmul %146, %147, %cst_98 {dimension_numbers = #tpu.dot_dimension_numbers<[1], [0], [0], [1], [0, 0, 1, 1], [], []>} : vector<80x4xf32>, vector<4x8xf32>, vector<80x8xf32> -> vector<80x8xf32>
    %c0_99 = arith.constant 0 : index
    %c0_100 = arith.constant 0 : index
    %c0_101 = arith.constant 0 : index
    %c0_102 = arith.constant 0 : index
    %149 = vector.load %arg5[%c0_99, %c0_100, %c0_101, %c0_102] : memref<1x1x80x4xf32, #tpu.memory_space<vmem>>, vector<1x1x80x4xf32>
    %150 = vector.shape_cast %149 : vector<1x1x80x4xf32> to vector<80x4xf32>
    %c0_103 = arith.constant 0 : index
    %c0_104 = arith.constant 0 : index
    %151 = vector.load %arg9[%c0_103, %c0_104] : memref<4x8xf32, #tpu.memory_space<vmem>>, vector<4x8xf32>
    %cst_105 = arith.constant dense<0.000000e+00> : vector<80x8xf32>
    %152 = tpu.matmul %150, %151, %cst_105 {dimension_numbers = #tpu.dot_dimension_numbers<[1], [0], [0], [1], [0, 0, 1, 1], [], []>} : vector<80x4xf32>, vector<4x8xf32>, vector<80x8xf32> -> vector<80x8xf32>
    %153 = arith.addf %148, %152 : vector<80x8xf32>
    %c0_106 = arith.constant 0 : index
    %c0_107 = arith.constant 0 : index
    %154 = vector.load %arg10[%c0_106, %c0_107] : memref<1x8xf32, #tpu.memory_space<vmem>>, vector<1x8xf32>
    %155 = vector.broadcast %154 : vector<1x8xf32> to vector<80x8xf32>
    %156 = arith.addf %153, %155 : vector<80x8xf32>
    %c0_108 = arith.constant 0 : index
    %c0_109 = arith.constant 0 : index
    %c0_110 = arith.constant 0 : index
    %c0_111 = arith.constant 0 : index
    %157 = vector.load %arg11[%c0_108, %c0_109, %c0_110, %c0_111] : memref<1x1x80x8xf32, #tpu.memory_space<vmem>>, vector<1x1x80x8xf32>
    %158 = vector.shape_cast %157 : vector<1x1x80x8xf32> to vector<80x8xf32>
    %159 = vector.shape_cast %156 : vector<80x8xf32> to vector<1x1x80x8xf32>
    tpu.vector_store %arg11[%c0_108, %c0_109, %c0_110, %c0_111], %159 {strides = array<i32>} : memref<1x1x80x8xf32, #tpu.memory_space<vmem>>, vector<1x1x80x8xf32>,
    return
  }
  func.func @transform_0(%arg0: i32, %arg1: i32) -> (i32, i32, i32, i32) {
    %c0_i32 = arith.constant 0 : i32
    %0 = arith.addi %arg1, %c0_i32 : i32
    %c0_i32_0 = arith.constant 0 : i32
    %c0_i32_1 = arith.constant 0 : i32
    %c0_i32_2 = arith.constant 0 : i32
    return %arg0, %0, %c0_i32_0, %c0_i32_1 : i32, i32, i32, i32
  }
  func.func @transform_1(%arg0: i32, %arg1: i32) -> (i32, i32, i32, i32) {
    %c1_i32 = arith.constant 1 : i32
    %0 = arith.addi %arg1, %c1_i32 : i32
    %c0_i32 = arith.constant 0 : i32
    %c0_i32_0 = arith.constant 0 : i32
    %c0_i32_1 = arith.constant 0 : i32
    return %arg0, %0, %c0_i32, %c0_i32_0 : i32, i32, i32, i32
  }
  func.func @transform_2(%arg0: i32, %arg1: i32) -> (i32, i32, i32, i32) {
    %c2_i32 = arith.constant 2 : i32
    %0 = arith.addi %arg1, %c2_i32 : i32
    %c0_i32 = arith.constant 0 : i32
    %c0_i32_0 = arith.constant 0 : i32
    %c0_i32_1 = arith.constant 0 : i32
    return %arg0, %0, %c0_i32, %c0_i32_0 : i32, i32, i32, i32
  }
  func.func @transform_3(%arg0: i32, %arg1: i32) -> (i32, i32, i32, i32) {
    %c0_i32 = arith.constant 0 : i32
    %c0_i32_0 = arith.constant 0 : i32
    %c0_i32_1 = arith.constant 0 : i32
    return %arg0, %arg1, %c0_i32, %c0_i32_0 : i32, i32, i32, i32
  }
  func.func @transform_4(%arg0: i32, %arg1: i32) -> (i32, i32, i32) {
    %c0_i32 = arith.constant 0 : i32
    %c0_i32_0 = arith.constant 0 : i32
    %c0_i32_1 = arith.constant 0 : i32
    %c0_i32_2 = arith.constant 0 : i32
    return %c0_i32, %c0_i32_0, %c0_i32_1 : i32, i32, i32
  }
  func.func @transform_5(%arg0: i32, %arg1: i32) -> (i32, i32) {
    %c0_i32 = arith.constant 0 : i32
    %c0_i32_0 = arith.constant 0 : i32
    %c0_i32_1 = arith.constant 0 : i32
    return %c0_i32, %c0_i32_0 : i32, i32
  }
  func.func @transform_6(%arg0: i32, %arg1: i32) -> (i32, i32) {
    %c0_i32 = arith.constant 0 : i32
    %c0_i32_0 = arith.constant 0 : i32
    %c0_i32_1 = arith.constant 0 : i32
    return %c0_i32, %c0_i32_0 : i32, i32
  }
  func.func @transform_7(%arg0: i32, %arg1: i32) -> (i32, i32) {
    %c0_i32 = arith.constant 0 : i32
    %c0_i32_0 = arith.constant 0 : i32
    %c0_i32_1 = arith.constant 0 : i32
    return %c0_i32, %c0_i32_0 : i32, i32
  }
  func.func @transform_8(%arg0: i32, %arg1: i32) -> (i32, i32) {
    %c0_i32 = arith.constant 0 : i32
    %c0_i32_0 = arith.constant 0 : i32
    %c0_i32_1 = arith.constant 0 : i32
    return %c0_i32, %c0_i32_0 : i32, i32
  }
  func.func @transform_9(%arg0: i32, %arg1: i32) -> (i32, i32, i32, i32) {
    %c0_i32 = arith.constant 0 : i32
    %c0_i32_0 = arith.constant 0 : i32
    %c0_i32_1 = arith.constant 0 : i32
    return %arg0, %arg1, %c0_i32, %c0_i32_0 : i32, i32, i32, i32
  }
}

</mosaic_0001>

<llo_original>
// kernel: residual_forward.2
$region0: #{residual_forward.2}
  #allocation0 [shape = 'u32[]', space=smem, size = 0x4, offset = 0x4, fixed_abs, tag = 'smem constant byte address 0x4 - core index']
  #allocation1 [shape = 'u32[144,128]{1,0:T(1,128)}', space=vmem, size = 0x12000, scoped, tag = 'internal scratch']
  %s0 = inlined_call_operand.vmem [shape: f32[512,4], index: 0, kind: input, shape index: {}]
  %s1 = inlined_call_operand.vmem [shape: f32[1,4], index: 1, kind: input, shape index: {}]
  %s2 = inlined_call_operand.vmem [shape: f32[1,4], index: 2, kind: input, shape index: {}]
  %s3 = inlined_call_operand.vmem [shape: f32[4,4], index: 3, kind: input, shape index: {}]
  %s4 = inlined_call_operand.vmem [shape: f32[1,4], index: 4, kind: input, shape index: {}]
  %s5 = inlined_call_operand.vmem [shape: f32[512,4], index: 5, kind: output, shape index: {}]
  %s6 = sld [smem:[#allocation0]]
  $region30: #{residual_forward.2} parent=0
    _
  %s8 = ssub.s32 1, %s6
  %s9 = scalar_select 0, %s8, %s6
  // Predicated region
  $region2: #{residual_forward.2} parent=0 // pred_check
    _
  $region3: #{residual_forward.2} parent=0 // pred_check_branch
    %11 = sbr.rel (0) target = $region5
  $region4: #{residual_forward.2} parent=0 // pred_region
    _
  $region5: #{residual_forward.2} parent=0 // pred_fallthru
    _
  // Predicated region
  $region6: #{residual_forward.2} parent=0 // pred_check
    _
  $region7: #{residual_forward.2} parent=0 // pred_check_branch
    %13 = sbr.rel (0) target = $region9
  $region8: #{residual_forward.2} parent=0 // pred_region
    _
  $region9: #{residual_forward.2} parent=0 // pred_fallthru
    _
  // Predicated region
  $region10: #{residual_forward.2} parent=0 // pred_check
    _
  $region11: #{residual_forward.2} parent=0 // pred_check_branch
    %15 = sbr.rel (0) target = $region13
  $region12: #{residual_forward.2} parent=0 // pred_region
    _
  $region13: #{residual_forward.2} parent=0 // pred_fallthru
    _
  // Predicated region
  $region14: #{residual_forward.2} parent=0 // pred_check
    _
  $region15: #{residual_forward.2} parent=0 // pred_check_branch
    %17 = sbr.rel (0) target = $region17
  $region16: #{residual_forward.2} parent=0 // pred_region
    _
  $region17: #{residual_forward.2} parent=0 // pred_fallthru
    _
  // Predicated region
  $region18: #{residual_forward.2} parent=0 // pred_check
    _
  $region19: #{residual_forward.2} parent=0 // pred_check_branch
    %19 = sbr.rel (0) target = $region21
  $region20: #{residual_forward.2} parent=0 // pred_region
    _
  $region21: #{residual_forward.2} parent=0 // pred_fallthru
    _
  %v20 = vld [vmem:[%s0] sm:$0xff]
  %v21 = vld [vmem:[%s0 + $0x8] sm:$0xff]
  %v22 = vld [vmem:[%s0 + $0x10] sm:$0xff]
  %v23 = vld [vmem:[%s0 + $0x18] sm:$0xff]
  %v24 = vld [vmem:[%s0 + $0x20] sm:$0xff]
  %v25 = vld [vmem:[%s0 + $0x28] sm:$0xff]
  %v26 = vld [vmem:[%s0 + $0x30] sm:$0xff]
  %v27 = vld [vmem:[%s0 + $0x38] sm:$0xff]
  %v28 = vld [vmem:[%s0 + $0x40] sm:$0xff]
  %v29 = vld [vmem:[%s0 + $0x48] sm:$0xff]
  %v30 = vld [vmem:[%s0 + $0x50] sm:$0xff]
  %v31 = vld [vmem:[%s0 + $0x58] sm:$0xff]
  %v32 = vld [vmem:[%s0 + $0x60] sm:$0xff]
  %v33 = vld [vmem:[%s0 + $0x68] sm:$0xff]
  %v34 = vld [vmem:[%s0 + $0x70] sm:$0xff]
  %v35 = vld [vmem:[%s0 + $0x78] sm:$0xff]
  %v36 = vld [vmem:[%s0 + $0x80] sm:$0xff]
  %v37 = vld [vmem:[%s0 + $0x88] sm:$0xff]
  %v38 = vld [vmem:[%s0 + $0x90] sm:$0xff]
  %v39 = vld [vmem:[%s0 + $0x98] sm:$0xff]
  %v40 = vld [vmem:[%s0 + $0xa0] sm:$0xff]
  %v41 = vld [vmem:[%s0 + $0xa8] sm:$0xff]
  %v42 = vld [vmem:[%s0 + $0xb0] sm:$0xff]
  %v43 = vld [vmem:[%s0 + $0xb8] sm:$0xff]
  %v44 = vld [vmem:[%s0 + $0xc0] sm:$0xff]
  %v45 = vld [vmem:[%s0 + $0xc8] sm:$0xff]
  %v46 = vld [vmem:[%s0 + $0xd0] sm:$0xff]
  %v47 = vld [vmem:[%s0 + $0xd8] sm:$0xff]
  %v48 = vld [vmem:[%s0 + $0xe0] sm:$0xff]
  %v49 = vld [vmem:[%s0 + $0xe8] sm:$0xff]
  %v50 = vld [vmem:[%s0 + $0xf0] sm:$0xff]
  %v51 = vld [vmem:[%s0 + $0xf8] sm:$0xff]
  %v52 = vld [vmem:[%s0 + $0x100] sm:$0xff]
  %v53 = vld [vmem:[%s0 + $0x108] sm:$0xff]
  %v54 = vld [vmem:[%s0 + $0x110] sm:$0xff]
  %v55 = vld [vmem:[%s0 + $0x118] sm:$0xff]
  %v56 = vld [vmem:[%s0 + $0x120] sm:$0xff]
  %v57 = vld [vmem:[%s0 + $0x128] sm:$0xff]
  %v58 = vld [vmem:[%s0 + $0x130] sm:$0xff]
  %v59 = vld [vmem:[%s0 + $0x138] sm:$0xff]
  %v60 = vld [vmem:[%s0 + $0x140] sm:$0xff]
  %v61 = vld [vmem:[%s0 + $0x148] sm:$0xff]
  %v62 = vld [vmem:[%s0 + $0x150] sm:$0xff]
  %v63 = vld [vmem:[%s0 + $0x158] sm:$0xff]
  %v64 = vld [vmem:[%s0 + $0x160] sm:$0xff]
  %v65 = vld [vmem:[%s0 + $0x168] sm:$0xff]
  %v66 = vld [vmem:[%s0 + $0x170] sm:$0xff]
  %v67 = vld [vmem:[%s0 + $0x178] sm:$0xff]
  %v68 = vld [vmem:[%s0 + $0x180] sm:$0xff]
  %v69 = vld [vmem:[%s0 + $0x188] sm:$0xff]
  %v70 = vld [vmem:[%s0 + $0x190] sm:$0xff]
  %v71 = vld [vmem:[%s0 + $0x198] sm:$0xff]
  %v72 = vld [vmem:[%s0 + $0x1a0] sm:$0xff]
  %v73 = vld [vmem:[%s0 + $0x1a8] sm:$0xff]
  %v74 = vld [vmem:[%s0 + $0x1b0] sm:$0xff]
  %v75 = vld [vmem:[%s0 + $0x1b8] sm:$0xff]
  %v76 = vld [vmem:[%s0 + $0x1c0] sm:$0xff]
  %v77 = vld [vmem:[%s0 + $0x1c8] sm:$0xff]
  %v78 = vld [vmem:[%s0 + $0x1d0] sm:$0xff]
  %v79 = vld [vmem:[%s0 + $0x1d8] sm:$0xff]
  %v80 = vld [vmem:[%s0 + $0x1e0] sm:$0xff]
  %v81 = vld [vmem:[%s0 + $0x1e8] sm:$0xff]
  %v82 = vld [vmem:[%s0 + $0x1f0] sm:$0xff]
  %v83 = vld [vmem:[%s0 + $0x1f8] sm:$0xff]
  %v84 = vld [vmem:[%s1] sm:$0x1]
  %v86 = vlaneseq
  %v87 = vshrl.u32 %v86, 7
  %v88 = vsub.s32 0, %v87
  %v89 = vrot.slane %v84, %v88
  %v91 = vmul.f32 %v20, %v89
  %v92 = vmul.f32 %v21, %v89
  %v93 = vmul.f32 %v22, %v89
  %v94 = vmul.f32 %v23, %v89
  %v95 = vmul.f32 %v24, %v89
  %v96 = vmul.f32 %v25, %v89
  %v97 = vmul.f32 %v26, %v89
  %v98 = vmul.f32 %v27, %v89
  %v99 = vmul.f32 %v28, %v89
  %v100 = vmul.f32 %v29, %v89
  %v101 = vmul.f32 %v30, %v89
  %v102 = vmul.f32 %v31, %v89
  %v103 = vmul.f32 %v32, %v89
  %v104 = vmul.f32 %v33, %v89
  %v105 = vmul.f32 %v34, %v89
  %v106 = vmul.f32 %v35, %v89
  %v107 = vmul.f32 %v36, %v89
  %v108 = vmul.f32 %v37, %v89
  %v109 = vmul.f32 %v38, %v89
  %v110 = vmul.f32 %v39, %v89
  %v111 = vmul.f32 %v40, %v89
  %v112 = vmul.f32 %v41, %v89
  %v113 = vmul.f32 %v42, %v89
  %v114 = vmul.f32 %v43, %v89
  %v115 = vmul.f32 %v44, %v89
  %v116 = vmul.f32 %v45, %v89
  %v117 = vmul.f32 %v46, %v89
  %v118 = vmul.f32 %v47, %v89
  %v119 = vmul.f32 %v48, %v89
  %v120 = vmul.f32 %v49, %v89
  %v121 = vmul.f32 %v50, %v89
  %v122 = vmul.f32 %v51, %v89
  %v123 = vmul.f32 %v52, %v89
  %v124 = vmul.f32 %v53, %v89
  %v125 = vmul.f32 %v54, %v89
  %v126 = vmul.f32 %v55, %v89
  %v127 = vmul.f32 %v56, %v89
  %v128 = vmul.f32 %v57, %v89
  %v129 = vmul.f32 %v58, %v89
  %v130 = vmul.f32 %v59, %v89
  %v131 = vmul.f32 %v60, %v89
  %v132 = vmul.f32 %v61, %v89
  %v133 = vmul.f32 %v62, %v89
  %v134 = vmul.f32 %v63, %v89
  %v135 = vmul.f32 %v64, %v89
  %v136 = vmul.f32 %v65, %v89
  %v137 = vmul.f32 %v66, %v89
  %v138 = vmul.f32 %v67, %v89
  %v139 = vmul.f32 %v68, %v89
  %v140 = vmul.f32 %v69, %v89
  %v141 = vmul.f32 %v70, %v89
  %v142 = vmul.f32 %v71, %v89
  %v143 = vmul.f32 %v72, %v89
  %v144 = vmul.f32 %v73, %v89
  %v145 = vmul.f32 %v74, %v89
  %v146 = vmul.f32 %v75, %v89
  %v147 = vmul.f32 %v76, %v89
  %v148 = vmul.f32 %v77, %v89
  %v149 = vmul.f32 %v78, %v89
  %v150 = vmul.f32 %v79, %v89
  %v151 = vmul.f32 %v80, %v89
  %v152 = vmul.f32 %v81, %v89
  %v153 = vmul.f32 %v82, %v89
  %v154 = vmul.f32 %v83, %v89
  %v155 = vld [vmem:[%s2] sm:$0x1]
  %v157 = vlaneseq
  %v158 = vshrl.u32 %v157, 7
  %v159 = vsub.s32 0, %v158
  %v160 = vrot.slane %v155, %v159
  %v162 = vadd.f32 %v91, %v160
  %v163 = vadd.f32 %v92, %v160
  %v164 = vadd.f32 %v93, %v160
  %v165 = vadd.f32 %v94, %v160
  %v166 = vadd.f32 %v95, %v160
  %v167 = vadd.f32 %v96, %v160
  %v168 = vadd.f32 %v97, %v160
  %v169 = vadd.f32 %v98, %v160
  %v170 = vadd.f32 %v99, %v160
  %v171 = vadd.f32 %v100, %v160
  %v172 = vadd.f32 %v101, %v160
  %v173 = vadd.f32 %v102, %v160
  %v174 = vadd.f32 %v103, %v160
  %v175 = vadd.f32 %v104, %v160
  %v176 = vadd.f32 %v105, %v160
  %v177 = vadd.f32 %v106, %v160
  %v178 = vadd.f32 %v107, %v160
  %v179 = vadd.f32 %v108, %v160
  %v180 = vadd.f32 %v109, %v160
  %v181 = vadd.f32 %v110, %v160
  %v182 = vadd.f32 %v111, %v160
  %v183 = vadd.f32 %v112, %v160
  %v184 = vadd.f32 %v113, %v160
  %v185 = vadd.f32 %v114, %v160
  %v186 = vadd.f32 %v115, %v160
  %v187 = vadd.f32 %v116, %v160
  %v188 = vadd.f32 %v117, %v160
  %v189 = vadd.f32 %v118, %v160
  %v190 = vadd.f32 %v119, %v160
  %v191 = vadd.f32 %v120, %v160
  %v192 = vadd.f32 %v121, %v160
  %v193 = vadd.f32 %v122, %v160
  %v194 = vadd.f32 %v123, %v160
  %v195 = vadd.f32 %v124, %v160
  %v196 = vadd.f32 %v125, %v160
  %v197 = vadd.f32 %v126, %v160
  %v198 = vadd.f32 %v127, %v160
  %v199 = vadd.f32 %v128, %v160
  %v200 = vadd.f32 %v129, %v160
  %v201 = vadd.f32 %v130, %v160
  %v202 = vadd.f32 %v131, %v160
  %v203 = vadd.f32 %v132, %v160
  %v204 = vadd.f32 %v133, %v160
  %v205 = vadd.f32 %v134, %v160
  %v206 = vadd.f32 %v135, %v160
  %v207 = vadd.f32 %v136, %v160
  %v208 = vadd.f32 %v137, %v160
  %v209 = vadd.f32 %v138, %v160
  %v210 = vadd.f32 %v139, %v160
  %v211 = vadd.f32 %v140, %v160
  %v212 = vadd.f32 %v141, %v160
  %v213 = vadd.f32 %v142, %v160
  %v214 = vadd.f32 %v143, %v160
  %v215 = vadd.f32 %v144, %v160
  %v216 = vadd.f32 %v145, %v160
  %v217 = vadd.f32 %v146, %v160
  %v218 = vadd.f32 %v147, %v160
  %v219 = vadd.f32 %v148, %v160
  %v220 = vadd.f32 %v149, %v160
  %v221 = vadd.f32 %v150, %v160
  %v222 = vadd.f32 %v151, %v160
  %v223 = vadd.f32 %v152, %v160
  %v224 = vadd.f32 %v153, %v160
  %v225 = vadd.f32 %v154, %v160
  %v226 = vmax.f32 %v162, 0.0
  %v227 = vmax.f32 %v163, 0.0
  %v228 = vmax.f32 %v164, 0.0
  %v229 = vmax.f32 %v165, 0.0
  %v230 = vmax.f32 %v166, 0.0
  %v231 = vmax.f32 %v167, 0.0
  %v232 = vmax.f32 %v168, 0.0
  %v233 = vmax.f32 %v169, 0.0
  %v234 = vmax.f32 %v170, 0.0
  %v235 = vmax.f32 %v171, 0.0
  %v236 = vmax.f32 %v172, 0.0
  %v237 = vmax.f32 %v173, 0.0
  %v238 = vmax.f32 %v174, 0.0
  %v239 = vmax.f32 %v175, 0.0
  %v240 = vmax.f32 %v176, 0.0
  %v241 = vmax.f32 %v177, 0.0
  %v242 = vmax.f32 %v178, 0.0
  %v243 = vmax.f32 %v179, 0.0
  %v244 = vmax.f32 %v180, 0.0
  %v245 = vmax.f32 %v181, 0.0
  %v246 = vmax.f32 %v182, 0.0
  %v247 = vmax.f32 %v183, 0.0
  %v248 = vmax.f32 %v184, 0.0
  %v249 = vmax.f32 %v185, 0.0
  %v250 = vmax.f32 %v186, 0.0
  %v251 = vmax.f32 %v187, 0.0
  %v252 = vmax.f32 %v188, 0.0
  %v253 = vmax.f32 %v189, 0.0
  %v254 = vmax.f32 %v190, 0.0
  %v255 = vmax.f32 %v191, 0.0
  %v256 = vmax.f32 %v192, 0.0
  %v257 = vmax.f32 %v193, 0.0
  %v258 = vmax.f32 %v194, 0.0
  %v259 = vmax.f32 %v195, 0.0
  %v260 = vmax.f32 %v196, 0.0
  %v261 = vmax.f32 %v197, 0.0
  %v262 = vmax.f32 %v198, 0.0
  %v263 = vmax.f32 %v199, 0.0
  %v264 = vmax.f32 %v200, 0.0
  %v265 = vmax.f32 %v201, 0.0
  %v266 = vmax.f32 %v202, 0.0
  %v267 = vmax.f32 %v203, 0.0
  %v268 = vmax.f32 %v204, 0.0
  %v269 = vmax.f32 %v205, 0.0
  %v270 = vmax.f32 %v206, 0.0
  %v271 = vmax.f32 %v207, 0.0
  %v272 = vmax.f32 %v208, 0.0
  %v273 = vmax.f32 %v209, 0.0
  %v274 = vmax.f32 %v210, 0.0
  %v275 = vmax.f32 %v211, 0.0
  %v276 = vmax.f32 %v212, 0.0
  %v277 = vmax.f32 %v213, 0.0
  %v278 = vmax.f32 %v214, 0.0
  %v279 = vmax.f32 %v215, 0.0
  %v280 = vmax.f32 %v216, 0.0
  %v281 = vmax.f32 %v217, 0.0
  %v282 = vmax.f32 %v218, 0.0
  %v283 = vmax.f32 %v219, 0.0
  %v284 = vmax.f32 %v220, 0.0
  %v285 = vmax.f32 %v221, 0.0
  %v286 = vmax.f32 %v222, 0.0
  %v287 = vmax.f32 %v223, 0.0
  %v288 = vmax.f32 %v224, 0.0
  %v289 = vmax.f32 %v225, 0.0
  %v290 = vld [vmem:[%s3] sm:$0xf]
  %v291 = vld [vmem:[%s4] sm:$0x1]
  %v293 = vlaneseq
  %v294 = vshrl.u32 %v293, 7
  %v295 = vsub.s32 0, %v294
  %v296 = vrot.slane %v291, %v295
  %vm298 = vcmask 31744
  %v300 = vsel %vm298, %v226, 0
  %v303 = vsel %vm298, %v227, 0
  %v306 = vsel %vm298, %v228, 0
  %v309 = vsel %vm298, %v229, 0
  %v312 = vsel %vm298, %v230, 0
  %v315 = vsel %vm298, %v231, 0
  %v318 = vsel %vm298, %v232, 0
  %v321 = vsel %vm298, %v233, 0
  %v324 = vsel %vm298, %v234, 0
  %v327 = vsel %vm298, %v235, 0
  %v330 = vsel %vm298, %v236, 0
  %v333 = vsel %vm298, %v237, 0
  %v336 = vsel %vm298, %v238, 0
  %v339 = vsel %vm298, %v239, 0
  %v342 = vsel %vm298, %v240, 0
  %v345 = vsel %vm298, %v241, 0
  %v348 = vsel %vm298, %v242, 0
  %v351 = vsel %vm298, %v243, 0
  %v354 = vsel %vm298, %v244, 0
  %v357 = vsel %vm298, %v245, 0
  %v360 = vsel %vm298, %v246, 0
  %v363 = vsel %vm298, %v247, 0
  %v366 = vsel %vm298, %v248, 0
  %v369 = vsel %vm298, %v249, 0
  %v372 = vsel %vm298, %v250, 0
  %v375 = vsel %vm298, %v251, 0
  %v378 = vsel %vm298, %v252, 0
  %v381 = vsel %vm298, %v253, 0
  %v384 = vsel %vm298, %v254, 0
  %v387 = vsel %vm298, %v255, 0
  %v390 = vsel %vm298, %v256, 0
  %v393 = vsel %vm298, %v257, 0
  %v396 = vsel %vm298, %v258, 0
  %v399 = vsel %vm298, %v259, 0
  %v402 = vsel %vm298, %v260, 0
  %v405 = vsel %vm298, %v261, 0
  %v408 = vsel %vm298, %v262, 0
  %v411 = vsel %vm298, %v263, 0
  %v414 = vsel %vm298, %v264, 0
  %v417 = vsel %vm298, %v265, 0
  %v420 = vsel %vm298, %v266, 0
  %v423 = vsel %vm298, %v267, 0
  %v426 = vsel %vm298, %v268, 0
  %v429 = vsel %vm298, %v269, 0
  %v432 = vsel %vm298, %v270, 0
  %v435 = vsel %vm298, %v271, 0
  %v438 = vsel %vm298, %v272, 0
  %v441 = vsel %vm298, %v273, 0
  %v444 = vsel %vm298, %v274, 0
  %v447 = vsel %vm298, %v275, 0
  %v450 = vsel %vm298, %v276, 0
  %v453 = vsel %vm298, %v277, 0
  %v456 = vsel %vm298, %v278, 0
  %v459 = vsel %vm298, %v279, 0
  %v462 = vsel %vm298, %v280, 0
  %v465 = vsel %vm298, %v281, 0
  %v468 = vsel %vm298, %v282, 0
  %v471 = vsel %vm298, %v283, 0
  %v474 = vsel %vm298, %v284, 0
  %v477 = vsel %vm298, %v285, 0
  %v480 = vsel %vm298, %v286, 0
  %v483 = vsel %vm298, %v287, 0
  %v486 = vsel %vm298, %v288, 0
  %v489 = vsel %vm298, %v289, 0
  %vm491 = vcmask 1043456
  %v493 = vsel %vm491, %v290, 0
  %495 = vmatprep.subr.mxu0 0.0
  %496 = vmatpush1.msra.mxu0 %v493
  %497 = vmatprep.subr.mxu0 0.0
  %498 = vmatpush1.msra.mxu0 0.0
  %499 = vmatprep.subr.mxu0 0.0
  %500 = vmatpush1.msra.mxu0 0.0
  %501 = vmatprep.subr.mxu0 0.0
  %502 = vmatpush1.msra.mxu0 0.0
  %503 = vmatprep.subr.mxu0 0.0
  %504 = vmatpush1.msra.mxu0 0.0
  %505 = vmatprep.subr.mxu0 0.0
  %506 = vmatpush1.msra.mxu0 0.0
  %507 = vmatprep.subr.mxu0 0.0
  %508 = vmatpush1.msra.mxu0 0.0
  %509 = vmatprep.subr.mxu0 0.0
  %510 = vmatpush1.msra.mxu0 0.0
  %511 = vmatprep.subr.mxu0 0.0
  %512 = vmatpush1.msra.mxu0 0.0
  %513 = vmatprep.subr.mxu0 0.0
  %514 = vmatpush1.msra.mxu0 0.0
  %515 = vmatprep.subr.mxu0 0.0
  %516 = vmatpush1.msra.mxu0 0.0
  %517 = vmatprep.subr.mxu0 0.0
  %518 = vmatpush1.msra.mxu0 0.0
  %519 = vmatprep.subr.mxu0 0.0
  %520 = vmatpush1.msra.mxu0 0.0
  %521 = vmatprep.subr.mxu0 0.0
  %522 = vmatpush1.msra.mxu0 0.0
  %523 = vmatprep.subr.mxu0 0.0
  %524 = vmatpush1.msra.mxu0 0.0
  %525 = vmatprep.subr.mxu0 0.0
  %526 = vmatpush1.msra.mxu0 0.0
  %527 = vmatprep.subr.mxu0 0.0
  %528 = vmatpush1.msra.mxu0 0.0
  %529 = vmatprep.subr.mxu0 0.0
  %530 = vmatpush1.msra.mxu0 0.0
  %531 = vmatprep.subr.mxu0 0.0
  %532 = vmatpush1.msra.mxu0 0.0
  %533 = vmatprep.subr.mxu0 0.0
  %534 = vmatpush1.msra.mxu0 0.0
  %535 = vmatprep.subr.mxu0 0.0
  %536 = vmatpush1.msra.mxu0 0.0
  %537 = vmatprep.subr.mxu0 0.0
  %538 = vmatpush1.msra.mxu0 0.0
  %539 = vmatprep.subr.mxu0 0.0
  %540 = vmatpush1.msra.mxu0 0.0
  %541 = vmatprep.subr.mxu0 0.0
  %542 = vmatpush1.msra.mxu0 0.0
  %543 = vmatprep.subr.mxu0 0.0
  %544 = vmatpush1.msra.mxu0 0.0
  %545 = vmatprep.subr.mxu0 0.0
  %546 = vmatpush1.msra.mxu0 0.0
  %547 = vmatprep.subr.mxu0 0.0
  %548 = vmatpush1.msra.mxu0 0.0
  %549 = vmatprep.subr.mxu0 0.0
  %550 = vmatpush1.msra.mxu0 0.0
  %551 = vmatprep.subr.mxu0 0.0
  %552 = vmatpush1.msra.mxu0 0.0
  %553 = vmatprep.subr.mxu0 0.0
  %554 = vmatpush1.msra.mxu0 0.0
  %555 = vmatprep.subr.mxu0 0.0
  %556 = vmatpush1.msra.mxu0 0.0
  %557 = vmatprep.subr.mxu0 0.0
  %558 = vmatpush1.msra.mxu0 0.0
  %559 = vmatprep.mubr.f32.mxu0 0.0
  %560 = vmatmul.mubr.f32.gmra.mrb[0].mxu0 %v300
  %v561 = vpop.f32.mrb[0].mxu0
  %v562 = vadd.f32 %v296, %v561
  %v563 = vpop.f32.mrb[0].mxu0
  %564 = vmatprep.mubr.f32.mxu0 0.0
  %565 = vmatmul.mubr.f32.gmra.mrb[0].mxu0 %v303
  %v566 = vpop.f32.mrb[0].mxu0
  %v567 = vadd.f32 %v296, %v566
  %v568 = vpop.f32.mrb[0].mxu0
  %569 = vmatprep.mubr.f32.mxu0 0.0
  %570 = vmatmul.mubr.f32.gmra.mrb[0].mxu0 %v306
  %v571 = vpop.f32.mrb[0].mxu0
  %v572 = vadd.f32 %v296, %v571
  %v573 = vpop.f32.mrb[0].mxu0
  %574 = vmatprep.mubr.f32.mxu0 0.0
  %575 = vmatmul.mubr.f32.gmra.mrb[0].mxu0 %v309
  %v576 = vpop.f32.mrb[0].mxu0
  %v577 = vadd.f32 %v296, %v576
  %v578 = vpop.f32.mrb[0].mxu0
  %579 = vmatprep.mubr.f32.mxu0 0.0
  %580 = vmatmul.mubr.f32.gmra.mrb[0].mxu0 %v312
  %v581 = vpop.f32.mrb[0].mxu0
  %v582 = vadd.f32 %v296, %v581
  %v583 = vpop.f32.mrb[0].mxu0
  %584 = vmatprep.mubr.f32.mxu0 0.0
  %585 = vmatmul.mubr.f32.gmra.mrb[0].mxu0 %v315
  %v586 = vpop.f32.mrb[0].mxu0
  %v587 = vadd.f32 %v296, %v586
  %v588 = vpop.f32.mrb[0].mxu0
  %589 = vmatprep.mubr.f32.mxu0 0.0
  %590 = vmatmul.mubr.f32.gmra.mrb[0].mxu0 %v318
  %v591 = vpop.f32.mrb[0].mxu0
  %v592 = vadd.f32 %v296, %v591
  %v593 = vpop.f32.mrb[0].mxu0
  %594 = vmatprep.mubr.f32.mxu0 0.0
  %595 = vmatmul.mubr.f32.gmra.mrb[0].mxu0 %v321
  %v596 = vpop.f32.mrb[0].mxu0
  %v597 = vadd.f32 %v296, %v596
  %v598 = vpop.f32.mrb[0].mxu0
  %599 = vmatprep.mubr.f32.mxu0 0.0
  %600 = vmatmul.mubr.f32.gmra.mrb[0].mxu0 %v324
  %v601 = vpop.f32.mrb[0].mxu0
  %v602 = vadd.f32 %v296, %v601
  %v603 = vpop.f32.mrb[0].mxu0
  %604 = vmatprep.mubr.f32.mxu0 0.0
  %605 = vmatmul.mubr.f32.gmra.mrb[0].mxu0 %v327
  %v606 = vpop.f32.mrb[0].mxu0
  %v607 = vadd.f32 %v296, %v606
  %v608 = vpop.f32.mrb[0].mxu0
  %609 = vmatprep.mubr.f32.mxu0 0.0
  %610 = vmatmul.mubr.f32.gmra.mrb[0].mxu0 %v330
  %v611 = vpop.f32.mrb[0].mxu0
  %v612 = vadd.f32 %v296, %v611
  %v613 = vpop.f32.mrb[0].mxu0
  %614 = vmatprep.mubr.f32.mxu0 0.0
  %615 = vmatmul.mubr.f32.gmra.mrb[0].mxu0 %v333
  %v616 = vpop.f32.mrb[0].mxu0
  %v617 = vadd.f32 %v296, %v616
  %v618 = vpop.f32.mrb[0].mxu0
  %619 = vmatprep.mubr.f32.mxu0 0.0
  %620 = vmatmul.mubr.f32.gmra.mrb[0].mxu0 %v336
  %v621 = vpop.f32.mrb[0].mxu0
  %v622 = vadd.f32 %v296, %v621
  %v623 = vpop.f32.mrb[0].mxu0
  %624 = vmatprep.mubr.f32.mxu0 0.0
  %625 = vmatmul.mubr.f32.gmra.mrb[0].mxu0 %v339
  %v626 = vpop.f32.mrb[0].mxu0
  %v627 = vadd.f32 %v296, %v626
  %v628 = vpop.f32.mrb[0].mxu0
  %629 = vmatprep.mubr.f32.mxu0 0.0
  %630 = vmatmul.mubr.f32.gmra.mrb[0].mxu0 %v342
  %v631 = vpop.f32.mrb[0].mxu0
  %v632 = vadd.f32 %v296, %v631
  %v633 = vpop.f32.mrb[0].mxu0
  %634 = vmatprep.mubr.f32.mxu0 0.0
  %635 = vmatmul.mubr.f32.gmra.mrb[0].mxu0 %v345
  %v636 = vpop.f32.mrb[0].mxu0
  %v637 = vadd.f32 %v296, %v636
  %v638 = vpop.f32.mrb[0].mxu0
  %639 = vmatprep.mubr.f32.mxu0 0.0
  %640 = vmatmul.mubr.f32.gmra.mrb[0].mxu0 %v348
  %v641 = vpop.f32.mrb[0].mxu0
  %v642 = vadd.f32 %v296, %v641
  %v643 = vpop.f32.mrb[0].mxu0
  %644 = vmatprep.mubr.f32.mxu0 0.0
  %645 = vmatmul.mubr.f32.gmra.mrb[0].mxu0 %v351
  %v646 = vpop.f32.mrb[0].mxu0
  %v647 = vadd.f32 %v296, %v646
  %v648 = vpop.f32.mrb[0].mxu0
  %649 = vmatprep.mubr.f32.mxu0 0.0
  %650 = vmatmul.mubr.f32.gmra.mrb[0].mxu0 %v354
  %v651 = vpop.f32.mrb[0].mxu0
  %v652 = vadd.f32 %v296, %v651
  %v653 = vpop.f32.mrb[0].mxu0
  %654 = vmatprep.mubr.f32.mxu0 0.0
  %655 = vmatmul.mubr.f32.gmra.mrb[0].mxu0 %v357
  %v656 = vpop.f32.mrb[0].mxu0
  %v657 = vadd.f32 %v296, %v656
  %v658 = vpop.f32.mrb[0].mxu0
  %659 = vmatprep.mubr.f32.mxu0 0.0
  %660 = vmatmul.mubr.f32.gmra.mrb[0].mxu0 %v360
  %v661 = vpop.f32.mrb[0].mxu0
  %v662 = vadd.f32 %v296, %v661
  %v663 = vpop.f32.mrb[0].mxu0
  %664 = vmatprep.mubr.f32.mxu0 0.0
  %665 = vmatmul.mubr.f32.gmra.mrb[0].mxu0 %v363
  %v666 = vpop.f32.mrb[0].mxu0
  %v667 = vadd.f32 %v296, %v666
  %v668 = vpop.f32.mrb[0].mxu0
  %669 = vmatprep.mubr.f32.mxu0 0.0
  %670 = vmatmul.mubr.f32.gmra.mrb[0].mxu0 %v366
  %v671 = vpop.f32.mrb[0].mxu0
  %v672 = vadd.f32 %v296, %v671
  %v673 = vpop.f32.mrb[0].mxu0
  %674 = vmatprep.mubr.f32.mxu0 0.0
  %675 = vmatmul.mubr.f32.gmra.mrb[0].mxu0 %v369
  %v676 = vpop.f32.mrb[0].mxu0
  %v677 = vadd.f32 %v296, %v676
  %v678 = vpop.f32.mrb[0].mxu0
  %679 = vmatprep.mubr.f32.mxu0 0.0
  %680 = vmatmul.mubr.f32.gmra.mrb[0].mxu0 %v372
  %v681 = vpop.f32.mrb[0].mxu0
  %v682 = vadd.f32 %v296, %v681
  %v683 = vpop.f32.mrb[0].mxu0
  %684 = vmatprep.mubr.f32.mxu0 0.0
  %685 = vmatmul.mubr.f32.gmra.mrb[0].mxu0 %v375
  %v686 = vpop.f32.mrb[0].mxu0
  %v687 = vadd.f32 %v296, %v686
  %v688 = vpop.f32.mrb[0].mxu0
  %689 = vmatprep.mubr.f32.mxu0 0.0
  %690 = vmatmul.mubr.f32.gmra.mrb[0].mxu0 %v378
  %v691 = vpop.f32.mrb[0].mxu0
  %v692 = vadd.f32 %v296, %v691
  %v693 = vpop.f32.mrb[0].mxu0
  %694 = vmatprep.mubr.f32.mxu0 0.0
  %695 = vmatmul.mubr.f32.gmra.mrb[0].mxu0 %v381
  %v696 = vpop.f32.mrb[0].mxu0
  %v697 = vadd.f32 %v296, %v696
  %v698 = vpop.f32.mrb[0].mxu0
  %699 = vmatprep.mubr.f32.mxu0 0.0
  %700 = vmatmul.mubr.f32.gmra.mrb[0].mxu0 %v384
  %v701 = vpop.f32.mrb[0].mxu0
  %v702 = vadd.f32 %v296, %v701
  %v703 = vpop.f32.mrb[0].mxu0
  %704 = vmatprep.mubr.f32.mxu0 0.0
  %705 = vmatmul.mubr.f32.gmra.mrb[0].mxu0 %v387
  %v706 = vpop.f32.mrb[0].mxu0
  %v707 = vadd.f32 %v296, %v706
  %v708 = vpop.f32.mrb[0].mxu0
  %709 = vmatprep.mubr.f32.mxu0 0.0
  %710 = vmatmul.mubr.f32.gmra.mrb[0].mxu0 %v390
  %v711 = vpop.f32.mrb[0].mxu0
  %v712 = vadd.f32 %v296, %v711
  %v713 = vpop.f32.mrb[0].mxu0
  %714 = vmatprep.mubr.f32.mxu0 0.0
  %715 = vmatmul.mubr.f32.gmra.mrb[0].mxu0 %v393
  %v716 = vpop.f32.mrb[0].mxu0
  %v717 = vadd.f32 %v296, %v716
  %v718 = vpop.f32.mrb[0].mxu0
  %719 = vmatprep.mubr.f32.mxu0 0.0
  %720 = vmatmul.mubr.f32.gmra.mrb[0].mxu0 %v396
  %v721 = vpop.f32.mrb[0].mxu0
  %v722 = vadd.f32 %v296, %v721
  %v723 = vpop.f32.mrb[0].mxu0
  %724 = vmatprep.mubr.f32.mxu0 0.0
  %725 = vmatmul.mubr.f32.gmra.mrb[0].mxu0 %v399
  %v726 = vpop.f32.mrb[0].mxu0
  %v727 = vadd.f32 %v296, %v726
  %v728 = vpop.f32.mrb[0].mxu0
  %729 = vmatprep.mubr.f32.mxu0 0.0
  %730 = vmatmul.mubr.f32.gmra.mrb[0].mxu0 %v402
  %v731 = vpop.f32.mrb[0].mxu0
  %v732 = vadd.f32 %v296, %v731
  %v733 = vpop.f32.mrb[0].mxu0
  %734 = vmatprep.mubr.f32.mxu0 0.0
  %735 = vmatmul.mubr.f32.gmra.mrb[0].mxu0 %v405
  %v736 = vpop.f32.mrb[0].mxu0
  %v737 = vadd.f32 %v296, %v736
  %v738 = vpop.f32.mrb[0].mxu0
  %739 = vmatprep.mubr.f32.mxu0 0.0
  %740 = vmatmul.mubr.f32.gmra.mrb[0].mxu0 %v408
  %v741 = vpop.f32.mrb[0].mxu0
  %v742 = vadd.f32 %v296, %v741
  %v743 = vpop.f32.mrb[0].mxu0
  %744 = vmatprep.mubr.f32.mxu0 0.0
  %745 = vmatmul.mubr.f32.gmra.mrb[0].mxu0 %v411
  %v746 = vpop.f32.mrb[0].mxu0
  %v747 = vadd.f32 %v296, %v746
  %v748 = vpop.f32.mrb[0].mxu0
  %749 = vmatprep.mubr.f32.mxu0 0.0
  %750 = vmatmul.mubr.f32.gmra.mrb[0].mxu0 %v414
  %v751 = vpop.f32.mrb[0].mxu0
  %v752 = vadd.f32 %v296, %v751
  %v753 = vpop.f32.mrb[0].mxu0
  %754 = vmatprep.mubr.f32.mxu0 0.0
  %755 = vmatmul.mubr.f32.gmra.mrb[0].mxu0 %v417
  %v756 = vpop.f32.mrb[0].mxu0
  %v757 = vadd.f32 %v296, %v756
  %v758 = vpop.f32.mrb[0].mxu0
  %759 = vmatprep.mubr.f32.mxu0 0.0
  %760 = vmatmul.mubr.f32.gmra.mrb[0].mxu0 %v420
  %v761 = vpop.f32.mrb[0].mxu0
  %v762 = vadd.f32 %v296, %v761
  %v763 = vpop.f32.mrb[0].mxu0
  %764 = vmatprep.mubr.f32.mxu0 0.0
  %765 = vmatmul.mubr.f32.gmra.mrb[0].mxu0 %v423
  %v766 = vpop.f32.mrb[0].mxu0
  %v767 = vadd.f32 %v296, %v766
  %v768 = vpop.f32.mrb[0].mxu0
  %769 = vmatprep.mubr.f32.mxu0 0.0
  %770 = vmatmul.mubr.f32.gmra.mrb[0].mxu0 %v426
  %v771 = vpop.f32.mrb[0].mxu0
  %v772 = vadd.f32 %v296, %v771
  %v773 = vpop.f32.mrb[0].mxu0
  %774 = vmatprep.mubr.f32.mxu0 0.0
  %775 = vmatmul.mubr.f32.gmra.mrb[0].mxu0 %v429
  %v776 = vpop.f32.mrb[0].mxu0
  %v777 = vadd.f32 %v296, %v776
  %v778 = vpop.f32.mrb[0].mxu0
  %779 = vmatprep.mubr.f32.mxu0 0.0
  %780 = vmatmul.mubr.f32.gmra.mrb[0].mxu0 %v432
  %v781 = vpop.f32.mrb[0].mxu0
  %v782 = vadd.f32 %v296, %v781
  %v783 = vpop.f32.mrb[0].mxu0
  %784 = vmatprep.mubr.f32.mxu0 0.0
  %785 = vmatmul.mubr.f32.gmra.mrb[0].mxu0 %v435
  %v786 = vpop.f32.mrb[0].mxu0
  %v787 = vadd.f32 %v296, %v786
  %v788 = vpop.f32.mrb[0].mxu0
  %789 = vmatprep.mubr.f32.mxu0 0.0
  %790 = vmatmul.mubr.f32.gmra.mrb[0].mxu0 %v438
  %v791 = vpop.f32.mrb[0].mxu0
  %v792 = vadd.f32 %v296, %v791
  %v793 = vpop.f32.mrb[0].mxu0
  %794 = vmatprep.mubr.f32.mxu0 0.0
  %795 = vmatmul.mubr.f32.gmra.mrb[0].mxu0 %v441
  %v796 = vpop.f32.mrb[0].mxu0
  %v797 = vadd.f32 %v296, %v796
  %v798 = vpop.f32.mrb[0].mxu0
  %799 = vmatprep.mubr.f32.mxu0 0.0
  %800 = vmatmul.mubr.f32.gmra.mrb[0].mxu0 %v444
  %v801 = vpop.f32.mrb[0].mxu0
  %v802 = vadd.f32 %v296, %v801
  %v803 = vpop.f32.mrb[0].mxu0
  %804 = vmatprep.mubr.f32.mxu0 0.0
  %805 = vmatmul.mubr.f32.gmra.mrb[0].mxu0 %v447
  %v806 = vpop.f32.mrb[0].mxu0
  %v807 = vadd.f32 %v296, %v806
  %v808 = vpop.f32.mrb[0].mxu0
  %809 = vmatprep.mubr.f32.mxu0 0.0
  %810 = vmatmul.mubr.f32.gmra.mrb[0].mxu0 %v450
  %v811 = vpop.f32.mrb[0].mxu0
  %v812 = vadd.f32 %v296, %v811
  %v813 = vpop.f32.mrb[0].mxu0
  %814 = vmatprep.mubr.f32.mxu0 0.0
  %815 = vmatmul.mubr.f32.gmra.mrb[0].mxu0 %v453
  %v816 = vpop.f32.mrb[0].mxu0
  %v817 = vadd.f32 %v296, %v816
  %v818 = vpop.f32.mrb[0].mxu0
  %819 = vmatprep.mubr.f32.mxu0 0.0
  %820 = vmatmul.mubr.f32.gmra.mrb[0].mxu0 %v456
  %v821 = vpop.f32.mrb[0].mxu0
  %v822 = vadd.f32 %v296, %v821
  %v823 = vpop.f32.mrb[0].mxu0
  %824 = vmatprep.mubr.f32.mxu0 0.0
  %825 = vmatmul.mubr.f32.gmra.mrb[0].mxu0 %v459
  %v826 = vpop.f32.mrb[0].mxu0
  %v827 = vadd.f32 %v296, %v826
  %v828 = vpop.f32.mrb[0].mxu0
  %829 = vmatprep.mubr.f32.mxu0 0.0
  %830 = vmatmul.mubr.f32.gmra.mrb[0].mxu0 %v462
  %v831 = vpop.f32.mrb[0].mxu0
  %v832 = vadd.f32 %v296, %v831
  %v833 = vpop.f32.mrb[0].mxu0
  %834 = vmatprep.mubr.f32.mxu0 0.0
  %835 = vmatmul.mubr.f32.gmra.mrb[0].mxu0 %v465
  %v836 = vpop.f32.mrb[0].mxu0
  %v837 = vadd.f32 %v296, %v836
  %v838 = vpop.f32.mrb[0].mxu0
  %839 = vmatprep.mubr.f32.mxu0 0.0
  %840 = vmatmul.mubr.f32.gmra.mrb[0].mxu0 %v468
  %v841 = vpop.f32.mrb[0].mxu0
  %v842 = vadd.f32 %v296, %v841
  %v843 = vpop.f32.mrb[0].mxu0
  %844 = vmatprep.mubr.f32.mxu0 0.0
  %845 = vmatmul.mubr.f32.gmra.mrb[0].mxu0 %v471
  %v846 = vpop.f32.mrb[0].mxu0
  %v847 = vadd.f32 %v296, %v846
  %v848 = vpop.f32.mrb[0].mxu0
  %849 = vmatprep.mubr.f32.mxu0 0.0
  %850 = vmatmul.mubr.f32.gmra.mrb[0].mxu0 %v474
  %v851 = vpop.f32.mrb[0].mxu0
  %v852 = vadd.f32 %v296, %v851
  %v853 = vpop.f32.mrb[0].mxu0
  %854 = vmatprep.mubr.f32.mxu0 0.0
  %855 = vmatmul.mubr.f32.gmra.mrb[0].mxu0 %v477
  %v856 = vpop.f32.mrb[0].mxu0
  %v857 = vadd.f32 %v296, %v856
  %v858 = vpop.f32.mrb[0].mxu0
  %859 = vmatprep.mubr.f32.mxu0 0.0
  %860 = vmatmul.mubr.f32.gmra.mrb[0].mxu0 %v480
  %v861 = vpop.f32.mrb[0].mxu0
  %v862 = vadd.f32 %v296, %v861
  %v863 = vpop.f32.mrb[0].mxu0
  %864 = vmatprep.mubr.f32.mxu0 0.0
  %865 = vmatmul.mubr.f32.gmra.mrb[0].mxu0 %v483
  %v866 = vpop.f32.mrb[0].mxu0
  %v867 = vadd.f32 %v296, %v866
  %v868 = vpop.f32.mrb[0].mxu0
  %869 = vmatprep.mubr.f32.mxu0 0.0
  %870 = vmatmul.mubr.f32.gmra.mrb[0].mxu0 %v486
  %v871 = vpop.f32.mrb[0].mxu0
  %v872 = vadd.f32 %v296, %v871
  %v873 = vpop.f32.mrb[0].mxu0
  %874 = vmatprep.mubr.f32.mxu0 0.0
  %875 = vmatmul.mubr.f32.gmra.mrb[0].mxu0 %v489
  %v876 = vpop.f32.mrb[0].mxu0
  %v877 = vadd.f32 %v296, %v876
  %v878 = vpop.f32.mrb[0].mxu0
  %879 = vdwg.mxu0
  %v880 = vmax.f32 %v562, 0.0
  %v881 = vmax.f32 %v567, 0.0
  %v882 = vmax.f32 %v572, 0.0
  %v883 = vmax.f32 %v577, 0.0
  %v884 = vmax.f32 %v582, 0.0
  %v885 = vmax.f32 %v587, 0.0
  %v886 = vmax.f32 %v592, 0.0
  %v887 = vmax.f32 %v597, 0.0
  %v888 = vmax.f32 %v602, 0.0
  %v889 = vmax.f32 %v607, 0.0
  %v890 = vmax.f32 %v612, 0.0
  %v891 = vmax.f32 %v617, 0.0
  %v892 = vmax.f32 %v622, 0.0
  %v893 = vmax.f32 %v627, 0.0
  %v894 = vmax.f32 %v632, 0.0
  %v895 = vmax.f32 %v637, 0.0
  %v896 = vmax.f32 %v642, 0.0
  %v897 = vmax.f32 %v647, 0.0
  %v898 = vmax.f32 %v652, 0.0
  %v899 = vmax.f32 %v657, 0.0
  %v900 = vmax.f32 %v662, 0.0
  %v901 = vmax.f32 %v667, 0.0
  %v902 = vmax.f32 %v672, 0.0
  %v903 = vmax.f32 %v677, 0.0
  %v904 = vmax.f32 %v682, 0.0
  %v905 = vmax.f32 %v687, 0.0
  %v906 = vmax.f32 %v692, 0.0
  %v907 = vmax.f32 %v697, 0.0
  %v908 = vmax.f32 %v702, 0.0
  %v909 = vmax.f32 %v707, 0.0
  %v910 = vmax.f32 %v712, 0.0
  %v911 = vmax.f32 %v717, 0.0
  %v912 = vmax.f32 %v722, 0.0
  %v913 = vmax.f32 %v727, 0.0
  %v914 = vmax.f32 %v732, 0.0
  %v915 = vmax.f32 %v737, 0.0
  %v916 = vmax.f32 %v742, 0.0
  %v917 = vmax.f32 %v747, 0.0
  %v918 = vmax.f32 %v752, 0.0
  %v919 = vmax.f32 %v757, 0.0
  %v920 = vmax.f32 %v762, 0.0
  %v921 = vmax.f32 %v767, 0.0
  %v922 = vmax.f32 %v772, 0.0
  %v923 = vmax.f32 %v777, 0.0
  %v924 = vmax.f32 %v782, 0.0
  %v925 = vmax.f32 %v787, 0.0
  %v926 = vmax.f32 %v792, 0.0
  %v927 = vmax.f32 %v797, 0.0
  %v928 = vmax.f32 %v802, 0.0
  %v929 = vmax.f32 %v807, 0.0
  %v930 = vmax.f32 %v812, 0.0
  %v931 = vmax.f32 %v817, 0.0
  %v932 = vmax.f32 %v822, 0.0
  %v933 = vmax.f32 %v827, 0.0
  %v934 = vmax.f32 %v832, 0.0
  %v935 = vmax.f32 %v837, 0.0
  %v936 = vmax.f32 %v842, 0.0
  %v937 = vmax.f32 %v847, 0.0
  %v938 = vmax.f32 %v852, 0.0
  %v939 = vmax.f32 %v857, 0.0
  %v940 = vmax.f32 %v862, 0.0
  %v941 = vmax.f32 %v867, 0.0
  %v942 = vmax.f32 %v872, 0.0
  %v943 = vmax.f32 %v877, 0.0
  %944 = vst.msk [vmem:[%s5] sm:$0xff] %vm298, %v880
  %945 = vst.msk [vmem:[%s5 + $0x8] sm:$0xff] %vm298, %v881
  %946 = vst.msk [vmem:[%s5 + $0x10] sm:$0xff] %vm298, %v882
  %947 = vst.msk [vmem:[%s5 + $0x18] sm:$0xff] %vm298, %v883
  %948 = vst.msk [vmem:[%s5 + $0x20] sm:$0xff] %vm298, %v884
  %949 = vst.msk [vmem:[%s5 + $0x28] sm:$0xff] %vm298, %v885
  %950 = vst.msk [vmem:[%s5 + $0x30] sm:$0xff] %vm298, %v886
  %951 = vst.msk [vmem:[%s5 + $0x38] sm:$0xff] %vm298, %v887
  %952 = vst.msk [vmem:[%s5 + $0x40] sm:$0xff] %vm298, %v888
  %953 = vst.msk [vmem:[%s5 + $0x48] sm:$0xff] %vm298, %v889
  %954 = vst.msk [vmem:[%s5 + $0x50] sm:$0xff] %vm298, %v890
  %955 = vst.msk [vmem:[%s5 + $0x58] sm:$0xff] %vm298, %v891
  %956 = vst.msk [vmem:[%s5 + $0x60] sm:$0xff] %vm298, %v892
  %957 = vst.msk [vmem:[%s5 + $0x68] sm:$0xff] %vm298, %v893
  %958 = vst.msk [vmem:[%s5 + $0x70] sm:$0xff] %vm298, %v894
  %959 = vst.msk [vmem:[%s5 + $0x78] sm:$0xff] %vm298, %v895
  %960 = vst.msk [vmem:[%s5 + $0x80] sm:$0xff] %vm298, %v896
  %961 = vst.msk [vmem:[%s5 + $0x88] sm:$0xff] %vm298, %v897
  %962 = vst.msk [vmem:[%s5 + $0x90] sm:$0xff] %vm298, %v898
  %963 = vst.msk [vmem:[%s5 + $0x98] sm:$0xff] %vm298, %v899
  %964 = vst.msk [vmem:[%s5 + $0xa0] sm:$0xff] %vm298, %v900
  %965 = vst.msk [vmem:[%s5 + $0xa8] sm:$0xff] %vm298, %v901
  %966 = vst.msk [vmem:[%s5 + $0xb0] sm:$0xff] %vm298, %v902
  %967 = vst.msk [vmem:[%s5 + $0xb8] sm:$0xff] %vm298, %v903
  %968 = vst.msk [vmem:[%s5 + $0xc0] sm:$0xff] %vm298, %v904
  %969 = vst.msk [vmem:[%s5 + $0xc8] sm:$0xff] %vm298, %v905
  %970 = vst.msk [vmem:[%s5 + $0xd0] sm:$0xff] %vm298, %v906
  %971 = vst.msk [vmem:[%s5 + $0xd8] sm:$0xff] %vm298, %v907
  %972 = vst.msk [vmem:[%s5 + $0xe0] sm:$0xff] %vm298, %v908
  %973 = vst.msk [vmem:[%s5 + $0xe8] sm:$0xff] %vm298, %v909
  %974 = vst.msk [vmem:[%s5 + $0xf0] sm:$0xff] %vm298, %v910
  %975 = vst.msk [vmem:[%s5 + $0xf8] sm:$0xff] %vm298, %v911
  %976 = vst.msk [vmem:[%s5 + $0x100] sm:$0xff] %vm298, %v912
  %977 = vst.msk [vmem:[%s5 + $0x108] sm:$0xff] %vm298, %v913
  %978 = vst.msk [vmem:[%s5 + $0x110] sm:$0xff] %vm298, %v914
  %979 = vst.msk [vmem:[%s5 + $0x118] sm:$0xff] %vm298, %v915
  %980 = vst.msk [vmem:[%s5 + $0x120] sm:$0xff] %vm298, %v916
  %981 = vst.msk [vmem:[%s5 + $0x128] sm:$0xff] %vm298, %v917
  %982 = vst.msk [vmem:[%s5 + $0x130] sm:$0xff] %vm298, %v918
  %983 = vst.msk [vmem:[%s5 + $0x138] sm:$0xff] %vm298, %v919
  %984 = vst.msk [vmem:[%s5 + $0x140] sm:$0xff] %vm298, %v920
  %985 = vst.msk [vmem:[%s5 + $0x148] sm:$0xff] %vm298, %v921
  %986 = vst.msk [vmem:[%s5 + $0x150] sm:$0xff] %vm298, %v922
  %987 = vst.msk [vmem:[%s5 + $0x158] sm:$0xff] %vm298, %v923
  %988 = vst.msk [vmem:[%s5 + $0x160] sm:$0xff] %vm298, %v924
  %989 = vst.msk [vmem:[%s5 + $0x168] sm:$0xff] %vm298, %v925
  %990 = vst.msk [vmem:[%s5 + $0x170] sm:$0xff] %vm298, %v926
  %991 = vst.msk [vmem:[%s5 + $0x178] sm:$0xff] %vm298, %v927
  %992 = vst.msk [vmem:[%s5 + $0x180] sm:$0xff] %vm298, %v928
  %993 = vst.msk [vmem:[%s5 + $0x188] sm:$0xff] %vm298, %v929
  %994 = vst.msk [vmem:[%s5 + $0x190] sm:$0xff] %vm298, %v930
  %995 = vst.msk [vmem:[%s5 + $0x198] sm:$0xff] %vm298, %v931
  %996 = vst.msk [vmem:[%s5 + $0x1a0] sm:$0xff] %vm298, %v932
  %997 = vst.msk [vmem:[%s5 + $0x1a8] sm:$0xff] %vm298, %v933
  %998 = vst.msk [vmem:[%s5 + $0x1b0] sm:$0xff] %vm298, %v934
  %999 = vst.msk [vmem:[%s5 + $0x1b8] sm:$0xff] %vm298, %v935
  %1000 = vst.msk [vmem:[%s5 + $0x1c0] sm:$0xff] %vm298, %v936
  %1001 = vst.msk [vmem:[%s5 + $0x1c8] sm:$0xff] %vm298, %v937
  %1002 = vst.msk [vmem:[%s5 + $0x1d0] sm:$0xff] %vm298, %v938
  %1003 = vst.msk [vmem:[%s5 + $0x1d8] sm:$0xff] %vm298, %v939
  %1004 = vst.msk [vmem:[%s5 + $0x1e0] sm:$0xff] %vm298, %v940
  %1005 = vst.msk [vmem:[%s5 + $0x1e8] sm:$0xff] %vm298, %v941
  %1006 = vst.msk [vmem:[%s5 + $0x1f0] sm:$0xff] %vm298, %v942
  %1007 = vst.msk [vmem:[%s5 + $0x1f8] sm:$0xff] %vm298, %v943
  // Predicated region
  $region22: #{residual_forward.2} parent=0 // pred_check
    _
  $region23: #{residual_forward.2} parent=0 // pred_check_branch
    %1009 = sbr.rel (0) target = $region25
  $region24: #{residual_forward.2} parent=0 // pred_region
    _
  $region25: #{residual_forward.2} parent=0 // pred_fallthru
    _
  // Predicated region
  $region26: #{residual_forward.2} parent=0 // pred_check
    _
  $region27: #{residual_forward.2} parent=0 // pred_check_branch
    %1011 = sbr.rel (0) target = $region29
  $region28: #{residual_forward.2} parent=0 // pred_region
    _
  $region29: #{residual_forward.2} parent=0 // pred_fallthru
    _

// kernel: residual_forward.3
$region0: #{residual_forward.3}
  #allocation0 [shape = 'u32[]', space=smem, size = 0x4, offset = 0x4, fixed_abs, tag = 'smem constant byte address 0x4 - core index']
  #allocation1 [shape = 'u32[144,128]{1,0:T(1,128)}', space=vmem, size = 0x12000, scoped, tag = 'internal scratch']
  %s0 = inlined_call_operand.vmem [shape: f32[2,6,110,4], index: 0, kind: input, shape index: {}, may-alias: {0,1,2}]
  %s1 = inlined_call_operand.vmem [shape: f32[2,6,110,4], index: 1, kind: input, shape index: {}, may-alias: {0,1,2}]
  %s2 = inlined_call_operand.vmem [shape: f32[2,6,110,4], index: 2, kind: input, shape index: {}, may-alias: {0,1,2}]
  %s3 = inlined_call_operand.vmem [shape: f32[2,4,80,4], index: 3, kind: input, shape index: {}]
  %s4 = inlined_call_operand.vmem [shape: f32[27,4,4], index: 4, kind: input, shape index: {}]
  %s5 = inlined_call_operand.vmem [shape: f32[1,4], index: 5, kind: input, shape index: {}]
  %s6 = inlined_call_operand.vmem [shape: f32[4,8], index: 6, kind: input, shape index: {}]
  %s7 = inlined_call_operand.vmem [shape: f32[4,8], index: 7, kind: input, shape index: {}]
  %s8 = inlined_call_operand.vmem [shape: f32[1,8], index: 8, kind: input, shape index: {}]
  %s9 = inlined_call_operand.vmem [shape: f32[2,4,80,8], index: 9, kind: output, shape index: {}]
  %s10 = sld [smem:[#allocation0]]
  $region69: #{residual_forward.3} parent=0
    _
  %s12 = ssub.s32 1, %s10
  %s13 = scalar_select 0, %s12, %s10
  loop: start=0, step=1, limit=10
  $region2: #{residual_forward.3} parent=0 // loop_pre_header
    _
  $region3: #{residual_forward.3} parent=0 // loop_header
    %s15 = sphi 0, %s19
    %p16 = scmp.ge.s32.totalorder %s15, 10
    %s22 = sphi 0, %s34
    %s23 = sphi 0, %s30
    %s24 = sphi 0, %s22
    %s25 = sphi 0, %s23
    %s26 = sphi 0, %s24
    %s27 = sphi 0, %s25
    %s39 = sphi 0, %s41
    %s42 = sphi 0, %s39
    %s43 = sphi 0, %s42
    %s59 = sphi 0, %s43
    %s69 = sphi 0, %s71
    %s72 = sphi 0, %s69
    %s73 = sphi 0, %s72
    %s89 = sphi 0, %s73
    %s99 = sphi 0, %s101
    %s102 = sphi 0, %s99
    %s103 = sphi 0, %s102
    %s119 = sphi 0, %s103
    %s127 = sphi 0, %s129
    %s130 = sphi 0, %s127
    %s131 = sphi 0, %s130
    %s147 = sphi 0, %s131
    %s151 = sphi 0, %s151
    %s153 = sphi 0, %s151
    %s154 = sphi 0, %s153
    %s168 = sphi 0, %s154
    %s172 = sphi 0, %s172
    %s174 = sphi 0, %s172
    %s175 = sphi 0, %s174
    %s189 = sphi 0, %s175
    %s193 = sphi 0, %s193
    %s195 = sphi 0, %s193
    %s196 = sphi 0, %s195
    %s210 = sphi 0, %s196
    %s214 = sphi 0, %s214
    %s216 = sphi 0, %s214
    %s217 = sphi 0, %s216
    %s231 = sphi 0, %s217
    %s235 = sphi 0, %s235
    %s237 = sphi 0, %s235
    %s238 = sphi 0, %s237
    %s252 = sphi 0, %s238
    %s260 = sphi 0, %s262
    %s263 = sphi 0, %s260
    %s264 = sphi 0, %s263
    %s280 = sphi 0, %s264
  $region4: #{residual_forward.3} parent=0 // loop_header_branch
    %18 = sbr.rel (%p16) target = $region8
  $region5: #{residual_forward.3} parent=0 // loop_body
    %s20 = ssub.s32 %s15, 1
    %s21 = ssub.s32 %s15, 2
    %s28 = sadd.s32 1, %s23
    %p29 = scmp.ge.s32.totalorder %s28, 4
    %s30 = scalar_select %p29, 0, %s28
    %s31 = sadd.s32 1, %s22
    %s32 = scalar_select %p29, %s31, %s22
    %p33 = scmp.ge.s32.totalorder %s32, 2
    %s34 = scalar_select %p33, 0, %s32
    %s35 = ssub.s32 %s22, %s34
    %s36 = ssub.s32 %s23, %s30
    %s37 = sor.u32 %s35, %s36
    %p38 = scmp.eq.s32.totalorder %s37, 0
    %s40 = sadd.s32 %s39, 1
    %s41 = scalar_select %p38, %s39, %s40
    %p44 = pneg %p38
    %p45 = scmp.eq.s32.totalorder %s15, 7
    %p46 = por %p44, %p45
    %p47 = scmp.ne.s32.totalorder %s39, %s42
    %p48 = scmp.eq.s32.totalorder %s15, 0
    %p49 = por %p47, %p48
    %p50 = scmp.ne.s32.totalorder %s39, %s42
    %p51 = scmp.eq.s32.totalorder %s20, 7
    %p52 = por %p50, %p51
    %p53 = scmp.ne.s32.totalorder %s42, %s43
    %p54 = scmp.eq.s32.totalorder %s20, 0
    %p55 = por %p53, %p54
    %p56 = scmp.ne.s32.totalorder %s42, %s43
    %p57 = scmp.eq.s32.totalorder %s21, 7
    %p58 = por %p56, %p57
    %p60 = scmp.ne.s32.totalorder %s43, %s59
    %p61 = scmp.eq.s32.totalorder %s21, 0
    %p62 = por %p60, %p61
    %s63 = sadd.s32 %s23, 1
    %s64 = sadd.s32 %s30, 1
    %s65 = ssub.s32 %s22, %s34
    %s66 = ssub.s32 %s63, %s64
    %s67 = sor.u32 %s65, %s66
    %p68 = scmp.eq.s32.totalorder %s67, 0
    %s70 = sadd.s32 %s69, 1
    %s71 = scalar_select %p68, %s69, %s70
    %p74 = pneg %p68
    %p75 = scmp.eq.s32.totalorder %s15, 7
    %p76 = por %p74, %p75
    %p77 = scmp.ne.s32.totalorder %s69, %s72
    %p78 = scmp.eq.s32.totalorder %s15, 0
    %p79 = por %p77, %p78
    %p80 = scmp.ne.s32.totalorder %s69, %s72
    %p81 = scmp.eq.s32.totalorder %s20, 7
    %p82 = por %p80, %p81
    %p83 = scmp.ne.s32.totalorder %s72, %s73
    %p84 = scmp.eq.s32.totalorder %s20, 0
    %p85 = por %p83, %p84
    %p86 = scmp.ne.s32.totalorder %s72, %s73
    %p87 = scmp.eq.s32.totalorder %s21, 7
    %p88 = por %p86, %p87
    %p90 = scmp.ne.s32.totalorder %s73, %s89
    %p91 = scmp.eq.s32.totalorder %s21, 0
    %p92 = por %p90, %p91
    %s93 = sadd.s32 %s23, 2
    %s94 = sadd.s32 %s30, 2
    %s95 = ssub.s32 %s22, %s34
    %s96 = ssub.s32 %s93, %s94
    %s97 = sor.u32 %s95, %s96
    %p98 = scmp.eq.s32.totalorder %s97, 0
    %s100 = sadd.s32 %s99, 1
    %s101 = scalar_select %p98, %s99, %s100
    %p104 = pneg %p98
    %p105 = scmp.eq.s32.totalorder %s15, 7
    %p106 = por %p104, %p105
    %p107 = scmp.ne.s32.totalorder %s99, %s102
    %p108 = scmp.eq.s32.totalorder %s15, 0
    %p109 = por %p107, %p108
    %p110 = scmp.ne.s32.totalorder %s99, %s102
    %p111 = scmp.eq.s32.totalorder %s20, 7
    %p112 = por %p110, %p111
    %p113 = scmp.ne.s32.totalorder %s102, %s103
    %p114 = scmp.eq.s32.totalorder %s20, 0
    %p115 = por %p113, %p114
    %p116 = scmp.ne.s32.totalorder %s102, %s103
    %p117 = scmp.eq.s32.totalorder %s21, 7
    %p118 = por %p116, %p117
    %p120 = scmp.ne.s32.totalorder %s103, %s119
    %p121 = scmp.eq.s32.totalorder %s21, 0
    %p122 = por %p120, %p121
    %s123 = ssub.s32 %s22, %s34
    %s124 = ssub.s32 %s23, %s30
    %s125 = sor.u32 %s123, %s124
    %p126 = scmp.eq.s32.totalorder %s125, 0
    %s128 = sadd.s32 %s127, 1
    %s129 = scalar_select %p126, %s127, %s128
    %p132 = pneg %p126
    %p133 = scmp.eq.s32.totalorder %s15, 7
    %p134 = por %p132, %p133
    %p135 = scmp.ne.s32.totalorder %s127, %s130
    %p136 = scmp.eq.s32.totalorder %s15, 0
    %p137 = por %p135, %p136
    %p138 = scmp.ne.s32.totalorder %s127, %s130
    %p139 = scmp.eq.s32.totalorder %s20, 7
    %p140 = por %p138, %p139
    %p141 = scmp.ne.s32.totalorder %s130, %s131
    %p142 = scmp.eq.s32.totalorder %s20, 0
    %p143 = por %p141, %p142
    %p144 = scmp.ne.s32.totalorder %s130, %s131
    %p145 = scmp.eq.s32.totalorder %s21, 7
    %p146 = por %p144, %p145
    %p148 = scmp.ne.s32.totalorder %s131, %s147
    %p149 = scmp.eq.s32.totalorder %s21, 0
    %p150 = por %p148, %p149
    %s152 = sadd.s32 %s151, 1
    %p155 = scmp.eq.s32.totalorder %s15, 7
    %p156 = scmp.ne.s32.totalorder %s151, %s153
    %p157 = scmp.eq.s32.totalorder %s15, 0
    %p158 = por %p156, %p157
    %p159 = scmp.ne.s32.totalorder %s151, %s153
    %p160 = scmp.eq.s32.totalorder %s20, 7
    %p161 = por %p159, %p160
    %p162 = scmp.ne.s32.totalorder %s153, %s154
    %p163 = scmp.eq.s32.totalorder %s20, 0
    %p164 = por %p162, %p163
    %p165 = scmp.ne.s32.totalorder %s153, %s154
    %p166 = scmp.eq.s32.totalorder %s21, 7
    %p167 = por %p165, %p166
    %p169 = scmp.ne.s32.totalorder %s154, %s168
    %p170 = scmp.eq.s32.totalorder %s21, 0
    %p171 = por %p169, %p170
    %s173 = sadd.s32 %s172, 1
    %p176 = scmp.eq.s32.totalorder %s15, 7
    %p177 = scmp.ne.s32.totalorder %s172, %s174
    %p178 = scmp.eq.s32.totalorder %s15, 0
    %p179 = por %p177, %p178
    %p180 = scmp.ne.s32.totalorder %s172, %s174
    %p181 = scmp.eq.s32.totalorder %s20, 7
    %p182 = por %p180, %p181
    %p183 = scmp.ne.s32.totalorder %s174, %s175
    %p184 = scmp.eq.s32.totalorder %s20, 0
    %p185 = por %p183, %p184
    %p186 = scmp.ne.s32.totalorder %s174, %s175
    %p187 = scmp.eq.s32.totalorder %s21, 7
    %p188 = por %p186, %p187
    %p190 = scmp.ne.s32.totalorder %s175, %s189
    %p191 = scmp.eq.s32.totalorder %s21, 0
    %p192 = por %p190, %p191
    %s194 = sadd.s32 %s193, 1
    %p197 = scmp.eq.s32.totalorder %s15, 7
    %p198 = scmp.ne.s32.totalorder %s193, %s195
    %p199 = scmp.eq.s32.totalorder %s15, 0
    %p200 = por %p198, %p199
    %p201 = scmp.ne.s32.totalorder %s193, %s195
    %p202 = scmp.eq.s32.totalorder %s20, 7
    %p203 = por %p201, %p202
    %p204 = scmp.ne.s32.totalorder %s195, %s196
    %p205 = scmp.eq.s32.totalorder %s20, 0
    %p206 = por %p204, %p205
    %p207 = scmp.ne.s32.totalorder %s195, %s196
    %p208 = scmp.eq.s32.totalorder %s21, 7
    %p209 = por %p207, %p208
    %p211 = scmp.ne.s32.totalorder %s196, %s210
    %p212 = scmp.eq.s32.totalorder %s21, 0
    %p213 = por %p211, %p212
    %s215 = sadd.s32 %s214, 1
    %p218 = scmp.eq.s32.totalorder %s15, 7
    %p219 = scmp.ne.s32.totalorder %s214, %s216
    %p220 = scmp.eq.s32.totalorder %s15, 0
    %p221 = por %p219, %p220
    %p222 = scmp.ne.s32.totalorder %s214, %s216
    %p223 = scmp.eq.s32.totalorder %s20, 7
    %p224 = por %p222, %p223
    %p225 = scmp.ne.s32.totalorder %s216, %s217
    %p226 = scmp.eq.s32.totalorder %s20, 0
    %p227 = por %p225, %p226
    %p228 = scmp.ne.s32.totalorder %s216, %s217
    %p229 = scmp.eq.s32.totalorder %s21, 7
    %p230 = por %p228, %p229
    %p232 = scmp.ne.s32.totalorder %s217, %s231
    %p233 = scmp.eq.s32.totalorder %s21, 0
    %p234 = por %p232, %p233
    %s236 = sadd.s32 %s235, 1
    %p239 = scmp.eq.s32.totalorder %s15, 7
    %p240 = scmp.ne.s32.totalorder %s235, %s237
    %p241 = scmp.eq.s32.totalorder %s15, 0
    %p242 = por %p240, %p241
    %p243 = scmp.ne.s32.totalorder %s235, %s237
    %p244 = scmp.eq.s32.totalorder %s20, 7
    %p245 = por %p243, %p244
    %p246 = scmp.ne.s32.totalorder %s237, %s238
    %p247 = scmp.eq.s32.totalorder %s20, 0
    %p248 = por %p246, %p247
    %p249 = scmp.ne.s32.totalorder %s237, %s238
    %p250 = scmp.eq.s32.totalorder %s21, 7
    %p251 = por %p249, %p250
    %p253 = scmp.ne.s32.totalorder %s238, %s252
    %p254 = scmp.eq.s32.totalorder %s21, 0
    %p255 = por %p253, %p254
    %s256 = ssub.s32 %s22, %s34
    %s257 = ssub.s32 %s23, %s30
    %s258 = sor.u32 %s256, %s257
    %p259 = scmp.eq.s32.totalorder %s258, 0
    %s261 = sadd.s32 %s260, 1
    %s262 = scalar_select %p259, %s260, %s261
    %p265 = pneg %p259
    %p266 = scmp.eq.s32.totalorder %s15, 7
    %p267 = por %p265, %p266
    %p268 = scmp.ne.s32.totalorder %s260, %s263
    %p269 = scmp.eq.s32.totalorder %s15, 0
    %p270 = por %p268, %p269
    %p271 = scmp.ne.s32.totalorder %s260, %s263
    %p272 = scmp.eq.s32.totalorder %s20, 7
    %p273 = por %p271, %p272
    %p274 = scmp.ne.s32.totalorder %s263, %s264
    %p275 = scmp.eq.s32.totalorder %s20, 0
    %p276 = por %p274, %p275
    %p277 = scmp.ne.s32.totalorder %s263, %s264
    %p278 = scmp.eq.s32.totalorder %s21, 7
    %p279 = por %p277, %p278
    %p281 = scmp.ne.s32.totalorder %s264, %s280
    %p282 = scmp.eq.s32.totalorder %s21, 0
    %p283 = por %p281, %p282
    %p284 = scmp.le.s32.totalorder 1, %s15
    %p285 = scmp.lt.s32.totalorder %s15, 9
    %p286 = pnand %p284, %p285
    %p287 = pneg %p286
    // Predicated region
    $region9: #{residual_forward.3} parent=5 // pred_check
      _
    $region10: #{residual_forward.3} parent=5 // pred_check_branch
      %289 = sbr.rel (%p286) target = $region12
    $region11: #{residual_forward.3} parent=5 // pred_region
      %s290 = ssub.s32 %s15, 1
      // Predicated region
      $region13: #{residual_forward.3} parent=11 // pred_check
        %p291 = pneg %p164
      $region14: #{residual_forward.3} parent=11 // pred_check_branch
        %293 = sbr.rel (%p291) target = $region16
      $region15: #{residual_forward.3} parent=11 // pred_region
        _
      $region16: #{residual_forward.3} parent=11 // pred_fallthru
        _
      // Predicated region
      $region17: #{residual_forward.3} parent=11 // pred_check
        %p294 = pneg %p185
      $region18: #{residual_forward.3} parent=11 // pred_check_branch
        %296 = sbr.rel (%p294) target = $region20
      $region19: #{residual_forward.3} parent=11 // pred_region
        _
      $region20: #{residual_forward.3} parent=11 // pred_fallthru
        _
      // Predicated region
      $region21: #{residual_forward.3} parent=11 // pred_check
        %p297 = pneg %p206
      $region22: #{residual_forward.3} parent=11 // pred_check_branch
        %299 = sbr.rel (%p297) target = $region24
      $region23: #{residual_forward.3} parent=11 // pred_region
        _
      $region24: #{residual_forward.3} parent=11 // pred_fallthru
        _
      // Predicated region
      $region25: #{residual_forward.3} parent=11 // pred_check
        %p300 = pneg %p227
      $region26: #{residual_forward.3} parent=11 // pred_check_branch
        %302 = sbr.rel (%p300) target = $region28
      $region27: #{residual_forward.3} parent=11 // pred_region
        _
      $region28: #{residual_forward.3} parent=11 // pred_fallthru
        _
      // Predicated region
      $region29: #{residual_forward.3} parent=11 // pred_check
        %p303 = pneg %p248
      $region30: #{residual_forward.3} parent=11 // pred_check_branch
        %305 = sbr.rel (%p303) target = $region32
      $region31: #{residual_forward.3} parent=11 // pred_region
        _
      $region32: #{residual_forward.3} parent=11 // pred_fallthru
        _
    $region12: #{residual_forward.3} parent=5 // pred_fallthru
      _
    %p306 = scmp.lt.s32.totalorder %s15, 8
    // Predicated region
    $region33: #{residual_forward.3} parent=5 // pred_check
      %p307 = pneg %p306
    $region34: #{residual_forward.3} parent=5 // pred_check_branch
      %309 = sbr.rel (%p307) target = $region36
    $region35: #{residual_forward.3} parent=5 // pred_region
      // Predicated region
      $region37: #{residual_forward.3} parent=35 // pred_check
        %p310 = pneg %p49
      $region38: #{residual_forward.3} parent=35 // pred_check_branch
        %312 = sbr.rel (%p310) target = $region40
      $region39: #{residual_forward.3} parent=35 // pred_region
        %p313 = scmp.lt.s32.totalorder %s22, 1
        %s314 = scalar_select %p313, %s22, 1
        %p315 = scmp.lt.s32.totalorder %s23, 5
        %s316 = scalar_select %p315, %s23, 5
        %s317 = smul.addr %s316, 14
        %s318 = smul.addr %s314, 84
        %s319 = sadd.s32 %s317, %s318
        %s320 = smul.addr %s319, 8
        %s321 = scalar_lea.vmem %s0, %s320
      $region40: #{residual_forward.3} parent=35 // pred_fallthru
        _
      // Predicated region
      $region41: #{residual_forward.3} parent=35 // pred_check
        %p322 = pneg %p79
      $region42: #{residual_forward.3} parent=35 // pred_check_branch
        %324 = sbr.rel (%p322) target = $region44
      $region43: #{residual_forward.3} parent=35 // pred_region
        %s325 = sadd.s32 %s23, 1
        %p326 = scmp.lt.s32.totalorder %s22, 1
        %s327 = scalar_select %p326, %s22, 1
        %p328 = scmp.lt.s32.totalorder %s325, 5
        %s329 = scalar_select %p328, %s325, 5
        %s330 = smul.addr %s329, 14
        %s331 = smul.addr %s327, 84
        %s332 = sadd.s32 %s330, %s331
        %s333 = smul.addr %s332, 8
        %s334 = scalar_lea.vmem %s1, %s333
        %s335 = sadd.s32 %s23, 1
      $region44: #{residual_forward.3} parent=35 // pred_fallthru
        _
      // Predicated region
      $region45: #{residual_forward.3} parent=35 // pred_check
        %p336 = pneg %p109
      $region46: #{residual_forward.3} parent=35 // pred_check_branch
        %338 = sbr.rel (%p336) target = $region48
      $region47: #{residual_forward.3} parent=35 // pred_region
        %s339 = sadd.s32 %s23, 2
        %p340 = scmp.lt.s32.totalorder %s22, 1
        %s341 = scalar_select %p340, %s22, 1
        %p342 = scmp.lt.s32.totalorder %s339, 5
        %s343 = scalar_select %p342, %s339, 5
        %s344 = smul.addr %s343, 14
        %s345 = smul.addr %s341, 84
        %s346 = sadd.s32 %s344, %s345
        %s347 = smul.addr %s346, 8
        %s348 = scalar_lea.vmem %s2, %s347
        %s349 = sadd.s32 %s23, 2
      $region48: #{residual_forward.3} parent=35 // pred_fallthru
        _
      // Predicated region
      $region49: #{residual_forward.3} parent=35 // pred_check
        %p350 = pneg %p137
      $region50: #{residual_forward.3} parent=35 // pred_check_branch
        %352 = sbr.rel (%p350) target = $region52
      $region51: #{residual_forward.3} parent=35 // pred_region
        %p353 = scmp.lt.s32.totalorder %s22, 1
        %s354 = scalar_select %p353, %s22, 1
        %p355 = scmp.lt.s32.totalorder %s23, 3
        %s356 = scalar_select %p355, %s23, 3
        %s357 = smul.addr %s356, 10
        %s358 = smul.addr %s354, 40
        %s359 = sadd.s32 %s357, %s358
        %s360 = smul.addr %s359, 8
        %s361 = scalar_lea.vmem %s3, %s360
      $region52: #{residual_forward.3} parent=35 // pred_fallthru
        _
    $region36: #{residual_forward.3} parent=5 // pred_fallthru
      _
    %p362 = scmp.le.s32.totalorder 1, %s15
    %p363 = scmp.lt.s32.totalorder %s15, 9
    %p364 = pnand %p362, %p363
    %p365 = pneg %p364
    // Predicated region
    $region53: #{residual_forward.3} parent=5 // pred_check
      _
    $region54: #{residual_forward.3} parent=5 // pred_check_branch
      %367 = sbr.rel (%p364) target = $region56
    $region55: #{residual_forward.3} parent=5 // pred_region
      %s368 = ssub.s32 %s15, 1
      %p369 = scmp.lt.s32.totalorder %s24, 1
      %s370 = scalar_select %p369, %s24, 1
      %p371 = scmp.lt.s32.totalorder %s25, 5
      %s372 = scalar_select %p371, %s25, 5
      %s373 = smul.addr %s372, 14
      %s374 = smul.addr %s370, 84
      %s375 = sadd.s32 %s373, %s374
      %s376 = smul.addr %s375, 8
      %s377 = scalar_lea.vmem %s0, %s376
      %p378 = pneg %p55
      %p379 = pneg %p52
      %s380 = sadd.s32 %s25, 1
      %p381 = scmp.lt.s32.totalorder %s24, 1
      %s382 = scalar_select %p381, %s24, 1
      %p383 = scmp.lt.s32.totalorder %s380, 5
      %s384 = scalar_select %p383, %s380, 5
      %s385 = smul.addr %s384, 14
      %s386 = smul.addr %s382, 84
      %s387 = sadd.s32 %s385, %s386
      %s388 = smul.addr %s387, 8
      %s389 = scalar_lea.vmem %s1, %s388
      %p390 = pneg %p85
      %p391 = pneg %p82
      %s392 = sadd.s32 %s25, 2
      %p393 = scmp.lt.s32.totalorder %s24, 1
      %s394 = scalar_select %p393, %s24, 1
      %p395 = scmp.lt.s32.totalorder %s392, 5
      %s396 = scalar_select %p395, %s392, 5
      %s397 = smul.addr %s396, 14
      %s398 = smul.addr %s394, 84
      %s399 = sadd.s32 %s397, %s398
      %s400 = smul.addr %s399, 8
      %s401 = scalar_lea.vmem %s2, %s400
      %p402 = pneg %p115
      %p403 = pneg %p112
      %p404 = scmp.lt.s32.totalorder %s24, 1
      %s405 = scalar_select %p404, %s24, 1
      %p406 = scmp.lt.s32.totalorder %s25, 3
      %s407 = scalar_select %p406, %s25, 3
      %s408 = smul.addr %s407, 10
      %s409 = smul.addr %s405, 40
      %s410 = sadd.s32 %s408, %s409
      %s411 = smul.addr %s410, 8
      %s412 = scalar_lea.vmem %s3, %s411
      %p413 = pneg %p143
      %p414 = pneg %p140
      %p415 = pneg %p164
      %p416 = pneg %p161
      %p417 = pneg %p185
      %p418 = pneg %p182
      %p419 = pneg %p206
      %p420 = pneg %p203
      %p421 = pneg %p227
      %p422 = pneg %p224
      %p423 = pneg %p248
      %p424 = pneg %p245
      %p425 = pneg %p276
      %p426 = pneg %p273
      %p427 = scmp.lt.s32.totalorder %s24, 1
      %s428 = scalar_select %p427, %s24, 1
      %p429 = scmp.lt.s32.totalorder %s25, 3
      %s430 = scalar_select %p429, %s25, 3
      %s431 = smul.addr %s430, 10
      %s432 = smul.addr %s428, 40
      %s433 = sadd.s32 %s431, %s432
      %s434 = smul.addr %s433, 8
      %s435 = scalar_lea.vmem %s9, %s434
      %p436 = scmp.lt.s32.totalorder %s24, 1
      %s437 = scalar_select %p436, %s24, 1
      %p438 = scmp.lt.s32.totalorder %s25, 5
      %s439 = scalar_select %p438, %s25, 5
      %s440 = smul.addr %s439, 14
      %s441 = smul.addr %s437, 84
      %s442 = sadd.s32 %s440, %s441
      %s443 = smul.addr %s442, 8
      %s444 = scalar_lea.vmem %s0, %s443
      %s445 = sadd.s32 %s25, 1
      %p446 = scmp.lt.s32.totalorder %s24, 1
      %s447 = scalar_select %p446, %s24, 1
      %p448 = scmp.lt.s32.totalorder %s445, 5
      %s449 = scalar_select %p448, %s445, 5
      %s450 = smul.addr %s449, 14
      %s451 = smul.addr %s447, 84
      %s452 = sadd.s32 %s450, %s451
      %s453 = smul.addr %s452, 8
      %s454 = scalar_lea.vmem %s1, %s453
      %s455 = sadd.s32 %s25, 1
      %s456 = sadd.s32 %s25, 2
      %p457 = scmp.lt.s32.totalorder %s24, 1
      %s458 = scalar_select %p457, %s24, 1
      %p459 = scmp.lt.s32.totalorder %s456, 5
      %s460 = scalar_select %p459, %s456, 5
      %s461 = smul.addr %s460, 14
      %s462 = smul.addr %s458, 84
      %s463 = sadd.s32 %s461, %s462
      %s464 = smul.addr %s463, 8
      %s465 = scalar_lea.vmem %s2, %s464
      %s466 = sadd.s32 %s25, 2
      %p467 = scmp.lt.s32.totalorder %s24, 1
      %s468 = scalar_select %p467, %s24, 1
      %p469 = scmp.lt.s32.totalorder %s25, 3
      %s470 = scalar_select %p469, %s25, 3
      %s471 = smul.addr %s470, 10
      %s472 = smul.addr %s468, 40
      %s473 = sadd.s32 %s471, %s472
      %s474 = smul.addr %s473, 8
      %s475 = scalar_lea.vmem %s3, %s474
      %p476 = scmp.lt.s32.totalorder %s24, 1
      %s477 = scalar_select %p476, %s24, 1
      %p478 = scmp.lt.s32.totalorder %s25, 3
      %s479 = scalar_select %p478, %s25, 3
      %s480 = smul.addr %s479, 10
      %s481 = smul.addr %s477, 40
      %s482 = sadd.s32 %s480, %s481
      %s483 = smul.addr %s482, 8
      %s484 = scalar_lea.vmem %s9, %s483
      %v485 = vld [vmem:[%s444] sm:$0xff]
      %v486 = vld [vmem:[%s444 + $0x8] sm:$0xff]
      %v487 = vld [vmem:[%s444 + $0x10] sm:$0xff]
      %v488 = vld [vmem:[%s444 + $0x18] sm:$0xff]
      %v489 = vld [vmem:[%s444 + $0x20] sm:$0xff]
      %v490 = vld [vmem:[%s444 + $0x28] sm:$0xff]
      %v491 = vld [vmem:[%s444 + $0x30] sm:$0xff]
      %v492 = vld [vmem:[%s444 + $0x38] sm:$0xff]
      %v493 = vld [vmem:[%s444 + $0x40] sm:$0xff]
      %v494 = vld [vmem:[%s444 + $0x48] sm:$0xff]
      %v495 = vld [vmem:[%s444 + $0x50] sm:$0xff]
      %v496 = vld [vmem:[%s444 + $0x58] sm:$0xff]
      %v497 = vld [vmem:[%s444 + $0x60] sm:$0xff]
      %v498 = vld [vmem:[%s454] sm:$0xff]
      %v499 = vld [vmem:[%s454 + $0x8] sm:$0xff]
      %v500 = vld [vmem:[%s454 + $0x10] sm:$0xff]
      %v501 = vld [vmem:[%s454 + $0x18] sm:$0xff]
      %v502 = vld [vmem:[%s454 + $0x20] sm:$0xff]
      %v503 = vld [vmem:[%s454 + $0x28] sm:$0xff]
      %v504 = vld [vmem:[%s454 + $0x30] sm:$0xff]
      %v505 = vld [vmem:[%s454 + $0x38] sm:$0xff]
      %v506 = vld [vmem:[%s454 + $0x40] sm:$0xff]
      %v507 = vld [vmem:[%s454 + $0x48] sm:$0xff]
      %v508 = vld [vmem:[%s454 + $0x50] sm:$0xff]
      %v509 = vld [vmem:[%s454 + $0x58] sm:$0xff]
      %v510 = vld [vmem:[%s454 + $0x60] sm:$0xff]
      %v511 = vld [vmem:[%s465] sm:$0xff]
      %v512 = vld [vmem:[%s465 + $0x8] sm:$0xff]
      %v513 = vld [vmem:[%s465 + $0x10] sm:$0xff]
      %v514 = vld [vmem:[%s465 + $0x18] sm:$0xff]
      %v515 = vld [vmem:[%s465 + $0x20] sm:$0xff]
      %v516 = vld [vmem:[%s465 + $0x28] sm:$0xff]
      %v517 = vld [vmem:[%s465 + $0x30] sm:$0xff]
      %v518 = vld [vmem:[%s465 + $0x38] sm:$0xff]
      %v519 = vld [vmem:[%s465 + $0x40] sm:$0xff]
      %v520 = vld [vmem:[%s465 + $0x48] sm:$0xff]
      %v521 = vld [vmem:[%s465 + $0x50] sm:$0xff]
      %v522 = vld [vmem:[%s465 + $0x58] sm:$0xff]
      %v523 = vld [vmem:[%s465 + $0x60] sm:$0xff]
      %v524 = vld [vmem:[%s4] sm:$0xf]
      %s525 = scalar_lea.vmem %s4, 4
      %v526 = vld [vmem:[%s525] sm:$0xf]
      %vm538 = vcmask 1046528
      %v539 = vrot.slane %v485, 1
      %v540 = vrot.slane %v486, 1
      %v541 = vsel %vm538, %v539, %v540
      %v542 = vrot.slane %v487, 1
      %v543 = vsel %vm538, %v540, %v542
      %v544 = vrot.slane %v488, 1
      %v545 = vsel %vm538, %v542, %v544
      %v546 = vrot.slane %v489, 1
      %v547 = vsel %vm538, %v544, %v546
      %v548 = vrot.slane %v490, 1
      %v549 = vsel %vm538, %v546, %v548
      %v550 = vrot.slane %v491, 1
      %v551 = vsel %vm538, %v548, %v550
      %v552 = vrot.slane %v492, 1
      %v553 = vsel %vm538, %v550, %v552
      %v554 = vrot.slane %v493, 1
      %v555 = vsel %vm538, %v552, %v554
      %v556 = vrot.slane %v494, 1
      %v557 = vsel %vm538, %v554, %v556
      %v558 = vrot.slane %v495, 1
      %v559 = vsel %vm538, %v556, %v558
      %vm560 = vcmask 31744
      %v561 = vsel %vm560, %v541, 0
      %v563 = vsel %vm560, %v543, 0
      %v565 = vsel %vm560, %v545, 0
      %v567 = vsel %vm560, %v547, 0
      %v569 = vsel %vm560, %v549, 0
      %v571 = vsel %vm560, %v551, 0
      %v573 = vsel %vm560, %v553, 0
      %v575 = vsel %vm560, %v555, 0
      %v577 = vsel %vm560, %v557, 0
      %v579 = vsel %vm560, %v559, 0
      %vm581 = vcmask 1043456
      %v583 = vsel %vm581, %v526, 0
      %585 = vmatprep.subr.mxu0 0.0
      %586 = vmatpush1.msra.mxu0 %v583
      %587 = vmatprep.subr.mxu0 0.0
      %588 = vmatpush1.msra.mxu0 0.0
      %589 = vmatprep.subr.mxu0 0.0
      %590 = vmatpush1.msra.mxu0 0.0
      %591 = vmatprep.subr.mxu0 0.0
      %592 = vmatpush1.msra.mxu0 0.0
      %593 = vmatprep.subr.mxu0 0.0
      %594 = vmatpush1.msra.mxu0 0.0
      %595 = vmatprep.subr.mxu0 0.0
      %596 = vmatpush1.msra.mxu0 0.0
      %597 = vmatprep.subr.mxu0 0.0
      %598 = vmatpush1.msra.mxu0 0.0
      %599 = vmatprep.subr.mxu0 0.0
      %600 = vmatpush1.msra.mxu0 0.0
      %601 = vmatprep.subr.mxu0 0.0
      %602 = vmatpush1.msra.mxu0 0.0
      %603 = vmatprep.subr.mxu0 0.0
      %604 = vmatpush1.msra.mxu0 0.0
      %605 = vmatprep.subr.mxu0 0.0
      %606 = vmatpush1.msra.mxu0 0.0
      %607 = vmatprep.subr.mxu0 0.0
      %608 = vmatpush1.msra.mxu0 0.0
      %609 = vmatprep.subr.mxu0 0.0
      %610 = vmatpush1.msra.mxu0 0.0
      %611 = vmatprep.subr.mxu0 0.0
      %612 = vmatpush1.msra.mxu0 0.0
      %613 = vmatprep.subr.mxu0 0.0
      %614 = vmatpush1.msra.mxu0 0.0
      %615 = vmatprep.subr.mxu0 0.0
      %616 = vmatpush1.msra.mxu0 0.0
      %617 = vmatprep.subr.mxu0 0.0
      %618 = vmatpush1.msra.mxu0 0.0
      %619 = vmatprep.subr.mxu0 0.0
      %620 = vmatpush1.msra.mxu0 0.0
      %621 = vmatprep.subr.mxu0 0.0
      %622 = vmatpush1.msra.mxu0 0.0
      %623 = vmatprep.subr.mxu0 0.0
      %624 = vmatpush1.msra.mxu0 0.0
      %625 = vmatprep.subr.mxu0 0.0
      %626 = vmatpush1.msra.mxu0 0.0
      %627 = vmatprep.subr.mxu0 0.0
      %628 = vmatpush1.msra.mxu0 0.0
      %629 = vmatprep.subr.mxu0 0.0
      %630 = vmatpush1.msra.mxu0 0.0
      %631 = vmatprep.subr.mxu0 0.0
      %632 = vmatpush1.msra.mxu0 0.0
      %633 = vmatprep.subr.mxu0 0.0
      %634 = vmatpush1.msra.mxu0 0.0
      %635 = vmatprep.subr.mxu0 0.0
      %636 = vmatpush1.msra.mxu0 0.0
      %637 = vmatprep.subr.mxu0 0.0
      %638 = vmatpush1.msra.mxu0 0.0
      %639 = vmatprep.subr.mxu0 0.0
      %640 = vmatpush1.msra.mxu0 0.0
      %641 = vmatprep.subr.mxu0 0.0
      %642 = vmatpush1.msra.mxu0 0.0
      %643 = vmatprep.subr.mxu0 0.0
      %644 = vmatpush1.msra.mxu0 0.0
      %645 = vmatprep.subr.mxu0 0.0
      %646 = vmatpush1.msra.mxu0 0.0
      %647 = vmatprep.subr.mxu0 0.0
      %648 = vmatpush1.msra.mxu0 0.0
      %649 = vmatprep.mubr.f32.mxu0 0.0
      %650 = vmatmul.mubr.f32.gmra.mrb[0].mxu0 %v561
      %v651 = vpop.f32.mrb[0].mxu0
      %v652 = vadd.f32 0.0, %v651
      %v653 = vpop.f32.mrb[0].mxu0
      %654 = vmatprep.mubr.f32.mxu0 0.0
      %655 = vmatmul.mubr.f32.gmra.mrb[0].mxu0 %v563
      %v656 = vpop.f32.mrb[0].mxu0
      %v657 = vadd.f32 0.0, %v656
      %v658 = vpop.f32.mrb[0].mxu0
      %659 = vmatprep.mubr.f32.mxu0 0.0
      %660 = vmatmul.mubr.f32.gmra.mrb[0].mxu0 %v565
      %v661 = vpop.f32.mrb[0].mxu0
      %v662 = vadd.f32 0.0, %v661
      %v663 = vpop.f32.mrb[0].mxu0
      %664 = vmatprep.mubr.f32.mxu0 0.0
      %665 = vmatmul.mubr.f32.gmra.mrb[0].mxu0 %v567
      %v666 = vpop.f32.mrb[0].mxu0
      %v667 = vadd.f32 0.0, %v666
      %v668 = vpop.f32.mrb[0].mxu0
      %669 = vmatprep.mubr.f32.mxu0 0.0
      %670 = vmatmul.mubr.f32.gmra.mrb[0].mxu0 %v569
      %v671 = vpop.f32.mrb[0].mxu0
      %v672 = vadd.f32 0.0, %v671
      %v673 = vpop.f32.mrb[0].mxu0
      %674 = vmatprep.mubr.f32.mxu0 0.0
      %675 = vmatmul.mubr.f32.gmra.mrb[0].mxu0 %v571
      %v676 = vpop.f32.mrb[0].mxu0
      %v677 = vadd.f32 0.0, %v676
      %v678 = vpop.f32.mrb[0].mxu0
      %679 = vmatprep.mubr.f32.mxu0 0.0
      %680 = vmatmul.mubr.f32.gmra.mrb[0].mxu0 %v573
      %v681 = vpop.f32.mrb[0].mxu0
      %v682 = vadd.f32 0.0, %v681
      %v683 = vpop.f32.mrb[0].mxu0
      %684 = vmatprep.mubr.f32.mxu0 0.0
      %685 = vmatmul.mubr.f32.gmra.mrb[0].mxu0 %v575
      %v686 = vpop.f32.mrb[0].mxu0
      %v687 = vadd.f32 0.0, %v686
      %v688 = vpop.f32.mrb[0].mxu0
      %689 = vmatprep.mubr.f32.mxu0 0.0
      %690 = vmatmul.mubr.f32.gmra.mrb[0].mxu0 %v577
      %v691 = vpop.f32.mrb[0].mxu0
      %v692 = vadd.f32 0.0, %v691
      %v693 = vpop.f32.mrb[0].mxu0
      %694 = vmatprep.mubr.f32.mxu0 0.0
      %695 = vmatmul.mubr.f32.gmra.mrb[0].mxu0 %v579
      %v696 = vpop.f32.mrb[0].mxu0
      %v697 = vadd.f32 0.0, %v696
      %v698 = vpop.f32.mrb[0].mxu0
      %699 = vdwg.mxu0
      %v700 = vsel %vm560, %v485, 0
      %v702 = vsel %vm560, %v486, 0
      %v704 = vsel %vm560, %v487, 0
      %v706 = vsel %vm560, %v488, 0
      %v708 = vsel %vm560, %v489, 0
      %v710 = vsel %vm560, %v490, 0
      %v712 = vsel %vm560, %v491, 0
      %v714 = vsel %vm560, %v492, 0
      %v716 = vsel %vm560, %v493, 0
      %v718 = vsel %vm560, %v494, 0
      %v721 = vsel %vm581, %v524, 0
      %723 = vmatprep.subr.mxu0 0.0
      %724 = vmatpush1.msra.mxu0 %v721
      %725 = vmatprep.subr.mxu0 0.0
      %726 = vmatpush1.msra.mxu0 0.0
      %727 = vmatprep.subr.mxu0 0.0
      %728 = vmatpush1.msra.mxu0 0.0
      %729 = vmatprep.subr.mxu0 0.0
      %730 = vmatpush1.msra.mxu0 0.0
      %731 = vmatprep.subr.mxu0 0.0
      %732 = vmatpush1.msra.mxu0 0.0
      %733 = vmatprep.subr.mxu0 0.0
      %734 = vmatpush1.msra.mxu0 0.0
      %735 = vmatprep.subr.mxu0 0.0
      %736 = vmatpush1.msra.mxu0 0.0
      %737 = vmatprep.subr.mxu0 0.0
      %738 = vmatpush1.msra.mxu0 0.0
      %739 = vmatprep.subr.mxu0 0.0
      %740 = vmatpush1.msra.mxu0 0.0
      %741 = vmatprep.subr.mxu0 0.0
      %742 = vmatpush1.msra.mxu0 0.0
      %743 = vmatprep.subr.mxu0 0.0
      %744 = vmatpush1.msra.mxu0 0.0
      %745 = vmatprep.subr.mxu0 0.0
      %746 = vmatpush1.msra.mxu0 0.0
      %747 = vmatprep.subr.mxu0 0.0
      %748 = vmatpush1.msra.mxu0 0.0
      %749 = vmatprep.subr.mxu0 0.0
      %750 = vmatpush1.msra.mxu0 0.0
      %751 = vmatprep.subr.mxu0 0.0
      %752 = vmatpush1.msra.mxu0 0.0
      %753 = vmatprep.subr.mxu0 0.0
      %754 = vmatpush1.msra.mxu0 0.0
      %755 = vmatprep.subr.mxu0 0.0
      %756 = vmatpush1.msra.mxu0 0.0
      %757 = vmatprep.subr.mxu0 0.0
      %758 = vmatpush1.msra.mxu0 0.0
      %759 = vmatprep.subr.mxu0 0.0
      %760 = vmatpush1.msra.mxu0 0.0
      %761 = vmatprep.subr.mxu0 0.0
      %762 = vmatpush1.msra.mxu0 0.0
      %763 = vmatprep.subr.mxu0 0.0
      %764 = vmatpush1.msra.mxu0 0.0
      %765 = vmatprep.subr.mxu0 0.0
      %766 = vmatpush1.msra.mxu0 0.0
      %767 = vmatprep.subr.mxu0 0.0
      %768 = vmatpush1.msra.mxu0 0.0
      %769 = vmatprep.subr.mxu0 0.0
      %770 = vmatpush1.msra.mxu0 0.0
      %771 = vmatprep.subr.mxu0 0.0
      %772 = vmatpush1.msra.mxu0 0.0
      %773 = vmatprep.subr.mxu0 0.0
      %774 = vmatpush1.msra.mxu0 0.0
      %775 = vmatprep.subr.mxu0 0.0
      %776 = vmatpush1.msra.mxu0 0.0
      %777 = vmatprep.subr.mxu0 0.0
      %778 = vmatpush1.msra.mxu0 0.0
      %779 = vmatprep.subr.mxu0 0.0
      %780 = vmatpush1.msra.mxu0 0.0
      %781 = vmatprep.subr.mxu0 0.0
      %782 = vmatpush1.msra.mxu0 0.0
      %783 = vmatprep.subr.mxu0 0.0
      %784 = vmatpush1.msra.mxu0 0.0
      %785 = vmatprep.subr.mxu0 0.0
      %786 = vmatpush1.msra.mxu0 0.0
      %787 = vmatprep.mubr.f32.mxu0 0.0
      %788 = vmatmul.mubr.f32.gmra.mrb[0].mxu0 %v700
      %v789 = vpop.f32.mrb[0].mxu0
      %v790 = vadd.f32 %v652, %v789
      %v791 = vpop.f32.mrb[0].mxu0
      %792 = vmatprep.mubr.f32.mxu0 0.0
      %793 = vmatmul.mubr.f32.gmra.mrb[0].mxu0 %v702
      %v794 = vpop.f32.mrb[0].mxu0
      %v795 = vadd.f32 %v657, %v794
      %v796 = vpop.f32.mrb[0].mxu0
      %797 = vmatprep.mubr.f32.mxu0 0.0
      %798 = vmatmul.mubr.f32.gmra.mrb[0].mxu0 %v704
      %v799 = vpop.f32.mrb[0].mxu0
      %v800 = vadd.f32 %v662, %v799
      %v801 = vpop.f32.mrb[0].mxu0
      %802 = vmatprep.mubr.f32.mxu0 0.0
      %803 = vmatmul.mubr.f32.gmra.mrb[0].mxu0 %v706
      %v804 = vpop.f32.mrb[0].mxu0
      %v805 = vadd.f32 %v667, %v804
      %v806 = vpop.f32.mrb[0].mxu0
      %807 = vmatprep.mubr.f32.mxu0 0.0
      %808 = vmatmul.mubr.f32.gmra.mrb[0].mxu0 %v708
      %v809 = vpop.f32.mrb[0].mxu0
      %v810 = vadd.f32 %v672, %v809
      %v811 = vpop.f32.mrb[0].mxu0
      %812 = vmatprep.mubr.f32.mxu0 0.0
      %813 = vmatmul.mubr.f32.gmra.mrb[0].mxu0 %v710
      %v814 = vpop.f32.mrb[0].mxu0
      %v815 = vadd.f32 %v677, %v814
      %v816 = vpop.f32.mrb[0].mxu0
      %817 = vmatprep.mubr.f32.mxu0 0.0
      %818 = vmatmul.mubr.f32.gmra.mrb[0].mxu0 %v712
      %v819 = vpop.f32.mrb[0].mxu0
      %v820 = vadd.f32 %v682, %v819
      %v821 = vpop.f32.mrb[0].mxu0
      %822 = vmatprep.mubr.f32.mxu0 0.0
      %823 = vmatmul.mubr.f32.gmra.mrb[0].mxu0 %v714
      %v824 = vpop.f32.mrb[0].mxu0
      %v825 = vadd.f32 %v687, %v824
      %v826 = vpop.f32.mrb[0].mxu0
      %827 = vmatprep.mubr.f32.mxu0 0.0
      %828 = vmatmul.mubr.f32.gmra.mrb[0].mxu0 %v716
      %v829 = vpop.f32.mrb[0].mxu0
      %v830 = vadd.f32 %v692, %v829
      %v831 = vpop.f32.mrb[0].mxu0
      %832 = vmatprep.mubr.f32.mxu0 0.0
      %833 = vmatmul.mubr.f32.gmra.mrb[0].mxu0 %v718
      %v834 = vpop.f32.mrb[0].mxu0
      %v835 = vadd.f32 %v697, %v834
      %v836 = vpop.f32.mrb[0].mxu0
      %837 = vdwg.mxu0
      %s838 = scalar_lea.vmem %s4, 8
      %v839 = vld [vmem:[%s838] sm:$0xf]
      %vm840 = vcmask 1045504
      %v841 = vrot.slane %v485, 2
      %v842 = vrot.slane %v486, 2
      %v843 = vsel %vm840, %v841, %v842
      %v844 = vrot.slane %v487, 2
      %v845 = vsel %vm840, %v842, %v844
      %v846 = vrot.slane %v488, 2
      %v847 = vsel %vm840, %v844, %v846
      %v848 = vrot.slane %v489, 2
      %v849 = vsel %vm840, %v846, %v848
      %v850 = vrot.slane %v490, 2
      %v851 = vsel %vm840, %v848, %v850
      %v852 = vrot.slane %v491, 2
      %v853 = vsel %vm840, %v850, %v852
      %v854 = vrot.slane %v492, 2
      %v855 = vsel %vm840, %v852, %v854
      %v856 = vrot.slane %v493, 2
      %v857 = vsel %vm840, %v854, %v856
      %v858 = vrot.slane %v494, 2
      %v859 = vsel %vm840, %v856, %v858
      %v860 = vrot.slane %v495, 2
      %v861 = vsel %vm840, %v858, %v860
      %v862 = vsel %vm560, %v843, 0
      %v864 = vsel %vm560, %v845, 0
      %v866 = vsel %vm560, %v847, 0
      %v868 = vsel %vm560, %v849, 0
      %v870 = vsel %vm560, %v851, 0
      %v872 = vsel %vm560, %v853, 0
      %v874 = vsel %vm560, %v855, 0
      %v876 = vsel %vm560, %v857, 0
      %v878 = vsel %vm560, %v859, 0
      %v880 = vsel %vm560, %v861, 0
      %v883 = vsel %vm581, %v839, 0
      %885 = vmatprep.subr.mxu0 0.0
      %886 = vmatpush1.msra.mxu0 %v883
      %887 = vmatprep.subr.mxu0 0.0
      %888 = vmatpush1.msra.mxu0 0.0
      %889 = vmatprep.subr.mxu0 0.0
      %890 = vmatpush1.msra.mxu0 0.0
      %891 = vmatprep.subr.mxu0 0.0
      %892 = vmatpush1.msra.mxu0 0.0
      %893 = vmatprep.subr.mxu0 0.0
      %894 = vmatpush1.msra.mxu0 0.0
      %895 = vmatprep.subr.mxu0 0.0
      %896 = vmatpush1.msra.mxu0 0.0
      %897 = vmatprep.subr.mxu0 0.0
      %898 = vmatpush1.msra.mxu0 0.0
      %899 = vmatprep.subr.mxu0 0.0
      %900 = vmatpush1.msra.mxu0 0.0
      %901 = vmatprep.subr.mxu0 0.0
      %902 = vmatpush1.msra.mxu0 0.0
      %903 = vmatprep.subr.mxu0 0.0
      %904 = vmatpush1.msra.mxu0 0.0
      %905 = vmatprep.subr.mxu0 0.0
      %906 = vmatpush1.msra.mxu0 0.0
      %907 = vmatprep.subr.mxu0 0.0
      %908 = vmatpush1.msra.mxu0 0.0
      %909 = vmatprep.subr.mxu0 0.0
      %910 = vmatpush1.msra.mxu0 0.0
      %911 = vmatprep.subr.mxu0 0.0
      %912 = vmatpush1.msra.mxu0 0.0
      %913 = vmatprep.subr.mxu0 0.0
      %914 = vmatpush1.msra.mxu0 0.0
      %915 = vmatprep.subr.mxu0 0.0
      %916 = vmatpush1.msra.mxu0 0.0
      %917 = vmatprep.subr.mxu0 0.0
      %918 = vmatpush1.msra.mxu0 0.0
      %919 = vmatprep.subr.mxu0 0.0
      %920 = vmatpush1.msra.mxu0 0.0
      %921 = vmatprep.subr.mxu0 0.0
      %922 = vmatpush1.msra.mxu0 0.0
      %923 = vmatprep.subr.mxu0 0.0
      %924 = vmatpush1.msra.mxu0 0.0
      %925 = vmatprep.subr.mxu0 0.0
      %926 = vmatpush1.msra.mxu0 0.0
      %927 = vmatprep.subr.mxu0 0.0
      %928 = vmatpush1.msra.mxu0 0.0
      %929 = vmatprep.subr.mxu0 0.0
      %930 = vmatpush1.msra.mxu0 0.0
      %931 = vmatprep.subr.mxu0 0.0
      %932 = vmatpush1.msra.mxu0 0.0
      %933 = vmatprep.subr.mxu0 0.0
      %934 = vmatpush1.msra.mxu0 0.0
      %935 = vmatprep.subr.mxu0 0.0
      %936 = vmatpush1.msra.mxu0 0.0
      %937 = vmatprep.subr.mxu0 0.0
      %938 = vmatpush1.msra.mxu0 0.0
      %939 = vmatprep.subr.mxu0 0.0
      %940 = vmatpush1.msra.mxu0 0.0
      %941 = vmatprep.subr.mxu0 0.0
      %942 = vmatpush1.msra.mxu0 0.0
      %943 = vmatprep.subr.mxu0 0.0
      %944 = vmatpush1.msra.mxu0 0.0
      %945 = vmatprep.subr.mxu0 0.0
      %946 = vmatpush1.msra.mxu0 0.0
      %947 = vmatprep.subr.mxu0 0.0
      %948 = vmatpush1.msra.mxu0 0.0
      %949 = vmatprep.mubr.f32.mxu0 0.0
      %950 = vmatmul.mubr.f32.gmra.mrb[0].mxu0 %v862
      %v951 = vpop.f32.mrb[0].mxu0
      %v952 = vadd.f32 0.0, %v951
      %v953 = vpop.f32.mrb[0].mxu0
      %954 = vmatprep.mubr.f32.mxu0 0.0
      %955 = vmatmul.mubr.f32.gmra.mrb[0].mxu0 %v864
      %v956 = vpop.f32.mrb[0].mxu0
      %v957 = vadd.f32 0.0, %v956
      %v958 = vpop.f32.mrb[0].mxu0
      %959 = vmatprep.mubr.f32.mxu0 0.0
      %960 = vmatmul.mubr.f32.gmra.mrb[0].mxu0 %v866
      %v961 = vpop.f32.mrb[0].mxu0
      %v962 = vadd.f32 0.0, %v961
      %v963 = vpop.f32.mrb[0].mxu0
      %964 = vmatprep.mubr.f32.mxu0 0.0
      %965 = vmatmul.mubr.f32.gmra.mrb[0].mxu0 %v868
      %v966 = vpop.f32.mrb[0].mxu0
      %v967 = vadd.f32 0.0, %v966
      %v968 = vpop.f32.mrb[0].mxu0
      %969 = vmatprep.mubr.f32.mxu0 0.0
      %970 = vmatmul.mubr.f32.gmra.mrb[0].mxu0 %v870
      %v971 = vpop.f32.mrb[0].mxu0
      %v972 = vadd.f32 0.0, %v971
      %v973 = vpop.f32.mrb[0].mxu0
      %974 = vmatprep.mubr.f32.mxu0 0.0
      %975 = vmatmul.mubr.f32.gmra.mrb[0].mxu0 %v872
      %v976 = vpop.f32.mrb[0].mxu0
      %v977 = vadd.f32 0.0, %v976
      %v978 = vpop.f32.mrb[0].mxu0
      %979 = vmatprep.mubr.f32.mxu0 0.0
      %980 = vmatmul.mubr.f32.gmra.mrb[0].mxu0 %v874
      %v981 = vpop.f32.mrb[0].mxu0
      %v982 = vadd.f32 0.0, %v981
      %v983 = vpop.f32.mrb[0].mxu0
      %984 = vmatprep.mubr.f32.mxu0 0.0
      %985 = vmatmul.mubr.f32.gmra.mrb[0].mxu0 %v876
      %v986 = vpop.f32.mrb[0].mxu0
      %v987 = vadd.f32 0.0, %v986
      %v988 = vpop.f32.mrb[0].mxu0
      %989 = vmatprep.mubr.f32.mxu0 0.0
      %990 = vmatmul.mubr.f32.gmra.mrb[0].mxu0 %v878
      %v991 = vpop.f32.mrb[0].mxu0
      %v992 = vadd.f32 0.0, %v991
      %v993 = vpop.f32.mrb[0].mxu0
      %994 = vmatprep.mubr.f32.mxu0 0.0
      %995 = vmatmul.mubr.f32.gmra.mrb[0].mxu0 %v880
      %v996 = vpop.f32.mrb[0].mxu0
      %v997 = vadd.f32 0.0, %v996
      %v998 = vpop.f32.mrb[0].mxu0
      %999 = vdwg.mxu0
      %v1000 = vadd.f32 %v790, %v952
      %v1001 = vadd.f32 %v795, %v957
      %v1002 = vadd.f32 %v800, %v962
      %v1003 = vadd.f32 %v805, %v967
      %v1004 = vadd.f32 %v810, %v972
      %v1005 = vadd.f32 %v815, %v977
      %v1006 = vadd.f32 %v820, %v982
      %v1007 = vadd.f32 %v825, %v987
      %v1008 = vadd.f32 %v830, %v992
      %v1009 = vadd.f32 %v835, %v997
      %s1010 = scalar_lea.vmem %s4, 12
      %v1011 = vld [vmem:[%s1010] sm:$0xf]
      %v1013 = vrot.slane %v496, 2
      %v1014 = vsel %vm840, %v860, %v1013
      %v1015 = vsel %vm560, %v1014, 0
      %v1018 = vsel %vm581, %v1011, 0
      %1020 = vmatprep.subr.mxu0 0.0
      %1021 = vmatpush1.msra.mxu0 %v1018
      %1022 = vmatprep.subr.mxu0 0.0
      %1023 = vmatpush1.msra.mxu0 0.0
      %1024 = vmatprep.subr.mxu0 0.0
      %1025 = vmatpush1.msra.mxu0 0.0
      %1026 = vmatprep.subr.mxu0 0.0
      %1027 = vmatpush1.msra.mxu0 0.0
      %1028 = vmatprep.subr.mxu0 0.0
      %1029 = vmatpush1.msra.mxu0 0.0
      %1030 = vmatprep.subr.mxu0 0.0
      %1031 = vmatpush1.msra.mxu0 0.0
      %1032 = vmatprep.subr.mxu0 0.0
      %1033 = vmatpush1.msra.mxu0 0.0
      %1034 = vmatprep.subr.mxu0 0.0
      %1035 = vmatpush1.msra.mxu0 0.0
      %1036 = vmatprep.subr.mxu0 0.0
      %1037 = vmatpush1.msra.mxu0 0.0
      %1038 = vmatprep.subr.mxu0 0.0
      %1039 = vmatpush1.msra.mxu0 0.0
      %1040 = vmatprep.subr.mxu0 0.0
      %1041 = vmatpush1.msra.mxu0 0.0
      %1042 = vmatprep.subr.mxu0 0.0
      %1043 = vmatpush1.msra.mxu0 0.0
      %1044 = vmatprep.subr.mxu0 0.0
      %1045 = vmatpush1.msra.mxu0 0.0
      %1046 = vmatprep.subr.mxu0 0.0
      %1047 = vmatpush1.msra.mxu0 0.0
      %1048 = vmatprep.subr.mxu0 0.0
      %1049 = vmatpush1.msra.mxu0 0.0
      %1050 = vmatprep.subr.mxu0 0.0
      %1051 = vmatpush1.msra.mxu0 0.0
      %1052 = vmatprep.subr.mxu0 0.0
      %1053 = vmatpush1.msra.mxu0 0.0
      %1054 = vmatprep.subr.mxu0 0.0
      %1055 = vmatpush1.msra.mxu0 0.0
      %1056 = vmatprep.subr.mxu0 0.0
      %1057 = vmatpush1.msra.mxu0 0.0
      %1058 = vmatprep.subr.mxu0 0.0
      %1059 = vmatpush1.msra.mxu0 0.0
      %1060 = vmatprep.subr.mxu0 0.0
      %1061 = vmatpush1.msra.mxu0 0.0
      %1062 = vmatprep.subr.mxu0 0.0
      %1063 = vmatpush1.msra.mxu0 0.0
      %1064 = vmatprep.subr.mxu0 0.0
      %1065 = vmatpush1.msra.mxu0 0.0
      %1066 = vmatprep.subr.mxu0 0.0
      %1067 = vmatpush1.msra.mxu0 0.0
      %1068 = vmatprep.subr.mxu0 0.0
      %1069 = vmatpush1.msra.mxu0 0.0
      %1070 = vmatprep.subr.mxu0 0.0
      %1071 = vmatpush1.msra.mxu0 0.0
      %1072 = vmatprep.subr.mxu0 0.0
      %1073 = vmatpush1.msra.mxu0 0.0
      %1074 = vmatprep.subr.mxu0 0.0
      %1075 = vmatpush1.msra.mxu0 0.0
      %1076 = vmatprep.subr.mxu0 0.0
      %1077 = vmatpush1.msra.mxu0 0.0
      %1078 = vmatprep.subr.mxu0 0.0
      %1079 = vmatpush1.msra.mxu0 0.0
      %1080 = vmatprep.subr.mxu0 0.0
      %1081 = vmatpush1.msra.mxu0 0.0
      %1082 = vmatprep.subr.mxu0 0.0
      %1083 = vmatpush1.msra.mxu0 0.0
      %1084 = vmatprep.mubr.f32.mxu0 0.0
      %1085 = vmatmul.mubr.f32.gmra.mrb[0].mxu0 %v864
      %v1086 = vpop.f32.mrb[0].mxu0
      %v1087 = vadd.f32 0.0, %v1086
      %v1088 = vpop.f32.mrb[0].mxu0
      %1089 = vmatprep.mubr.f32.mxu0 0.0
      %1090 = vmatmul.mubr.f32.gmra.mrb[0].mxu0 %v866
      %v1091 = vpop.f32.mrb[0].mxu0
      %v1092 = vadd.f32 0.0, %v1091
      %v1093 = vpop.f32.mrb[0].mxu0
      %1094 = vmatprep.mubr.f32.mxu0 0.0
      %1095 = vmatmul.mubr.f32.gmra.mrb[0].mxu0 %v868
      %v1096 = vpop.f32.mrb[0].mxu0
      %v1097 = vadd.f32 0.0, %v1096
      %v1098 = vpop.f32.mrb[0].mxu0
      %1099 = vmatprep.mubr.f32.mxu0 0.0
      %1100 = vmatmul.mubr.f32.gmra.mrb[0].mxu0 %v870
      %v1101 = vpop.f32.mrb[0].mxu0
      %v1102 = vadd.f32 0.0, %v1101
      %v1103 = vpop.f32.mrb[0].mxu0
      %1104 = vmatprep.mubr.f32.mxu0 0.0
      %1105 = vmatmul.mubr.f32.gmra.mrb[0].mxu0 %v872
      %v1106 = vpop.f32.mrb[0].mxu0
      %v1107 = vadd.f32 0.0, %v1106
      %v1108 = vpop.f32.mrb[0].mxu0
      %1109 = vmatprep.mubr.f32.mxu0 0.0
      %1110 = vmatmul.mubr.f32.gmra.mrb[0].mxu0 %v874
      %v1111 = vpop.f32.mrb[0].mxu0
      %v1112 = vadd.f32 0.0, %v1111
      %v1113 = vpop.f32.mrb[0].mxu0
      %1114 = vmatprep.mubr.f32.mxu0 0.0
      %1115 = vmatmul.mubr.f32.gmra.mrb[0].mxu0 %v876
      %v1116 = vpop.f32.mrb[0].mxu0
      %v1117 = vadd.f32 0.0, %v1116
      %v1118 = vpop.f32.mrb[0].mxu0
      %1119 = vmatprep.mubr.f32.mxu0 0.0
      %1120 = vmatmul.mubr.f32.gmra.mrb[0].mxu0 %v878
      %v1121 = vpop.f32.mrb[0].mxu0
      %v1122 = vadd.f32 0.0, %v1121
      %v1123 = vpop.f32.mrb[0].mxu0
      %1124 = vmatprep.mubr.f32.mxu0 0.0
      %1125 = vmatmul.mubr.f32.gmra.mrb[0].mxu0 %v880
      %v1126 = vpop.f32.mrb[0].mxu0
      %v1127 = vadd.f32 0.0, %v1126
      %v1128 = vpop.f32.mrb[0].mxu0
      %1129 = vmatprep.mubr.f32.mxu0 0.0
      %1130 = vmatmul.mubr.f32.gmra.mrb[0].mxu0 %v1015
      %v1131 = vpop.f32.mrb[0].mxu0
      %v1132 = vadd.f32 0.0, %v1131
      %v1133 = vpop.f32.mrb[0].mxu0
      %1134 = vdwg.mxu0
      %v1135 = vadd.f32 %v1000, %v1087
      %v1136 = vadd.f32 %v1001, %v1092
      %v1137 = vadd.f32 %v1002, %v1097
      %v1138 = vadd.f32 %v1003, %v1102
      %v1139 = vadd.f32 %v1004, %v1107
      %v1140 = vadd.f32 %v1005, %v1112
      %v1141 = vadd.f32 %v1006, %v1117
      %v1142 = vadd.f32 %v1007, %v1122
      %v1143 = vadd.f32 %v1008, %v1127
      %v1144 = vadd.f32 %v1009, %v1132
      %s1145 = scalar_lea.vmem %s4, 16
      %v1146 = vld [vmem:[%s1145] sm:$0xf]
      %vm1147 = vcmask 1044480
      %v1148 = vrot.slane %v486, 3
      %v1149 = vrot.slane %v487, 3
      %v1150 = vsel %vm1147, %v1148, %v1149
      %v1151 = vrot.slane %v488, 3
      %v1152 = vsel %vm1147, %v1149, %v1151
      %v1153 = vrot.slane %v489, 3
      %v1154 = vsel %vm1147, %v1151, %v1153
      %v1155 = vrot.slane %v490, 3
      %v1156 = vsel %vm1147, %v1153, %v1155
      %v1157 = vrot.slane %v491, 3
      %v1158 = vsel %vm1147, %v1155, %v1157
      %v1159 = vrot.slane %v492, 3
      %v1160 = vsel %vm1147, %v1157, %v1159
      %v1161 = vrot.slane %v493, 3
      %v1162 = vsel %vm1147, %v1159, %v1161
      %v1163 = vrot.slane %v494, 3
      %v1164 = vsel %vm1147, %v1161, %v1163
      %v1165 = vrot.slane %v495, 3
      %v1166 = vsel %vm1147, %v1163, %v1165
      %v1167 = vrot.slane %v496, 3
      %v1168 = vsel %vm1147, %v1165, %v1167
      %v1169 = vsel %vm560, %v1150, 0
      %v1171 = vsel %vm560, %v1152, 0
      %v1173 = vsel %vm560, %v1154, 0
      %v1175 = vsel %vm560, %v1156, 0
      %v1177 = vsel %vm560, %v1158, 0
      %v1179 = vsel %vm560, %v1160, 0
      %v1181 = vsel %vm560, %v1162, 0
      %v1183 = vsel %vm560, %v1164, 0
      %v1185 = vsel %vm560, %v1166, 0
      %v1187 = vsel %vm560, %v1168, 0
      %v1190 = vsel %vm581, %v1146, 0
      %1192 = vmatprep.subr.mxu0 0.0
      %1193 = vmatpush1.msra.mxu0 %v1190
      %1194 = vmatprep.subr.mxu0 0.0
      %1195 = vmatpush1.msra.mxu0 0.0
      %1196 = vmatprep.subr.mxu0 0.0
      %1197 = vmatpush1.msra.mxu0 0.0
      %1198 = vmatprep.subr.mxu0 0.0
      %1199 = vmatpush1.msra.mxu0 0.0
      %1200 = vmatprep.subr.mxu0 0.0
      %1201 = vmatpush1.msra.mxu0 0.0
      %1202 = vmatprep.subr.mxu0 0.0
      %1203 = vmatpush1.msra.mxu0 0.0
      %1204 = vmatprep.subr.mxu0 0.0
      %1205 = vmatpush1.msra.mxu0 0.0
      %1206 = vmatprep.subr.mxu0 0.0
      %1207 = vmatpush1.msra.mxu0 0.0
      %1208 = vmatprep.subr.mxu0 0.0
      %1209 = vmatpush1.msra.mxu0 0.0
      %1210 = vmatprep.subr.mxu0 0.0
      %1211 = vmatpush1.msra.mxu0 0.0
      %1212 = vmatprep.subr.mxu0 0.0
      %1213 = vmatpush1.msra.mxu0 0.0
      %1214 = vmatprep.subr.mxu0 0.0
      %1215 = vmatpush1.msra.mxu0 0.0
      %1216 = vmatprep.subr.mxu0 0.0
      %1217 = vmatpush1.msra.mxu0 0.0
      %1218 = vmatprep.subr.mxu0 0.0
      %1219 = vmatpush1.msra.mxu0 0.0
      %1220 = vmatprep.subr.mxu0 0.0
      %1221 = vmatpush1.msra.mxu0 0.0
      %1222 = vmatprep.subr.mxu0 0.0
      %1223 = vmatpush1.msra.mxu0 0.0
      %1224 = vmatprep.subr.mxu0 0.0
      %1225 = vmatpush1.msra.mxu0 0.0
      %1226 = vmatprep.subr.mxu0 0.0
      %1227 = vmatpush1.msra.mxu0 0.0
      %1228 = vmatprep.subr.mxu0 0.0
      %1229 = vmatpush1.msra.mxu0 0.0
      %1230 = vmatprep.subr.mxu0 0.0
      %1231 = vmatpush1.msra.mxu0 0.0
      %1232 = vmatprep.subr.mxu0 0.0
      %1233 = vmatpush1.msra.mxu0 0.0
      %1234 = vmatprep.subr.mxu0 0.0
      %1235 = vmatpush1.msra.mxu0 0.0
      %1236 = vmatprep.subr.mxu0 0.0
      %1237 = vmatpush1.msra.mxu0 0.0
      %1238 = vmatprep.subr.mxu0 0.0
      %1239 = vmatpush1.msra.mxu0 0.0
      %1240 = vmatprep.subr.mxu0 0.0
      %1241 = vmatpush1.msra.mxu0 0.0
      %1242 = vmatprep.subr.mxu0 0.0
      %1243 = vmatpush1.msra.mxu0 0.0
      %1244 = vmatprep.subr.mxu0 0.0
      %1245 = vmatpush1.msra.mxu0 0.0
      %1246 = vmatprep.subr.mxu0 0.0
      %1247 = vmatpush1.msra.mxu0 0.0
      %1248 = vmatprep.subr.mxu0 0.0
      %1249 = vmatpush1.msra.mxu0 0.0
      %1250 = vmatprep.subr.mxu0 0.0
      %1251 = vmatpush1.msra.mxu0 0.0
      %1252 = vmatprep.subr.mxu0 0.0
      %1253 = vmatpush1.msra.mxu0 0.0
      %1254 = vmatprep.subr.mxu0 0.0
      %1255 = vmatpush1.msra.mxu0 0.0
      %1256 = vmatprep.mubr.f32.mxu0 0.0
      %1257 = vmatmul.mubr.f32.gmra.mrb[0].mxu0 %v1169
      %v1258 = vpop.f32.mrb[0].mxu0
      %v1259 = vadd.f32 0.0, %v1258
      %v1260 = vpop.f32.mrb[0].mxu0
      %1261 = vmatprep.mubr.f32.mxu0 0.0
      %1262 = vmatmul.mubr.f32.gmra.mrb[0].mxu0 %v1171
      %v1263 = vpop.f32.mrb[0].mxu0
      %v1264 = vadd.f32 0.0, %v1263
      %v1265 = vpop.f32.mrb[0].mxu0
      %1266 = vmatprep.mubr.f32.mxu0 0.0
      %1267 = vmatmul.mubr.f32.gmra.mrb[0].mxu0 %v1173
      %v1268 = vpop.f32.mrb[0].mxu0
      %v1269 = vadd.f32 0.0, %v1268
      %v1270 = vpop.f32.mrb[0].mxu0
      %1271 = vmatprep.mubr.f32.mxu0 0.0
      %1272 = vmatmul.mubr.f32.gmra.mrb[0].mxu0 %v1175
      %v1273 = vpop.f32.mrb[0].mxu0
      %v1274 = vadd.f32 0.0, %v1273
      %v1275 = vpop.f32.mrb[0].mxu0
      %1276 = vmatprep.mubr.f32.mxu0 0.0
      %1277 = vmatmul.mubr.f32.gmra.mrb[0].mxu0 %v1177
      %v1278 = vpop.f32.mrb[0].mxu0
      %v1279 = vadd.f32 0.0, %v1278
      %v1280 = vpop.f32.mrb[0].mxu0
      %1281 = vmatprep.mubr.f32.mxu0 0.0
      %1282 = vmatmul.mubr.f32.gmra.mrb[0].mxu0 %v1179
      %v1283 = vpop.f32.mrb[0].mxu0
      %v1284 = vadd.f32 0.0, %v1283
      %v1285 = vpop.f32.mrb[0].mxu0
      %1286 = vmatprep.mubr.f32.mxu0 0.0
      %1287 = vmatmul.mubr.f32.gmra.mrb[0].mxu0 %v1181
      %v1288 = vpop.f32.mrb[0].mxu0
      %v1289 = vadd.f32 0.0, %v1288
      %v1290 = vpop.f32.mrb[0].mxu0
      %1291 = vmatprep.mubr.f32.mxu0 0.0
      %1292 = vmatmul.mubr.f32.gmra.mrb[0].mxu0 %v1183
      %v1293 = vpop.f32.mrb[0].mxu0
      %v1294 = vadd.f32 0.0, %v1293
      %v1295 = vpop.f32.mrb[0].mxu0
      %1296 = vmatprep.mubr.f32.mxu0 0.0
      %1297 = vmatmul.mubr.f32.gmra.mrb[0].mxu0 %v1185
      %v1298 = vpop.f32.mrb[0].mxu0
      %v1299 = vadd.f32 0.0, %v1298
      %v1300 = vpop.f32.mrb[0].mxu0
      %1301 = vmatprep.mubr.f32.mxu0 0.0
      %1302 = vmatmul.mubr.f32.gmra.mrb[0].mxu0 %v1187
      %v1303 = vpop.f32.mrb[0].mxu0
      %v1304 = vadd.f32 0.0, %v1303
      %v1305 = vpop.f32.mrb[0].mxu0
      %1306 = vdwg.mxu0
      %v1307 = vadd.f32 %v1135, %v1259
      %v1308 = vadd.f32 %v1136, %v1264
      %v1309 = vadd.f32 %v1137, %v1269
      %v1310 = vadd.f32 %v1138, %v1274
      %v1311 = vadd.f32 %v1139, %v1279
      %v1312 = vadd.f32 %v1140, %v1284
      %v1313 = vadd.f32 %v1141, %v1289
      %v1314 = vadd.f32 %v1142, %v1294
      %v1315 = vadd.f32 %v1143, %v1299
      %v1316 = vadd.f32 %v1144, %v1304
      %s1317 = scalar_lea.vmem %s4, 20
      %v1318 = vld [vmem:[%s1317] sm:$0xf]
      %v1319 = vrot.slane %v486, 4
      %v1320 = vrot.slane %v487, 4
      %v1321 = vsel %vm581, %v1319, %v1320
      %v1322 = vrot.slane %v488, 4
      %v1323 = vsel %vm581, %v1320, %v1322
      %v1324 = vrot.slane %v489, 4
      %v1325 = vsel %vm581, %v1322, %v1324
      %v1326 = vrot.slane %v490, 4
      %v1327 = vsel %vm581, %v1324, %v1326
      %v1328 = vrot.slane %v491, 4
      %v1329 = vsel %vm581, %v1326, %v1328
      %v1330 = vrot.slane %v492, 4
      %v1331 = vsel %vm581, %v1328, %v1330
      %v1332 = vrot.slane %v493, 4
      %v1333 = vsel %vm581, %v1330, %v1332
      %v1334 = vrot.slane %v494, 4
      %v1335 = vsel %vm581, %v1332, %v1334
      %v1336 = vrot.slane %v495, 4
      %v1337 = vsel %vm581, %v1334, %v1336
      %v1338 = vrot.slane %v496, 4
      %v1339 = vsel %vm581, %v1336, %v1338
      %v1340 = vsel %vm560, %v1321, 0
      %v1342 = vsel %vm560, %v1323, 0
      %v1344 = vsel %vm560, %v1325, 0
      %v1346 = vsel %vm560, %v1327, 0
      %v1348 = vsel %vm560, %v1329, 0
      %v1350 = vsel %vm560, %v1331, 0
      %v1352 = vsel %vm560, %v1333, 0
      %v1354 = vsel %vm560, %v1335, 0
      %v1356 = vsel %vm560, %v1337, 0
      %v1358 = vsel %vm560, %v1339, 0
      %v1361 = vsel %vm581, %v1318, 0
      %1363 = vmatprep.subr.mxu0 0.0
      %1364 = vmatpush1.msra.mxu0 %v1361
      %1365 = vmatprep.subr.mxu0 0.0
      %1366 = vmatpush1.msra.mxu0 0.0
      %1367 = vmatprep.subr.mxu0 0.0
      %1368 = vmatpush1.msra.mxu0 0.0
      %1369 = vmatprep.subr.mxu0 0.0
      %1370 = vmatpush1.msra.mxu0 0.0
      %1371 = vmatprep.subr.mxu0 0.0
      %1372 = vmatpush1.msra.mxu0 0.0
      %1373 = vmatprep.subr.mxu0 0.0
      %1374 = vmatpush1.msra.mxu0 0.0
      %1375 = vmatprep.subr.mxu0 0.0
      %1376 = vmatpush1.msra.mxu0 0.0
      %1377 = vmatprep.subr.mxu0 0.0
      %1378 = vmatpush1.msra.mxu0 0.0
      %1379 = vmatprep.subr.mxu0 0.0
      %1380 = vmatpush1.msra.mxu0 0.0
      %1381 = vmatprep.subr.mxu0 0.0
      %1382 = vmatpush1.msra.mxu0 0.0
      %1383 = vmatprep.subr.mxu0 0.0
      %1384 = vmatpush1.msra.mxu0 0.0
      %1385 = vmatprep.subr.mxu0 0.0
      %1386 = vmatpush1.msra.mxu0 0.0
      %1387 = vmatprep.subr.mxu0 0.0
      %1388 = vmatpush1.msra.mxu0 0.0
      %1389 = vmatprep.subr.mxu0 0.0
      %1390 = vmatpush1.msra.mxu0 0.0
      %1391 = vmatprep.subr.mxu0 0.0
      %1392 = vmatpush1.msra.mxu0 0.0
      %1393 = vmatprep.subr.mxu0 0.0
      %1394 = vmatpush1.msra.mxu0 0.0
      %1395 = vmatprep.subr.mxu0 0.0
      %1396 = vmatpush1.msra.mxu0 0.0
      %1397 = vmatprep.subr.mxu0 0.0
      %1398 = vmatpush1.msra.mxu0 0.0
      %1399 = vmatprep.subr.mxu0 0.0
      %1400 = vmatpush1.msra.mxu0 0.0
      %1401 = vmatprep.subr.mxu0 0.0
      %1402 = vmatpush1.msra.mxu0 0.0
      %1403 = vmatprep.subr.mxu0 0.0
      %1404 = vmatpush1.msra.mxu0 0.0
      %1405 = vmatprep.subr.mxu0 0.0
      %1406 = vmatpush1.msra.mxu0 0.0
      %1407 = vmatprep.subr.mxu0 0.0
      %1408 = vmatpush1.msra.mxu0 0.0
      %1409 = vmatprep.subr.mxu0 0.0
      %1410 = vmatpush1.msra.mxu0 0.0
      %1411 = vmatprep.subr.mxu0 0.0
      %1412 = vmatpush1.msra.mxu0 0.0
      %1413 = vmatprep.subr.mxu0 0.0
      %1414 = vmatpush1.msra.mxu0 0.0
      %1415 = vmatprep.subr.mxu0 0.0
      %1416 = vmatpush1.msra.mxu0 0.0
      %1417 = vmatprep.subr.mxu0 0.0
      %1418 = vmatpush1.msra.mxu0 0.0
      %1419 = vmatprep.subr.mxu0 0.0
      %1420 = vmatpush1.msra.mxu0 0.0
      %1421 = vmatprep.subr.mxu0 0.0
      %1422 = vmatpush1.msra.mxu0 0.0
      %1423 = vmatprep.subr.mxu0 0.0
      %1424 = vmatpush1.msra.mxu0 0.0
      %1425 = vmatprep.subr.mxu0 0.0
      %1426 = vmatpush1.msra.mxu0 0.0
      %1427 = vmatprep.mubr.f32.mxu0 0.0
      %1428 = vmatmul.mubr.f32.gmra.mrb[0].mxu0 %v1340
      %v1429 = vpop.f32.mrb[0].mxu0
      %v1430 = vadd.f32 0.0, %v1429
      %v1431 = vpop.f32.mrb[0].mxu0
      %1432 = vmatprep.mubr.f32.mxu0 0.0
      %1433 = vmatmul.mubr.f32.gmra.mrb[0].mxu0 %v1342
      %v1434 = vpop.f32.mrb[0].mxu0
      %v1435 = vadd.f32 0.0, %v1434
      %v1436 = vpop.f32.mrb[0].mxu0
      %1437 = vmatprep.mubr.f32.mxu0 0.0
      %1438 = vmatmul.mubr.f32.gmra.mrb[0].mxu0 %v1344
      %v1439 = vpop.f32.mrb[0].mxu0
      %v1440 = vadd.f32 0.0, %v1439
      %v1441 = vpop.f32.mrb[0].mxu0
      %1442 = vmatprep.mubr.f32.mxu0 0.0
      %1443 = vmatmul.mubr.f32.gmra.mrb[0].mxu0 %v1346
      %v1444 = vpop.f32.mrb[0].mxu0
      %v1445 = vadd.f32 0.0, %v1444
      %v1446 = vpop.f32.mrb[0].mxu0
      %1447 = vmatprep.mubr.f32.mxu0 0.0
      %1448 = vmatmul.mubr.f32.gmra.mrb[0].mxu0 %v1348
      %v1449 = vpop.f32.mrb[0].mxu0
      %v1450 = vadd.f32 0.0, %v1449
      %v1451 = vpop.f32.mrb[0].mxu0
      %1452 = vmatprep.mubr.f32.mxu0 0.0
      %1453 = vmatmul.mubr.f32.gmra.mrb[0].mxu0 %v1350
      %v1454 = vpop.f32.mrb[0].mxu0
      %v1455 = vadd.f32 0.0, %v1454
      %v1456 = vpop.f32.mrb[0].mxu0
      %1457 = vmatprep.mubr.f32.mxu0 0.0
      %1458 = vmatmul.mubr.f32.gmra.mrb[0].mxu0 %v1352
      %v1459 = vpop.f32.mrb[0].mxu0
      %v1460 = vadd.f32 0.0, %v1459
      %v1461 = vpop.f32.mrb[0].mxu0
      %1462 = vmatprep.mubr.f32.mxu0 0.0
      %1463 = vmatmul.mubr.f32.gmra.mrb[0].mxu0 %v1354
      %v1464 = vpop.f32.mrb[0].mxu0
      %v1465 = vadd.f32 0.0, %v1464
      %v1466 = vpop.f32.mrb[0].mxu0
      %1467 = vmatprep.mubr.f32.mxu0 0.0
      %1468 = vmatmul.mubr.f32.gmra.mrb[0].mxu0 %v1356
      %v1469 = vpop.f32.mrb[0].mxu0
      %v1470 = vadd.f32 0.0, %v1469
      %v1471 = vpop.f32.mrb[0].mxu0
      %1472 = vmatprep.mubr.f32.mxu0 0.0
      %1473 = vmatmul.mubr.f32.gmra.mrb[0].mxu0 %v1358
      %v1474 = vpop.f32.mrb[0].mxu0
      %v1475 = vadd.f32 0.0, %v1474
      %v1476 = vpop.f32.mrb[0].mxu0
      %1477 = vdwg.mxu0
      %v1478 = vadd.f32 %v1307, %v1430
      %v1479 = vadd.f32 %v1308, %v1435
      %v1480 = vadd.f32 %v1309, %v1440
      %v1481 = vadd.f32 %v1310, %v1445
      %v1482 = vadd.f32 %v1311, %v1450
      %v1483 = vadd.f32 %v1312, %v1455
      %v1484 = vadd.f32 %v1313, %v1460
      %v1485 = vadd.f32 %v1314, %v1465
      %v1486 = vadd.f32 %v1315, %v1470
      %v1487 = vadd.f32 %v1316, %v1475
      %s1488 = scalar_lea.vmem %s4, 24
      %v1489 = vld [vmem:[%s1488] sm:$0xf]
      %v1491 = vrot.slane %v497, 4
      %v1492 = vsel %vm581, %v1338, %v1491
      %v1493 = vsel %vm560, %v1492, 0
      %v1496 = vsel %vm581, %v1489, 0
      %1498 = vmatprep.subr.mxu0 0.0
      %1499 = vmatpush1.msra.mxu0 %v1496
      %1500 = vmatprep.subr.mxu0 0.0
      %1501 = vmatpush1.msra.mxu0 0.0
      %1502 = vmatprep.subr.mxu0 0.0
      %1503 = vmatpush1.msra.mxu0 0.0
      %1504 = vmatprep.subr.mxu0 0.0
      %1505 = vmatpush1.msra.mxu0 0.0
      %1506 = vmatprep.subr.mxu0 0.0
      %1507 = vmatpush1.msra.mxu0 0.0
      %1508 = vmatprep.subr.mxu0 0.0
      %1509 = vmatpush1.msra.mxu0 0.0
      %1510 = vmatprep.subr.mxu0 0.0
      %1511 = vmatpush1.msra.mxu0 0.0
      %1512 = vmatprep.subr.mxu0 0.0
      %1513 = vmatpush1.msra.mxu0 0.0
      %1514 = vmatprep.subr.mxu0 0.0
      %1515 = vmatpush1.msra.mxu0 0.0
      %1516 = vmatprep.subr.mxu0 0.0
      %1517 = vmatpush1.msra.mxu0 0.0
      %1518 = vmatprep.subr.mxu0 0.0
      %1519 = vmatpush1.msra.mxu0 0.0
      %1520 = vmatprep.subr.mxu0 0.0
      %1521 = vmatpush1.msra.mxu0 0.0
      %1522 = vmatprep.subr.mxu0 0.0
      %1523 = vmatpush1.msra.mxu0 0.0
      %1524 = vmatprep.subr.mxu0 0.0
      %1525 = vmatpush1.msra.mxu0 0.0
      %1526 = vmatprep.subr.mxu0 0.0
      %1527 = vmatpush1.msra.mxu0 0.0
      %1528 = vmatprep.subr.mxu0 0.0
      %1529 = vmatpush1.msra.mxu0 0.0
      %1530 = vmatprep.subr.mxu0 0.0
      %1531 = vmatpush1.msra.mxu0 0.0
      %1532 = vmatprep.subr.mxu0 0.0
      %1533 = vmatpush1.msra.mxu0 0.0
      %1534 = vmatprep.subr.mxu0 0.0
      %1535 = vmatpush1.msra.mxu0 0.0
      %1536 = vmatprep.subr.mxu0 0.0
      %1537 = vmatpush1.msra.mxu0 0.0
      %1538 = vmatprep.subr.mxu0 0.0
      %1539 = vmatpush1.msra.mxu0 0.0
      %1540 = vmatprep.subr.mxu0 0.0
      %1541 = vmatpush1.msra.mxu0 0.0
      %1542 = vmatprep.subr.mxu0 0.0
      %1543 = vmatpush1.msra.mxu0 0.0
      %1544 = vmatprep.subr.mxu0 0.0
      %1545 = vmatpush1.msra.mxu0 0.0
      %1546 = vmatprep.subr.mxu0 0.0
      %1547 = vmatpush1.msra.mxu0 0.0
      %1548 = vmatprep.subr.mxu0 0.0
      %1549 = vmatpush1.msra.mxu0 0.0
      %1550 = vmatprep.subr.mxu0 0.0
      %1551 = vmatpush1.msra.mxu0 0.0
      %1552 = vmatprep.subr.mxu0 0.0
      %1553 = vmatpush1.msra.mxu0 0.0
      %1554 = vmatprep.subr.mxu0 0.0
      %1555 = vmatpush1.msra.mxu0 0.0
      %1556 = vmatprep.subr.mxu0 0.0
      %1557 = vmatpush1.msra.mxu0 0.0
      %1558 = vmatprep.subr.mxu0 0.0
      %1559 = vmatpush1.msra.mxu0 0.0
      %1560 = vmatprep.subr.mxu0 0.0
      %1561 = vmatpush1.msra.mxu0 0.0
      %1562 = vmatprep.mubr.f32.mxu0 0.0
      %1563 = vmatmul.mubr.f32.gmra.mrb[0].mxu0 %v1342
      %v1564 = vpop.f32.mrb[0].mxu0
      %v1565 = vadd.f32 0.0, %v1564
      %v1566 = vpop.f32.mrb[0].mxu0
      %1567 = vmatprep.mubr.f32.mxu0 0.0
      %1568 = vmatmul.mubr.f32.gmra.mrb[0].mxu0 %v1344
      %v1569 = vpop.f32.mrb[0].mxu0
      %v1570 = vadd.f32 0.0, %v1569
      %v1571 = vpop.f32.mrb[0].mxu0
      %1572 = vmatprep.mubr.f32.mxu0 0.0
      %1573 = vmatmul.mubr.f32.gmra.mrb[0].mxu0 %v1346
      %v1574 = vpop.f32.mrb[0].mxu0
      %v1575 = vadd.f32 0.0, %v1574
      %v1576 = vpop.f32.mrb[0].mxu0
      %1577 = vmatprep.mubr.f32.mxu0 0.0
      %1578 = vmatmul.mubr.f32.gmra.mrb[0].mxu0 %v1348
      %v1579 = vpop.f32.mrb[0].mxu0
      %v1580 = vadd.f32 0.0, %v1579
      %v1581 = vpop.f32.mrb[0].mxu0
      %1582 = vmatprep.mubr.f32.mxu0 0.0
      %1583 = vmatmul.mubr.f32.gmra.mrb[0].mxu0 %v1350
      %v1584 = vpop.f32.mrb[0].mxu0
      %v1585 = vadd.f32 0.0, %v1584
      %v1586 = vpop.f32.mrb[0].mxu0
      %1587 = vmatprep.mubr.f32.mxu0 0.0
      %1588 = vmatmul.mubr.f32.gmra.mrb[0].mxu0 %v1352
      %v1589 = vpop.f32.mrb[0].mxu0
      %v1590 = vadd.f32 0.0, %v1589
      %v1591 = vpop.f32.mrb[0].mxu0
      %1592 = vmatprep.mubr.f32.mxu0 0.0
      %1593 = vmatmul.mubr.f32.gmra.mrb[0].mxu0 %v1354
      %v1594 = vpop.f32.mrb[0].mxu0
      %v1595 = vadd.f32 0.0, %v1594
      %v1596 = vpop.f32.mrb[0].mxu0
      %1597 = vmatprep.mubr.f32.mxu0 0.0
      %1598 = vmatmul.mubr.f32.gmra.mrb[0].mxu0 %v1356
      %v1599 = vpop.f32.mrb[0].mxu0
      %v1600 = vadd.f32 0.0, %v1599
      %v1601 = vpop.f32.mrb[0].mxu0
      %1602 = vmatprep.mubr.f32.mxu0 0.0
      %1603 = vmatmul.mubr.f32.gmra.mrb[0].mxu0 %v1358
      %v1604 = vpop.f32.mrb[0].mxu0
      %v1605 = vadd.f32 0.0, %v1604
      %v1606 = vpop.f32.mrb[0].mxu0
      %1607 = vmatprep.mubr.f32.mxu0 0.0
      %1608 = vmatmul.mubr.f32.gmra.mrb[0].mxu0 %v1493
      %v1609 = vpop.f32.mrb[0].mxu0
      %v1610 = vadd.f32 0.0, %v1609
      %v1611 = vpop.f32.mrb[0].mxu0
      %1612 = vdwg.mxu0
      %v1613 = vadd.f32 %v1478, %v1565
      %v1614 = vadd.f32 %v1479, %v1570
      %v1615 = vadd.f32 %v1480, %v1575
      %v1616 = vadd.f32 %v1481, %v1580
      %v1617 = vadd.f32 %v1482, %v1585
      %v1618 = vadd.f32 %v1483, %v1590
      %v1619 = vadd.f32 %v1484, %v1595
      %v1620 = vadd.f32 %v1485, %v1600
      %v1621 = vadd.f32 %v1486, %v1605
      %v1622 = vadd.f32 %v1487, %v1610
      %s1623 = scalar_lea.vmem %s4, 28
      %v1624 = vld [vmem:[%s1623] sm:$0xf]
      %vm1625 = vcmask 1042432
      %v1626 = vrot.slane %v487, 5
      %v1627 = vrot.slane %v488, 5
      %v1628 = vsel %vm1625, %v1626, %v1627
      %v1629 = vrot.slane %v489, 5
      %v1630 = vsel %vm1625, %v1627, %v1629
      %v1631 = vrot.slane %v490, 5
      %v1632 = vsel %vm1625, %v1629, %v1631
      %v1633 = vrot.slane %v491, 5
      %v1634 = vsel %vm1625, %v1631, %v1633
      %v1635 = vrot.slane %v492, 5
      %v1636 = vsel %vm1625, %v1633, %v1635
      %v1637 = vrot.slane %v493, 5
      %v1638 = vsel %vm1625, %v1635, %v1637
      %v1639 = vrot.slane %v494, 5
      %v1640 = vsel %vm1625, %v1637, %v1639
      %v1641 = vrot.slane %v495, 5
      %v1642 = vsel %vm1625, %v1639, %v1641
      %v1643 = vrot.slane %v496, 5
      %v1644 = vsel %vm1625, %v1641, %v1643
      %v1645 = vrot.slane %v497, 5
      %v1646 = vsel %vm1625, %v1643, %v1645
      %v1647 = vsel %vm560, %v1628, 0
      %v1649 = vsel %vm560, %v1630, 0
      %v1651 = vsel %vm560, %v1632, 0
      %v1653 = vsel %vm560, %v1634, 0
      %v1655 = vsel %vm560, %v1636, 0
      %v1657 = vsel %vm560, %v1638, 0
      %v1659 = vsel %vm560, %v1640, 0
      %v1661 = vsel %vm560, %v1642, 0
      %v1663 = vsel %vm560, %v1644, 0
      %v1665 = vsel %vm560, %v1646, 0
      %v1668 = vsel %vm581, %v1624, 0
      %1670 = vmatprep.subr.mxu0 0.0
      %1671 = vmatpush1.msra.mxu0 %v1668
      %1672 = vmatprep.subr.mxu0 0.0
      %1673 = vmatpush1.msra.mxu0 0.0
      %1674 = vmatprep.subr.mxu0 0.0
      %1675 = vmatpush1.msra.mxu0 0.0
      %1676 = vmatprep.subr.mxu0 0.0
      %1677 = vmatpush1.msra.mxu0 0.0
      %1678 = vmatprep.subr.mxu0 0.0
      %1679 = vmatpush1.msra.mxu0 0.0
      %1680 = vmatprep.subr.mxu0 0.0
      %1681 = vmatpush1.msra.mxu0 0.0
      %1682 = vmatprep.subr.mxu0 0.0
      %1683 = vmatpush1.msra.mxu0 0.0
      %1684 = vmatprep.subr.mxu0 0.0
      %1685 = vmatpush1.msra.mxu0 0.0
      %1686 = vmatprep.subr.mxu0 0.0
      %1687 = vmatpush1.msra.mxu0 0.0
      %1688 = vmatprep.subr.mxu0 0.0
      %1689 = vmatpush1.msra.mxu0 0.0
      %1690 = vmatprep.subr.mxu0 0.0
      %1691 = vmatpush1.msra.mxu0 0.0
      %1692 = vmatprep.subr.mxu0 0.0
      %1693 = vmatpush1.msra.mxu0 0.0
      %1694 = vmatprep.subr.mxu0 0.0
      %1695 = vmatpush1.msra.mxu0 0.0
      %1696 = vmatprep.subr.mxu0 0.0
      %1697 = vmatpush1.msra.mxu0 0.0
      %1698 = vmatprep.subr.mxu0 0.0
      %1699 = vmatpush1.msra.mxu0 0.0
      %1700 = vmatprep.subr.mxu0 0.0
      %1701 = vmatpush1.msra.mxu0 0.0
      %1702 = vmatprep.subr.mxu0 0.0
      %1703 = vmatpush1.msra.mxu0 0.0
      %1704 = vmatprep.subr.mxu0 0.0
      %1705 = vmatpush1.msra.mxu0 0.0
      %1706 = vmatprep.subr.mxu0 0.0
      %1707 = vmatpush1.msra.mxu0 0.0
      %1708 = vmatprep.subr.mxu0 0.0
      %1709 = vmatpush1.msra.mxu0 0.0
      %1710 = vmatprep.subr.mxu0 0.0
      %1711 = vmatpush1.msra.mxu0 0.0
      %1712 = vmatprep.subr.mxu0 0.0
      %1713 = vmatpush1.msra.mxu0 0.0
      %1714 = vmatprep.subr.mxu0 0.0
      %1715 = vmatpush1.msra.mxu0 0.0
      %1716 = vmatprep.subr.mxu0 0.0
      %1717 = vmatpush1.msra.mxu0 0.0
      %1718 = vmatprep.subr.mxu0 0.0
      %1719 = vmatpush1.msra.mxu0 0.0
      %1720 = vmatprep.subr.mxu0 0.0
      %1721 = vmatpush1.msra.mxu0 0.0
      %1722 = vmatprep.subr.mxu0 0.0
      %1723 = vmatpush1.msra.mxu0 0.0
      %1724 = vmatprep.subr.mxu0 0.0
      %1725 = vmatpush1.msra.mxu0 0.0
      %1726 = vmatprep.subr.mxu0 0.0
      %1727 = vmatpush1.msra.mxu0 0.0
      %1728 = vmatprep.subr.mxu0 0.0
      %1729 = vmatpush1.msra.mxu0 0.0
      %1730 = vmatprep.subr.mxu0 0.0
      %1731 = vmatpush1.msra.mxu0 0.0
      %1732 = vmatprep.subr.mxu0 0.0
      %1733 = vmatpush1.msra.mxu0 0.0
      %1734 = vmatprep.mubr.f32.mxu0 0.0
      %1735 = vmatmul.mubr.f32.gmra.mrb[0].mxu0 %v1647
      %v1736 = vpop.f32.mrb[0].mxu0
      %v1737 = vadd.f32 0.0, %v1736
      %v1738 = vpop.f32.mrb[0].mxu0
      %1739 = vmatprep.mubr.f32.mxu0 0.0
      %1740 = vmatmul.mubr.f32.gmra.mrb[0].mxu0 %v1649
      %v1741 = vpop.f32.mrb[0].mxu0
      %v1742 = vadd.f32 0.0, %v1741
      %v1743 = vpop.f32.mrb[0].mxu0
      %1744 = vmatprep.mubr.f32.mxu0 0.0
      %1745 = vmatmul.mubr.f32.gmra.mrb[0].mxu0 %v1651
      %v1746 = vpop.f32.mrb[0].mxu0
      %v1747 = vadd.f32 0.0, %v1746
      %v1748 = vpop.f32.mrb[0].mxu0
      %1749 = vmatprep.mubr.f32.mxu0 0.0
      %1750 = vmatmul.mubr.f32.gmra.mrb[0].mxu0 %v1653
      %v1751 = vpop.f32.mrb[0].mxu0
      %v1752 = vadd.f32 0.0, %v1751
      %v1753 = vpop.f32.mrb[0].mxu0
      %1754 = vmatprep.mubr.f32.mxu0 0.0
      %1755 = vmatmul.mubr.f32.gmra.mrb[0].mxu0 %v1655
      %v1756 = vpop.f32.mrb[0].mxu0
      %v1757 = vadd.f32 0.0, %v1756
      %v1758 = vpop.f32.mrb[0].mxu0
      %1759 = vmatprep.mubr.f32.mxu0 0.0
      %1760 = vmatmul.mubr.f32.gmra.mrb[0].mxu0 %v1657
      %v1761 = vpop.f32.mrb[0].mxu0
      %v1762 = vadd.f32 0.0, %v1761
      %v1763 = vpop.f32.mrb[0].mxu0
      %1764 = vmatprep.mubr.f32.mxu0 0.0
      %1765 = vmatmul.mubr.f32.gmra.mrb[0].mxu0 %v1659
      %v1766 = vpop.f32.mrb[0].mxu0
      %v1767 = vadd.f32 0.0, %v1766
      %v1768 = vpop.f32.mrb[0].mxu0
      %1769 = vmatprep.mubr.f32.mxu0 0.0
      %1770 = vmatmul.mubr.f32.gmra.mrb[0].mxu0 %v1661
      %v1771 = vpop.f32.mrb[0].mxu0
      %v1772 = vadd.f32 0.0, %v1771
      %v1773 = vpop.f32.mrb[0].mxu0
      %1774 = vmatprep.mubr.f32.mxu0 0.0
      %1775 = vmatmul.mubr.f32.gmra.mrb[0].mxu0 %v1663
      %v1776 = vpop.f32.mrb[0].mxu0
      %v1777 = vadd.f32 0.0, %v1776
      %v1778 = vpop.f32.mrb[0].mxu0
      %1779 = vmatprep.mubr.f32.mxu0 0.0
      %1780 = vmatmul.mubr.f32.gmra.mrb[0].mxu0 %v1665
      %v1781 = vpop.f32.mrb[0].mxu0
      %v1782 = vadd.f32 0.0, %v1781
      %v1783 = vpop.f32.mrb[0].mxu0
      %1784 = vdwg.mxu0
      %v1785 = vadd.f32 %v1613, %v1737
      %v1786 = vadd.f32 %v1614, %v1742
      %v1787 = vadd.f32 %v1615, %v1747
      %v1788 = vadd.f32 %v1616, %v1752
      %v1789 = vadd.f32 %v1617, %v1757
      %v1790 = vadd.f32 %v1618, %v1762
      %v1791 = vadd.f32 %v1619, %v1767
      %v1792 = vadd.f32 %v1620, %v1772
      %v1793 = vadd.f32 %v1621, %v1777
      %v1794 = vadd.f32 %v1622, %v1782
      %s1795 = scalar_lea.vmem %s4, 32
      %v1796 = vld [vmem:[%s1795] sm:$0xf]
      %vm1797 = vcmask 1041408
      %v1798 = vrot.slane %v487, 6
      %v1799 = vrot.slane %v488, 6
      %v1800 = vsel %vm1797, %v1798, %v1799
      %v1801 = vrot.slane %v489, 6
      %v1802 = vsel %vm1797, %v1799, %v1801
      %v1803 = vrot.slane %v490, 6
      %v1804 = vsel %vm1797, %v1801, %v1803
      %v1805 = vrot.slane %v491, 6
      %v1806 = vsel %vm1797, %v1803, %v1805
      %v1807 = vrot.slane %v492, 6
      %v1808 = vsel %vm1797, %v1805, %v1807
      %v1809 = vrot.slane %v493, 6
      %v1810 = vsel %vm1797, %v1807, %v1809
      %v1811 = vrot.slane %v494, 6
      %v1812 = vsel %vm1797, %v1809, %v1811
      %v1813 = vrot.slane %v495, 6
      %v1814 = vsel %vm1797, %v1811, %v1813
      %v1815 = vrot.slane %v496, 6
      %v1816 = vsel %vm1797, %v1813, %v1815
      %v1817 = vrot.slane %v497, 6
      %v1818 = vsel %vm1797, %v1815, %v1817
      %v1819 = vsel %vm560, %v1800, 0
      %v1821 = vsel %vm560, %v1802, 0
      %v1823 = vsel %vm560, %v1804, 0
      %v1825 = vsel %vm560, %v1806, 0
      %v1827 = vsel %vm560, %v1808, 0
      %v1829 = vsel %vm560, %v1810, 0
      %v1831 = vsel %vm560, %v1812, 0
      %v1833 = vsel %vm560, %v1814, 0
      %v1835 = vsel %vm560, %v1816, 0
      %v1837 = vsel %vm560, %v1818, 0
      %v1840 = vsel %vm581, %v1796, 0
      %1842 = vmatprep.subr.mxu0 0.0
      %1843 = vmatpush1.msra.mxu0 %v1840
      %1844 = vmatprep.subr.mxu0 0.0
      %1845 = vmatpush1.msra.mxu0 0.0
      %1846 = vmatprep.subr.mxu0 0.0
      %1847 = vmatpush1.msra.mxu0 0.0
      %1848 = vmatprep.subr.mxu0 0.0
      %1849 = vmatpush1.msra.mxu0 0.0
      %1850 = vmatprep.subr.mxu0 0.0
      %1851 = vmatpush1.msra.mxu0 0.0
      %1852 = vmatprep.subr.mxu0 0.0
      %1853 = vmatpush1.msra.mxu0 0.0
      %1854 = vmatprep.subr.mxu0 0.0
      %1855 = vmatpush1.msra.mxu0 0.0
      %1856 = vmatprep.subr.mxu0 0.0
      %1857 = vmatpush1.msra.mxu0 0.0
      %1858 = vmatprep.subr.mxu0 0.0
      %1859 = vmatpush1.msra.mxu0 0.0
      %1860 = vmatprep.subr.mxu0 0.0
      %1861 = vmatpush1.msra.mxu0 0.0
      %1862 = vmatprep.subr.mxu0 0.0
      %1863 = vmatpush1.msra.mxu0 0.0
      %1864 = vmatprep.subr.mxu0 0.0
      %1865 = vmatpush1.msra.mxu0 0.0
      %1866 = vmatprep.subr.mxu0 0.0
      %1867 = vmatpush1.msra.mxu0 0.0
      %1868 = vmatprep.subr.mxu0 0.0
      %1869 = vmatpush1.msra.mxu0 0.0
      %1870 = vmatprep.subr.mxu0 0.0
      %1871 = vmatpush1.msra.mxu0 0.0
      %1872 = vmatprep.subr.mxu0 0.0
      %1873 = vmatpush1.msra.mxu0 0.0
      %1874 = vmatprep.subr.mxu0 0.0
      %1875 = vmatpush1.msra.mxu0 0.0
      %1876 = vmatprep.subr.mxu0 0.0
      %1877 = vmatpush1.msra.mxu0 0.0
      %1878 = vmatprep.subr.mxu0 0.0
      %1879 = vmatpush1.msra.mxu0 0.0
      %1880 = vmatprep.subr.mxu0 0.0
      %1881 = vmatpush1.msra.mxu0 0.0
      %1882 = vmatprep.subr.mxu0 0.0
      %1883 = vmatpush1.msra.mxu0 0.0
      %1884 = vmatprep.subr.mxu0 0.0
      %1885 = vmatpush1.msra.mxu0 0.0
      %1886 = vmatprep.subr.mxu0 0.0
      %1887 = vmatpush1.msra.mxu0 0.0
      %1888 = vmatprep.subr.mxu0 0.0
      %1889 = vmatpush1.msra.mxu0 0.0
      %1890 = vmatprep.subr.mxu0 0.0
      %1891 = vmatpush1.msra.mxu0 0.0
      %1892 = vmatprep.subr.mxu0 0.0
      %1893 = vmatpush1.msra.mxu0 0.0
      %1894 = vmatprep.subr.mxu0 0.0
      %1895 = vmatpush1.msra.mxu0 0.0
      %1896 = vmatprep.subr.mxu0 0.0
      %1897 = vmatpush1.msra.mxu0 0.0
      %1898 = vmatprep.subr.mxu0 0.0
      %1899 = vmatpush1.msra.mxu0 0.0
      %1900 = vmatprep.subr.mxu0 0.0
      %1901 = vmatpush1.msra.mxu0 0.0
      %1902 = vmatprep.subr.mxu0 0.0
      %1903 = vmatpush1.msra.mxu0 0.0
      %1904 = vmatprep.subr.mxu0 0.0
      %1905 = vmatpush1.msra.mxu0 0.0
      %1906 = vmatprep.mubr.f32.mxu0 0.0
      %1907 = vmatmul.mubr.f32.gmra.mrb[0].mxu0 %v1819
      %v1908 = vpop.f32.mrb[0].mxu0
      %v1909 = vadd.f32 0.0, %v1908
      %v1910 = vpop.f32.mrb[0].mxu0
      %1911 = vmatprep.mubr.f32.mxu0 0.0
      %1912 = vmatmul.mubr.f32.gmra.mrb[0].mxu0 %v1821
      %v1913 = vpop.f32.mrb[0].mxu0
      %v1914 = vadd.f32 0.0, %v1913
      %v1915 = vpop.f32.mrb[0].mxu0
      %1916 = vmatprep.mubr.f32.mxu0 0.0
      %1917 = vmatmul.mubr.f32.gmra.mrb[0].mxu0 %v1823
      %v1918 = vpop.f32.mrb[0].mxu0
      %v1919 = vadd.f32 0.0, %v1918
      %v1920 = vpop.f32.mrb[0].mxu0
      %1921 = vmatprep.mubr.f32.mxu0 0.0
      %1922 = vmatmul.mubr.f32.gmra.mrb[0].mxu0 %v1825
      %v1923 = vpop.f32.mrb[0].mxu0
      %v1924 = vadd.f32 0.0, %v1923
      %v1925 = vpop.f32.mrb[0].mxu0
      %1926 = vmatprep.mubr.f32.mxu0 0.0
      %1927 = vmatmul.mubr.f32.gmra.mrb[0].mxu0 %v1827
      %v1928 = vpop.f32.mrb[0].mxu0
      %v1929 = vadd.f32 0.0, %v1928
      %v1930 = vpop.f32.mrb[0].mxu0
      %1931 = vmatprep.mubr.f32.mxu0 0.0
      %1932 = vmatmul.mubr.f32.gmra.mrb[0].mxu0 %v1829
      %v1933 = vpop.f32.mrb[0].mxu0
      %v1934 = vadd.f32 0.0, %v1933
      %v1935 = vpop.f32.mrb[0].mxu0
      %1936 = vmatprep.mubr.f32.mxu0 0.0
      %1937 = vmatmul.mubr.f32.gmra.mrb[0].mxu0 %v1831
      %v1938 = vpop.f32.mrb[0].mxu0
      %v1939 = vadd.f32 0.0, %v1938
      %v1940 = vpop.f32.mrb[0].mxu0
      %1941 = vmatprep.mubr.f32.mxu0 0.0
      %1942 = vmatmul.mubr.f32.gmra.mrb[0].mxu0 %v1833
      %v1943 = vpop.f32.mrb[0].mxu0
      %v1944 = vadd.f32 0.0, %v1943
      %v1945 = vpop.f32.mrb[0].mxu0
      %1946 = vmatprep.mubr.f32.mxu0 0.0
      %1947 = vmatmul.mubr.f32.gmra.mrb[0].mxu0 %v1835
      %v1948 = vpop.f32.mrb[0].mxu0
      %v1949 = vadd.f32 0.0, %v1948
      %v1950 = vpop.f32.mrb[0].mxu0
      %1951 = vmatprep.mubr.f32.mxu0 0.0
      %1952 = vmatmul.mubr.f32.gmra.mrb[0].mxu0 %v1837
      %v1953 = vpop.f32.mrb[0].mxu0
      %v1954 = vadd.f32 0.0, %v1953
      %v1955 = vpop.f32.mrb[0].mxu0
      %1956 = vdwg.mxu0
      %v1957 = vadd.f32 %v1785, %v1909
      %v1958 = vadd.f32 %v1786, %v1914
      %v1959 = vadd.f32 %v1787, %v1919
      %v1960 = vadd.f32 %v1788, %v1924
      %v1961 = vadd.f32 %v1789, %v1929
      %v1962 = vadd.f32 %v1790, %v1934
      %v1963 = vadd.f32 %v1791, %v1939
      %v1964 = vadd.f32 %v1792, %v1944
      %v1965 = vadd.f32 %v1793, %v1949
      %v1966 = vadd.f32 %v1794, %v1954
      %s1967 = scalar_lea.vmem %s4, 36
      %v1968 = vld [vmem:[%s1967] sm:$0xf]
      %v1970 = vsel %vm560, %v498, 0
      %v1973 = vsel %vm560, %v499, 0
      %v1976 = vsel %vm560, %v500, 0
      %v1979 = vsel %vm560, %v501, 0
      %v1982 = vsel %vm560, %v502, 0
      %v1985 = vsel %vm560, %v503, 0
      %v1988 = vsel %vm560, %v504, 0
      %v1991 = vsel %vm560, %v505, 0
      %v1994 = vsel %vm560, %v506, 0
      %v1997 = vsel %vm560, %v507, 0
      %v2000 = vsel %vm581, %v1968, 0
      %2002 = vmatprep.subr.mxu0 0.0
      %2003 = vmatpush1.msra.mxu0 %v2000
      %2004 = vmatprep.subr.mxu0 0.0
      %2005 = vmatpush1.msra.mxu0 0.0
      %2006 = vmatprep.subr.mxu0 0.0
      %2007 = vmatpush1.msra.mxu0 0.0
      %2008 = vmatprep.subr.mxu0 0.0
      %2009 = vmatpush1.msra.mxu0 0.0
      %2010 = vmatprep.subr.mxu0 0.0
      %2011 = vmatpush1.msra.mxu0 0.0
      %2012 = vmatprep.subr.mxu0 0.0
      %2013 = vmatpush1.msra.mxu0 0.0
      %2014 = vmatprep.subr.mxu0 0.0
      %2015 = vmatpush1.msra.mxu0 0.0
      %2016 = vmatprep.subr.mxu0 0.0
      %2017 = vmatpush1.msra.mxu0 0.0
      %2018 = vmatprep.subr.mxu0 0.0
      %2019 = vmatpush1.msra.mxu0 0.0
      %2020 = vmatprep.subr.mxu0 0.0
      %2021 = vmatpush1.msra.mxu0 0.0
      %2022 = vmatprep.subr.mxu0 0.0
      %2023 = vmatpush1.msra.mxu0 0.0
      %2024 = vmatprep.subr.mxu0 0.0
      %2025 = vmatpush1.msra.mxu0 0.0
      %2026 = vmatprep.subr.mxu0 0.0
      %2027 = vmatpush1.msra.mxu0 0.0
      %2028 = vmatprep.subr.mxu0 0.0
      %2029 = vmatpush1.msra.mxu0 0.0
      %2030 = vmatprep.subr.mxu0 0.0
      %2031 = vmatpush1.msra.mxu0 0.0
      %2032 = vmatprep.subr.mxu0 0.0
      %2033 = vmatpush1.msra.mxu0 0.0
      %2034 = vmatprep.subr.mxu0 0.0
      %2035 = vmatpush1.msra.mxu0 0.0
      %2036 = vmatprep.subr.mxu0 0.0
      %2037 = vmatpush1.msra.mxu0 0.0
      %2038 = vmatprep.subr.mxu0 0.0
      %2039 = vmatpush1.msra.mxu0 0.0
      %2040 = vmatprep.subr.mxu0 0.0
      %2041 = vmatpush1.msra.mxu0 0.0
      %2042 = vmatprep.subr.mxu0 0.0
      %2043 = vmatpush1.msra.mxu0 0.0
      %2044 = vmatprep.subr.mxu0 0.0
      %2045 = vmatpush1.msra.mxu0 0.0
      %2046 = vmatprep.subr.mxu0 0.0
      %2047 = vmatpush1.msra.mxu0 0.0
      %2048 = vmatprep.subr.mxu0 0.0
      %2049 = vmatpush1.msra.mxu0 0.0
      %2050 = vmatprep.subr.mxu0 0.0
      %2051 = vmatpush1.msra.mxu0 0.0
      %2052 = vmatprep.subr.mxu0 0.0
      %2053 = vmatpush1.msra.mxu0 0.0
      %2054 = vmatprep.subr.mxu0 0.0
      %2055 = vmatpush1.msra.mxu0 0.0
      %2056 = vmatprep.subr.mxu0 0.0
      %2057 = vmatpush1.msra.mxu0 0.0
      %2058 = vmatprep.subr.mxu0 0.0
      %2059 = vmatpush1.msra.mxu0 0.0
      %2060 = vmatprep.subr.mxu0 0.0
      %2061 = vmatpush1.msra.mxu0 0.0
      %2062 = vmatprep.subr.mxu0 0.0
      %2063 = vmatpush1.msra.mxu0 0.0
      %2064 = vmatprep.subr.mxu0 0.0
      %2065 = vmatpush1.msra.mxu0 0.0
      %2066 = vmatprep.mubr.f32.mxu0 0.0
      %2067 = vmatmul.mubr.f32.gmra.mrb[0].mxu0 %v1970
      %v2068 = vpop.f32.mrb[0].mxu0
      %v2069 = vadd.f32 0.0, %v2068
      %v2070 = vpop.f32.mrb[0].mxu0
      %2071 = vmatprep.mubr.f32.mxu0 0.0
      %2072 = vmatmul.mubr.f32.gmra.mrb[0].mxu0 %v1973
      %v2073 = vpop.f32.mrb[0].mxu0
      %v2074 = vadd.f32 0.0, %v2073
      %v2075 = vpop.f32.mrb[0].mxu0
      %2076 = vmatprep.mubr.f32.mxu0 0.0
      %2077 = vmatmul.mubr.f32.gmra.mrb[0].mxu0 %v1976
      %v2078 = vpop.f32.mrb[0].mxu0
      %v2079 = vadd.f32 0.0, %v2078
      %v2080 = vpop.f32.mrb[0].mxu0
      %2081 = vmatprep.mubr.f32.mxu0 0.0
      %2082 = vmatmul.mubr.f32.gmra.mrb[0].mxu0 %v1979
      %v2083 = vpop.f32.mrb[0].mxu0
      %v2084 = vadd.f32 0.0, %v2083
      %v2085 = vpop.f32.mrb[0].mxu0
      %2086 = vmatprep.mubr.f32.mxu0 0.0
      %2087 = vmatmul.mubr.f32.gmra.mrb[0].mxu0 %v1982
      %v2088 = vpop.f32.mrb[0].mxu0
      %v2089 = vadd.f32 0.0, %v2088
      %v2090 = vpop.f32.mrb[0].mxu0
      %2091 = vmatprep.mubr.f32.mxu0 0.0
      %2092 = vmatmul.mubr.f32.gmra.mrb[0].mxu0 %v1985
      %v2093 = vpop.f32.mrb[0].mxu0
      %v2094 = vadd.f32 0.0, %v2093
      %v2095 = vpop.f32.mrb[0].mxu0
      %2096 = vmatprep.mubr.f32.mxu0 0.0
      %2097 = vmatmul.mubr.f32.gmra.mrb[0].mxu0 %v1988
      %v2098 = vpop.f32.mrb[0].mxu0
      %v2099 = vadd.f32 0.0, %v2098
      %v2100 = vpop.f32.mrb[0].mxu0
      %2101 = vmatprep.mubr.f32.mxu0 0.0
      %2102 = vmatmul.mubr.f32.gmra.mrb[0].mxu0 %v1991
      %v2103 = vpop.f32.mrb[0].mxu0
      %v2104 = vadd.f32 0.0, %v2103
      %v2105 = vpop.f32.mrb[0].mxu0
      %2106 = vmatprep.mubr.f32.mxu0 0.0
      %2107 = vmatmul.mubr.f32.gmra.mrb[0].mxu0 %v1994
      %v2108 = vpop.f32.mrb[0].mxu0
      %v2109 = vadd.f32 0.0, %v2108
      %v2110 = vpop.f32.mrb[0].mxu0
      %2111 = vmatprep.mubr.f32.mxu0 0.0
      %2112 = vmatmul.mubr.f32.gmra.mrb[0].mxu0 %v1997
      %v2113 = vpop.f32.mrb[0].mxu0
      %v2114 = vadd.f32 0.0, %v2113
      %v2115 = vpop.f32.mrb[0].mxu0
      %2116 = vdwg.mxu0
      %v2117 = vadd.f32 %v1957, %v2069
      %v2118 = vadd.f32 %v1958, %v2074
      %v2119 = vadd.f32 %v1959, %v2079
      %v2120 = vadd.f32 %v1960, %v2084
      %v2121 = vadd.f32 %v1961, %v2089
      %v2122 = vadd.f32 %v1962, %v2094
      %v2123 = vadd.f32 %v1963, %v2099
      %v2124 = vadd.f32 %v1964, %v2104
      %v2125 = vadd.f32 %v1965, %v2109
      %v2126 = vadd.f32 %v1966, %v2114
      %s2127 = scalar_lea.vmem %s4, 40
      %v2128 = vld [vmem:[%s2127] sm:$0xf]
      %v2130 = vrot.slane %v498, 1
      %v2131 = vrot.slane %v499, 1
      %v2132 = vsel %vm538, %v2130, %v2131
      %v2133 = vrot.slane %v500, 1
      %v2134 = vsel %vm538, %v2131, %v2133
      %v2135 = vrot.slane %v501, 1
      %v2136 = vsel %vm538, %v2133, %v2135
      %v2137 = vrot.slane %v502, 1
      %v2138 = vsel %vm538, %v2135, %v2137
      %v2139 = vrot.slane %v503, 1
      %v2140 = vsel %vm538, %v2137, %v2139
      %v2141 = vrot.slane %v504, 1
      %v2142 = vsel %vm538, %v2139, %v2141
      %v2143 = vrot.slane %v505, 1
      %v2144 = vsel %vm538, %v2141, %v2143
      %v2145 = vrot.slane %v506, 1
      %v2146 = vsel %vm538, %v2143, %v2145
      %v2147 = vrot.slane %v507, 1
      %v2148 = vsel %vm538, %v2145, %v2147
      %v2149 = vrot.slane %v508, 1
      %v2150 = vsel %vm538, %v2147, %v2149
      %v2151 = vsel %vm560, %v2132, 0
      %v2153 = vsel %vm560, %v2134, 0
      %v2155 = vsel %vm560, %v2136, 0
      %v2157 = vsel %vm560, %v2138, 0
      %v2159 = vsel %vm560, %v2140, 0
      %v2161 = vsel %vm560, %v2142, 0
      %v2163 = vsel %vm560, %v2144, 0
      %v2165 = vsel %vm560, %v2146, 0
      %v2167 = vsel %vm560, %v2148, 0
      %v2169 = vsel %vm560, %v2150, 0
      %v2172 = vsel %vm581, %v2128, 0
      %2174 = vmatprep.subr.mxu0 0.0
      %2175 = vmatpush1.msra.mxu0 %v2172
      %2176 = vmatprep.subr.mxu0 0.0
      %2177 = vmatpush1.msra.mxu0 0.0
      %2178 = vmatprep.subr.mxu0 0.0
      %2179 = vmatpush1.msra.mxu0 0.0
      %2180 = vmatprep.subr.mxu0 0.0
      %2181 = vmatpush1.msra.mxu0 0.0
      %2182 = vmatprep.subr.mxu0 0.0
      %2183 = vmatpush1.msra.mxu0 0.0
      %2184 = vmatprep.subr.mxu0 0.0
      %2185 = vmatpush1.msra.mxu0 0.0
      %2186 = vmatprep.subr.mxu0 0.0
      %2187 = vmatpush1.msra.mxu0 0.0
      %2188 = vmatprep.subr.mxu0 0.0
      %2189 = vmatpush1.msra.mxu0 0.0
      %2190 = vmatprep.subr.mxu0 0.0
      %2191 = vmatpush1.msra.mxu0 0.0
      %2192 = vmatprep.subr.mxu0 0.0
      %2193 = vmatpush1.msra.mxu0 0.0
      %2194 = vmatprep.subr.mxu0 0.0
      %2195 = vmatpush1.msra.mxu0 0.0
      %2196 = vmatprep.subr.mxu0 0.0
      %2197 = vmatpush1.msra.mxu0 0.0
      %2198 = vmatprep.subr.mxu0 0.0
      %2199 = vmatpush1.msra.mxu0 0.0
      %2200 = vmatprep.subr.mxu0 0.0
      %2201 = vmatpush1.msra.mxu0 0.0
      %2202 = vmatprep.subr.mxu0 0.0
      %2203 = vmatpush1.msra.mxu0 0.0
      %2204 = vmatprep.subr.mxu0 0.0
      %2205 = vmatpush1.msra.mxu0 0.0
      %2206 = vmatprep.subr.mxu0 0.0
      %2207 = vmatpush1.msra.mxu0 0.0
      %2208 = vmatprep.subr.mxu0 0.0
      %2209 = vmatpush1.msra.mxu0 0.0
      %2210 = vmatprep.subr.mxu0 0.0
      %2211 = vmatpush1.msra.mxu0 0.0
      %2212 = vmatprep.subr.mxu0 0.0
      %2213 = vmatpush1.msra.mxu0 0.0
      %2214 = vmatprep.subr.mxu0 0.0
      %2215 = vmatpush1.msra.mxu0 0.0
      %2216 = vmatprep.subr.mxu0 0.0
      %2217 = vmatpush1.msra.mxu0 0.0
      %2218 = vmatprep.subr.mxu0 0.0
      %2219 = vmatpush1.msra.mxu0 0.0
      %2220 = vmatprep.subr.mxu0 0.0
      %2221 = vmatpush1.msra.mxu0 0.0
      %2222 = vmatprep.subr.mxu0 0.0
      %2223 = vmatpush1.msra.mxu0 0.0
      %2224 = vmatprep.subr.mxu0 0.0
      %2225 = vmatpush1.msra.mxu0 0.0
      %2226 = vmatprep.subr.mxu0 0.0
      %2227 = vmatpush1.msra.mxu0 0.0
      %2228 = vmatprep.subr.mxu0 0.0
      %2229 = vmatpush1.msra.mxu0 0.0
      %2230 = vmatprep.subr.mxu0 0.0
      %2231 = vmatpush1.msra.mxu0 0.0
      %2232 = vmatprep.subr.mxu0 0.0
      %2233 = vmatpush1.msra.mxu0 0.0
      %2234 = vmatprep.subr.mxu0 0.0
      %2235 = vmatpush1.msra.mxu0 0.0
      %2236 = vmatprep.subr.mxu0 0.0
      %2237 = vmatpush1.msra.mxu0 0.0
      %2238 = vmatprep.mubr.f32.mxu0 0.0
      %2239 = vmatmul.mubr.f32.gmra.mrb[0].mxu0 %v2151
      %v2240 = vpop.f32.mrb[0].mxu0
      %v2241 = vadd.f32 0.0, %v2240
      %v2242 = vpop.f32.mrb[0].mxu0
      %2243 = vmatprep.mubr.f32.mxu0 0.0
      %2244 = vmatmul.mubr.f32.gmra.mrb[0].mxu0 %v2153
      %v2245 = vpop.f32.mrb[0].mxu0
      %v2246 = vadd.f32 0.0, %v2245
      %v2247 = vpop.f32.mrb[0].mxu0
      %2248 = vmatprep.mubr.f32.mxu0 0.0
      %2249 = vmatmul.mubr.f32.gmra.mrb[0].mxu0 %v2155
      %v2250 = vpop.f32.mrb[0].mxu0
      %v2251 = vadd.f32 0.0, %v2250
      %v2252 = vpop.f32.mrb[0].mxu0
      %2253 = vmatprep.mubr.f32.mxu0 0.0
      %2254 = vmatmul.mubr.f32.gmra.mrb[0].mxu0 %v2157
      %v2255 = vpop.f32.mrb[0].mxu0
      %v2256 = vadd.f32 0.0, %v2255
      %v2257 = vpop.f32.mrb[0].mxu0
      %2258 = vmatprep.mubr.f32.mxu0 0.0
      %2259 = vmatmul.mubr.f32.gmra.mrb[0].mxu0 %v2159
      %v2260 = vpop.f32.mrb[0].mxu0
      %v2261 = vadd.f32 0.0, %v2260
      %v2262 = vpop.f32.mrb[0].mxu0
      %2263 = vmatprep.mubr.f32.mxu0 0.0
      %2264 = vmatmul.mubr.f32.gmra.mrb[0].mxu0 %v2161
      %v2265 = vpop.f32.mrb[0].mxu0
      %v2266 = vadd.f32 0.0, %v2265
      %v2267 = vpop.f32.mrb[0].mxu0
      %2268 = vmatprep.mubr.f32.mxu0 0.0
      %2269 = vmatmul.mubr.f32.gmra.mrb[0].mxu0 %v2163
      %v2270 = vpop.f32.mrb[0].mxu0
      %v2271 = vadd.f32 0.0, %v2270
      %v2272 = vpop.f32.mrb[0].mxu0
      %2273 = vmatprep.mubr.f32.mxu0 0.0
      %2274 = vmatmul.mubr.f32.gmra.mrb[0].mxu0 %v2165
      %v2275 = vpop.f32.mrb[0].mxu0
      %v2276 = vadd.f32 0.0, %v2275
      %v2277 = vpop.f32.mrb[0].mxu0
      %2278 = vmatprep.mubr.f32.mxu0 0.0
      %2279 = vmatmul.mubr.f32.gmra.mrb[0].mxu0 %v2167
      %v2280 = vpop.f32.mrb[0].mxu0
      %v2281 = vadd.f32 0.0, %v2280
      %v2282 = vpop.f32.mrb[0].mxu0
      %2283 = vmatprep.mubr.f32.mxu0 0.0
      %2284 = vmatmul.mubr.f32.gmra.mrb[0].mxu0 %v2169
      %v2285 = vpop.f32.mrb[0].mxu0
      %v2286 = vadd.f32 0.0, %v2285
      %v2287 = vpop.f32.mrb[0].mxu0
      %2288 = vdwg.mxu0
      %v2289 = vadd.f32 %v2117, %v2241
      %v2290 = vadd.f32 %v2118, %v2246
      %v2291 = vadd.f32 %v2119, %v2251
      %v2292 = vadd.f32 %v2120, %v2256
      %v2293 = vadd.f32 %v2121, %v2261
      %v2294 = vadd.f32 %v2122, %v2266
      %v2295 = vadd.f32 %v2123, %v2271
      %v2296 = vadd.f32 %v2124, %v2276
      %v2297 = vadd.f32 %v2125, %v2281
      %v2298 = vadd.f32 %v2126, %v2286
      %s2299 = scalar_lea.vmem %s4, 44
      %v2300 = vld [vmem:[%s2299] sm:$0xf]
      %v2301 = vrot.slane %v498, 2
      %v2302 = vrot.slane %v499, 2
      %v2303 = vsel %vm840, %v2301, %v2302
      %v2304 = vrot.slane %v500, 2
      %v2305 = vsel %vm840, %v2302, %v2304
      %v2306 = vrot.slane %v501, 2
      %v2307 = vsel %vm840, %v2304, %v2306
      %v2308 = vrot.slane %v502, 2
      %v2309 = vsel %vm840, %v2306, %v2308
      %v2310 = vrot.slane %v503, 2
      %v2311 = vsel %vm840, %v2308, %v2310
      %v2312 = vrot.slane %v504, 2
      %v2313 = vsel %vm840, %v2310, %v2312
      %v2314 = vrot.slane %v505, 2
      %v2315 = vsel %vm840, %v2312, %v2314
      %v2316 = vrot.slane %v506, 2
      %v2317 = vsel %vm840, %v2314, %v2316
      %v2318 = vrot.slane %v507, 2
      %v2319 = vsel %vm840, %v2316, %v2318
      %v2320 = vrot.slane %v508, 2
      %v2321 = vsel %vm840, %v2318, %v2320
      %v2322 = vsel %vm560, %v2303, 0
      %v2324 = vsel %vm560, %v2305, 0
      %v2326 = vsel %vm560, %v2307, 0
      %v2328 = vsel %vm560, %v2309, 0
      %v2330 = vsel %vm560, %v2311, 0
      %v2332 = vsel %vm560, %v2313, 0
      %v2334 = vsel %vm560, %v2315, 0
      %v2336 = vsel %vm560, %v2317, 0
      %v2338 = vsel %vm560, %v2319, 0
      %v2340 = vsel %vm560, %v2321, 0
      %v2343 = vsel %vm581, %v2300, 0
      %2345 = vmatprep.subr.mxu0 0.0
      %2346 = vmatpush1.msra.mxu0 %v2343
      %2347 = vmatprep.subr.mxu0 0.0
      %2348 = vmatpush1.msra.mxu0 0.0
      %2349 = vmatprep.subr.mxu0 0.0
      %2350 = vmatpush1.msra.mxu0 0.0
      %2351 = vmatprep.subr.mxu0 0.0
      %2352 = vmatpush1.msra.mxu0 0.0
      %2353 = vmatprep.subr.mxu0 0.0
      %2354 = vmatpush1.msra.mxu0 0.0
      %2355 = vmatprep.subr.mxu0 0.0
      %2356 = vmatpush1.msra.mxu0 0.0
      %2357 = vmatprep.subr.mxu0 0.0
      %2358 = vmatpush1.msra.mxu0 0.0
      %2359 = vmatprep.subr.mxu0 0.0
      %2360 = vmatpush1.msra.mxu0 0.0
      %2361 = vmatprep.subr.mxu0 0.0
      %2362 = vmatpush1.msra.mxu0 0.0
      %2363 = vmatprep.subr.mxu0 0.0
      %2364 = vmatpush1.msra.mxu0 0.0
      %2365 = vmatprep.subr.mxu0 0.0
      %2366 = vmatpush1.msra.mxu0 0.0
      %2367 = vmatprep.subr.mxu0 0.0
      %2368 = vmatpush1.msra.mxu0 0.0
      %2369 = vmatprep.subr.mxu0 0.0
      %2370 = vmatpush1.msra.mxu0 0.0
      %2371 = vmatprep.subr.mxu0 0.0
      %2372 = vmatpush1.msra.mxu0 0.0
      %2373 = vmatprep.subr.mxu0 0.0
      %2374 = vmatpush1.msra.mxu0 0.0
      %2375 = vmatprep.subr.mxu0 0.0
      %2376 = vmatpush1.msra.mxu0 0.0
      %2377 = vmatprep.subr.mxu0 0.0
      %2378 = vmatpush1.msra.mxu0 0.0
      %2379 = vmatprep.subr.mxu0 0.0
      %2380 = vmatpush1.msra.mxu0 0.0
      %2381 = vmatprep.subr.mxu0 0.0
      %2382 = vmatpush1.msra.mxu0 0.0
      %2383 = vmatprep.subr.mxu0 0.0
      %2384 = vmatpush1.msra.mxu0 0.0
      %2385 = vmatprep.subr.mxu0 0.0
      %2386 = vmatpush1.msra.mxu0 0.0
      %2387 = vmatprep.subr.mxu0 0.0
      %2388 = vmatpush1.msra.mxu0 0.0
      %2389 = vmatprep.subr.mxu0 0.0
      %2390 = vmatpush1.msra.mxu0 0.0
      %2391 = vmatprep.subr.mxu0 0.0
      %2392 = vmatpush1.msra.mxu0 0.0
      %2393 = vmatprep.subr.mxu0 0.0
      %2394 = vmatpush1.msra.mxu0 0.0
      %2395 = vmatprep.subr.mxu0 0.0
      %2396 = vmatpush1.msra.mxu0 0.0
      %2397 = vmatprep.subr.mxu0 0.0
      %2398 = vmatpush1.msra.mxu0 0.0
      %2399 = vmatprep.subr.mxu0 0.0
      %2400 = vmatpush1.msra.mxu0 0.0
      %2401 = vmatprep.subr.mxu0 0.0
      %2402 = vmatpush1.msra.mxu0 0.0
      %2403 = vmatprep.subr.mxu0 0.0
      %2404 = vmatpush1.msra.mxu0 0.0
      %2405 = vmatprep.subr.mxu0 0.0
      %2406 = vmatpush1.msra.mxu0 0.0
      %2407 = vmatprep.subr.mxu0 0.0
      %2408 = vmatpush1.msra.mxu0 0.0
      %2409 = vmatprep.mubr.f32.mxu0 0.0
      %2410 = vmatmul.mubr.f32.gmra.mrb[0].mxu0 %v2322
      %v2411 = vpop.f32.mrb[0].mxu0
      %v2412 = vadd.f32 0.0, %v2411
      %v2413 = vpop.f32.mrb[0].mxu0
      %2414 = vmatprep.mubr.f32.mxu0 0.0
      %2415 = vmatmul.mubr.f32.gmra.mrb[0].mxu0 %v2324
      %v2416 = vpop.f32.mrb[0].mxu0
      %v2417 = vadd.f32 0.0, %v2416
      %v2418 = vpop.f32.mrb[0].mxu0
      %2419 = vmatprep.mubr.f32.mxu0 0.0
      %2420 = vmatmul.mubr.f32.gmra.mrb[0].mxu0 %v2326
      %v2421 = vpop.f32.mrb[0].mxu0
      %v2422 = vadd.f32 0.0, %v2421
      %v2423 = vpop.f32.mrb[0].mxu0
      %2424 = vmatprep.mubr.f32.mxu0 0.0
      %2425 = vmatmul.mubr.f32.gmra.mrb[0].mxu0 %v2328
      %v2426 = vpop.f32.mrb[0].mxu0
      %v2427 = vadd.f32 0.0, %v2426
      %v2428 = vpop.f32.mrb[0].mxu0
      %2429 = vmatprep.mubr.f32.mxu0 0.0
      %2430 = vmatmul.mubr.f32.gmra.mrb[0].mxu0 %v2330
      %v2431 = vpop.f32.mrb[0].mxu0
      %v2432 = vadd.f32 0.0, %v2431
      %v2433 = vpop.f32.mrb[0].mxu0
      %2434 = vmatprep.mubr.f32.mxu0 0.0
      %2435 = vmatmul.mubr.f32.gmra.mrb[0].mxu0 %v2332
      %v2436 = vpop.f32.mrb[0].mxu0
      %v2437 = vadd.f32 0.0, %v2436
      %v2438 = vpop.f32.mrb[0].mxu0
      %2439 = vmatprep.mubr.f32.mxu0 0.0
      %2440 = vmatmul.mubr.f32.gmra.mrb[0].mxu0 %v2334
      %v2441 = vpop.f32.mrb[0].mxu0
      %v2442 = vadd.f32 0.0, %v2441
      %v2443 = vpop.f32.mrb[0].mxu0
      %2444 = vmatprep.mubr.f32.mxu0 0.0
      %2445 = vmatmul.mubr.f32.gmra.mrb[0].mxu0 %v2336
      %v2446 = vpop.f32.mrb[0].mxu0
      %v2447 = vadd.f32 0.0, %v2446
      %v2448 = vpop.f32.mrb[0].mxu0
      %2449 = vmatprep.mubr.f32.mxu0 0.0
      %2450 = vmatmul.mubr.f32.gmra.mrb[0].mxu0 %v2338
      %v2451 = vpop.f32.mrb[0].mxu0
      %v2452 = vadd.f32 0.0, %v2451
      %v2453 = vpop.f32.mrb[0].mxu0
      %2454 = vmatprep.mubr.f32.mxu0 0.0
      %2455 = vmatmul.mubr.f32.gmra.mrb[0].mxu0 %v2340
      %v2456 = vpop.f32.mrb[0].mxu0
      %v2457 = vadd.f32 0.0, %v2456
      %v2458 = vpop.f32.mrb[0].mxu0
      %2459 = vdwg.mxu0
      %v2460 = vadd.f32 %v2289, %v2412
      %v2461 = vadd.f32 %v2290, %v2417
      %v2462 = vadd.f32 %v2291, %v2422
      %v2463 = vadd.f32 %v2292, %v2427
      %v2464 = vadd.f32 %v2293, %v2432
      %v2465 = vadd.f32 %v2294, %v2437
      %v2466 = vadd.f32 %v2295, %v2442
      %v2467 = vadd.f32 %v2296, %v2447
      %v2468 = vadd.f32 %v2297, %v2452
      %v2469 = vadd.f32 %v2298, %v2457
      %s2470 = scalar_lea.vmem %s4, 48
      %v2471 = vld [vmem:[%s2470] sm:$0xf]
      %v2473 = vrot.slane %v509, 2
      %v2474 = vsel %vm840, %v2320, %v2473
      %v2475 = vsel %vm560, %v2474, 0
      %v2478 = vsel %vm581, %v2471, 0
      %2480 = vmatprep.subr.mxu0 0.0
      %2481 = vmatpush1.msra.mxu0 %v2478
      %2482 = vmatprep.subr.mxu0 0.0
      %2483 = vmatpush1.msra.mxu0 0.0
      %2484 = vmatprep.subr.mxu0 0.0
      %2485 = vmatpush1.msra.mxu0 0.0
      %2486 = vmatprep.subr.mxu0 0.0
      %2487 = vmatpush1.msra.mxu0 0.0
      %2488 = vmatprep.subr.mxu0 0.0
      %2489 = vmatpush1.msra.mxu0 0.0
      %2490 = vmatprep.subr.mxu0 0.0
      %2491 = vmatpush1.msra.mxu0 0.0
      %2492 = vmatprep.subr.mxu0 0.0
      %2493 = vmatpush1.msra.mxu0 0.0
      %2494 = vmatprep.subr.mxu0 0.0
      %2495 = vmatpush1.msra.mxu0 0.0
      %2496 = vmatprep.subr.mxu0 0.0
      %2497 = vmatpush1.msra.mxu0 0.0
      %2498 = vmatprep.subr.mxu0 0.0
      %2499 = vmatpush1.msra.mxu0 0.0
      %2500 = vmatprep.subr.mxu0 0.0
      %2501 = vmatpush1.msra.mxu0 0.0
      %2502 = vmatprep.subr.mxu0 0.0
      %2503 = vmatpush1.msra.mxu0 0.0
      %2504 = vmatprep.subr.mxu0 0.0
      %2505 = vmatpush1.msra.mxu0 0.0
      %2506 = vmatprep.subr.mxu0 0.0
      %2507 = vmatpush1.msra.mxu0 0.0
      %2508 = vmatprep.subr.mxu0 0.0
      %2509 = vmatpush1.msra.mxu0 0.0
      %2510 = vmatprep.subr.mxu0 0.0
      %2511 = vmatpush1.msra.mxu0 0.0
      %2512 = vmatprep.subr.mxu0 0.0
      %2513 = vmatpush1.msra.mxu0 0.0
      %2514 = vmatprep.subr.mxu0 0.0
      %2515 = vmatpush1.msra.mxu0 0.0
      %2516 = vmatprep.subr.mxu0 0.0
      %2517 = vmatpush1.msra.mxu0 0.0
      %2518 = vmatprep.subr.mxu0 0.0
      %2519 = vmatpush1.msra.mxu0 0.0
      %2520 = vmatprep.subr.mxu0 0.0
      %2521 = vmatpush1.msra.mxu0 0.0
      %2522 = vmatprep.subr.mxu0 0.0
      %2523 = vmatpush1.msra.mxu0 0.0
      %2524 = vmatprep.subr.mxu0 0.0
      %2525 = vmatpush1.msra.mxu0 0.0
      %2526 = vmatprep.subr.mxu0 0.0
      %2527 = vmatpush1.msra.mxu0 0.0
      %2528 = vmatprep.subr.mxu0 0.0
      %2529 = vmatpush1.msra.mxu0 0.0
      %2530 = vmatprep.subr.mxu0 0.0
      %2531 = vmatpush1.msra.mxu0 0.0
      %2532 = vmatprep.subr.mxu0 0.0
      %2533 = vmatpush1.msra.mxu0 0.0
      %2534 = vmatprep.subr.mxu0 0.0
      %2535 = vmatpush1.msra.mxu0 0.0
      %2536 = vmatprep.subr.mxu0 0.0
      %2537 = vmatpush1.msra.mxu0 0.0
      %2538 = vmatprep.subr.mxu0 0.0
      %2539 = vmatpush1.msra.mxu0 0.0
      %2540 = vmatprep.subr.mxu0 0.0
      %2541 = vmatpush1.msra.mxu0 0.0
      %2542 = vmatprep.subr.mxu0 0.0
      %2543 = vmatpush1.msra.mxu0 0.0
      %2544 = vmatprep.mubr.f32.mxu0 0.0
      %2545 = vmatmul.mubr.f32.gmra.mrb[0].mxu0 %v2324
      %v2546 = vpop.f32.mrb[0].mxu0
      %v2547 = vadd.f32 0.0, %v2546
      %v2548 = vpop.f32.mrb[0].mxu0
      %2549 = vmatprep.mubr.f32.mxu0 0.0
      %2550 = vmatmul.mubr.f32.gmra.mrb[0].mxu0 %v2326
      %v2551 = vpop.f32.mrb[0].mxu0
      %v2552 = vadd.f32 0.0, %v2551
      %v2553 = vpop.f32.mrb[0].mxu0
      %2554 = vmatprep.mubr.f32.mxu0 0.0
      %2555 = vmatmul.mubr.f32.gmra.mrb[0].mxu0 %v2328
      %v2556 = vpop.f32.mrb[0].mxu0
      %v2557 = vadd.f32 0.0, %v2556
      %v2558 = vpop.f32.mrb[0].mxu0
      %2559 = vmatprep.mubr.f32.mxu0 0.0
      %2560 = vmatmul.mubr.f32.gmra.mrb[0].mxu0 %v2330
      %v2561 = vpop.f32.mrb[0].mxu0
      %v2562 = vadd.f32 0.0, %v2561
      %v2563 = vpop.f32.mrb[0].mxu0
      %2564 = vmatprep.mubr.f32.mxu0 0.0
      %2565 = vmatmul.mubr.f32.gmra.mrb[0].mxu0 %v2332
      %v2566 = vpop.f32.mrb[0].mxu0
      %v2567 = vadd.f32 0.0, %v2566
      %v2568 = vpop.f32.mrb[0].mxu0
      %2569 = vmatprep.mubr.f32.mxu0 0.0
      %2570 = vmatmul.mubr.f32.gmra.mrb[0].mxu0 %v2334
      %v2571 = vpop.f32.mrb[0].mxu0
      %v2572 = vadd.f32 0.0, %v2571
      %v2573 = vpop.f32.mrb[0].mxu0
      %2574 = vmatprep.mubr.f32.mxu0 0.0
      %2575 = vmatmul.mubr.f32.gmra.mrb[0].mxu0 %v2336
      %v2576 = vpop.f32.mrb[0].mxu0
      %v2577 = vadd.f32 0.0, %v2576
      %v2578 = vpop.f32.mrb[0].mxu0
      %2579 = vmatprep.mubr.f32.mxu0 0.0
      %2580 = vmatmul.mubr.f32.gmra.mrb[0].mxu0 %v2338
      %v2581 = vpop.f32.mrb[0].mxu0
      %v2582 = vadd.f32 0.0, %v2581
      %v2583 = vpop.f32.mrb[0].mxu0
      %2584 = vmatprep.mubr.f32.mxu0 0.0
      %2585 = vmatmul.mubr.f32.gmra.mrb[0].mxu0 %v2340
      %v2586 = vpop.f32.mrb[0].mxu0
      %v2587 = vadd.f32 0.0, %v2586
      %v2588 = vpop.f32.mrb[0].mxu0
      %2589 = vmatprep.mubr.f32.mxu0 0.0
      %2590 = vmatmul.mubr.f32.gmra.mrb[0].mxu0 %v2475
      %v2591 = vpop.f32.mrb[0].mxu0
      %v2592 = vadd.f32 0.0, %v2591
      %v2593 = vpop.f32.mrb[0].mxu0
      %2594 = vdwg.mxu0
      %v2595 = vadd.f32 %v2460, %v2547
      %v2596 = vadd.f32 %v2461, %v2552
      %v2597 = vadd.f32 %v2462, %v2557
      %v2598 = vadd.f32 %v2463, %v2562
      %v2599 = vadd.f32 %v2464, %v2567
      %v2600 = vadd.f32 %v2465, %v2572
      %v2601 = vadd.f32 %v2466, %v2577
      %v2602 = vadd.f32 %v2467, %v2582
      %v2603 = vadd.f32 %v2468, %v2587
      %v2604 = vadd.f32 %v2469, %v2592
      %s2605 = scalar_lea.vmem %s4, 52
      %v2606 = vld [vmem:[%s2605] sm:$0xf]
      %v2607 = vrot.slane %v499, 3
      %v2608 = vrot.slane %v500, 3
      %v2609 = vsel %vm1147, %v2607, %v2608
      %v2610 = vrot.slane %v501, 3
      %v2611 = vsel %vm1147, %v2608, %v2610
      %v2612 = vrot.slane %v502, 3
      %v2613 = vsel %vm1147, %v2610, %v2612
      %v2614 = vrot.slane %v503, 3
      %v2615 = vsel %vm1147, %v2612, %v2614
      %v2616 = vrot.slane %v504, 3
      %v2617 = vsel %vm1147, %v2614, %v2616
      %v2618 = vrot.slane %v505, 3
      %v2619 = vsel %vm1147, %v2616, %v2618
      %v2620 = vrot.slane %v506, 3
      %v2621 = vsel %vm1147, %v2618, %v2620
      %v2622 = vrot.slane %v507, 3
      %v2623 = vsel %vm1147, %v2620, %v2622
      %v2624 = vrot.slane %v508, 3
      %v2625 = vsel %vm1147, %v2622, %v2624
      %v2626 = vrot.slane %v509, 3
      %v2627 = vsel %vm1147, %v2624, %v2626
      %v2628 = vsel %vm560, %v2609, 0
      %v2630 = vsel %vm560, %v2611, 0
      %v2632 = vsel %vm560, %v2613, 0
      %v2634 = vsel %vm560, %v2615, 0
      %v2636 = vsel %vm560, %v2617, 0
      %v2638 = vsel %vm560, %v2619, 0
      %v2640 = vsel %vm560, %v2621, 0
      %v2642 = vsel %vm560, %v2623, 0
      %v2644 = vsel %vm560, %v2625, 0
      %v2646 = vsel %vm560, %v2627, 0
      %v2649 = vsel %vm581, %v2606, 0
      %2651 = vmatprep.subr.mxu0 0.0
      %2652 = vmatpush1.msra.mxu0 %v2649
      %2653 = vmatprep.subr.mxu0 0.0
      %2654 = vmatpush1.msra.mxu0 0.0
      %2655 = vmatprep.subr.mxu0 0.0
      %2656 = vmatpush1.msra.mxu0 0.0
      %2657 = vmatprep.subr.mxu0 0.0
      %2658 = vmatpush1.msra.mxu0 0.0
      %2659 = vmatprep.subr.mxu0 0.0
      %2660 = vmatpush1.msra.mxu0 0.0
      %2661 = vmatprep.subr.mxu0 0.0
      %2662 = vmatpush1.msra.mxu0 0.0
      %2663 = vmatprep.subr.mxu0 0.0
      %2664 = vmatpush1.msra.mxu0 0.0
      %2665 = vmatprep.subr.mxu0 0.0
      %2666 = vmatpush1.msra.mxu0 0.0
      %2667 = vmatprep.subr.mxu0 0.0
      %2668 = vmatpush1.msra.mxu0 0.0
      %2669 = vmatprep.subr.mxu0 0.0
      %2670 = vmatpush1.msra.mxu0 0.0
      %2671 = vmatprep.subr.mxu0 0.0
      %2672 = vmatpush1.msra.mxu0 0.0
      %2673 = vmatprep.subr.mxu0 0.0
      %2674 = vmatpush1.msra.mxu0 0.0
      %2675 = vmatprep.subr.mxu0 0.0
      %2676 = vmatpush1.msra.mxu0 0.0
      %2677 = vmatprep.subr.mxu0 0.0
      %2678 = vmatpush1.msra.mxu0 0.0
      %2679 = vmatprep.subr.mxu0 0.0
      %2680 = vmatpush1.msra.mxu0 0.0
      %2681 = vmatprep.subr.mxu0 0.0
      %2682 = vmatpush1.msra.mxu0 0.0
      %2683 = vmatprep.subr.mxu0 0.0
      %2684 = vmatpush1.msra.mxu0 0.0
      %2685 = vmatprep.subr.mxu0 0.0
      %2686 = vmatpush1.msra.mxu0 0.0
      %2687 = vmatprep.subr.mxu0 0.0
      %2688 = vmatpush1.msra.mxu0 0.0
      %2689 = vmatprep.subr.mxu0 0.0
      %2690 = vmatpush1.msra.mxu0 0.0
      %2691 = vmatprep.subr.mxu0 0.0
      %2692 = vmatpush1.msra.mxu0 0.0
      %2693 = vmatprep.subr.mxu0 0.0
      %2694 = vmatpush1.msra.mxu0 0.0
      %2695 = vmatprep.subr.mxu0 0.0
      %2696 = vmatpush1.msra.mxu0 0.0
      %2697 = vmatprep.subr.mxu0 0.0
      %2698 = vmatpush1.msra.mxu0 0.0
      %2699 = vmatprep.subr.mxu0 0.0
      %2700 = vmatpush1.msra.mxu0 0.0
      %2701 = vmatprep.subr.mxu0 0.0
      %2702 = vmatpush1.msra.mxu0 0.0
      %2703 = vmatprep.subr.mxu0 0.0
      %2704 = vmatpush1.msra.mxu0 0.0
      %2705 = vmatprep.subr.mxu0 0.0
      %2706 = vmatpush1.msra.mxu0 0.0
      %2707 = vmatprep.subr.mxu0 0.0
      %2708 = vmatpush1.msra.mxu0 0.0
      %2709 = vmatprep.subr.mxu0 0.0
      %2710 = vmatpush1.msra.mxu0 0.0
      %2711 = vmatprep.subr.mxu0 0.0
      %2712 = vmatpush1.msra.mxu0 0.0
      %2713 = vmatprep.subr.mxu0 0.0
      %2714 = vmatpush1.msra.mxu0 0.0
      %2715 = vmatprep.mubr.f32.mxu0 0.0
      %2716 = vmatmul.mubr.f32.gmra.mrb[0].mxu0 %v2628
      %v2717 = vpop.f32.mrb[0].mxu0
      %v2718 = vadd.f32 0.0, %v2717
      %v2719 = vpop.f32.mrb[0].mxu0
      %2720 = vmatprep.mubr.f32.mxu0 0.0
      %2721 = vmatmul.mubr.f32.gmra.mrb[0].mxu0 %v2630
      %v2722 = vpop.f32.mrb[0].mxu0
      %v2723 = vadd.f32 0.0, %v2722
      %v2724 = vpop.f32.mrb[0].mxu0
      %2725 = vmatprep.mubr.f32.mxu0 0.0
      %2726 = vmatmul.mubr.f32.gmra.mrb[0].mxu0 %v2632
      %v2727 = vpop.f32.mrb[0].mxu0
      %v2728 = vadd.f32 0.0, %v2727
      %v2729 = vpop.f32.mrb[0].mxu0
      %2730 = vmatprep.mubr.f32.mxu0 0.0
      %2731 = vmatmul.mubr.f32.gmra.mrb[0].mxu0 %v2634
      %v2732 = vpop.f32.mrb[0].mxu0
      %v2733 = vadd.f32 0.0, %v2732
      %v2734 = vpop.f32.mrb[0].mxu0
      %2735 = vmatprep.mubr.f32.mxu0 0.0
      %2736 = vmatmul.mubr.f32.gmra.mrb[0].mxu0 %v2636
      %v2737 = vpop.f32.mrb[0].mxu0
      %v2738 = vadd.f32 0.0, %v2737
      %v2739 = vpop.f32.mrb[0].mxu0
      %2740 = vmatprep.mubr.f32.mxu0 0.0
      %2741 = vmatmul.mubr.f32.gmra.mrb[0].mxu0 %v2638
      %v2742 = vpop.f32.mrb[0].mxu0
      %v2743 = vadd.f32 0.0, %v2742
      %v2744 = vpop.f32.mrb[0].mxu0
      %2745 = vmatprep.mubr.f32.mxu0 0.0
      %2746 = vmatmul.mubr.f32.gmra.mrb[0].mxu0 %v2640
      %v2747 = vpop.f32.mrb[0].mxu0
      %v2748 = vadd.f32 0.0, %v2747
      %v2749 = vpop.f32.mrb[0].mxu0
      %2750 = vmatprep.mubr.f32.mxu0 0.0
      %2751 = vmatmul.mubr.f32.gmra.mrb[0].mxu0 %v2642
      %v2752 = vpop.f32.mrb[0].mxu0
      %v2753 = vadd.f32 0.0, %v2752
      %v2754 = vpop.f32.mrb[0].mxu0
      %2755 = vmatprep.mubr.f32.mxu0 0.0
      %2756 = vmatmul.mubr.f32.gmra.mrb[0].mxu0 %v2644
      %v2757 = vpop.f32.mrb[0].mxu0
      %v2758 = vadd.f32 0.0, %v2757
      %v2759 = vpop.f32.mrb[0].mxu0
      %2760 = vmatprep.mubr.f32.mxu0 0.0
      %2761 = vmatmul.mubr.f32.gmra.mrb[0].mxu0 %v2646
      %v2762 = vpop.f32.mrb[0].mxu0
      %v2763 = vadd.f32 0.0, %v2762
      %v2764 = vpop.f32.mrb[0].mxu0
      %2765 = vdwg.mxu0
      %v2766 = vadd.f32 %v2595, %v2718
      %v2767 = vadd.f32 %v2596, %v2723
      %v2768 = vadd.f32 %v2597, %v2728
      %v2769 = vadd.f32 %v2598, %v2733
      %v2770 = vadd.f32 %v2599, %v2738
      %v2771 = vadd.f32 %v2600, %v2743
      %v2772 = vadd.f32 %v2601, %v2748
      %v2773 = vadd.f32 %v2602, %v2753
      %v2774 = vadd.f32 %v2603, %v2758
      %v2775 = vadd.f32 %v2604, %v2763
      %s2776 = scalar_lea.vmem %s4, 56
      %v2777 = vld [vmem:[%s2776] sm:$0xf]
      %v2778 = vrot.slane %v499, 4
      %v2779 = vrot.slane %v500, 4
      %v2780 = vsel %vm581, %v2778, %v2779
      %v2781 = vrot.slane %v501, 4
      %v2782 = vsel %vm581, %v2779, %v2781
      %v2783 = vrot.slane %v502, 4
      %v2784 = vsel %vm581, %v2781, %v2783
      %v2785 = vrot.slane %v503, 4
      %v2786 = vsel %vm581, %v2783, %v2785
      %v2787 = vrot.slane %v504, 4
      %v2788 = vsel %vm581, %v2785, %v2787
      %v2789 = vrot.slane %v505, 4
      %v2790 = vsel %vm581, %v2787, %v2789
      %v2791 = vrot.slane %v506, 4
      %v2792 = vsel %vm581, %v2789, %v2791
      %v2793 = vrot.slane %v507, 4
      %v2794 = vsel %vm581, %v2791, %v2793
      %v2795 = vrot.slane %v508, 4
      %v2796 = vsel %vm581, %v2793, %v2795
      %v2797 = vrot.slane %v509, 4
      %v2798 = vsel %vm581, %v2795, %v2797
      %v2799 = vsel %vm560, %v2780, 0
      %v2801 = vsel %vm560, %v2782, 0
      %v2803 = vsel %vm560, %v2784, 0
      %v2805 = vsel %vm560, %v2786, 0
      %v2807 = vsel %vm560, %v2788, 0
      %v2809 = vsel %vm560, %v2790, 0
      %v2811 = vsel %vm560, %v2792, 0
      %v2813 = vsel %vm560, %v2794, 0
      %v2815 = vsel %vm560, %v2796, 0
      %v2817 = vsel %vm560, %v2798, 0
      %v2820 = vsel %vm581, %v2777, 0
      %2822 = vmatprep.subr.mxu0 0.0
      %2823 = vmatpush1.msra.mxu0 %v2820
      %2824 = vmatprep.subr.mxu0 0.0
      %2825 = vmatpush1.msra.mxu0 0.0
      %2826 = vmatprep.subr.mxu0 0.0
      %2827 = vmatpush1.msra.mxu0 0.0
      %2828 = vmatprep.subr.mxu0 0.0
      %2829 = vmatpush1.msra.mxu0 0.0
      %2830 = vmatprep.subr.mxu0 0.0
      %2831 = vmatpush1.msra.mxu0 0.0
      %2832 = vmatprep.subr.mxu0 0.0
      %2833 = vmatpush1.msra.mxu0 0.0
      %2834 = vmatprep.subr.mxu0 0.0
      %2835 = vmatpush1.msra.mxu0 0.0
      %2836 = vmatprep.subr.mxu0 0.0
      %2837 = vmatpush1.msra.mxu0 0.0
      %2838 = vmatprep.subr.mxu0 0.0
      %2839 = vmatpush1.msra.mxu0 0.0
      %2840 = vmatprep.subr.mxu0 0.0
      %2841 = vmatpush1.msra.mxu0 0.0
      %2842 = vmatprep.subr.mxu0 0.0
      %2843 = vmatpush1.msra.mxu0 0.0
      %2844 = vmatprep.subr.mxu0 0.0
      %2845 = vmatpush1.msra.mxu0 0.0
      %2846 = vmatprep.subr.mxu0 0.0
      %2847 = vmatpush1.msra.mxu0 0.0
      %2848 = vmatprep.subr.mxu0 0.0
      %2849 = vmatpush1.msra.mxu0 0.0
      %2850 = vmatprep.subr.mxu0 0.0
      %2851 = vmatpush1.msra.mxu0 0.0
      %2852 = vmatprep.subr.mxu0 0.0
      %2853 = vmatpush1.msra.mxu0 0.0
      %2854 = vmatprep.subr.mxu0 0.0
      %2855 = vmatpush1.msra.mxu0 0.0
      %2856 = vmatprep.subr.mxu0 0.0
      %2857 = vmatpush1.msra.mxu0 0.0
      %2858 = vmatprep.subr.mxu0 0.0
      %2859 = vmatpush1.msra.mxu0 0.0
      %2860 = vmatprep.subr.mxu0 0.0
      %2861 = vmatpush1.msra.mxu0 0.0
      %2862 = vmatprep.subr.mxu0 0.0
      %2863 = vmatpush1.msra.mxu0 0.0
      %2864 = vmatprep.subr.mxu0 0.0
      %2865 = vmatpush1.msra.mxu0 0.0
      %2866 = vmatprep.subr.mxu0 0.0
      %2867 = vmatpush1.msra.mxu0 0.0
      %2868 = vmatprep.subr.mxu0 0.0
      %2869 = vmatpush1.msra.mxu0 0.0
      %2870 = vmatprep.subr.mxu0 0.0
      %2871 = vmatpush1.msra.mxu0 0.0
      %2872 = vmatprep.subr.mxu0 0.0
      %2873 = vmatpush1.msra.mxu0 0.0
      %2874 = vmatprep.subr.mxu0 0.0
      %2875 = vmatpush1.msra.mxu0 0.0
      %2876 = vmatprep.subr.mxu0 0.0
      %2877 = vmatpush1.msra.mxu0 0.0
      %2878 = vmatprep.subr.mxu0 0.0
      %2879 = vmatpush1.msra.mxu0 0.0
      %2880 = vmatprep.subr.mxu0 0.0
      %2881 = vmatpush1.msra.mxu0 0.0
      %2882 = vmatprep.subr.mxu0 0.0
      %2883 = vmatpush1.msra.mxu0 0.0
      %2884 = vmatprep.subr.mxu0 0.0
      %2885 = vmatpush1.msra.mxu0 0.0
      %2886 = vmatprep.mubr.f32.mxu0 0.0
      %2887 = vmatmul.mubr.f32.gmra.mrb[0].mxu0 %v2799
      %v2888 = vpop.f32.mrb[0].mxu0
      %v2889 = vadd.f32 0.0, %v2888
      %v2890 = vpop.f32.mrb[0].mxu0
      %2891 = vmatprep.mubr.f32.mxu0 0.0
      %2892 = vmatmul.mubr.f32.gmra.mrb[0].mxu0 %v2801
      %v2893 = vpop.f32.mrb[0].mxu0
      %v2894 = vadd.f32 0.0, %v2893
      %v2895 = vpop.f32.mrb[0].mxu0
      %2896 = vmatprep.mubr.f32.mxu0 0.0
      %2897 = vmatmul.mubr.f32.gmra.mrb[0].mxu0 %v2803
      %v2898 = vpop.f32.mrb[0].mxu0
      %v2899 = vadd.f32 0.0, %v2898
      %v2900 = vpop.f32.mrb[0].mxu0
      %2901 = vmatprep.mubr.f32.mxu0 0.0
      %2902 = vmatmul.mubr.f32.gmra.mrb[0].mxu0 %v2805
      %v2903 = vpop.f32.mrb[0].mxu0
      %v2904 = vadd.f32 0.0, %v2903
      %v2905 = vpop.f32.mrb[0].mxu0
      %2906 = vmatprep.mubr.f32.mxu0 0.0
      %2907 = vmatmul.mubr.f32.gmra.mrb[0].mxu0 %v2807
      %v2908 = vpop.f32.mrb[0].mxu0
      %v2909 = vadd.f32 0.0, %v2908
      %v2910 = vpop.f32.mrb[0].mxu0
      %2911 = vmatprep.mubr.f32.mxu0 0.0
      %2912 = vmatmul.mubr.f32.gmra.mrb[0].mxu0 %v2809
      %v2913 = vpop.f32.mrb[0].mxu0
      %v2914 = vadd.f32 0.0, %v2913
      %v2915 = vpop.f32.mrb[0].mxu0
      %2916 = vmatprep.mubr.f32.mxu0 0.0
      %2917 = vmatmul.mubr.f32.gmra.mrb[0].mxu0 %v2811
      %v2918 = vpop.f32.mrb[0].mxu0
      %v2919 = vadd.f32 0.0, %v2918
      %v2920 = vpop.f32.mrb[0].mxu0
      %2921 = vmatprep.mubr.f32.mxu0 0.0
      %2922 = vmatmul.mubr.f32.gmra.mrb[0].mxu0 %v2813
      %v2923 = vpop.f32.mrb[0].mxu0
      %v2924 = vadd.f32 0.0, %v2923
      %v2925 = vpop.f32.mrb[0].mxu0
      %2926 = vmatprep.mubr.f32.mxu0 0.0
      %2927 = vmatmul.mubr.f32.gmra.mrb[0].mxu0 %v2815
      %v2928 = vpop.f32.mrb[0].mxu0
      %v2929 = vadd.f32 0.0, %v2928
      %v2930 = vpop.f32.mrb[0].mxu0
      %2931 = vmatprep.mubr.f32.mxu0 0.0
      %2932 = vmatmul.mubr.f32.gmra.mrb[0].mxu0 %v2817
      %v2933 = vpop.f32.mrb[0].mxu0
      %v2934 = vadd.f32 0.0, %v2933
      %v2935 = vpop.f32.mrb[0].mxu0
      %2936 = vdwg.mxu0
      %v2937 = vadd.f32 %v2766, %v2889
      %v2938 = vadd.f32 %v2767, %v2894
      %v2939 = vadd.f32 %v2768, %v2899
      %v2940 = vadd.f32 %v2769, %v2904
      %v2941 = vadd.f32 %v2770, %v2909
      %v2942 = vadd.f32 %v2771, %v2914
      %v2943 = vadd.f32 %v2772, %v2919
      %v2944 = vadd.f32 %v2773, %v2924
      %v2945 = vadd.f32 %v2774, %v2929
      %v2946 = vadd.f32 %v2775, %v2934
      %s2947 = scalar_lea.vmem %s4, 60
      %v2948 = vld [vmem:[%s2947] sm:$0xf]
      %v2950 = vrot.slane %v510, 4
      %v2951 = vsel %vm581, %v2797, %v2950
      %v2952 = vsel %vm560, %v2951, 0
      %v2955 = vsel %vm581, %v2948, 0
      %2957 = vmatprep.subr.mxu0 0.0
      %2958 = vmatpush1.msra.mxu0 %v2955
      %2959 = vmatprep.subr.mxu0 0.0
      %2960 = vmatpush1.msra.mxu0 0.0
      %2961 = vmatprep.subr.mxu0 0.0
      %2962 = vmatpush1.msra.mxu0 0.0
      %2963 = vmatprep.subr.mxu0 0.0
      %2964 = vmatpush1.msra.mxu0 0.0
      %2965 = vmatprep.subr.mxu0 0.0
      %2966 = vmatpush1.msra.mxu0 0.0
      %2967 = vmatprep.subr.mxu0 0.0
      %2968 = vmatpush1.msra.mxu0 0.0
      %2969 = vmatprep.subr.mxu0 0.0
      %2970 = vmatpush1.msra.mxu0 0.0
      %2971 = vmatprep.subr.mxu0 0.0
      %2972 = vmatpush1.msra.mxu0 0.0
      %2973 = vmatprep.subr.mxu0 0.0
      %2974 = vmatpush1.msra.mxu0 0.0
      %2975 = vmatprep.subr.mxu0 0.0
      %2976 = vmatpush1.msra.mxu0 0.0
      %2977 = vmatprep.subr.mxu0 0.0
      %2978 = vmatpush1.msra.mxu0 0.0
      %2979 = vmatprep.subr.mxu0 0.0
      %2980 = vmatpush1.msra.mxu0 0.0
      %2981 = vmatprep.subr.mxu0 0.0
      %2982 = vmatpush1.msra.mxu0 0.0
      %2983 = vmatprep.subr.mxu0 0.0
      %2984 = vmatpush1.msra.mxu0 0.0
      %2985 = vmatprep.subr.mxu0 0.0
      %2986 = vmatpush1.msra.mxu0 0.0
      %2987 = vmatprep.subr.mxu0 0.0
      %2988 = vmatpush1.msra.mxu0 0.0
      %2989 = vmatprep.subr.mxu0 0.0
      %2990 = vmatpush1.msra.mxu0 0.0
      %2991 = vmatprep.subr.mxu0 0.0
      %2992 = vmatpush1.msra.mxu0 0.0
      %2993 = vmatprep.subr.mxu0 0.0
      %2994 = vmatpush1.msra.mxu0 0.0
      %2995 = vmatprep.subr.mxu0 0.0
      %2996 = vmatpush1.msra.mxu0 0.0
      %2997 = vmatprep.subr.mxu0 0.0
      %2998 = vmatpush1.msra.mxu0 0.0
      %2999 = vmatprep.subr.mxu0 0.0
      %3000 = vmatpush1.msra.mxu0 0.0
      %3001 = vmatprep.subr.mxu0 0.0
      %3002 = vmatpush1.msra.mxu0 0.0
      %3003 = vmatprep.subr.mxu0 0.0
      %3004 = vmatpush1.msra.mxu0 0.0
      %3005 = vmatprep.subr.mxu0 0.0
      %3006 = vmatpush1.msra.mxu0 0.0
      %3007 = vmatprep.subr.mxu0 0.0
      %3008 = vmatpush1.msra.mxu0 0.0
      %3009 = vmatprep.subr.mxu0 0.0
      %3010 = vmatpush1.msra.mxu0 0.0
      %3011 = vmatprep.subr.mxu0 0.0
      %3012 = vmatpush1.msra.mxu0 0.0
      %3013 = vmatprep.subr.mxu0 0.0
      %3014 = vmatpush1.msra.mxu0 0.0
      %3015 = vmatprep.subr.mxu0 0.0
      %3016 = vmatpush1.msra.mxu0 0.0
      %3017 = vmatprep.subr.mxu0 0.0
      %3018 = vmatpush1.msra.mxu0 0.0
      %3019 = vmatprep.subr.mxu0 0.0
      %3020 = vmatpush1.msra.mxu0 0.0
      %3021 = vmatprep.mubr.f32.mxu0 0.0
      %3022 = vmatmul.mubr.f32.gmra.mrb[0].mxu0 %v2801
      %v3023 = vpop.f32.mrb[0].mxu0
      %v3024 = vadd.f32 0.0, %v3023
      %v3025 = vpop.f32.mrb[0].mxu0
      %3026 = vmatprep.mubr.f32.mxu0 0.0
      %3027 = vmatmul.mubr.f32.gmra.mrb[0].mxu0 %v2803
      %v3028 = vpop.f32.mrb[0].mxu0
      %v3029 = vadd.f32 0.0, %v3028
      %v3030 = vpop.f32.mrb[0].mxu0
      %3031 = vmatprep.mubr.f32.mxu0 0.0
      %3032 = vmatmul.mubr.f32.gmra.mrb[0].mxu0 %v2805
      %v3033 = vpop.f32.mrb[0].mxu0
      %v3034 = vadd.f32 0.0, %v3033
      %v3035 = vpop.f32.mrb[0].mxu0
      %3036 = vmatprep.mubr.f32.mxu0 0.0
      %3037 = vmatmul.mubr.f32.gmra.mrb[0].mxu0 %v2807
      %v3038 = vpop.f32.mrb[0].mxu0
      %v3039 = vadd.f32 0.0, %v3038
      %v3040 = vpop.f32.mrb[0].mxu0
      %3041 = vmatprep.mubr.f32.mxu0 0.0
      %3042 = vmatmul.mubr.f32.gmra.mrb[0].mxu0 %v2809
      %v3043 = vpop.f32.mrb[0].mxu0
      %v3044 = vadd.f32 0.0, %v3043
      %v3045 = vpop.f32.mrb[0].mxu0
      %3046 = vmatprep.mubr.f32.mxu0 0.0
      %3047 = vmatmul.mubr.f32.gmra.mrb[0].mxu0 %v2811
      %v3048 = vpop.f32.mrb[0].mxu0
      %v3049 = vadd.f32 0.0, %v3048
      %v3050 = vpop.f32.mrb[0].mxu0
      %3051 = vmatprep.mubr.f32.mxu0 0.0
      %3052 = vmatmul.mubr.f32.gmra.mrb[0].mxu0 %v2813
      %v3053 = vpop.f32.mrb[0].mxu0
      %v3054 = vadd.f32 0.0, %v3053
      %v3055 = vpop.f32.mrb[0].mxu0
      %3056 = vmatprep.mubr.f32.mxu0 0.0
      %3057 = vmatmul.mubr.f32.gmra.mrb[0].mxu0 %v2815
      %v3058 = vpop.f32.mrb[0].mxu0
      %v3059 = vadd.f32 0.0, %v3058
      %v3060 = vpop.f32.mrb[0].mxu0
      %3061 = vmatprep.mubr.f32.mxu0 0.0
      %3062 = vmatmul.mubr.f32.gmra.mrb[0].mxu0 %v2817
      %v3063 = vpop.f32.mrb[0].mxu0
      %v3064 = vadd.f32 0.0, %v3063
      %v3065 = vpop.f32.mrb[0].mxu0
      %3066 = vmatprep.mubr.f32.mxu0 0.0
      %3067 = vmatmul.mubr.f32.gmra.mrb[0].mxu0 %v2952
      %v3068 = vpop.f32.mrb[0].mxu0
      %v3069 = vadd.f32 0.0, %v3068
      %v3070 = vpop.f32.mrb[0].mxu0
      %3071 = vdwg.mxu0
      %v3072 = vadd.f32 %v2937, %v3024
      %v3073 = vadd.f32 %v2938, %v3029
      %v3074 = vadd.f32 %v2939, %v3034
      %v3075 = vadd.f32 %v2940, %v3039
      %v3076 = vadd.f32 %v2941, %v3044
      %v3077 = vadd.f32 %v2942, %v3049
      %v3078 = vadd.f32 %v2943, %v3054
      %v3079 = vadd.f32 %v2944, %v3059
      %v3080 = vadd.f32 %v2945, %v3064
      %v3081 = vadd.f32 %v2946, %v3069
      %s3082 = scalar_lea.vmem %s4, 64
      %v3083 = vld [vmem:[%s3082] sm:$0xf]
      %v3084 = vrot.slane %v500, 5
      %v3085 = vrot.slane %v501, 5
      %v3086 = vsel %vm1625, %v3084, %v3085
      %v3087 = vrot.slane %v502, 5
      %v3088 = vsel %vm1625, %v3085, %v3087
      %v3089 = vrot.slane %v503, 5
      %v3090 = vsel %vm1625, %v3087, %v3089
      %v3091 = vrot.slane %v504, 5
      %v3092 = vsel %vm1625, %v3089, %v3091
      %v3093 = vrot.slane %v505, 5
      %v3094 = vsel %vm1625, %v3091, %v3093
      %v3095 = vrot.slane %v506, 5
      %v3096 = vsel %vm1625, %v3093, %v3095
      %v3097 = vrot.slane %v507, 5
      %v3098 = vsel %vm1625, %v3095, %v3097
      %v3099 = vrot.slane %v508, 5
      %v3100 = vsel %vm1625, %v3097, %v3099
      %v3101 = vrot.slane %v509, 5
      %v3102 = vsel %vm1625, %v3099, %v3101
      %v3103 = vrot.slane %v510, 5
      %v3104 = vsel %vm1625, %v3101, %v3103
      %v3105 = vsel %vm560, %v3086, 0
      %v3107 = vsel %vm560, %v3088, 0
      %v3109 = vsel %vm560, %v3090, 0
      %v3111 = vsel %vm560, %v3092, 0
      %v3113 = vsel %vm560, %v3094, 0
      %v3115 = vsel %vm560, %v3096, 0
      %v3117 = vsel %vm560, %v3098, 0
      %v3119 = vsel %vm560, %v3100, 0
      %v3121 = vsel %vm560, %v3102, 0
      %v3123 = vsel %vm560, %v3104, 0
      %v3126 = vsel %vm581, %v3083, 0
      %3128 = vmatprep.subr.mxu0 0.0
      %3129 = vmatpush1.msra.mxu0 %v3126
      %3130 = vmatprep.subr.mxu0 0.0
      %3131 = vmatpush1.msra.mxu0 0.0
      %3132 = vmatprep.subr.mxu0 0.0
      %3133 = vmatpush1.msra.mxu0 0.0
      %3134 = vmatprep.subr.mxu0 0.0
      %3135 = vmatpush1.msra.mxu0 0.0
      %3136 = vmatprep.subr.mxu0 0.0
      %3137 = vmatpush1.msra.mxu0 0.0
      %3138 = vmatprep.subr.mxu0 0.0
      %3139 = vmatpush1.msra.mxu0 0.0
      %3140 = vmatprep.subr.mxu0 0.0
      %3141 = vmatpush1.msra.mxu0 0.0
      %3142 = vmatprep.subr.mxu0 0.0
      %3143 = vmatpush1.msra.mxu0 0.0
      %3144 = vmatprep.subr.mxu0 0.0
      %3145 = vmatpush1.msra.mxu0 0.0
      %3146 = vmatprep.subr.mxu0 0.0
      %3147 = vmatpush1.msra.mxu0 0.0
      %3148 = vmatprep.subr.mxu0 0.0
      %3149 = vmatpush1.msra.mxu0 0.0
      %3150 = vmatprep.subr.mxu0 0.0
      %3151 = vmatpush1.msra.mxu0 0.0
      %3152 = vmatprep.subr.mxu0 0.0
      %3153 = vmatpush1.msra.mxu0 0.0
      %3154 = vmatprep.subr.mxu0 0.0
      %3155 = vmatpush1.msra.mxu0 0.0
      %3156 = vmatprep.subr.mxu0 0.0
      %3157 = vmatpush1.msra.mxu0 0.0
      %3158 = vmatprep.subr.mxu0 0.0
      %3159 = vmatpush1.msra.mxu0 0.0
      %3160 = vmatprep.subr.mxu0 0.0
      %3161 = vmatpush1.msra.mxu0 0.0
      %3162 = vmatprep.subr.mxu0 0.0
      %3163 = vmatpush1.msra.mxu0 0.0
      %3164 = vmatprep.subr.mxu0 0.0
      %3165 = vmatpush1.msra.mxu0 0.0
      %3166 = vmatprep.subr.mxu0 0.0
      %3167 = vmatpush1.msra.mxu0 0.0
      %3168 = vmatprep.subr.mxu0 0.0
      %3169 = vmatpush1.msra.mxu0 0.0
      %3170 = vmatprep.subr.mxu0 0.0
      %3171 = vmatpush1.msra.mxu0 0.0
      %3172 = vmatprep.subr.mxu0 0.0
      %3173 = vmatpush1.msra.mxu0 0.0
      %3174 = vmatprep.subr.mxu0 0.0
      %3175 = vmatpush1.msra.mxu0 0.0
      %3176 = vmatprep.subr.mxu0 0.0
      %3177 = vmatpush1.msra.mxu0 0.0
      %3178 = vmatprep.subr.mxu0 0.0
      %3179 = vmatpush1.msra.mxu0 0.0
      %3180 = vmatprep.subr.mxu0 0.0
      %3181 = vmatpush1.msra.mxu0 0.0
      %3182 = vmatprep.subr.mxu0 0.0
      %3183 = vmatpush1.msra.mxu0 0.0
      %3184 = vmatprep.subr.mxu0 0.0
      %3185 = vmatpush1.msra.mxu0 0.0
      %3186 = vmatprep.subr.mxu0 0.0
      %3187 = vmatpush1.msra.mxu0 0.0
      %3188 = vmatprep.subr.mxu0 0.0
      %3189 = vmatpush1.msra.mxu0 0.0
      %3190 = vmatprep.subr.mxu0 0.0
      %3191 = vmatpush1.msra.mxu0 0.0
      %3192 = vmatprep.mubr.f32.mxu0 0.0
      %3193 = vmatmul.mubr.f32.gmra.mrb[0].mxu0 %v3105
      %v3194 = vpop.f32.mrb[0].mxu0
      %v3195 = vadd.f32 0.0, %v3194
      %v3196 = vpop.f32.mrb[0].mxu0
      %3197 = vmatprep.mubr.f32.mxu0 0.0
      %3198 = vmatmul.mubr.f32.gmra.mrb[0].mxu0 %v3107
      %v3199 = vpop.f32.mrb[0].mxu0
      %v3200 = vadd.f32 0.0, %v3199
      %v3201 = vpop.f32.mrb[0].mxu0
      %3202 = vmatprep.mubr.f32.mxu0 0.0
      %3203 = vmatmul.mubr.f32.gmra.mrb[0].mxu0 %v3109
      %v3204 = vpop.f32.mrb[0].mxu0
      %v3205 = vadd.f32 0.0, %v3204
      %v3206 = vpop.f32.mrb[0].mxu0
      %3207 = vmatprep.mubr.f32.mxu0 0.0
      %3208 = vmatmul.mubr.f32.gmra.mrb[0].mxu0 %v3111
      %v3209 = vpop.f32.mrb[0].mxu0
      %v3210 = vadd.f32 0.0, %v3209
      %v3211 = vpop.f32.mrb[0].mxu0
      %3212 = vmatprep.mubr.f32.mxu0 0.0
      %3213 = vmatmul.mubr.f32.gmra.mrb[0].mxu0 %v3113
      %v3214 = vpop.f32.mrb[0].mxu0
      %v3215 = vadd.f32 0.0, %v3214
      %v3216 = vpop.f32.mrb[0].mxu0
      %3217 = vmatprep.mubr.f32.mxu0 0.0
      %3218 = vmatmul.mubr.f32.gmra.mrb[0].mxu0 %v3115
      %v3219 = vpop.f32.mrb[0].mxu0
      %v3220 = vadd.f32 0.0, %v3219
      %v3221 = vpop.f32.mrb[0].mxu0
      %3222 = vmatprep.mubr.f32.mxu0 0.0
      %3223 = vmatmul.mubr.f32.gmra.mrb[0].mxu0 %v3117
      %v3224 = vpop.f32.mrb[0].mxu0
      %v3225 = vadd.f32 0.0, %v3224
      %v3226 = vpop.f32.mrb[0].mxu0
      %3227 = vmatprep.mubr.f32.mxu0 0.0
      %3228 = vmatmul.mubr.f32.gmra.mrb[0].mxu0 %v3119
      %v3229 = vpop.f32.mrb[0].mxu0
      %v3230 = vadd.f32 0.0, %v3229
      %v3231 = vpop.f32.mrb[0].mxu0
      %3232 = vmatprep.mubr.f32.mxu0 0.0
      %3233 = vmatmul.mubr.f32.gmra.mrb[0].mxu0 %v3121
      %v3234 = vpop.f32.mrb[0].mxu0
      %v3235 = vadd.f32 0.0, %v3234
      %v3236 = vpop.f32.mrb[0].mxu0
      %3237 = vmatprep.mubr.f32.mxu0 0.0
      %3238 = vmatmul.mubr.f32.gmra.mrb[0].mxu0 %v3123
      %v3239 = vpop.f32.mrb[0].mxu0
      %v3240 = vadd.f32 0.0, %v3239
      %v3241 = vpop.f32.mrb[0].mxu0
      %3242 = vdwg.mxu0
      %v3243 = vadd.f32 %v3072, %v3195
      %v3244 = vadd.f32 %v3073, %v3200
      %v3245 = vadd.f32 %v3074, %v3205
      %v3246 = vadd.f32 %v3075, %v3210
      %v3247 = vadd.f32 %v3076, %v3215
      %v3248 = vadd.f32 %v3077, %v3220
      %v3249 = vadd.f32 %v3078, %v3225
      %v3250 = vadd.f32 %v3079, %v3230
      %v3251 = vadd.f32 %v3080, %v3235
      %v3252 = vadd.f32 %v3081, %v3240
      %s3253 = scalar_lea.vmem %s4, 68
      %v3254 = vld [vmem:[%s3253] sm:$0xf]
      %v3255 = vrot.slane %v500, 6
      %v3256 = vrot.slane %v501, 6
      %v3257 = vsel %vm1797, %v3255, %v3256
      %v3258 = vrot.slane %v502, 6
      %v3259 = vsel %vm1797, %v3256, %v3258
      %v3260 = vrot.slane %v503, 6
      %v3261 = vsel %vm1797, %v3258, %v3260
      %v3262 = vrot.slane %v504, 6
      %v3263 = vsel %vm1797, %v3260, %v3262
      %v3264 = vrot.slane %v505, 6
      %v3265 = vsel %vm1797, %v3262, %v3264
      %v3266 = vrot.slane %v506, 6
      %v3267 = vsel %vm1797, %v3264, %v3266
      %v3268 = vrot.slane %v507, 6
      %v3269 = vsel %vm1797, %v3266, %v3268
      %v3270 = vrot.slane %v508, 6
      %v3271 = vsel %vm1797, %v3268, %v3270
      %v3272 = vrot.slane %v509, 6
      %v3273 = vsel %vm1797, %v3270, %v3272
      %v3274 = vrot.slane %v510, 6
      %v3275 = vsel %vm1797, %v3272, %v3274
      %v3276 = vsel %vm560, %v3257, 0
      %v3278 = vsel %vm560, %v3259, 0
      %v3280 = vsel %vm560, %v3261, 0
      %v3282 = vsel %vm560, %v3263, 0
      %v3284 = vsel %vm560, %v3265, 0
      %v3286 = vsel %vm560, %v3267, 0
      %v3288 = vsel %vm560, %v3269, 0
      %v3290 = vsel %vm560, %v3271, 0
      %v3292 = vsel %vm560, %v3273, 0
      %v3294 = vsel %vm560, %v3275, 0
      %v3297 = vsel %vm581, %v3254, 0
      %3299 = vmatprep.subr.mxu0 0.0
      %3300 = vmatpush1.msra.mxu0 %v3297
      %3301 = vmatprep.subr.mxu0 0.0
      %3302 = vmatpush1.msra.mxu0 0.0
      %3303 = vmatprep.subr.mxu0 0.0
      %3304 = vmatpush1.msra.mxu0 0.0
      %3305 = vmatprep.subr.mxu0 0.0
      %3306 = vmatpush1.msra.mxu0 0.0
      %3307 = vmatprep.subr.mxu0 0.0
      %3308 = vmatpush1.msra.mxu0 0.0
      %3309 = vmatprep.subr.mxu0 0.0
      %3310 = vmatpush1.msra.mxu0 0.0
      %3311 = vmatprep.subr.mxu0 0.0
      %3312 = vmatpush1.msra.mxu0 0.0
      %3313 = vmatprep.subr.mxu0 0.0
      %3314 = vmatpush1.msra.mxu0 0.0
      %3315 = vmatprep.subr.mxu0 0.0
      %3316 = vmatpush1.msra.mxu0 0.0
      %3317 = vmatprep.subr.mxu0 0.0
      %3318 = vmatpush1.msra.mxu0 0.0
      %3319 = vmatprep.subr.mxu0 0.0
      %3320 = vmatpush1.msra.mxu0 0.0
      %3321 = vmatprep.subr.mxu0 0.0
      %3322 = vmatpush1.msra.mxu0 0.0
      %3323 = vmatprep.subr.mxu0 0.0
      %3324 = vmatpush1.msra.mxu0 0.0
      %3325 = vmatprep.subr.mxu0 0.0
      %3326 = vmatpush1.msra.mxu0 0.0
      %3327 = vmatprep.subr.mxu0 0.0
      %3328 = vmatpush1.msra.mxu0 0.0
      %3329 = vmatprep.subr.mxu0 0.0
      %3330 = vmatpush1.msra.mxu0 0.0
      %3331 = vmatprep.subr.mxu0 0.0
      %3332 = vmatpush1.msra.mxu0 0.0
      %3333 = vmatprep.subr.mxu0 0.0
      %3334 = vmatpush1.msra.mxu0 0.0
      %3335 = vmatprep.subr.mxu0 0.0
      %3336 = vmatpush1.msra.mxu0 0.0
      %3337 = vmatprep.subr.mxu0 0.0
      %3338 = vmatpush1.msra.mxu0 0.0
      %3339 = vmatprep.subr.mxu0 0.0
      %3340 = vmatpush1.msra.mxu0 0.0
      %3341 = vmatprep.subr.mxu0 0.0
      %3342 = vmatpush1.msra.mxu0 0.0
      %3343 = vmatprep.subr.mxu0 0.0
      %3344 = vmatpush1.msra.mxu0 0.0
      %3345 = vmatprep.subr.mxu0 0.0
      %3346 = vmatpush1.msra.mxu0 0.0
      %3347 = vmatprep.subr.mxu0 0.0
      %3348 = vmatpush1.msra.mxu0 0.0
      %3349 = vmatprep.subr.mxu0 0.0
      %3350 = vmatpush1.msra.mxu0 0.0
      %3351 = vmatprep.subr.mxu0 0.0
      %3352 = vmatpush1.msra.mxu0 0.0
      %3353 = vmatprep.subr.mxu0 0.0
      %3354 = vmatpush1.msra.mxu0 0.0
      %3355 = vmatprep.subr.mxu0 0.0
      %3356 = vmatpush1.msra.mxu0 0.0
      %3357 = vmatprep.subr.mxu0 0.0
      %3358 = vmatpush1.msra.mxu0 0.0
      %3359 = vmatprep.subr.mxu0 0.0
      %3360 = vmatpush1.msra.mxu0 0.0
      %3361 = vmatprep.subr.mxu0 0.0
      %3362 = vmatpush1.msra.mxu0 0.0
      %3363 = vmatprep.mubr.f32.mxu0 0.0
      %3364 = vmatmul.mubr.f32.gmra.mrb[0].mxu0 %v3276
      %v3365 = vpop.f32.mrb[0].mxu0
      %v3366 = vadd.f32 0.0, %v3365
      %v3367 = vpop.f32.mrb[0].mxu0
      %3368 = vmatprep.mubr.f32.mxu0 0.0
      %3369 = vmatmul.mubr.f32.gmra.mrb[0].mxu0 %v3278
      %v3370 = vpop.f32.mrb[0].mxu0
      %v3371 = vadd.f32 0.0, %v3370
      %v3372 = vpop.f32.mrb[0].mxu0
      %3373 = vmatprep.mubr.f32.mxu0 0.0
      %3374 = vmatmul.mubr.f32.gmra.mrb[0].mxu0 %v3280
      %v3375 = vpop.f32.mrb[0].mxu0
      %v3376 = vadd.f32 0.0, %v3375
      %v3377 = vpop.f32.mrb[0].mxu0
      %3378 = vmatprep.mubr.f32.mxu0 0.0
      %3379 = vmatmul.mubr.f32.gmra.mrb[0].mxu0 %v3282
      %v3380 = vpop.f32.mrb[0].mxu0
      %v3381 = vadd.f32 0.0, %v3380
      %v3382 = vpop.f32.mrb[0].mxu0
      %3383 = vmatprep.mubr.f32.mxu0 0.0
      %3384 = vmatmul.mubr.f32.gmra.mrb[0].mxu0 %v3284
      %v3385 = vpop.f32.mrb[0].mxu0
      %v3386 = vadd.f32 0.0, %v3385
      %v3387 = vpop.f32.mrb[0].mxu0
      %3388 = vmatprep.mubr.f32.mxu0 0.0
      %3389 = vmatmul.mubr.f32.gmra.mrb[0].mxu0 %v3286
      %v3390 = vpop.f32.mrb[0].mxu0
      %v3391 = vadd.f32 0.0, %v3390
      %v3392 = vpop.f32.mrb[0].mxu0
      %3393 = vmatprep.mubr.f32.mxu0 0.0
      %3394 = vmatmul.mubr.f32.gmra.mrb[0].mxu0 %v3288
      %v3395 = vpop.f32.mrb[0].mxu0
      %v3396 = vadd.f32 0.0, %v3395
      %v3397 = vpop.f32.mrb[0].mxu0
      %3398 = vmatprep.mubr.f32.mxu0 0.0
      %3399 = vmatmul.mubr.f32.gmra.mrb[0].mxu0 %v3290
      %v3400 = vpop.f32.mrb[0].mxu0
      %v3401 = vadd.f32 0.0, %v3400
      %v3402 = vpop.f32.mrb[0].mxu0
      %3403 = vmatprep.mubr.f32.mxu0 0.0
      %3404 = vmatmul.mubr.f32.gmra.mrb[0].mxu0 %v3292
      %v3405 = vpop.f32.mrb[0].mxu0
      %v3406 = vadd.f32 0.0, %v3405
      %v3407 = vpop.f32.mrb[0].mxu0
      %3408 = vmatprep.mubr.f32.mxu0 0.0
      %3409 = vmatmul.mubr.f32.gmra.mrb[0].mxu0 %v3294
      %v3410 = vpop.f32.mrb[0].mxu0
      %v3411 = vadd.f32 0.0, %v3410
      %v3412 = vpop.f32.mrb[0].mxu0
      %3413 = vdwg.mxu0
      %v3414 = vadd.f32 %v3243, %v3366
      %v3415 = vadd.f32 %v3244, %v3371
      %v3416 = vadd.f32 %v3245, %v3376
      %v3417 = vadd.f32 %v3246, %v3381
      %v3418 = vadd.f32 %v3247, %v3386
      %v3419 = vadd.f32 %v3248, %v3391
      %v3420 = vadd.f32 %v3249, %v3396
      %v3421 = vadd.f32 %v3250, %v3401
      %v3422 = vadd.f32 %v3251, %v3406
      %v3423 = vadd.f32 %v3252, %v3411
      %s3424 = scalar_lea.vmem %s4, 72
      %v3425 = vld [vmem:[%s3424] sm:$0xf]
      %v3427 = vsel %vm560, %v511, 0
      %v3430 = vsel %vm560, %v512, 0
      %v3433 = vsel %vm560, %v513, 0
      %v3436 = vsel %vm560, %v514, 0
      %v3439 = vsel %vm560, %v515, 0
      %v3442 = vsel %vm560, %v516, 0
      %v3445 = vsel %vm560, %v517, 0
      %v3448 = vsel %vm560, %v518, 0
      %v3451 = vsel %vm560, %v519, 0
      %v3454 = vsel %vm560, %v520, 0
      %v3457 = vsel %vm581, %v3425, 0
      %3459 = vmatprep.subr.mxu0 0.0
      %3460 = vmatpush1.msra.mxu0 %v3457
      %3461 = vmatprep.subr.mxu0 0.0
      %3462 = vmatpush1.msra.mxu0 0.0
      %3463 = vmatprep.subr.mxu0 0.0
      %3464 = vmatpush1.msra.mxu0 0.0
      %3465 = vmatprep.subr.mxu0 0.0
      %3466 = vmatpush1.msra.mxu0 0.0
      %3467 = vmatprep.subr.mxu0 0.0
      %3468 = vmatpush1.msra.mxu0 0.0
      %3469 = vmatprep.subr.mxu0 0.0
      %3470 = vmatpush1.msra.mxu0 0.0
      %3471 = vmatprep.subr.mxu0 0.0
      %3472 = vmatpush1.msra.mxu0 0.0
      %3473 = vmatprep.subr.mxu0 0.0
      %3474 = vmatpush1.msra.mxu0 0.0
      %3475 = vmatprep.subr.mxu0 0.0
      %3476 = vmatpush1.msra.mxu0 0.0
      %3477 = vmatprep.subr.mxu0 0.0
      %3478 = vmatpush1.msra.mxu0 0.0
      %3479 = vmatprep.subr.mxu0 0.0
      %3480 = vmatpush1.msra.mxu0 0.0
      %3481 = vmatprep.subr.mxu0 0.0
      %3482 = vmatpush1.msra.mxu0 0.0
      %3483 = vmatprep.subr.mxu0 0.0
      %3484 = vmatpush1.msra.mxu0 0.0
      %3485 = vmatprep.subr.mxu0 0.0
      %3486 = vmatpush1.msra.mxu0 0.0
      %3487 = vmatprep.subr.mxu0 0.0
      %3488 = vmatpush1.msra.mxu0 0.0
      %3489 = vmatprep.subr.mxu0 0.0
      %3490 = vmatpush1.msra.mxu0 0.0
      %3491 = vmatprep.subr.mxu0 0.0
      %3492 = vmatpush1.msra.mxu0 0.0
      %3493 = vmatprep.subr.mxu0 0.0
      %3494 = vmatpush1.msra.mxu0 0.0
      %3495 = vmatprep.subr.mxu0 0.0
      %3496 = vmatpush1.msra.mxu0 0.0
      %3497 = vmatprep.subr.mxu0 0.0
      %3498 = vmatpush1.msra.mxu0 0.0
      %3499 = vmatprep.subr.mxu0 0.0
      %3500 = vmatpush1.msra.mxu0 0.0
      %3501 = vmatprep.subr.mxu0 0.0
      %3502 = vmatpush1.msra.mxu0 0.0
      %3503 = vmatprep.subr.mxu0 0.0
      %3504 = vmatpush1.msra.mxu0 0.0
      %3505 = vmatprep.subr.mxu0 0.0
      %3506 = vmatpush1.msra.mxu0 0.0
      %3507 = vmatprep.subr.mxu0 0.0
      %3508 = vmatpush1.msra.mxu0 0.0
      %3509 = vmatprep.subr.mxu0 0.0
      %3510 = vmatpush1.msra.mxu0 0.0
      %3511 = vmatprep.subr.mxu0 0.0
      %3512 = vmatpush1.msra.mxu0 0.0
      %3513 = vmatprep.subr.mxu0 0.0
      %3514 = vmatpush1.msra.mxu0 0.0
      %3515 = vmatprep.subr.mxu0 0.0
      %3516 = vmatpush1.msra.mxu0 0.0
      %3517 = vmatprep.subr.mxu0 0.0
      %3518 = vmatpush1.msra.mxu0 0.0
      %3519 = vmatprep.subr.mxu0 0.0
      %3520 = vmatpush1.msra.mxu0 0.0
      %3521 = vmatprep.subr.mxu0 0.0
      %3522 = vmatpush1.msra.mxu0 0.0
      %3523 = vmatprep.mubr.f32.mxu0 0.0
      %3524 = vmatmul.mubr.f32.gmra.mrb[0].mxu0 %v3427
      %v3525 = vpop.f32.mrb[0].mxu0
      %v3526 = vadd.f32 0.0, %v3525
      %v3527 = vpop.f32.mrb[0].mxu0
      %3528 = vmatprep.mubr.f32.mxu0 0.0
      %3529 = vmatmul.mubr.f32.gmra.mrb[0].mxu0 %v3430
      %v3530 = vpop.f32.mrb[0].mxu0
      %v3531 = vadd.f32 0.0, %v3530
      %v3532 = vpop.f32.mrb[0].mxu0
      %3533 = vmatprep.mubr.f32.mxu0 0.0
      %3534 = vmatmul.mubr.f32.gmra.mrb[0].mxu0 %v3433
      %v3535 = vpop.f32.mrb[0].mxu0
      %v3536 = vadd.f32 0.0, %v3535
      %v3537 = vpop.f32.mrb[0].mxu0
      %3538 = vmatprep.mubr.f32.mxu0 0.0
      %3539 = vmatmul.mubr.f32.gmra.mrb[0].mxu0 %v3436
      %v3540 = vpop.f32.mrb[0].mxu0
      %v3541 = vadd.f32 0.0, %v3540
      %v3542 = vpop.f32.mrb[0].mxu0
      %3543 = vmatprep.mubr.f32.mxu0 0.0
      %3544 = vmatmul.mubr.f32.gmra.mrb[0].mxu0 %v3439
      %v3545 = vpop.f32.mrb[0].mxu0
      %v3546 = vadd.f32 0.0, %v3545
      %v3547 = vpop.f32.mrb[0].mxu0
      %3548 = vmatprep.mubr.f32.mxu0 0.0
      %3549 = vmatmul.mubr.f32.gmra.mrb[0].mxu0 %v3442
      %v3550 = vpop.f32.mrb[0].mxu0
      %v3551 = vadd.f32 0.0, %v3550
      %v3552 = vpop.f32.mrb[0].mxu0
      %3553 = vmatprep.mubr.f32.mxu0 0.0
      %3554 = vmatmul.mubr.f32.gmra.mrb[0].mxu0 %v3445
      %v3555 = vpop.f32.mrb[0].mxu0
      %v3556 = vadd.f32 0.0, %v3555
      %v3557 = vpop.f32.mrb[0].mxu0
      %3558 = vmatprep.mubr.f32.mxu0 0.0
      %3559 = vmatmul.mubr.f32.gmra.mrb[0].mxu0 %v3448
      %v3560 = vpop.f32.mrb[0].mxu0
      %v3561 = vadd.f32 0.0, %v3560
      %v3562 = vpop.f32.mrb[0].mxu0
      %3563 = vmatprep.mubr.f32.mxu0 0.0
      %3564 = vmatmul.mubr.f32.gmra.mrb[0].mxu0 %v3451
      %v3565 = vpop.f32.mrb[0].mxu0
      %v3566 = vadd.f32 0.0, %v3565
      %v3567 = vpop.f32.mrb[0].mxu0
      %3568 = vmatprep.mubr.f32.mxu0 0.0
      %3569 = vmatmul.mubr.f32.gmra.mrb[0].mxu0 %v3454
      %v3570 = vpop.f32.mrb[0].mxu0
      %v3571 = vadd.f32 0.0, %v3570
      %v3572 = vpop.f32.mrb[0].mxu0
      %3573 = vdwg.mxu0
      %v3574 = vadd.f32 %v3414, %v3526
      %v3575 = vadd.f32 %v3415, %v3531
      %v3576 = vadd.f32 %v3416, %v3536
      %v3577 = vadd.f32 %v3417, %v3541
      %v3578 = vadd.f32 %v3418, %v3546
      %v3579 = vadd.f32 %v3419, %v3551
      %v3580 = vadd.f32 %v3420, %v3556
      %v3581 = vadd.f32 %v3421, %v3561
      %v3582 = vadd.f32 %v3422, %v3566
      %v3583 = vadd.f32 %v3423, %v3571
      %s3584 = scalar_lea.vmem %s4, 76
      %v3585 = vld [vmem:[%s3584] sm:$0xf]
      %v3587 = vrot.slane %v511, 1
      %v3588 = vrot.slane %v512, 1
      %v3589 = vsel %vm538, %v3587, %v3588
      %v3590 = vrot.slane %v513, 1
      %v3591 = vsel %vm538, %v3588, %v3590
      %v3592 = vrot.slane %v514, 1
      %v3593 = vsel %vm538, %v3590, %v3592
      %v3594 = vrot.slane %v515, 1
      %v3595 = vsel %vm538, %v3592, %v3594
      %v3596 = vrot.slane %v516, 1
      %v3597 = vsel %vm538, %v3594, %v3596
      %v3598 = vrot.slane %v517, 1
      %v3599 = vsel %vm538, %v3596, %v3598
      %v3600 = vrot.slane %v518, 1
      %v3601 = vsel %vm538, %v3598, %v3600
      %v3602 = vrot.slane %v519, 1
      %v3603 = vsel %vm538, %v3600, %v3602
      %v3604 = vrot.slane %v520, 1
      %v3605 = vsel %vm538, %v3602, %v3604
      %v3606 = vrot.slane %v521, 1
      %v3607 = vsel %vm538, %v3604, %v3606
      %v3608 = vsel %vm560, %v3589, 0
      %v3610 = vsel %vm560, %v3591, 0
      %v3612 = vsel %vm560, %v3593, 0
      %v3614 = vsel %vm560, %v3595, 0
      %v3616 = vsel %vm560, %v3597, 0
      %v3618 = vsel %vm560, %v3599, 0
      %v3620 = vsel %vm560, %v3601, 0
      %v3622 = vsel %vm560, %v3603, 0
      %v3624 = vsel %vm560, %v3605, 0
      %v3626 = vsel %vm560, %v3607, 0
      %v3629 = vsel %vm581, %v3585, 0
      %3631 = vmatprep.subr.mxu0 0.0
      %3632 = vmatpush1.msra.mxu0 %v3629
      %3633 = vmatprep.subr.mxu0 0.0
      %3634 = vmatpush1.msra.mxu0 0.0
      %3635 = vmatprep.subr.mxu0 0.0
      %3636 = vmatpush1.msra.mxu0 0.0
      %3637 = vmatprep.subr.mxu0 0.0
      %3638 = vmatpush1.msra.mxu0 0.0
      %3639 = vmatprep.subr.mxu0 0.0
      %3640 = vmatpush1.msra.mxu0 0.0
      %3641 = vmatprep.subr.mxu0 0.0
      %3642 = vmatpush1.msra.mxu0 0.0
      %3643 = vmatprep.subr.mxu0 0.0
      %3644 = vmatpush1.msra.mxu0 0.0
      %3645 = vmatprep.subr.mxu0 0.0
      %3646 = vmatpush1.msra.mxu0 0.0
      %3647 = vmatprep.subr.mxu0 0.0
      %3648 = vmatpush1.msra.mxu0 0.0
      %3649 = vmatprep.subr.mxu0 0.0
      %3650 = vmatpush1.msra.mxu0 0.0
      %3651 = vmatprep.subr.mxu0 0.0
      %3652 = vmatpush1.msra.mxu0 0.0
      %3653 = vmatprep.subr.mxu0 0.0
      %3654 = vmatpush1.msra.mxu0 0.0
      %3655 = vmatprep.subr.mxu0 0.0
      %3656 = vmatpush1.msra.mxu0 0.0
      %3657 = vmatprep.subr.mxu0 0.0
      %3658 = vmatpush1.msra.mxu0 0.0
      %3659 = vmatprep.subr.mxu0 0.0
      %3660 = vmatpush1.msra.mxu0 0.0
      %3661 = vmatprep.subr.mxu0 0.0
      %3662 = vmatpush1.msra.mxu0 0.0
      %3663 = vmatprep.subr.mxu0 0.0
      %3664 = vmatpush1.msra.mxu0 0.0
      %3665 = vmatprep.subr.mxu0 0.0
      %3666 = vmatpush1.msra.mxu0 0.0
      %3667 = vmatprep.subr.mxu0 0.0
      %3668 = vmatpush1.msra.mxu0 0.0
      %3669 = vmatprep.subr.mxu0 0.0
      %3670 = vmatpush1.msra.mxu0 0.0
      %3671 = vmatprep.subr.mxu0 0.0
      %3672 = vmatpush1.msra.mxu0 0.0
      %3673 = vmatprep.subr.mxu0 0.0
      %3674 = vmatpush1.msra.mxu0 0.0
      %3675 = vmatprep.subr.mxu0 0.0
      %3676 = vmatpush1.msra.mxu0 0.0
      %3677 = vmatprep.subr.mxu0 0.0
      %3678 = vmatpush1.msra.mxu0 0.0
      %3679 = vmatprep.subr.mxu0 0.0
      %3680 = vmatpush1.msra.mxu0 0.0
      %3681 = vmatprep.subr.mxu0 0.0
      %3682 = vmatpush1.msra.mxu0 0.0
      %3683 = vmatprep.subr.mxu0 0.0
      %3684 = vmatpush1.msra.mxu0 0.0
      %3685 = vmatprep.subr.mxu0 0.0
      %3686 = vmatpush1.msra.mxu0 0.0
      %3687 = vmatprep.subr.mxu0 0.0
      %3688 = vmatpush1.msra.mxu0 0.0
      %3689 = vmatprep.subr.mxu0 0.0
      %3690 = vmatpush1.msra.mxu0 0.0
      %3691 = vmatprep.subr.mxu0 0.0
      %3692 = vmatpush1.msra.mxu0 0.0
      %3693 = vmatprep.subr.mxu0 0.0
      %3694 = vmatpush1.msra.mxu0 0.0
      %3695 = vmatprep.mubr.f32.mxu0 0.0
      %3696 = vmatmul.mubr.f32.gmra.mrb[0].mxu0 %v3608
      %v3697 = vpop.f32.mrb[0].mxu0
      %v3698 = vadd.f32 0.0, %v3697
      %v3699 = vpop.f32.mrb[0].mxu0
      %3700 = vmatprep.mubr.f32.mxu0 0.0
      %3701 = vmatmul.mubr.f32.gmra.mrb[0].mxu0 %v3610
      %v3702 = vpop.f32.mrb[0].mxu0
      %v3703 = vadd.f32 0.0, %v3702
      %v3704 = vpop.f32.mrb[0].mxu0
      %3705 = vmatprep.mubr.f32.mxu0 0.0
      %3706 = vmatmul.mubr.f32.gmra.mrb[0].mxu0 %v3612
      %v3707 = vpop.f32.mrb[0].mxu0
      %v3708 = vadd.f32 0.0, %v3707
      %v3709 = vpop.f32.mrb[0].mxu0
      %3710 = vmatprep.mubr.f32.mxu0 0.0
      %3711 = vmatmul.mubr.f32.gmra.mrb[0].mxu0 %v3614
      %v3712 = vpop.f32.mrb[0].mxu0
      %v3713 = vadd.f32 0.0, %v3712
      %v3714 = vpop.f32.mrb[0].mxu0
      %3715 = vmatprep.mubr.f32.mxu0 0.0
      %3716 = vmatmul.mubr.f32.gmra.mrb[0].mxu0 %v3616
      %v3717 = vpop.f32.mrb[0].mxu0
      %v3718 = vadd.f32 0.0, %v3717
      %v3719 = vpop.f32.mrb[0].mxu0
      %3720 = vmatprep.mubr.f32.mxu0 0.0
      %3721 = vmatmul.mubr.f32.gmra.mrb[0].mxu0 %v3618
      %v3722 = vpop.f32.mrb[0].mxu0
      %v3723 = vadd.f32 0.0, %v3722
      %v3724 = vpop.f32.mrb[0].mxu0
      %3725 = vmatprep.mubr.f32.mxu0 0.0
      %3726 = vmatmul.mubr.f32.gmra.mrb[0].mxu0 %v3620
      %v3727 = vpop.f32.mrb[0].mxu0
      %v3728 = vadd.f32 0.0, %v3727
      %v3729 = vpop.f32.mrb[0].mxu0
      %3730 = vmatprep.mubr.f32.mxu0 0.0
      %3731 = vmatmul.mubr.f32.gmra.mrb[0].mxu0 %v3622
      %v3732 = vpop.f32.mrb[0].mxu0
      %v3733 = vadd.f32 0.0, %v3732
      %v3734 = vpop.f32.mrb[0].mxu0
      %3735 = vmatprep.mubr.f32.mxu0 0.0
      %3736 = vmatmul.mubr.f32.gmra.mrb[0].mxu0 %v3624
      %v3737 = vpop.f32.mrb[0].mxu0
      %v3738 = vadd.f32 0.0, %v3737
      %v3739 = vpop.f32.mrb[0].mxu0
      %3740 = vmatprep.mubr.f32.mxu0 0.0
      %3741 = vmatmul.mubr.f32.gmra.mrb[0].mxu0 %v3626
      %v3742 = vpop.f32.mrb[0].mxu0
      %v3743 = vadd.f32 0.0, %v3742
      %v3744 = vpop.f32.mrb[0].mxu0
      %3745 = vdwg.mxu0
      %v3746 = vadd.f32 %v3574, %v3698
      %v3747 = vadd.f32 %v3575, %v3703
      %v3748 = vadd.f32 %v3576, %v3708
      %v3749 = vadd.f32 %v3577, %v3713
      %v3750 = vadd.f32 %v3578, %v3718
      %v3751 = vadd.f32 %v3579, %v3723
      %v3752 = vadd.f32 %v3580, %v3728
      %v3753 = vadd.f32 %v3581, %v3733
      %v3754 = vadd.f32 %v3582, %v3738
      %v3755 = vadd.f32 %v3583, %v3743
      %s3756 = scalar_lea.vmem %s4, 80
      %v3757 = vld [vmem:[%s3756] sm:$0xf]
      %v3758 = vrot.slane %v511, 2
      %v3759 = vrot.slane %v512, 2
      %v3760 = vsel %vm840, %v3758, %v3759
      %v3761 = vrot.slane %v513, 2
      %v3762 = vsel %vm840, %v3759, %v3761
      %v3763 = vrot.slane %v514, 2
      %v3764 = vsel %vm840, %v3761, %v3763
      %v3765 = vrot.slane %v515, 2
      %v3766 = vsel %vm840, %v3763, %v3765
      %v3767 = vrot.slane %v516, 2
      %v3768 = vsel %vm840, %v3765, %v3767
      %v3769 = vrot.slane %v517, 2
      %v3770 = vsel %vm840, %v3767, %v3769
      %v3771 = vrot.slane %v518, 2
      %v3772 = vsel %vm840, %v3769, %v3771
      %v3773 = vrot.slane %v519, 2
      %v3774 = vsel %vm840, %v3771, %v3773
      %v3775 = vrot.slane %v520, 2
      %v3776 = vsel %vm840, %v3773, %v3775
      %v3777 = vrot.slane %v521, 2
      %v3778 = vsel %vm840, %v3775, %v3777
      %v3779 = vsel %vm560, %v3760, 0
      %v3781 = vsel %vm560, %v3762, 0
      %v3783 = vsel %vm560, %v3764, 0
      %v3785 = vsel %vm560, %v3766, 0
      %v3787 = vsel %vm560, %v3768, 0
      %v3789 = vsel %vm560, %v3770, 0
      %v3791 = vsel %vm560, %v3772, 0
      %v3793 = vsel %vm560, %v3774, 0
      %v3795 = vsel %vm560, %v3776, 0
      %v3797 = vsel %vm560, %v3778, 0
      %v3800 = vsel %vm581, %v3757, 0
      %3802 = vmatprep.subr.mxu0 0.0
      %3803 = vmatpush1.msra.mxu0 %v3800
      %3804 = vmatprep.subr.mxu0 0.0
      %3805 = vmatpush1.msra.mxu0 0.0
      %3806 = vmatprep.subr.mxu0 0.0
      %3807 = vmatpush1.msra.mxu0 0.0
      %3808 = vmatprep.subr.mxu0 0.0
      %3809 = vmatpush1.msra.mxu0 0.0
      %3810 = vmatprep.subr.mxu0 0.0
      %3811 = vmatpush1.msra.mxu0 0.0
      %3812 = vmatprep.subr.mxu0 0.0
      %3813 = vmatpush1.msra.mxu0 0.0
      %3814 = vmatprep.subr.mxu0 0.0
      %3815 = vmatpush1.msra.mxu0 0.0
      %3816 = vmatprep.subr.mxu0 0.0
      %3817 = vmatpush1.msra.mxu0 0.0
      %3818 = vmatprep.subr.mxu0 0.0
      %3819 = vmatpush1.msra.mxu0 0.0
      %3820 = vmatprep.subr.mxu0 0.0
      %3821 = vmatpush1.msra.mxu0 0.0
      %3822 = vmatprep.subr.mxu0 0.0
      %3823 = vmatpush1.msra.mxu0 0.0
      %3824 = vmatprep.subr.mxu0 0.0
      %3825 = vmatpush1.msra.mxu0 0.0
      %3826 = vmatprep.subr.mxu0 0.0
      %3827 = vmatpush1.msra.mxu0 0.0
      %3828 = vmatprep.subr.mxu0 0.0
      %3829 = vmatpush1.msra.mxu0 0.0
      %3830 = vmatprep.subr.mxu0 0.0
      %3831 = vmatpush1.msra.mxu0 0.0
      %3832 = vmatprep.subr.mxu0 0.0
      %3833 = vmatpush1.msra.mxu0 0.0
      %3834 = vmatprep.subr.mxu0 0.0
      %3835 = vmatpush1.msra.mxu0 0.0
      %3836 = vmatprep.subr.mxu0 0.0
      %3837 = vmatpush1.msra.mxu0 0.0
      %3838 = vmatprep.subr.mxu0 0.0
      %3839 = vmatpush1.msra.mxu0 0.0
      %3840 = vmatprep.subr.mxu0 0.0
      %3841 = vmatpush1.msra.mxu0 0.0
      %3842 = vmatprep.subr.mxu0 0.0
      %3843 = vmatpush1.msra.mxu0 0.0
      %3844 = vmatprep.subr.mxu0 0.0
      %3845 = vmatpush1.msra.mxu0 0.0
      %3846 = vmatprep.subr.mxu0 0.0
      %3847 = vmatpush1.msra.mxu0 0.0
      %3848 = vmatprep.subr.mxu0 0.0
      %3849 = vmatpush1.msra.mxu0 0.0
      %3850 = vmatprep.subr.mxu0 0.0
      %3851 = vmatpush1.msra.mxu0 0.0
      %3852 = vmatprep.subr.mxu0 0.0
      %3853 = vmatpush1.msra.mxu0 0.0
      %3854 = vmatprep.subr.mxu0 0.0
      %3855 = vmatpush1.msra.mxu0 0.0
      %3856 = vmatprep.subr.mxu0 0.0
      %3857 = vmatpush1.msra.mxu0 0.0
      %3858 = vmatprep.subr.mxu0 0.0
      %3859 = vmatpush1.msra.mxu0 0.0
      %3860 = vmatprep.subr.mxu0 0.0
      %3861 = vmatpush1.msra.mxu0 0.0
      %3862 = vmatprep.subr.mxu0 0.0
      %3863 = vmatpush1.msra.mxu0 0.0
      %3864 = vmatprep.subr.mxu0 0.0
      %3865 = vmatpush1.msra.mxu0 0.0
      %3866 = vmatprep.mubr.f32.mxu0 0.0
      %3867 = vmatmul.mubr.f32.gmra.mrb[0].mxu0 %v3779
      %v3868 = vpop.f32.mrb[0].mxu0
      %v3869 = vadd.f32 0.0, %v3868
      %v3870 = vpop.f32.mrb[0].mxu0
      %3871 = vmatprep.mubr.f32.mxu0 0.0
      %3872 = vmatmul.mubr.f32.gmra.mrb[0].mxu0 %v3781
      %v3873 = vpop.f32.mrb[0].mxu0
      %v3874 = vadd.f32 0.0, %v3873
      %v3875 = vpop.f32.mrb[0].mxu0
      %3876 = vmatprep.mubr.f32.mxu0 0.0
      %3877 = vmatmul.mubr.f32.gmra.mrb[0].mxu0 %v3783
      %v3878 = vpop.f32.mrb[0].mxu0
      %v3879 = vadd.f32 0.0, %v3878
      %v3880 = vpop.f32.mrb[0].mxu0
      %3881 = vmatprep.mubr.f32.mxu0 0.0
      %3882 = vmatmul.mubr.f32.gmra.mrb[0].mxu0 %v3785
      %v3883 = vpop.f32.mrb[0].mxu0
      %v3884 = vadd.f32 0.0, %v3883
      %v3885 = vpop.f32.mrb[0].mxu0
      %3886 = vmatprep.mubr.f32.mxu0 0.0
      %3887 = vmatmul.mubr.f32.gmra.mrb[0].mxu0 %v3787
      %v3888 = vpop.f32.mrb[0].mxu0
      %v3889 = vadd.f32 0.0, %v3888
      %v3890 = vpop.f32.mrb[0].mxu0
      %3891 = vmatprep.mubr.f32.mxu0 0.0
      %3892 = vmatmul.mubr.f32.gmra.mrb[0].mxu0 %v3789
      %v3893 = vpop.f32.mrb[0].mxu0
      %v3894 = vadd.f32 0.0, %v3893
      %v3895 = vpop.f32.mrb[0].mxu0
      %3896 = vmatprep.mubr.f32.mxu0 0.0
      %3897 = vmatmul.mubr.f32.gmra.mrb[0].mxu0 %v3791
      %v3898 = vpop.f32.mrb[0].mxu0
      %v3899 = vadd.f32 0.0, %v3898
      %v3900 = vpop.f32.mrb[0].mxu0
      %3901 = vmatprep.mubr.f32.mxu0 0.0
      %3902 = vmatmul.mubr.f32.gmra.mrb[0].mxu0 %v3793
      %v3903 = vpop.f32.mrb[0].mxu0
      %v3904 = vadd.f32 0.0, %v3903
      %v3905 = vpop.f32.mrb[0].mxu0
      %3906 = vmatprep.mubr.f32.mxu0 0.0
      %3907 = vmatmul.mubr.f32.gmra.mrb[0].mxu0 %v3795
      %v3908 = vpop.f32.mrb[0].mxu0
      %v3909 = vadd.f32 0.0, %v3908
      %v3910 = vpop.f32.mrb[0].mxu0
      %3911 = vmatprep.mubr.f32.mxu0 0.0
      %3912 = vmatmul.mubr.f32.gmra.mrb[0].mxu0 %v3797
      %v3913 = vpop.f32.mrb[0].mxu0
      %v3914 = vadd.f32 0.0, %v3913
      %v3915 = vpop.f32.mrb[0].mxu0
      %3916 = vdwg.mxu0
      %v3917 = vadd.f32 %v3746, %v3869
      %v3918 = vadd.f32 %v3747, %v3874
      %v3919 = vadd.f32 %v3748, %v3879
      %v3920 = vadd.f32 %v3749, %v3884
      %v3921 = vadd.f32 %v3750, %v3889
      %v3922 = vadd.f32 %v3751, %v3894
      %v3923 = vadd.f32 %v3752, %v3899
      %v3924 = vadd.f32 %v3753, %v3904
      %v3925 = vadd.f32 %v3754, %v3909
      %v3926 = vadd.f32 %v3755, %v3914
      %s3927 = scalar_lea.vmem %s4, 84
      %v3928 = vld [vmem:[%s3927] sm:$0xf]
      %v3930 = vrot.slane %v522, 2
      %v3931 = vsel %vm840, %v3777, %v3930
      %v3932 = vsel %vm560, %v3931, 0
      %v3935 = vsel %vm581, %v3928, 0
      %3937 = vmatprep.subr.mxu0 0.0
      %3938 = vmatpush1.msra.mxu0 %v3935
      %3939 = vmatprep.subr.mxu0 0.0
      %3940 = vmatpush1.msra.mxu0 0.0
      %3941 = vmatprep.subr.mxu0 0.0
      %3942 = vmatpush1.msra.mxu0 0.0
      %3943 = vmatprep.subr.mxu0 0.0
      %3944 = vmatpush1.msra.mxu0 0.0
      %3945 = vmatprep.subr.mxu0 0.0
      %3946 = vmatpush1.msra.mxu0 0.0
      %3947 = vmatprep.subr.mxu0 0.0
      %3948 = vmatpush1.msra.mxu0 0.0
      %3949 = vmatprep.subr.mxu0 0.0
      %3950 = vmatpush1.msra.mxu0 0.0
      %3951 = vmatprep.subr.mxu0 0.0
      %3952 = vmatpush1.msra.mxu0 0.0
      %3953 = vmatprep.subr.mxu0 0.0
      %3954 = vmatpush1.msra.mxu0 0.0
      %3955 = vmatprep.subr.mxu0 0.0
      %3956 = vmatpush1.msra.mxu0 0.0
      %3957 = vmatprep.subr.mxu0 0.0
      %3958 = vmatpush1.msra.mxu0 0.0
      %3959 = vmatprep.subr.mxu0 0.0
      %3960 = vmatpush1.msra.mxu0 0.0
      %3961 = vmatprep.subr.mxu0 0.0
      %3962 = vmatpush1.msra.mxu0 0.0
      %3963 = vmatprep.subr.mxu0 0.0
      %3964 = vmatpush1.msra.mxu0 0.0
      %3965 = vmatprep.subr.mxu0 0.0
      %3966 = vmatpush1.msra.mxu0 0.0
      %3967 = vmatprep.subr.mxu0 0.0
      %3968 = vmatpush1.msra.mxu0 0.0
      %3969 = vmatprep.subr.mxu0 0.0
      %3970 = vmatpush1.msra.mxu0 0.0
      %3971 = vmatprep.subr.mxu0 0.0
      %3972 = vmatpush1.msra.mxu0 0.0
      %3973 = vmatprep.subr.mxu0 0.0
      %3974 = vmatpush1.msra.mxu0 0.0
      %3975 = vmatprep.subr.mxu0 0.0
      %3976 = vmatpush1.msra.mxu0 0.0
      %3977 = vmatprep.subr.mxu0 0.0
      %3978 = vmatpush1.msra.mxu0 0.0
      %3979 = vmatprep.subr.mxu0 0.0
      %3980 = vmatpush1.msra.mxu0 0.0
      %3981 = vmatprep.subr.mxu0 0.0
      %3982 = vmatpush1.msra.mxu0 0.0
      %3983 = vmatprep.subr.mxu0 0.0
      %3984 = vmatpush1.msra.mxu0 0.0
      %3985 = vmatprep.subr.mxu0 0.0
      %3986 = vmatpush1.msra.mxu0 0.0
      %3987 = vmatprep.subr.mxu0 0.0
      %3988 = vmatpush1.msra.mxu0 0.0
      %3989 = vmatprep.subr.mxu0 0.0
      %3990 = vmatpush1.msra.mxu0 0.0
      %3991 = vmatprep.subr.mxu0 0.0
      %3992 = vmatpush1.msra.mxu0 0.0
      %3993 = vmatprep.subr.mxu0 0.0
      %3994 = vmatpush1.msra.mxu0 0.0
      %3995 = vmatprep.subr.mxu0 0.0
      %3996 = vmatpush1.msra.mxu0 0.0
      %3997 = vmatprep.subr.mxu0 0.0
      %3998 = vmatpush1.msra.mxu0 0.0
      %3999 = vmatprep.subr.mxu0 0.0
      %4000 = vmatpush1.msra.mxu0 0.0
      %4001 = vmatprep.mubr.f32.mxu0 0.0
      %4002 = vmatmul.mubr.f32.gmra.mrb[0].mxu0 %v3781
      %v4003 = vpop.f32.mrb[0].mxu0
      %v4004 = vadd.f32 0.0, %v4003
      %v4005 = vpop.f32.mrb[0].mxu0
      %4006 = vmatprep.mubr.f32.mxu0 0.0
      %4007 = vmatmul.mubr.f32.gmra.mrb[0].mxu0 %v3783
      %v4008 = vpop.f32.mrb[0].mxu0
      %v4009 = vadd.f32 0.0, %v4008
      %v4010 = vpop.f32.mrb[0].mxu0
      %4011 = vmatprep.mubr.f32.mxu0 0.0
      %4012 = vmatmul.mubr.f32.gmra.mrb[0].mxu0 %v3785
      %v4013 = vpop.f32.mrb[0].mxu0
      %v4014 = vadd.f32 0.0, %v4013
      %v4015 = vpop.f32.mrb[0].mxu0
      %4016 = vmatprep.mubr.f32.mxu0 0.0
      %4017 = vmatmul.mubr.f32.gmra.mrb[0].mxu0 %v3787
      %v4018 = vpop.f32.mrb[0].mxu0
      %v4019 = vadd.f32 0.0, %v4018
      %v4020 = vpop.f32.mrb[0].mxu0
      %4021 = vmatprep.mubr.f32.mxu0 0.0
      %4022 = vmatmul.mubr.f32.gmra.mrb[0].mxu0 %v3789
      %v4023 = vpop.f32.mrb[0].mxu0
      %v4024 = vadd.f32 0.0, %v4023
      %v4025 = vpop.f32.mrb[0].mxu0
      %4026 = vmatprep.mubr.f32.mxu0 0.0
      %4027 = vmatmul.mubr.f32.gmra.mrb[0].mxu0 %v3791
      %v4028 = vpop.f32.mrb[0].mxu0
      %v4029 = vadd.f32 0.0, %v4028
      %v4030 = vpop.f32.mrb[0].mxu0
      %4031 = vmatprep.mubr.f32.mxu0 0.0
      %4032 = vmatmul.mubr.f32.gmra.mrb[0].mxu0 %v3793
      %v4033 = vpop.f32.mrb[0].mxu0
      %v4034 = vadd.f32 0.0, %v4033
      %v4035 = vpop.f32.mrb[0].mxu0
      %4036 = vmatprep.mubr.f32.mxu0 0.0
      %4037 = vmatmul.mubr.f32.gmra.mrb[0].mxu0 %v3795
      %v4038 = vpop.f32.mrb[0].mxu0
      %v4039 = vadd.f32 0.0, %v4038
      %v4040 = vpop.f32.mrb[0].mxu0
      %4041 = vmatprep.mubr.f32.mxu0 0.0
      %4042 = vmatmul.mubr.f32.gmra.mrb[0].mxu0 %v3797
      %v4043 = vpop.f32.mrb[0].mxu0
      %v4044 = vadd.f32 0.0, %v4043
      %v4045 = vpop.f32.mrb[0].mxu0
      %4046 = vmatprep.mubr.f32.mxu0 0.0
      %4047 = vmatmul.mubr.f32.gmra.mrb[0].mxu0 %v3932
      %v4048 = vpop.f32.mrb[0].mxu0
      %v4049 = vadd.f32 0.0, %v4048
      %v4050 = vpop.f32.mrb[0].mxu0
      %4051 = vdwg.mxu0
      %v4052 = vadd.f32 %v3917, %v4004
      %v4053 = vadd.f32 %v3918, %v4009
      %v4054 = vadd.f32 %v3919, %v4014
      %v4055 = vadd.f32 %v3920, %v4019
      %v4056 = vadd.f32 %v3921, %v4024
      %v4057 = vadd.f32 %v3922, %v4029
      %v4058 = vadd.f32 %v3923, %v4034
      %v4059 = vadd.f32 %v3924, %v4039
      %v4060 = vadd.f32 %v3925, %v4044
      %v4061 = vadd.f32 %v3926, %v4049
      %s4062 = scalar_lea.vmem %s4, 88
      %v4063 = vld [vmem:[%s4062] sm:$0xf]
      %v4064 = vrot.slane %v512, 3
      %v4065 = vrot.slane %v513, 3
      %v4066 = vsel %vm1147, %v4064, %v4065
      %v4067 = vrot.slane %v514, 3
      %v4068 = vsel %vm1147, %v4065, %v4067
      %v4069 = vrot.slane %v515, 3
      %v4070 = vsel %vm1147, %v4067, %v4069
      %v4071 = vrot.slane %v516, 3
      %v4072 = vsel %vm1147, %v4069, %v4071
      %v4073 = vrot.slane %v517, 3
      %v4074 = vsel %vm1147, %v4071, %v4073
      %v4075 = vrot.slane %v518, 3
      %v4076 = vsel %vm1147, %v4073, %v4075
      %v4077 = vrot.slane %v519, 3
      %v4078 = vsel %vm1147, %v4075, %v4077
      %v4079 = vrot.slane %v520, 3
      %v4080 = vsel %vm1147, %v4077, %v4079
      %v4081 = vrot.slane %v521, 3
      %v4082 = vsel %vm1147, %v4079, %v4081
      %v4083 = vrot.slane %v522, 3
      %v4084 = vsel %vm1147, %v4081, %v4083
      %v4085 = vsel %vm560, %v4066, 0
      %v4087 = vsel %vm560, %v4068, 0
      %v4089 = vsel %vm560, %v4070, 0
      %v4091 = vsel %vm560, %v4072, 0
      %v4093 = vsel %vm560, %v4074, 0
      %v4095 = vsel %vm560, %v4076, 0
      %v4097 = vsel %vm560, %v4078, 0
      %v4099 = vsel %vm560, %v4080, 0
      %v4101 = vsel %vm560, %v4082, 0
      %v4103 = vsel %vm560, %v4084, 0
      %v4106 = vsel %vm581, %v4063, 0
      %4108 = vmatprep.subr.mxu0 0.0
      %4109 = vmatpush1.msra.mxu0 %v4106
      %4110 = vmatprep.subr.mxu0 0.0
      %4111 = vmatpush1.msra.mxu0 0.0
      %4112 = vmatprep.subr.mxu0 0.0
      %4113 = vmatpush1.msra.mxu0 0.0
      %4114 = vmatprep.subr.mxu0 0.0
      %4115 = vmatpush1.msra.mxu0 0.0
      %4116 = vmatprep.subr.mxu0 0.0
      %4117 = vmatpush1.msra.mxu0 0.0
      %4118 = vmatprep.subr.mxu0 0.0
      %4119 = vmatpush1.msra.mxu0 0.0
      %4120 = vmatprep.subr.mxu0 0.0
      %4121 = vmatpush1.msra.mxu0 0.0
      %4122 = vmatprep.subr.mxu0 0.0
      %4123 = vmatpush1.msra.mxu0 0.0
      %4124 = vmatprep.subr.mxu0 0.0
      %4125 = vmatpush1.msra.mxu0 0.0
      %4126 = vmatprep.subr.mxu0 0.0
      %4127 = vmatpush1.msra.mxu0 0.0
      %4128 = vmatprep.subr.mxu0 0.0
      %4129 = vmatpush1.msra.mxu0 0.0
      %4130 = vmatprep.subr.mxu0 0.0
      %4131 = vmatpush1.msra.mxu0 0.0
      %4132 = vmatprep.subr.mxu0 0.0
      %4133 = vmatpush1.msra.mxu0 0.0
      %4134 = vmatprep.subr.mxu0 0.0
      %4135 = vmatpush1.msra.mxu0 0.0
      %4136 = vmatprep.subr.mxu0 0.0
      %4137 = vmatpush1.msra.mxu0 0.0
      %4138 = vmatprep.subr.mxu0 0.0
      %4139 = vmatpush1.msra.mxu0 0.0
      %4140 = vmatprep.subr.mxu0 0.0
      %4141 = vmatpush1.msra.mxu0 0.0
      %4142 = vmatprep.subr.mxu0 0.0
      %4143 = vmatpush1.msra.mxu0 0.0
      %4144 = vmatprep.subr.mxu0 0.0
      %4145 = vmatpush1.msra.mxu0 0.0
      %4146 = vmatprep.subr.mxu0 0.0
      %4147 = vmatpush1.msra.mxu0 0.0
      %4148 = vmatprep.subr.mxu0 0.0
      %4149 = vmatpush1.msra.mxu0 0.0
      %4150 = vmatprep.subr.mxu0 0.0
      %4151 = vmatpush1.msra.mxu0 0.0
      %4152 = vmatprep.subr.mxu0 0.0
      %4153 = vmatpush1.msra.mxu0 0.0
      %4154 = vmatprep.subr.mxu0 0.0
      %4155 = vmatpush1.msra.mxu0 0.0
      %4156 = vmatprep.subr.mxu0 0.0
      %4157 = vmatpush1.msra.mxu0 0.0
      %4158 = vmatprep.subr.mxu0 0.0
      %4159 = vmatpush1.msra.mxu0 0.0
      %4160 = vmatprep.subr.mxu0 0.0
      %4161 = vmatpush1.msra.mxu0 0.0
      %4162 = vmatprep.subr.mxu0 0.0
      %4163 = vmatpush1.msra.mxu0 0.0
      %4164 = vmatprep.subr.mxu0 0.0
      %4165 = vmatpush1.msra.mxu0 0.0
      %4166 = vmatprep.subr.mxu0 0.0
      %4167 = vmatpush1.msra.mxu0 0.0
      %4168 = vmatprep.subr.mxu0 0.0
      %4169 = vmatpush1.msra.mxu0 0.0
      %4170 = vmatprep.subr.mxu0 0.0
      %4171 = vmatpush1.msra.mxu0 0.0
      %4172 = vmatprep.mubr.f32.mxu0 0.0
      %4173 = vmatmul.mubr.f32.gmra.mrb[0].mxu0 %v4085
      %v4174 = vpop.f32.mrb[0].mxu0
      %v4175 = vadd.f32 0.0, %v4174
      %v4176 = vpop.f32.mrb[0].mxu0
      %4177 = vmatprep.mubr.f32.mxu0 0.0
      %4178 = vmatmul.mubr.f32.gmra.mrb[0].mxu0 %v4087
      %v4179 = vpop.f32.mrb[0].mxu0
      %v4180 = vadd.f32 0.0, %v4179
      %v4181 = vpop.f32.mrb[0].mxu0
      %4182 = vmatprep.mubr.f32.mxu0 0.0
      %4183 = vmatmul.mubr.f32.gmra.mrb[0].mxu0 %v4089
      %v4184 = vpop.f32.mrb[0].mxu0
      %v4185 = vadd.f32 0.0, %v4184
      %v4186 = vpop.f32.mrb[0].mxu0
      %4187 = vmatprep.mubr.f32.mxu0 0.0
      %4188 = vmatmul.mubr.f32.gmra.mrb[0].mxu0 %v4091
      %v4189 = vpop.f32.mrb[0].mxu0
      %v4190 = vadd.f32 0.0, %v4189
      %v4191 = vpop.f32.mrb[0].mxu0
      %4192 = vmatprep.mubr.f32.mxu0 0.0
      %4193 = vmatmul.mubr.f32.gmra.mrb[0].mxu0 %v4093
      %v4194 = vpop.f32.mrb[0].mxu0
      %v4195 = vadd.f32 0.0, %v4194
      %v4196 = vpop.f32.mrb[0].mxu0
      %4197 = vmatprep.mubr.f32.mxu0 0.0
      %4198 = vmatmul.mubr.f32.gmra.mrb[0].mxu0 %v4095
      %v4199 = vpop.f32.mrb[0].mxu0
      %v4200 = vadd.f32 0.0, %v4199
      %v4201 = vpop.f32.mrb[0].mxu0
      %4202 = vmatprep.mubr.f32.mxu0 0.0
      %4203 = vmatmul.mubr.f32.gmra.mrb[0].mxu0 %v4097
      %v4204 = vpop.f32.mrb[0].mxu0
      %v4205 = vadd.f32 0.0, %v4204
      %v4206 = vpop.f32.mrb[0].mxu0
      %4207 = vmatprep.mubr.f32.mxu0 0.0
      %4208 = vmatmul.mubr.f32.gmra.mrb[0].mxu0 %v4099
      %v4209 = vpop.f32.mrb[0].mxu0
      %v4210 = vadd.f32 0.0, %v4209
      %v4211 = vpop.f32.mrb[0].mxu0
      %4212 = vmatprep.mubr.f32.mxu0 0.0
      %4213 = vmatmul.mubr.f32.gmra.mrb[0].mxu0 %v4101
      %v4214 = vpop.f32.mrb[0].mxu0
      %v4215 = vadd.f32 0.0, %v4214
      %v4216 = vpop.f32.mrb[0].mxu0
      %4217 = vmatprep.mubr.f32.mxu0 0.0
      %4218 = vmatmul.mubr.f32.gmra.mrb[0].mxu0 %v4103
      %v4219 = vpop.f32.mrb[0].mxu0
      %v4220 = vadd.f32 0.0, %v4219
      %v4221 = vpop.f32.mrb[0].mxu0
      %4222 = vdwg.mxu0
      %v4223 = vadd.f32 %v4052, %v4175
      %v4224 = vadd.f32 %v4053, %v4180
      %v4225 = vadd.f32 %v4054, %v4185
      %v4226 = vadd.f32 %v4055, %v4190
      %v4227 = vadd.f32 %v4056, %v4195
      %v4228 = vadd.f32 %v4057, %v4200
      %v4229 = vadd.f32 %v4058, %v4205
      %v4230 = vadd.f32 %v4059, %v4210
      %v4231 = vadd.f32 %v4060, %v4215
      %v4232 = vadd.f32 %v4061, %v4220
      %s4233 = scalar_lea.vmem %s4, 92
      %v4234 = vld [vmem:[%s4233] sm:$0xf]
      %v4235 = vrot.slane %v512, 4
      %v4236 = vrot.slane %v513, 4
      %v4237 = vsel %vm581, %v4235, %v4236
      %v4238 = vrot.slane %v514, 4
      %v4239 = vsel %vm581, %v4236, %v4238
      %v4240 = vrot.slane %v515, 4
      %v4241 = vsel %vm581, %v4238, %v4240
      %v4242 = vrot.slane %v516, 4
      %v4243 = vsel %vm581, %v4240, %v4242
      %v4244 = vrot.slane %v517, 4
      %v4245 = vsel %vm581, %v4242, %v4244
      %v4246 = vrot.slane %v518, 4
      %v4247 = vsel %vm581, %v4244, %v4246
      %v4248 = vrot.slane %v519, 4
      %v4249 = vsel %vm581, %v4246, %v4248
      %v4250 = vrot.slane %v520, 4
      %v4251 = vsel %vm581, %v4248, %v4250
      %v4252 = vrot.slane %v521, 4
      %v4253 = vsel %vm581, %v4250, %v4252
      %v4254 = vrot.slane %v522, 4
      %v4255 = vsel %vm581, %v4252, %v4254
      %v4256 = vsel %vm560, %v4237, 0
      %v4258 = vsel %vm560, %v4239, 0
      %v4260 = vsel %vm560, %v4241, 0
      %v4262 = vsel %vm560, %v4243, 0
      %v4264 = vsel %vm560, %v4245, 0
      %v4266 = vsel %vm560, %v4247, 0
      %v4268 = vsel %vm560, %v4249, 0
      %v4270 = vsel %vm560, %v4251, 0
      %v4272 = vsel %vm560, %v4253, 0
      %v4274 = vsel %vm560, %v4255, 0
      %v4277 = vsel %vm581, %v4234, 0
      %4279 = vmatprep.subr.mxu0 0.0
      %4280 = vmatpush1.msra.mxu0 %v4277
      %4281 = vmatprep.subr.mxu0 0.0
      %4282 = vmatpush1.msra.mxu0 0.0
      %4283 = vmatprep.subr.mxu0 0.0
      %4284 = vmatpush1.msra.mxu0 0.0
      %4285 = vmatprep.subr.mxu0 0.0
      %4286 = vmatpush1.msra.mxu0 0.0
      %4287 = vmatprep.subr.mxu0 0.0
      %4288 = vmatpush1.msra.mxu0 0.0
      %4289 = vmatprep.subr.mxu0 0.0
      %4290 = vmatpush1.msra.mxu0 0.0
      %4291 = vmatprep.subr.mxu0 0.0
      %4292 = vmatpush1.msra.mxu0 0.0
      %4293 = vmatprep.subr.mxu0 0.0
      %4294 = vmatpush1.msra.mxu0 0.0
      %4295 = vmatprep.subr.mxu0 0.0
      %4296 = vmatpush1.msra.mxu0 0.0
      %4297 = vmatprep.subr.mxu0 0.0
      %4298 = vmatpush1.msra.mxu0 0.0
      %4299 = vmatprep.subr.mxu0 0.0
      %4300 = vmatpush1.msra.mxu0 0.0
      %4301 = vmatprep.subr.mxu0 0.0
      %4302 = vmatpush1.msra.mxu0 0.0
      %4303 = vmatprep.subr.mxu0 0.0
      %4304 = vmatpush1.msra.mxu0 0.0
      %4305 = vmatprep.subr.mxu0 0.0
      %4306 = vmatpush1.msra.mxu0 0.0
      %4307 = vmatprep.subr.mxu0 0.0
      %4308 = vmatpush1.msra.mxu0 0.0
      %4309 = vmatprep.subr.mxu0 0.0
      %4310 = vmatpush1.msra.mxu0 0.0
      %4311 = vmatprep.subr.mxu0 0.0
      %4312 = vmatpush1.msra.mxu0 0.0
      %4313 = vmatprep.subr.mxu0 0.0
      %4314 = vmatpush1.msra.mxu0 0.0
      %4315 = vmatprep.subr.mxu0 0.0
      %4316 = vmatpush1.msra.mxu0 0.0
      %4317 = vmatprep.subr.mxu0 0.0
      %4318 = vmatpush1.msra.mxu0 0.0
      %4319 = vmatprep.subr.mxu0 0.0
      %4320 = vmatpush1.msra.mxu0 0.0
      %4321 = vmatprep.subr.mxu0 0.0
      %4322 = vmatpush1.msra.mxu0 0.0
      %4323 = vmatprep.subr.mxu0 0.0
      %4324 = vmatpush1.msra.mxu0 0.0
      %4325 = vmatprep.subr.mxu0 0.0
      %4326 = vmatpush1.msra.mxu0 0.0
      %4327 = vmatprep.subr.mxu0 0.0
      %4328 = vmatpush1.msra.mxu0 0.0
      %4329 = vmatprep.subr.mxu0 0.0
      %4330 = vmatpush1.msra.mxu0 0.0
      %4331 = vmatprep.subr.mxu0 0.0
      %4332 = vmatpush1.msra.mxu0 0.0
      %4333 = vmatprep.subr.mxu0 0.0
      %4334 = vmatpush1.msra.mxu0 0.0
      %4335 = vmatprep.subr.mxu0 0.0
      %4336 = vmatpush1.msra.mxu0 0.0
      %4337 = vmatprep.subr.mxu0 0.0
      %4338 = vmatpush1.msra.mxu0 0.0
      %4339 = vmatprep.subr.mxu0 0.0
      %4340 = vmatpush1.msra.mxu0 0.0
      %4341 = vmatprep.subr.mxu0 0.0
      %4342 = vmatpush1.msra.mxu0 0.0
      %4343 = vmatprep.mubr.f32.mxu0 0.0
      %4344 = vmatmul.mubr.f32.gmra.mrb[0].mxu0 %v4256
      %v4345 = vpop.f32.mrb[0].mxu0
      %v4346 = vadd.f32 0.0, %v4345
      %v4347 = vpop.f32.mrb[0].mxu0
      %4348 = vmatprep.mubr.f32.mxu0 0.0
      %4349 = vmatmul.mubr.f32.gmra.mrb[0].mxu0 %v4258
      %v4350 = vpop.f32.mrb[0].mxu0
      %v4351 = vadd.f32 0.0, %v4350
      %v4352 = vpop.f32.mrb[0].mxu0
      %4353 = vmatprep.mubr.f32.mxu0 0.0
      %4354 = vmatmul.mubr.f32.gmra.mrb[0].mxu0 %v4260
      %v4355 = vpop.f32.mrb[0].mxu0
      %v4356 = vadd.f32 0.0, %v4355
      %v4357 = vpop.f32.mrb[0].mxu0
      %4358 = vmatprep.mubr.f32.mxu0 0.0
      %4359 = vmatmul.mubr.f32.gmra.mrb[0].mxu0 %v4262
      %v4360 = vpop.f32.mrb[0].mxu0
      %v4361 = vadd.f32 0.0, %v4360
      %v4362 = vpop.f32.mrb[0].mxu0
      %4363 = vmatprep.mubr.f32.mxu0 0.0
      %4364 = vmatmul.mubr.f32.gmra.mrb[0].mxu0 %v4264
      %v4365 = vpop.f32.mrb[0].mxu0
      %v4366 = vadd.f32 0.0, %v4365
      %v4367 = vpop.f32.mrb[0].mxu0
      %4368 = vmatprep.mubr.f32.mxu0 0.0
      %4369 = vmatmul.mubr.f32.gmra.mrb[0].mxu0 %v4266
      %v4370 = vpop.f32.mrb[0].mxu0
      %v4371 = vadd.f32 0.0, %v4370
      %v4372 = vpop.f32.mrb[0].mxu0
      %4373 = vmatprep.mubr.f32.mxu0 0.0
      %4374 = vmatmul.mubr.f32.gmra.mrb[0].mxu0 %v4268
      %v4375 = vpop.f32.mrb[0].mxu0
      %v4376 = vadd.f32 0.0, %v4375
      %v4377 = vpop.f32.mrb[0].mxu0
      %4378 = vmatprep.mubr.f32.mxu0 0.0
      %4379 = vmatmul.mubr.f32.gmra.mrb[0].mxu0 %v4270
      %v4380 = vpop.f32.mrb[0].mxu0
      %v4381 = vadd.f32 0.0, %v4380
      %v4382 = vpop.f32.mrb[0].mxu0
      %4383 = vmatprep.mubr.f32.mxu0 0.0
      %4384 = vmatmul.mubr.f32.gmra.mrb[0].mxu0 %v4272
      %v4385 = vpop.f32.mrb[0].mxu0
      %v4386 = vadd.f32 0.0, %v4385
      %v4387 = vpop.f32.mrb[0].mxu0
      %4388 = vmatprep.mubr.f32.mxu0 0.0
      %4389 = vmatmul.mubr.f32.gmra.mrb[0].mxu0 %v4274
      %v4390 = vpop.f32.mrb[0].mxu0
      %v4391 = vadd.f32 0.0, %v4390
      %v4392 = vpop.f32.mrb[0].mxu0
      %4393 = vdwg.mxu0
      %v4394 = vadd.f32 %v4223, %v4346
      %v4395 = vadd.f32 %v4224, %v4351
      %v4396 = vadd.f32 %v4225, %v4356
      %v4397 = vadd.f32 %v4226, %v4361
      %v4398 = vadd.f32 %v4227, %v4366
      %v4399 = vadd.f32 %v4228, %v4371
      %v4400 = vadd.f32 %v4229, %v4376
      %v4401 = vadd.f32 %v4230, %v4381
      %v4402 = vadd.f32 %v4231, %v4386
      %v4403 = vadd.f32 %v4232, %v4391
      %s4404 = scalar_lea.vmem %s4, 96
      %v4405 = vld [vmem:[%s4404] sm:$0xf]
      %v4407 = vrot.slane %v523, 4
      %v4408 = vsel %vm581, %v4254, %v4407
      %v4409 = vsel %vm560, %v4408, 0
      %v4412 = vsel %vm581, %v4405, 0
      %4414 = vmatprep.subr.mxu0 0.0
      %4415 = vmatpush1.msra.mxu0 %v4412
      %4416 = vmatprep.subr.mxu0 0.0
      %4417 = vmatpush1.msra.mxu0 0.0
      %4418 = vmatprep.subr.mxu0 0.0
      %4419 = vmatpush1.msra.mxu0 0.0
      %4420 = vmatprep.subr.mxu0 0.0
      %4421 = vmatpush1.msra.mxu0 0.0
      %4422 = vmatprep.subr.mxu0 0.0
      %4423 = vmatpush1.msra.mxu0 0.0
      %4424 = vmatprep.subr.mxu0 0.0
      %4425 = vmatpush1.msra.mxu0 0.0
      %4426 = vmatprep.subr.mxu0 0.0
      %4427 = vmatpush1.msra.mxu0 0.0
      %4428 = vmatprep.subr.mxu0 0.0
      %4429 = vmatpush1.msra.mxu0 0.0
      %4430 = vmatprep.subr.mxu0 0.0
      %4431 = vmatpush1.msra.mxu0 0.0
      %4432 = vmatprep.subr.mxu0 0.0
      %4433 = vmatpush1.msra.mxu0 0.0
      %4434 = vmatprep.subr.mxu0 0.0
      %4435 = vmatpush1.msra.mxu0 0.0
      %4436 = vmatprep.subr.mxu0 0.0
      %4437 = vmatpush1.msra.mxu0 0.0
      %4438 = vmatprep.subr.mxu0 0.0
      %4439 = vmatpush1.msra.mxu0 0.0
      %4440 = vmatprep.subr.mxu0 0.0
      %4441 = vmatpush1.msra.mxu0 0.0
      %4442 = vmatprep.subr.mxu0 0.0
      %4443 = vmatpush1.msra.mxu0 0.0
      %4444 = vmatprep.subr.mxu0 0.0
      %4445 = vmatpush1.msra.mxu0 0.0
      %4446 = vmatprep.subr.mxu0 0.0
      %4447 = vmatpush1.msra.mxu0 0.0
      %4448 = vmatprep.subr.mxu0 0.0
      %4449 = vmatpush1.msra.mxu0 0.0
      %4450 = vmatprep.subr.mxu0 0.0
      %4451 = vmatpush1.msra.mxu0 0.0
      %4452 = vmatprep.subr.mxu0 0.0
      %4453 = vmatpush1.msra.mxu0 0.0
      %4454 = vmatprep.subr.mxu0 0.0
      %4455 = vmatpush1.msra.mxu0 0.0
      %4456 = vmatprep.subr.mxu0 0.0
      %4457 = vmatpush1.msra.mxu0 0.0
      %4458 = vmatprep.subr.mxu0 0.0
      %4459 = vmatpush1.msra.mxu0 0.0
      %4460 = vmatprep.subr.mxu0 0.0
      %4461 = vmatpush1.msra.mxu0 0.0
      %4462 = vmatprep.subr.mxu0 0.0
      %4463 = vmatpush1.msra.mxu0 0.0
      %4464 = vmatprep.subr.mxu0 0.0
      %4465 = vmatpush1.msra.mxu0 0.0
      %4466 = vmatprep.subr.mxu0 0.0
      %4467 = vmatpush1.msra.mxu0 0.0
      %4468 = vmatprep.subr.mxu0 0.0
      %4469 = vmatpush1.msra.mxu0 0.0
      %4470 = vmatprep.subr.mxu0 0.0
      %4471 = vmatpush1.msra.mxu0 0.0
      %4472 = vmatprep.subr.mxu0 0.0
      %4473 = vmatpush1.msra.mxu0 0.0
      %4474 = vmatprep.subr.mxu0 0.0
      %4475 = vmatpush1.msra.mxu0 0.0
      %4476 = vmatprep.subr.mxu0 0.0
      %4477 = vmatpush1.msra.mxu0 0.0
      %4478 = vmatprep.mubr.f32.mxu0 0.0
      %4479 = vmatmul.mubr.f32.gmra.mrb[0].mxu0 %v4258
      %v4480 = vpop.f32.mrb[0].mxu0
      %v4481 = vadd.f32 0.0, %v4480
      %v4482 = vpop.f32.mrb[0].mxu0
      %4483 = vmatprep.mubr.f32.mxu0 0.0
      %4484 = vmatmul.mubr.f32.gmra.mrb[0].mxu0 %v4260
      %v4485 = vpop.f32.mrb[0].mxu0
      %v4486 = vadd.f32 0.0, %v4485
      %v4487 = vpop.f32.mrb[0].mxu0
      %4488 = vmatprep.mubr.f32.mxu0 0.0
      %4489 = vmatmul.mubr.f32.gmra.mrb[0].mxu0 %v4262
      %v4490 = vpop.f32.mrb[0].mxu0
      %v4491 = vadd.f32 0.0, %v4490
      %v4492 = vpop.f32.mrb[0].mxu0
      %4493 = vmatprep.mubr.f32.mxu0 0.0
      %4494 = vmatmul.mubr.f32.gmra.mrb[0].mxu0 %v4264
      %v4495 = vpop.f32.mrb[0].mxu0
      %v4496 = vadd.f32 0.0, %v4495
      %v4497 = vpop.f32.mrb[0].mxu0
      %4498 = vmatprep.mubr.f32.mxu0 0.0
      %4499 = vmatmul.mubr.f32.gmra.mrb[0].mxu0 %v4266
      %v4500 = vpop.f32.mrb[0].mxu0
      %v4501 = vadd.f32 0.0, %v4500
      %v4502 = vpop.f32.mrb[0].mxu0
      %4503 = vmatprep.mubr.f32.mxu0 0.0
      %4504 = vmatmul.mubr.f32.gmra.mrb[0].mxu0 %v4268
      %v4505 = vpop.f32.mrb[0].mxu0
      %v4506 = vadd.f32 0.0, %v4505
      %v4507 = vpop.f32.mrb[0].mxu0
      %4508 = vmatprep.mubr.f32.mxu0 0.0
      %4509 = vmatmul.mubr.f32.gmra.mrb[0].mxu0 %v4270
      %v4510 = vpop.f32.mrb[0].mxu0
      %v4511 = vadd.f32 0.0, %v4510
      %v4512 = vpop.f32.mrb[0].mxu0
      %4513 = vmatprep.mubr.f32.mxu0 0.0
      %4514 = vmatmul.mubr.f32.gmra.mrb[0].mxu0 %v4272
      %v4515 = vpop.f32.mrb[0].mxu0
      %v4516 = vadd.f32 0.0, %v4515
      %v4517 = vpop.f32.mrb[0].mxu0
      %4518 = vmatprep.mubr.f32.mxu0 0.0
      %4519 = vmatmul.mubr.f32.gmra.mrb[0].mxu0 %v4274
      %v4520 = vpop.f32.mrb[0].mxu0
      %v4521 = vadd.f32 0.0, %v4520
      %v4522 = vpop.f32.mrb[0].mxu0
      %4523 = vmatprep.mubr.f32.mxu0 0.0
      %4524 = vmatmul.mubr.f32.gmra.mrb[0].mxu0 %v4409
      %v4525 = vpop.f32.mrb[0].mxu0
      %v4526 = vadd.f32 0.0, %v4525
      %v4527 = vpop.f32.mrb[0].mxu0
      %4528 = vdwg.mxu0
      %v4529 = vadd.f32 %v4394, %v4481
      %v4530 = vadd.f32 %v4395, %v4486
      %v4531 = vadd.f32 %v4396, %v4491
      %v4532 = vadd.f32 %v4397, %v4496
      %v4533 = vadd.f32 %v4398, %v4501
      %v4534 = vadd.f32 %v4399, %v4506
      %v4535 = vadd.f32 %v4400, %v4511
      %v4536 = vadd.f32 %v4401, %v4516
      %v4537 = vadd.f32 %v4402, %v4521
      %v4538 = vadd.f32 %v4403, %v4526
      %s4539 = scalar_lea.vmem %s4, 100
      %v4540 = vld [vmem:[%s4539] sm:$0xf]
      %v4541 = vrot.slane %v513, 5
      %v4542 = vrot.slane %v514, 5
      %v4543 = vsel %vm1625, %v4541, %v4542
      %v4544 = vrot.slane %v515, 5
      %v4545 = vsel %vm1625, %v4542, %v4544
      %v4546 = vrot.slane %v516, 5
      %v4547 = vsel %vm1625, %v4544, %v4546
      %v4548 = vrot.slane %v517, 5
      %v4549 = vsel %vm1625, %v4546, %v4548
      %v4550 = vrot.slane %v518, 5
      %v4551 = vsel %vm1625, %v4548, %v4550
      %v4552 = vrot.slane %v519, 5
      %v4553 = vsel %vm1625, %v4550, %v4552
      %v4554 = vrot.slane %v520, 5
      %v4555 = vsel %vm1625, %v4552, %v4554
      %v4556 = vrot.slane %v521, 5
      %v4557 = vsel %vm1625, %v4554, %v4556
      %v4558 = vrot.slane %v522, 5
      %v4559 = vsel %vm1625, %v4556, %v4558
      %v4560 = vrot.slane %v523, 5
      %v4561 = vsel %vm1625, %v4558, %v4560
      %v4562 = vsel %vm560, %v4543, 0
      %v4564 = vsel %vm560, %v4545, 0
      %v4566 = vsel %vm560, %v4547, 0
      %v4568 = vsel %vm560, %v4549, 0
      %v4570 = vsel %vm560, %v4551, 0
      %v4572 = vsel %vm560, %v4553, 0
      %v4574 = vsel %vm560, %v4555, 0
      %v4576 = vsel %vm560, %v4557, 0
      %v4578 = vsel %vm560, %v4559, 0
      %v4580 = vsel %vm560, %v4561, 0
      %v4583 = vsel %vm581, %v4540, 0
      %4585 = vmatprep.subr.mxu0 0.0
      %4586 = vmatpush1.msra.mxu0 %v4583
      %4587 = vmatprep.subr.mxu0 0.0
      %4588 = vmatpush1.msra.mxu0 0.0
      %4589 = vmatprep.subr.mxu0 0.0
      %4590 = vmatpush1.msra.mxu0 0.0
      %4591 = vmatprep.subr.mxu0 0.0
      %4592 = vmatpush1.msra.mxu0 0.0
      %4593 = vmatprep.subr.mxu0 0.0
      %4594 = vmatpush1.msra.mxu0 0.0
      %4595 = vmatprep.subr.mxu0 0.0
      %4596 = vmatpush1.msra.mxu0 0.0
      %4597 = vmatprep.subr.mxu0 0.0
      %4598 = vmatpush1.msra.mxu0 0.0
      %4599 = vmatprep.subr.mxu0 0.0
      %4600 = vmatpush1.msra.mxu0 0.0
      %4601 = vmatprep.subr.mxu0 0.0
      %4602 = vmatpush1.msra.mxu0 0.0
      %4603 = vmatprep.subr.mxu0 0.0
      %4604 = vmatpush1.msra.mxu0 0.0
      %4605 = vmatprep.subr.mxu0 0.0
      %4606 = vmatpush1.msra.mxu0 0.0
      %4607 = vmatprep.subr.mxu0 0.0
      %4608 = vmatpush1.msra.mxu0 0.0
      %4609 = vmatprep.subr.mxu0 0.0
      %4610 = vmatpush1.msra.mxu0 0.0
      %4611 = vmatprep.subr.mxu0 0.0
      %4612 = vmatpush1.msra.mxu0 0.0
      %4613 = vmatprep.subr.mxu0 0.0
      %4614 = vmatpush1.msra.mxu0 0.0
      %4615 = vmatprep.subr.mxu0 0.0
      %4616 = vmatpush1.msra.mxu0 0.0
      %4617 = vmatprep.subr.mxu0 0.0
      %4618 = vmatpush1.msra.mxu0 0.0
      %4619 = vmatprep.subr.mxu0 0.0
      %4620 = vmatpush1.msra.mxu0 0.0
      %4621 = vmatprep.subr.mxu0 0.0
      %4622 = vmatpush1.msra.mxu0 0.0
      %4623 = vmatprep.subr.mxu0 0.0
      %4624 = vmatpush1.msra.mxu0 0.0
      %4625 = vmatprep.subr.mxu0 0.0
      %4626 = vmatpush1.msra.mxu0 0.0
      %4627 = vmatprep.subr.mxu0 0.0
      %4628 = vmatpush1.msra.mxu0 0.0
      %4629 = vmatprep.subr.mxu0 0.0
      %4630 = vmatpush1.msra.mxu0 0.0
      %4631 = vmatprep.subr.mxu0 0.0
      %4632 = vmatpush1.msra.mxu0 0.0
      %4633 = vmatprep.subr.mxu0 0.0
      %4634 = vmatpush1.msra.mxu0 0.0
      %4635 = vmatprep.subr.mxu0 0.0
      %4636 = vmatpush1.msra.mxu0 0.0
      %4637 = vmatprep.subr.mxu0 0.0
      %4638 = vmatpush1.msra.mxu0 0.0
      %4639 = vmatprep.subr.mxu0 0.0
      %4640 = vmatpush1.msra.mxu0 0.0
      %4641 = vmatprep.subr.mxu0 0.0
      %4642 = vmatpush1.msra.mxu0 0.0
      %4643 = vmatprep.subr.mxu0 0.0
      %4644 = vmatpush1.msra.mxu0 0.0
      %4645 = vmatprep.subr.mxu0 0.0
      %4646 = vmatpush1.msra.mxu0 0.0
      %4647 = vmatprep.subr.mxu0 0.0
      %4648 = vmatpush1.msra.mxu0 0.0
      %4649 = vmatprep.mubr.f32.mxu0 0.0
      %4650 = vmatmul.mubr.f32.gmra.mrb[0].mxu0 %v4562
      %v4651 = vpop.f32.mrb[0].mxu0
      %v4652 = vadd.f32 0.0, %v4651
      %v4653 = vpop.f32.mrb[0].mxu0
      %4654 = vmatprep.mubr.f32.mxu0 0.0
      %4655 = vmatmul.mubr.f32.gmra.mrb[0].mxu0 %v4564
      %v4656 = vpop.f32.mrb[0].mxu0
      %v4657 = vadd.f32 0.0, %v4656
      %v4658 = vpop.f32.mrb[0].mxu0
      %4659 = vmatprep.mubr.f32.mxu0 0.0
      %4660 = vmatmul.mubr.f32.gmra.mrb[0].mxu0 %v4566
      %v4661 = vpop.f32.mrb[0].mxu0
      %v4662 = vadd.f32 0.0, %v4661
      %v4663 = vpop.f32.mrb[0].mxu0
      %4664 = vmatprep.mubr.f32.mxu0 0.0
      %4665 = vmatmul.mubr.f32.gmra.mrb[0].mxu0 %v4568
      %v4666 = vpop.f32.mrb[0].mxu0
      %v4667 = vadd.f32 0.0, %v4666
      %v4668 = vpop.f32.mrb[0].mxu0
      %4669 = vmatprep.mubr.f32.mxu0 0.0
      %4670 = vmatmul.mubr.f32.gmra.mrb[0].mxu0 %v4570
      %v4671 = vpop.f32.mrb[0].mxu0
      %v4672 = vadd.f32 0.0, %v4671
      %v4673 = vpop.f32.mrb[0].mxu0
      %4674 = vmatprep.mubr.f32.mxu0 0.0
      %4675 = vmatmul.mubr.f32.gmra.mrb[0].mxu0 %v4572
      %v4676 = vpop.f32.mrb[0].mxu0
      %v4677 = vadd.f32 0.0, %v4676
      %v4678 = vpop.f32.mrb[0].mxu0
      %4679 = vmatprep.mubr.f32.mxu0 0.0
      %4680 = vmatmul.mubr.f32.gmra.mrb[0].mxu0 %v4574
      %v4681 = vpop.f32.mrb[0].mxu0
      %v4682 = vadd.f32 0.0, %v4681
      %v4683 = vpop.f32.mrb[0].mxu0
      %4684 = vmatprep.mubr.f32.mxu0 0.0
      %4685 = vmatmul.mubr.f32.gmra.mrb[0].mxu0 %v4576
      %v4686 = vpop.f32.mrb[0].mxu0
      %v4687 = vadd.f32 0.0, %v4686
      %v4688 = vpop.f32.mrb[0].mxu0
      %4689 = vmatprep.mubr.f32.mxu0 0.0
      %4690 = vmatmul.mubr.f32.gmra.mrb[0].mxu0 %v4578
      %v4691 = vpop.f32.mrb[0].mxu0
      %v4692 = vadd.f32 0.0, %v4691
      %v4693 = vpop.f32.mrb[0].mxu0
      %4694 = vmatprep.mubr.f32.mxu0 0.0
      %4695 = vmatmul.mubr.f32.gmra.mrb[0].mxu0 %v4580
      %v4696 = vpop.f32.mrb[0].mxu0
      %v4697 = vadd.f32 0.0, %v4696
      %v4698 = vpop.f32.mrb[0].mxu0
      %4699 = vdwg.mxu0
      %v4700 = vadd.f32 %v4529, %v4652
      %v4701 = vadd.f32 %v4530, %v4657
      %v4702 = vadd.f32 %v4531, %v4662
      %v4703 = vadd.f32 %v4532, %v4667
      %v4704 = vadd.f32 %v4533, %v4672
      %v4705 = vadd.f32 %v4534, %v4677
      %v4706 = vadd.f32 %v4535, %v4682
      %v4707 = vadd.f32 %v4536, %v4687
      %v4708 = vadd.f32 %v4537, %v4692
      %v4709 = vadd.f32 %v4538, %v4697
      %s4710 = scalar_lea.vmem %s4, 104
      %v4711 = vld [vmem:[%s4710] sm:$0xf]
      %v4712 = vrot.slane %v513, 6
      %v4713 = vrot.slane %v514, 6
      %v4714 = vsel %vm1797, %v4712, %v4713
      %v4715 = vrot.slane %v515, 6
      %v4716 = vsel %vm1797, %v4713, %v4715
      %v4717 = vrot.slane %v516, 6
      %v4718 = vsel %vm1797, %v4715, %v4717
      %v4719 = vrot.slane %v517, 6
      %v4720 = vsel %vm1797, %v4717, %v4719
      %v4721 = vrot.slane %v518, 6
      %v4722 = vsel %vm1797, %v4719, %v4721
      %v4723 = vrot.slane %v519, 6
      %v4724 = vsel %vm1797, %v4721, %v4723
      %v4725 = vrot.slane %v520, 6
      %v4726 = vsel %vm1797, %v4723, %v4725
      %v4727 = vrot.slane %v521, 6
      %v4728 = vsel %vm1797, %v4725, %v4727
      %v4729 = vrot.slane %v522, 6
      %v4730 = vsel %vm1797, %v4727, %v4729
      %v4731 = vrot.slane %v523, 6
      %v4732 = vsel %vm1797, %v4729, %v4731
      %v4733 = vsel %vm560, %v4714, 0
      %v4735 = vsel %vm560, %v4716, 0
      %v4737 = vsel %vm560, %v4718, 0
      %v4739 = vsel %vm560, %v4720, 0
      %v4741 = vsel %vm560, %v4722, 0
      %v4743 = vsel %vm560, %v4724, 0
      %v4745 = vsel %vm560, %v4726, 0
      %v4747 = vsel %vm560, %v4728, 0
      %v4749 = vsel %vm560, %v4730, 0
      %v4751 = vsel %vm560, %v4732, 0
      %v4754 = vsel %vm581, %v4711, 0
      %4756 = vmatprep.subr.mxu0 0.0
      %4757 = vmatpush1.msra.mxu0 %v4754
      %4758 = vmatprep.subr.mxu0 0.0
      %4759 = vmatpush1.msra.mxu0 0.0
      %4760 = vmatprep.subr.mxu0 0.0
      %4761 = vmatpush1.msra.mxu0 0.0
      %4762 = vmatprep.subr.mxu0 0.0
      %4763 = vmatpush1.msra.mxu0 0.0
      %4764 = vmatprep.subr.mxu0 0.0
      %4765 = vmatpush1.msra.mxu0 0.0
      %4766 = vmatprep.subr.mxu0 0.0
      %4767 = vmatpush1.msra.mxu0 0.0
      %4768 = vmatprep.subr.mxu0 0.0
      %4769 = vmatpush1.msra.mxu0 0.0
      %4770 = vmatprep.subr.mxu0 0.0
      %4771 = vmatpush1.msra.mxu0 0.0
      %4772 = vmatprep.subr.mxu0 0.0
      %4773 = vmatpush1.msra.mxu0 0.0
      %4774 = vmatprep.subr.mxu0 0.0
      %4775 = vmatpush1.msra.mxu0 0.0
      %4776 = vmatprep.subr.mxu0 0.0
      %4777 = vmatpush1.msra.mxu0 0.0
      %4778 = vmatprep.subr.mxu0 0.0
      %4779 = vmatpush1.msra.mxu0 0.0
      %4780 = vmatprep.subr.mxu0 0.0
      %4781 = vmatpush1.msra.mxu0 0.0
      %4782 = vmatprep.subr.mxu0 0.0
      %4783 = vmatpush1.msra.mxu0 0.0
      %4784 = vmatprep.subr.mxu0 0.0
      %4785 = vmatpush1.msra.mxu0 0.0
      %4786 = vmatprep.subr.mxu0 0.0
      %4787 = vmatpush1.msra.mxu0 0.0
      %4788 = vmatprep.subr.mxu0 0.0
      %4789 = vmatpush1.msra.mxu0 0.0
      %4790 = vmatprep.subr.mxu0 0.0
      %4791 = vmatpush1.msra.mxu0 0.0
      %4792 = vmatprep.subr.mxu0 0.0
      %4793 = vmatpush1.msra.mxu0 0.0
      %4794 = vmatprep.subr.mxu0 0.0
      %4795 = vmatpush1.msra.mxu0 0.0
      %4796 = vmatprep.subr.mxu0 0.0
      %4797 = vmatpush1.msra.mxu0 0.0
      %4798 = vmatprep.subr.mxu0 0.0
      %4799 = vmatpush1.msra.mxu0 0.0
      %4800 = vmatprep.subr.mxu0 0.0
      %4801 = vmatpush1.msra.mxu0 0.0
      %4802 = vmatprep.subr.mxu0 0.0
      %4803 = vmatpush1.msra.mxu0 0.0
      %4804 = vmatprep.subr.mxu0 0.0
      %4805 = vmatpush1.msra.mxu0 0.0
      %4806 = vmatprep.subr.mxu0 0.0
      %4807 = vmatpush1.msra.mxu0 0.0
      %4808 = vmatprep.subr.mxu0 0.0
      %4809 = vmatpush1.msra.mxu0 0.0
      %4810 = vmatprep.subr.mxu0 0.0
      %4811 = vmatpush1.msra.mxu0 0.0
      %4812 = vmatprep.subr.mxu0 0.0
      %4813 = vmatpush1.msra.mxu0 0.0
      %4814 = vmatprep.subr.mxu0 0.0
      %4815 = vmatpush1.msra.mxu0 0.0
      %4816 = vmatprep.subr.mxu0 0.0
      %4817 = vmatpush1.msra.mxu0 0.0
      %4818 = vmatprep.subr.mxu0 0.0
      %4819 = vmatpush1.msra.mxu0 0.0
      %4820 = vmatprep.mubr.f32.mxu0 0.0
      %4821 = vmatmul.mubr.f32.gmra.mrb[0].mxu0 %v4733
      %v4822 = vpop.f32.mrb[0].mxu0
      %v4823 = vadd.f32 0.0, %v4822
      %v4824 = vpop.f32.mrb[0].mxu0
      %4825 = vmatprep.mubr.f32.mxu0 0.0
      %4826 = vmatmul.mubr.f32.gmra.mrb[0].mxu0 %v4735
      %v4827 = vpop.f32.mrb[0].mxu0
      %v4828 = vadd.f32 0.0, %v4827
      %v4829 = vpop.f32.mrb[0].mxu0
      %4830 = vmatprep.mubr.f32.mxu0 0.0
      %4831 = vmatmul.mubr.f32.gmra.mrb[0].mxu0 %v4737
      %v4832 = vpop.f32.mrb[0].mxu0
      %v4833 = vadd.f32 0.0, %v4832
      %v4834 = vpop.f32.mrb[0].mxu0
      %4835 = vmatprep.mubr.f32.mxu0 0.0
      %4836 = vmatmul.mubr.f32.gmra.mrb[0].mxu0 %v4739
      %v4837 = vpop.f32.mrb[0].mxu0
      %v4838 = vadd.f32 0.0, %v4837
      %v4839 = vpop.f32.mrb[0].mxu0
      %4840 = vmatprep.mubr.f32.mxu0 0.0
      %4841 = vmatmul.mubr.f32.gmra.mrb[0].mxu0 %v4741
      %v4842 = vpop.f32.mrb[0].mxu0
      %v4843 = vadd.f32 0.0, %v4842
      %v4844 = vpop.f32.mrb[0].mxu0
      %4845 = vmatprep.mubr.f32.mxu0 0.0
      %4846 = vmatmul.mubr.f32.gmra.mrb[0].mxu0 %v4743
      %v4847 = vpop.f32.mrb[0].mxu0
      %v4848 = vadd.f32 0.0, %v4847
      %v4849 = vpop.f32.mrb[0].mxu0
      %4850 = vmatprep.mubr.f32.mxu0 0.0
      %4851 = vmatmul.mubr.f32.gmra.mrb[0].mxu0 %v4745
      %v4852 = vpop.f32.mrb[0].mxu0
      %v4853 = vadd.f32 0.0, %v4852
      %v4854 = vpop.f32.mrb[0].mxu0
      %4855 = vmatprep.mubr.f32.mxu0 0.0
      %4856 = vmatmul.mubr.f32.gmra.mrb[0].mxu0 %v4747
      %v4857 = vpop.f32.mrb[0].mxu0
      %v4858 = vadd.f32 0.0, %v4857
      %v4859 = vpop.f32.mrb[0].mxu0
      %4860 = vmatprep.mubr.f32.mxu0 0.0
      %4861 = vmatmul.mubr.f32.gmra.mrb[0].mxu0 %v4749
      %v4862 = vpop.f32.mrb[0].mxu0
      %v4863 = vadd.f32 0.0, %v4862
      %v4864 = vpop.f32.mrb[0].mxu0
      %4865 = vmatprep.mubr.f32.mxu0 0.0
      %4866 = vmatmul.mubr.f32.gmra.mrb[0].mxu0 %v4751
      %v4867 = vpop.f32.mrb[0].mxu0
      %v4868 = vadd.f32 0.0, %v4867
      %v4869 = vpop.f32.mrb[0].mxu0
      %4870 = vdwg.mxu0
      %v4871 = vadd.f32 %v4700, %v4823
      %v4872 = vadd.f32 %v4701, %v4828
      %v4873 = vadd.f32 %v4702, %v4833
      %v4874 = vadd.f32 %v4703, %v4838
      %v4875 = vadd.f32 %v4704, %v4843
      %v4876 = vadd.f32 %v4705, %v4848
      %v4877 = vadd.f32 %v4706, %v4853
      %v4878 = vadd.f32 %v4707, %v4858
      %v4879 = vadd.f32 %v4708, %v4863
      %v4880 = vadd.f32 %v4709, %v4868
      %v4881 = vld [vmem:[%s5] sm:$0x1]
      %v4883 = vlaneseq
      %v4884 = vshrl.u32 %v4883, 7
      %v4885 = vsub.s32 0, %v4884
      %v4886 = vrot.slane %v4881, %v4885
      %v4888 = vadd.f32 %v4871, %v4886
      %v4889 = vadd.f32 %v4872, %v4886
      %v4890 = vadd.f32 %v4873, %v4886
      %v4891 = vadd.f32 %v4874, %v4886
      %v4892 = vadd.f32 %v4875, %v4886
      %v4893 = vadd.f32 %v4876, %v4886
      %v4894 = vadd.f32 %v4877, %v4886
      %v4895 = vadd.f32 %v4878, %v4886
      %v4896 = vadd.f32 %v4879, %v4886
      %v4897 = vadd.f32 %v4880, %v4886
      %v4898 = vmax.f32 %v4888, 0.0
      %v4899 = vmax.f32 %v4889, 0.0
      %v4900 = vmax.f32 %v4890, 0.0
      %v4901 = vmax.f32 %v4891, 0.0
      %v4902 = vmax.f32 %v4892, 0.0
      %v4903 = vmax.f32 %v4893, 0.0
      %v4904 = vmax.f32 %v4894, 0.0
      %v4905 = vmax.f32 %v4895, 0.0
      %v4906 = vmax.f32 %v4896, 0.0
      %v4907 = vmax.f32 %v4897, 0.0
      %v4908 = vld [vmem:[%s6] sm:$0xf]
      %v4909 = vld [vmem:[%s475] sm:$0xff]
      %v4910 = vld [vmem:[%s475 + $0x8] sm:$0xff]
      %v4911 = vld [vmem:[%s475 + $0x10] sm:$0xff]
      %v4912 = vld [vmem:[%s475 + $0x18] sm:$0xff]
      %v4913 = vld [vmem:[%s475 + $0x20] sm:$0xff]
      %v4914 = vld [vmem:[%s475 + $0x28] sm:$0xff]
      %v4915 = vld [vmem:[%s475 + $0x30] sm:$0xff]
      %v4916 = vld [vmem:[%s475 + $0x38] sm:$0xff]
      %v4917 = vld [vmem:[%s475 + $0x40] sm:$0xff]
      %v4918 = vld [vmem:[%s475 + $0x48] sm:$0xff]
      %v4919 = vld [vmem:[%s7] sm:$0xf]
      %v4921 = vsel %vm560, %v4909, 0
      %v4924 = vsel %vm560, %v4910, 0
      %v4927 = vsel %vm560, %v4911, 0
      %v4930 = vsel %vm560, %v4912, 0
      %v4933 = vsel %vm560, %v4913, 0
      %v4936 = vsel %vm560, %v4914, 0
      %v4939 = vsel %vm560, %v4915, 0
      %v4942 = vsel %vm560, %v4916, 0
      %v4945 = vsel %vm560, %v4917, 0
      %v4948 = vsel %vm560, %v4918, 0
      %v4951 = vsel %vm581, %v4919, 0
      %4953 = vmatprep.subr.mxu0 0.0
      %4954 = vmatpush1.msra.mxu0 %v4951
      %4955 = vmatprep.subr.mxu0 0.0
      %4956 = vmatpush1.msra.mxu0 0.0
      %4957 = vmatprep.subr.mxu0 0.0
      %4958 = vmatpush1.msra.mxu0 0.0
      %4959 = vmatprep.subr.mxu0 0.0
      %4960 = vmatpush1.msra.mxu0 0.0
      %4961 = vmatprep.subr.mxu0 0.0
      %4962 = vmatpush1.msra.mxu0 0.0
      %4963 = vmatprep.subr.mxu0 0.0
      %4964 = vmatpush1.msra.mxu0 0.0
      %4965 = vmatprep.subr.mxu0 0.0
      %4966 = vmatpush1.msra.mxu0 0.0
      %4967 = vmatprep.subr.mxu0 0.0
      %4968 = vmatpush1.msra.mxu0 0.0
      %4969 = vmatprep.subr.mxu0 0.0
      %4970 = vmatpush1.msra.mxu0 0.0
      %4971 = vmatprep.subr.mxu0 0.0
      %4972 = vmatpush1.msra.mxu0 0.0
      %4973 = vmatprep.subr.mxu0 0.0
      %4974 = vmatpush1.msra.mxu0 0.0
      %4975 = vmatprep.subr.mxu0 0.0
      %4976 = vmatpush1.msra.mxu0 0.0
      %4977 = vmatprep.subr.mxu0 0.0
      %4978 = vmatpush1.msra.mxu0 0.0
      %4979 = vmatprep.subr.mxu0 0.0
      %4980 = vmatpush1.msra.mxu0 0.0
      %4981 = vmatprep.subr.mxu0 0.0
      %4982 = vmatpush1.msra.mxu0 0.0
      %4983 = vmatprep.subr.mxu0 0.0
      %4984 = vmatpush1.msra.mxu0 0.0
      %4985 = vmatprep.subr.mxu0 0.0
      %4986 = vmatpush1.msra.mxu0 0.0
      %4987 = vmatprep.subr.mxu0 0.0
      %4988 = vmatpush1.msra.mxu0 0.0
      %4989 = vmatprep.subr.mxu0 0.0
      %4990 = vmatpush1.msra.mxu0 0.0
      %4991 = vmatprep.subr.mxu0 0.0
      %4992 = vmatpush1.msra.mxu0 0.0
      %4993 = vmatprep.subr.mxu0 0.0
      %4994 = vmatpush1.msra.mxu0 0.0
      %4995 = vmatprep.subr.mxu0 0.0
      %4996 = vmatpush1.msra.mxu0 0.0
      %4997 = vmatprep.subr.mxu0 0.0
      %4998 = vmatpush1.msra.mxu0 0.0
      %4999 = vmatprep.subr.mxu0 0.0
      %5000 = vmatpush1.msra.mxu0 0.0
      %5001 = vmatprep.subr.mxu0 0.0
      %5002 = vmatpush1.msra.mxu0 0.0
      %5003 = vmatprep.subr.mxu0 0.0
      %5004 = vmatpush1.msra.mxu0 0.0
      %5005 = vmatprep.subr.mxu0 0.0
      %5006 = vmatpush1.msra.mxu0 0.0
      %5007 = vmatprep.subr.mxu0 0.0
      %5008 = vmatpush1.msra.mxu0 0.0
      %5009 = vmatprep.subr.mxu0 0.0
      %5010 = vmatpush1.msra.mxu0 0.0
      %5011 = vmatprep.subr.mxu0 0.0
      %5012 = vmatpush1.msra.mxu0 0.0
      %5013 = vmatprep.subr.mxu0 0.0
      %5014 = vmatpush1.msra.mxu0 0.0
      %5015 = vmatprep.subr.mxu0 0.0
      %5016 = vmatpush1.msra.mxu0 0.0
      %5017 = vmatprep.mubr.f32.mxu0 0.0
      %5018 = vmatmul.mubr.f32.gmra.mrb[0].mxu0 %v4921
      %v5019 = vpop.f32.mrb[0].mxu0
      %v5020 = vadd.f32 0.0, %v5019
      %v5021 = vpop.f32.mrb[0].mxu0
      %5022 = vmatprep.mubr.f32.mxu0 0.0
      %5023 = vmatmul.mubr.f32.gmra.mrb[0].mxu0 %v4924
      %v5024 = vpop.f32.mrb[0].mxu0
      %v5025 = vadd.f32 0.0, %v5024
      %v5026 = vpop.f32.mrb[0].mxu0
      %5027 = vmatprep.mubr.f32.mxu0 0.0
      %5028 = vmatmul.mubr.f32.gmra.mrb[0].mxu0 %v4927
      %v5029 = vpop.f32.mrb[0].mxu0
      %v5030 = vadd.f32 0.0, %v5029
      %v5031 = vpop.f32.mrb[0].mxu0
      %5032 = vmatprep.mubr.f32.mxu0 0.0
      %5033 = vmatmul.mubr.f32.gmra.mrb[0].mxu0 %v4930
      %v5034 = vpop.f32.mrb[0].mxu0
      %v5035 = vadd.f32 0.0, %v5034
      %v5036 = vpop.f32.mrb[0].mxu0
      %5037 = vmatprep.mubr.f32.mxu0 0.0
      %5038 = vmatmul.mubr.f32.gmra.mrb[0].mxu0 %v4933
      %v5039 = vpop.f32.mrb[0].mxu0
      %v5040 = vadd.f32 0.0, %v5039
      %v5041 = vpop.f32.mrb[0].mxu0
      %5042 = vmatprep.mubr.f32.mxu0 0.0
      %5043 = vmatmul.mubr.f32.gmra.mrb[0].mxu0 %v4936
      %v5044 = vpop.f32.mrb[0].mxu0
      %v5045 = vadd.f32 0.0, %v5044
      %v5046 = vpop.f32.mrb[0].mxu0
      %5047 = vmatprep.mubr.f32.mxu0 0.0
      %5048 = vmatmul.mubr.f32.gmra.mrb[0].mxu0 %v4939
      %v5049 = vpop.f32.mrb[0].mxu0
      %v5050 = vadd.f32 0.0, %v5049
      %v5051 = vpop.f32.mrb[0].mxu0
      %5052 = vmatprep.mubr.f32.mxu0 0.0
      %5053 = vmatmul.mubr.f32.gmra.mrb[0].mxu0 %v4942
      %v5054 = vpop.f32.mrb[0].mxu0
      %v5055 = vadd.f32 0.0, %v5054
      %v5056 = vpop.f32.mrb[0].mxu0
      %5057 = vmatprep.mubr.f32.mxu0 0.0
      %5058 = vmatmul.mubr.f32.gmra.mrb[0].mxu0 %v4945
      %v5059 = vpop.f32.mrb[0].mxu0
      %v5060 = vadd.f32 0.0, %v5059
      %v5061 = vpop.f32.mrb[0].mxu0
      %5062 = vmatprep.mubr.f32.mxu0 0.0
      %5063 = vmatmul.mubr.f32.gmra.mrb[0].mxu0 %v4948
      %v5064 = vpop.f32.mrb[0].mxu0
      %v5065 = vadd.f32 0.0, %v5064
      %v5066 = vpop.f32.mrb[0].mxu0
      %5067 = vdwg.mxu0
      %v5069 = vsel %vm560, %v4898, 0
      %v5072 = vsel %vm560, %v4899, 0
      %v5075 = vsel %vm560, %v4900, 0
      %v5078 = vsel %vm560, %v4901, 0
      %v5081 = vsel %vm560, %v4902, 0
      %v5084 = vsel %vm560, %v4903, 0
      %v5087 = vsel %vm560, %v4904, 0
      %v5090 = vsel %vm560, %v4905, 0
      %v5093 = vsel %vm560, %v4906, 0
      %v5096 = vsel %vm560, %v4907, 0
      %v5099 = vsel %vm581, %v4908, 0
      %5101 = vmatprep.subr.mxu0 0.0
      %5102 = vmatpush1.msra.mxu0 %v5099
      %5103 = vmatprep.subr.mxu0 0.0
      %5104 = vmatpush1.msra.mxu0 0.0
      %5105 = vmatprep.subr.mxu0 0.0
      %5106 = vmatpush1.msra.mxu0 0.0
      %5107 = vmatprep.subr.mxu0 0.0
      %5108 = vmatpush1.msra.mxu0 0.0
      %5109 = vmatprep.subr.mxu0 0.0
      %5110 = vmatpush1.msra.mxu0 0.0
      %5111 = vmatprep.subr.mxu0 0.0
      %5112 = vmatpush1.msra.mxu0 0.0
      %5113 = vmatprep.subr.mxu0 0.0
      %5114 = vmatpush1.msra.mxu0 0.0
      %5115 = vmatprep.subr.mxu0 0.0
      %5116 = vmatpush1.msra.mxu0 0.0
      %5117 = vmatprep.subr.mxu0 0.0
      %5118 = vmatpush1.msra.mxu0 0.0
      %5119 = vmatprep.subr.mxu0 0.0
      %5120 = vmatpush1.msra.mxu0 0.0
      %5121 = vmatprep.subr.mxu0 0.0
      %5122 = vmatpush1.msra.mxu0 0.0
      %5123 = vmatprep.subr.mxu0 0.0
      %5124 = vmatpush1.msra.mxu0 0.0
      %5125 = vmatprep.subr.mxu0 0.0
      %5126 = vmatpush1.msra.mxu0 0.0
      %5127 = vmatprep.subr.mxu0 0.0
      %5128 = vmatpush1.msra.mxu0 0.0
      %5129 = vmatprep.subr.mxu0 0.0
      %5130 = vmatpush1.msra.mxu0 0.0
      %5131 = vmatprep.subr.mxu0 0.0
      %5132 = vmatpush1.msra.mxu0 0.0
      %5133 = vmatprep.subr.mxu0 0.0
      %5134 = vmatpush1.msra.mxu0 0.0
      %5135 = vmatprep.subr.mxu0 0.0
      %5136 = vmatpush1.msra.mxu0 0.0
      %5137 = vmatprep.subr.mxu0 0.0
      %5138 = vmatpush1.msra.mxu0 0.0
      %5139 = vmatprep.subr.mxu0 0.0
      %5140 = vmatpush1.msra.mxu0 0.0
      %5141 = vmatprep.subr.mxu0 0.0
      %5142 = vmatpush1.msra.mxu0 0.0
      %5143 = vmatprep.subr.mxu0 0.0
      %5144 = vmatpush1.msra.mxu0 0.0
      %5145 = vmatprep.subr.mxu0 0.0
      %5146 = vmatpush1.msra.mxu0 0.0
      %5147 = vmatprep.subr.mxu0 0.0
      %5148 = vmatpush1.msra.mxu0 0.0
      %5149 = vmatprep.subr.mxu0 0.0
      %5150 = vmatpush1.msra.mxu0 0.0
      %5151 = vmatprep.subr.mxu0 0.0
      %5152 = vmatpush1.msra.mxu0 0.0
      %5153 = vmatprep.subr.mxu0 0.0
      %5154 = vmatpush1.msra.mxu0 0.0
      %5155 = vmatprep.subr.mxu0 0.0
      %5156 = vmatpush1.msra.mxu0 0.0
      %5157 = vmatprep.subr.mxu0 0.0
      %5158 = vmatpush1.msra.mxu0 0.0
      %5159 = vmatprep.subr.mxu0 0.0
      %5160 = vmatpush1.msra.mxu0 0.0
      %5161 = vmatprep.subr.mxu0 0.0
      %5162 = vmatpush1.msra.mxu0 0.0
      %5163 = vmatprep.subr.mxu0 0.0
      %5164 = vmatpush1.msra.mxu0 0.0
      %5165 = vmatprep.mubr.f32.mxu0 0.0
      %5166 = vmatmul.mubr.f32.gmra.mrb[0].mxu0 %v5069
      %v5167 = vpop.f32.mrb[0].mxu0
      %v5168 = vadd.f32 %v5020, %v5167
      %v5169 = vpop.f32.mrb[0].mxu0
      %5170 = vmatprep.mubr.f32.mxu0 0.0
      %5171 = vmatmul.mubr.f32.gmra.mrb[0].mxu0 %v5072
      %v5172 = vpop.f32.mrb[0].mxu0
      %v5173 = vadd.f32 %v5025, %v5172
      %v5174 = vpop.f32.mrb[0].mxu0
      %5175 = vmatprep.mubr.f32.mxu0 0.0
      %5176 = vmatmul.mubr.f32.gmra.mrb[0].mxu0 %v5075
      %v5177 = vpop.f32.mrb[0].mxu0
      %v5178 = vadd.f32 %v5030, %v5177
      %v5179 = vpop.f32.mrb[0].mxu0
      %5180 = vmatprep.mubr.f32.mxu0 0.0
      %5181 = vmatmul.mubr.f32.gmra.mrb[0].mxu0 %v5078
      %v5182 = vpop.f32.mrb[0].mxu0
      %v5183 = vadd.f32 %v5035, %v5182
      %v5184 = vpop.f32.mrb[0].mxu0
      %5185 = vmatprep.mubr.f32.mxu0 0.0
      %5186 = vmatmul.mubr.f32.gmra.mrb[0].mxu0 %v5081
      %v5187 = vpop.f32.mrb[0].mxu0
      %v5188 = vadd.f32 %v5040, %v5187
      %v5189 = vpop.f32.mrb[0].mxu0
      %5190 = vmatprep.mubr.f32.mxu0 0.0
      %5191 = vmatmul.mubr.f32.gmra.mrb[0].mxu0 %v5084
      %v5192 = vpop.f32.mrb[0].mxu0
      %v5193 = vadd.f32 %v5045, %v5192
      %v5194 = vpop.f32.mrb[0].mxu0
      %5195 = vmatprep.mubr.f32.mxu0 0.0
      %5196 = vmatmul.mubr.f32.gmra.mrb[0].mxu0 %v5087
      %v5197 = vpop.f32.mrb[0].mxu0
      %v5198 = vadd.f32 %v5050, %v5197
      %v5199 = vpop.f32.mrb[0].mxu0
      %5200 = vmatprep.mubr.f32.mxu0 0.0
      %5201 = vmatmul.mubr.f32.gmra.mrb[0].mxu0 %v5090
      %v5202 = vpop.f32.mrb[0].mxu0
      %v5203 = vadd.f32 %v5055, %v5202
      %v5204 = vpop.f32.mrb[0].mxu0
      %5205 = vmatprep.mubr.f32.mxu0 0.0
      %5206 = vmatmul.mubr.f32.gmra.mrb[0].mxu0 %v5093
      %v5207 = vpop.f32.mrb[0].mxu0
      %v5208 = vadd.f32 %v5060, %v5207
      %v5209 = vpop.f32.mrb[0].mxu0
      %5210 = vmatprep.mubr.f32.mxu0 0.0
      %5211 = vmatmul.mubr.f32.gmra.mrb[0].mxu0 %v5096
      %v5212 = vpop.f32.mrb[0].mxu0
      %v5213 = vadd.f32 %v5065, %v5212
      %v5214 = vpop.f32.mrb[0].mxu0
      %5215 = vdwg.mxu0
      %v5216 = vld [vmem:[%s8] sm:$0x1]
      %v5218 = vlaneseq
      %v5219 = vshrl.u32 %v5218, 7
      %v5220 = vsub.s32 0, %v5219
      %v5221 = vrot.slane %v5216, %v5220
      %v5223 = vadd.f32 %v5168, %v5221
      %v5224 = vadd.f32 %v5173, %v5221
      %v5225 = vadd.f32 %v5178, %v5221
      %v5226 = vadd.f32 %v5183, %v5221
      %v5227 = vadd.f32 %v5188, %v5221
      %v5228 = vadd.f32 %v5193, %v5221
      %v5229 = vadd.f32 %v5198, %v5221
      %v5230 = vadd.f32 %v5203, %v5221
      %v5231 = vadd.f32 %v5208, %v5221
      %v5232 = vadd.f32 %v5213, %v5221
      %vm5233 = vcmask 64512
      %5234 = vst.msk [vmem:[%s484] sm:$0xff] %vm5233, %v5223
      %5235 = vst.msk [vmem:[%s484 + $0x8] sm:$0xff] %vm5233, %v5224
      %5236 = vst.msk [vmem:[%s484 + $0x10] sm:$0xff] %vm5233, %v5225
      %5237 = vst.msk [vmem:[%s484 + $0x18] sm:$0xff] %vm5233, %v5226
      %5238 = vst.msk [vmem:[%s484 + $0x20] sm:$0xff] %vm5233, %v5227
      %5239 = vst.msk [vmem:[%s484 + $0x28] sm:$0xff] %vm5233, %v5228
      %5240 = vst.msk [vmem:[%s484 + $0x30] sm:$0xff] %vm5233, %v5229
      %5241 = vst.msk [vmem:[%s484 + $0x38] sm:$0xff] %vm5233, %v5230
      %5242 = vst.msk [vmem:[%s484 + $0x40] sm:$0xff] %vm5233, %v5231
      %5243 = vst.msk [vmem:[%s484 + $0x48] sm:$0xff] %vm5233, %v5232
      %p5244 = scmp.lt.s32.totalorder %s24, 1
      %s5245 = scalar_select %p5244, %s24, 1
      %p5246 = scmp.lt.s32.totalorder %s25, 3
      %s5247 = scalar_select %p5246, %s25, 3
      %s5248 = smul.addr %s5247, 10
      %s5249 = smul.addr %s5245, 40
      %s5250 = sadd.s32 %s5248, %s5249
      %s5251 = smul.addr %s5250, 8
      %s5252 = scalar_lea.vmem %s9, %s5251
      // Predicated region
      $region57: #{residual_forward.3} parent=55 // pred_check
        %p5253 = pneg %p273
      $region58: #{residual_forward.3} parent=55 // pred_check_branch
        %5255 = sbr.rel (%p5253) target = $region60
      $region59: #{residual_forward.3} parent=55 // pred_region
        _
      $region60: #{residual_forward.3} parent=55 // pred_fallthru
        _
    $region56: #{residual_forward.3} parent=5 // pred_fallthru
      _
    %p5256 = scmp.le.s32.totalorder 2, %s15
    // Predicated region
    $region61: #{residual_forward.3} parent=5 // pred_check
      %p5257 = pneg %p5256
    $region62: #{residual_forward.3} parent=5 // pred_check_branch
      %5259 = sbr.rel (%p5257) target = $region64
    $region63: #{residual_forward.3} parent=5 // pred_region
      %s5260 = ssub.s32 %s15, 2
      // Predicated region
      $region65: #{residual_forward.3} parent=63 // pred_check
        %p5261 = pneg %p279
      $region66: #{residual_forward.3} parent=63 // pred_check_branch
        %5263 = sbr.rel (%p5261) target = $region68
      $region67: #{residual_forward.3} parent=63 // pred_region
        %p5264 = scmp.lt.s32.totalorder %s26, 1
        %s5265 = scalar_select %p5264, %s26, 1
        %p5266 = scmp.lt.s32.totalorder %s27, 3
        %s5267 = scalar_select %p5266, %s27, 3
        %s5268 = smul.addr %s5267, 10
        %s5269 = smul.addr %s5265, 40
        %s5270 = sadd.s32 %s5268, %s5269
        %s5271 = smul.addr %s5270, 8
        %s5272 = scalar_lea.vmem %s9, %s5271
      $region68: #{residual_forward.3} parent=63 // pred_fallthru
        _
    $region64: #{residual_forward.3} parent=5 // pred_fallthru
      _
  $region6: #{residual_forward.3} parent=0 // loop_footer
    %s19 = sadd.s32 1, %s15
  $region7: #{residual_forward.3} parent=0 // loop_footer_branch
    %14 = sbr.rel target = $region3
  $region8: #{residual_forward.3} parent=0 // loop_exit
    _

</llo_original>
